<compile_context>
chip_gen: v6e
topology: v6e:2x2x1
jax: 0.10.0
libtpu: 0.0.40
codegen_flags: <defaults>
</compile_context>

<pallas_src>
import functools

import jax
import jax.numpy as jnp
from jax.experimental import pallas as pl
from jax.experimental.pallas import tpu as pltpu

LANE = 128
SUBLANE = 8
P_SPLIT = 2          # edge-loop split into partial accumulators (megacore on v7x)


def _round_up(x, m):
    return ((x + m - 1) // m) * m


def _pad2(x, rows, cols):
    return jnp.pad(x, ((0, rows - x.shape[0]), (0, cols - x.shape[1])))


@functools.lru_cache(maxsize=1)
def _tpu_config():
    """Generation-aware (vmem_limit_bytes, edge_tile) - big on v5e/v6e, safe on v7x."""
    try:
        phys = int(pltpu.get_tpu_info().vmem_capacity_bytes)
    except Exception:
        phys = 64 * 1024 * 1024          # conservative fallback (v7x per-TC size)
    vmem_limit = int(min(phys * 7 // 10, 100 * 1024 * 1024))
    te = 512 if phys >= 100 * 1024 * 1024 else 256
    return vmem_limit, te


# ----------------------------------------------------------------------------
# Edge-message kernel
#   grid = (P_SPLIT [parallel], E_pad/(P_SPLIT*TE) [arbitrary reduction])
#   out  = [P_SPLIT, n_node_pad, HP] f32 partial scatter-sums (out_ref IS the accumulator)
# ----------------------------------------------------------------------------
def gnn_msg_kernel(edge_ref, hprev_ref, rela_ref, hqr_ref,
                   ws_ref, wr_ref, wqr_ref, bqr_ref, wa_ref, ba_ref,
                   out_ref):
    k = pl.program_id(1)

    @pl.when(k == 0)
    def _():
        out_ref[...] = jnp.zeros_like(out_ref)

    f32, bf16 = jnp.float32, jnp.bfloat16
    edges = edge_ref[...]                           # [TE, 4] int32: (r_idx, rel, sub, obj)
    ridx, rel = edges[:, 0:1], edges[:, 1:2]
    sub, obj = edges[:, 2:3], edges[:, 3:4]

    TE = edges.shape[0]
    n_prev = hprev_ref.shape[0]
    n_emb = rela_ref.shape[0]
    n_q = hqr_ref.shape[0]
    n_node = out_ref.shape[0]

    # in-kernel gathers as bf16 one-hot matmuls on the MXU; tables are bf16 so the
    # immediate bf16 cast of the result is exact -> only bf16 [TE,HP] slabs stay live.
    oh_sub = (jax.lax.broadcasted_iota(jnp.int32, (TE, n_prev), 1) == sub).astype(bf16)
    hs = jnp.dot(oh_sub, hprev_ref[...], preferred_element_type=f32).astype(bf16)
    oh_rel = (jax.lax.broadcasted_iota(jnp.int32, (TE, n_emb), 1) == rel).astype(bf16)
    hr = jnp.dot(oh_rel, rela_ref[...], preferred_element_type=f32).astype(bf16)
    oh_rq = (jax.lax.broadcasted_iota(jnp.int32, (TE, n_q), 1) == ridx).astype(bf16)
    hqr = jnp.dot(oh_rq, hqr_ref[...], preferred_element_type=f32).astype(bf16)

    # attention MLP: sigmoid(w_alpha . relu(Ws hs + Wr hr + Wqr hqr + bqr) + ba)
    pre = (jnp.dot(hs, ws_ref[...], preferred_element_type=f32)
           + jnp.dot(hr, wr_ref[...], preferred_element_type=f32)
           + jnp.dot(hqr, wqr_ref[...], preferred_element_type=f32)
           + bqr_ref[...])                                                 # [TE, AP]
    pre = jnp.maximum(pre, 0.0)
    # width-1 w_alpha as a VPU mul + lane reduction (no 1-column MXU matmul)
    alpha = jax.nn.sigmoid(jnp.sum(pre * wa_ref[...], axis=-1, keepdims=True)
                           + ba_ref[...])                                  # [TE, 1]

    msg = (alpha * (hs + hr).astype(f32)).astype(bf16)                     # [TE, HP]

    # scatter-sum over obj: padded edges carry obj == n_node_pad -> all-zero one-hot row.
    oh_obj = (jax.lax.broadcasted_iota(jnp.int32, (TE, n_node), 1) == obj).astype(bf16)
    out_ref[...] += jax.lax.dot_general(oh_obj, msg, (((0,), (0,)), ((), ())),
                                        preferred_element_type=f32)       # [n_node, HP]


def gnn_message_partials(edges_p, hprev_b, rela_b, hqr_b, lp, n_node_pad, TE, vmem_limit):
    E_pad = edges_p.shape[0]
    HP = hprev_b.shape[1]
    n_k = E_pad // (P_SPLIT * TE)
    inv_args = (hprev_b, rela_b, hqr_b,
                lp['Ws'], lp['Wr'], lp['Wqr'], lp['bqr'], lp['wa'], lp['ba'])

    def call(single_buffer_invariants):
        def inv_spec(arr):
            if single_buffer_invariants:
                return pl.BlockSpec(arr.shape, lambda p, k: (0, 0),
                                    pipeline_mode=pl.Buffered(1))
            return pl.BlockSpec(arr.shape, lambda p, k: (0, 0))

        return pl.pallas_call(
            gnn_msg_kernel,
            out_shape=jax.ShapeDtypeStruct((P_SPLIT, n_node_pad, HP), jnp.float32),
            grid=(P_SPLIT, n_k),
            in_specs=[pl.BlockSpec((TE, 4), lambda p, k: (p * n_k + k, 0))]
                     + [inv_spec(a) for a in inv_args],
            out_specs=pl.BlockSpec((None, n_node_pad, HP), lambda p, k: (p, 0, 0)),
            compiler_params=pltpu.CompilerParams(
                dimension_semantics=("parallel", "arbitrary"),
                vmem_limit_bytes=vmem_limit),
        )(edges_p, *inv_args)

    try:
        # grid-invariant operands single-buffered (saves up to 2x VMEM on the tables)
        return call(True)
    except Exception:
        # pl.Buffered(1) not accepted by this jax build -> default double buffering
        return call(False)


# ----------------------------------------------------------------------------
# Epilogue kernel: sum the P_SPLIT partials, W_h matmul + relu, fused 1-step GRU
# ----------------------------------------------------------------------------
def gru_epilogue_kernel(part_ref, h0_ref, wh_ref, wih_ref, whh_ref,
                        bih_ref, bhh_ref, out_ref):
    f32, bf16 = jnp.float32, jnp.bfloat16
    HP = out_ref.shape[1]

    agg = part_ref[0]
    for p in range(1, part_ref.shape[0]):
        agg = agg + part_ref[p]                                            # [n_node, HP] f32

    h_new = jnp.maximum(
        jnp.dot(agg.astype(bf16), wh_ref[...], preferred_element_type=f32), 0.0)  # act=relu
    h0 = h0_ref[...]
    # single-step GRU (PyTorch r,z,n gate order; gate chunks pre-padded to 128 lanes)
    gi = jnp.dot(h_new.astype(bf16), wih_ref[...], preferred_element_type=f32) + bih_ref[...]
    gh = jnp.dot(h0.astype(bf16), whh_ref[...], preferred_element_type=f32) + bhh_ref[...]
    r = jax.nn.sigmoid(gi[:, 0:HP] + gh[:, 0:HP])
    z = jax.nn.sigmoid(gi[:, HP:2 * HP] + gh[:, HP:2 * HP])
    n = jnp.tanh(gi[:, 2 * HP:3 * HP] + r * gh[:, 2 * HP:3 * HP])
    out_ref[...] = (1.0 - z) * n + z * h0


def gru_epilogue(partials, h0, lp, gp, vmem_limit):
    n_node_pad, HP = h0.shape
    args = (partials, h0, lp['Wh'], gp['Wih'], gp['Whh'], gp['bih'], gp['bhh'])

    def full_spec(shape):
        nd = len(shape)
        return pl.BlockSpec(shape, lambda i: (0,) * nd)

    # TODO(synk): for very large graphs, tile this epilogue over node rows instead of a
    # single full block.
    return pl.pallas_call(
        gru_epilogue_kernel,
        out_shape=jax.ShapeDtypeStruct((n_node_pad, HP), jnp.float32),
        grid=(1,),
        in_specs=[full_spec(a.shape) for a in args],
        out_specs=pl.BlockSpec((n_node_pad, HP), lambda i: (0, 0)),
        compiler_params=pltpu.CompilerParams(
            dimension_semantics=("arbitrary",),
            vmem_limit_bytes=vmem_limit),
    )(*args)


# ----------------------------------------------------------------------------
# Final per-node scores: W_final row-reduction (the unique-(q,e) scatter stays in JAX)
# ----------------------------------------------------------------------------
def score_kernel(hidden_ref, wf_ref, out_ref):
    out_ref[...] = jnp.sum(hidden_ref[...] * wf_ref[...], axis=-1, keepdims=True)


def node_scores(hidden, wf_row, vmem_limit, TN=128):
    N, HP = hidden.shape
    N_pad = _round_up(N, TN)
    hidden_p = jnp.pad(hidden, ((0, N_pad - N), (0, 0)))
    out = pl.pallas_call(
        score_kernel,
        out_shape=jax.ShapeDtypeStruct((N_pad, 1), jnp.float32),
        grid=(N_pad // TN,),
        in_specs=[pl.BlockSpec((TN, HP), lambda n: (n, 0)),
                  pl.BlockSpec((1, HP), lambda n: (0, 0))],
        out_specs=pl.BlockSpec((TN, 1), lambda n: (n, 0)),
        compiler_params=pltpu.CompilerParams(
            dimension_semantics=("parallel",),
            vmem_limit_bytes=vmem_limit),
    )(hidden_p, wf_row)
    return out[:N, 0]


# ----------------------------------------------------------------------------
# Parameters: logical init (matches PyTorch module shapes, pre-transposed Linear
# weights) + padded / bf16 kernel layouts.
# ----------------------------------------------------------------------------
def init_params(key, n_layer, H, A, n_rel):
    def lin(k, fi, fo):
        return 0.1 * jax.random.normal(k, (fi, fo), jnp.float32)

    layers = []
    for i in range(n_layer):
        k = jax.random.fold_in(key, i)
        ks = jax.random.split(k, 7)
        layers.append(dict(
            rela_embed=0.1 * jax.random.normal(ks[0], (2 * n_rel + 1, H), jnp.float32),
            Ws=lin(ks[1], H, A), Wr=lin(ks[2], H, A), Wqr=lin(ks[3], H, A),
            bqr=0.1 * jax.random.normal(ks[4], (1, A), jnp.float32),
            wa=lin(ks[5], A, 1), ba=jnp.zeros((1, 1), jnp.float32),
            Wh=lin(ks[6], H, H)))
    kg = jax.random.fold_in(key, 1000)
    kgs = jax.random.split(kg, 5)
    gru = dict(Wih=0.1 * jax.random.normal(kgs[0], (H, 3 * H), jnp.float32),
               Whh=0.1 * jax.random.normal(kgs[1], (H, 3 * H), jnp.float32),
               bih=0.1 * jax.random.normal(kgs[2], (1, 3 * H), jnp.float32),
               bhh=0.1 * jax.random.normal(kgs[3], (1, 3 * H), jnp.float32))
    W_final = 0.1 * jax.random.normal(kgs[4], (H, 1), jnp.float32)
    return dict(hidden_dim=H, attn_dim=A, layers=layers, gru=gru, W_final=W_final)


def prepare_params(params, HP=LANE, AP=LANE):
    H, A = params['hidden_dim'], params['attn_dim']
    layers = []
    for lp in params['layers']:
        n_emb_pad = _round_up(lp['rela_embed'].shape[0], SUBLANE)
        layers.append(dict(
            rela_embed=_pad2(lp['rela_embed'], n_emb_pad, HP).astype(jnp.bfloat16),
            Ws=_pad2(lp['Ws'], HP, AP).astype(jnp.bfloat16),
            Wr=_pad2(lp['Wr'], HP, AP).astype(jnp.bfloat16),
            Wqr=_pad2(lp['Wqr'], HP, AP).astype(jnp.bfloat16),
            bqr=_pad2(lp['bqr'], 1, AP),
            wa=_pad2(lp['wa'].T, 1, AP),        # row vector for the VPU reduction
            ba=lp['ba'],
            Wh=_pad2(lp['Wh'], HP, HP).astype(jnp.bfloat16)))
    g = params['gru']
    Wih_p = jnp.zeros((HP, 3 * HP), jnp.float32)
    Whh_p = jnp.zeros((HP, 3 * HP), jnp.float32)
    bih_p = jnp.zeros((1, 3 * HP), jnp.float32)
    bhh_p = jnp.zeros((1, 3 * HP), jnp.float32)
    for gi in range(3):   # each gate chunk padded to a full 128-lane tile
        Wih_p = Wih_p.at[:H, gi * HP:gi * HP + H].set(g['Wih'][:, gi * H:(gi + 1) * H])
        Whh_p = Whh_p.at[:H, gi * HP:gi * HP + H].set(g['Whh'][:, gi * H:(gi + 1) * H])
        bih_p = bih_p.at[:, gi * HP:gi * HP + H].set(g['bih'][:, gi * H:(gi + 1) * H])
        bhh_p = bhh_p.at[:, gi * HP:gi * HP + H].set(g['bhh'][:, gi * H:(gi + 1) * H])
    gru = dict(Wih=Wih_p.astype(jnp.bfloat16), Whh=Whh_p.astype(jnp.bfloat16),
               bih=bih_p, bhh=bhh_p)
    W_final_row = _pad2(params['W_final'].T, 1, HP)
    return dict(H=H, HP=HP, AP=AP, layers=layers, gru=gru, W_final=W_final_row)


# ----------------------------------------------------------------------------
# Full forward (Pallas kernels + thin JAX glue)
# ----------------------------------------------------------------------------
def tred_gnn_forward(prep, subject, relation, layer_graphs, num_entity):
    vmem_limit, TE = _tpu_config()
    HP = prep['HP']
    Q = subject.shape[0]
    Qp = _round_up(Q, SUBLANE)

    nodes = jnp.stack([jnp.arange(Q, dtype=jnp.int32), subject.astype(jnp.int32)], axis=1)
    hidden = jnp.zeros((Q, HP), jnp.float32)
    h0 = jnp.zeros((Q, HP), jnp.float32)

    for i, (nodes_i, edges_i, idx_i) in enumerate(layer_graphs):
        lp = prep['layers'][i]
        gp = prep['gru']
        n_node = int(nodes_i.shape[0])
        n_prev = hidden.shape[0]
        n_node_pad = _round_up(n_node, SUBLANE)
        n_prev_pad = _round_up(n_prev, SUBLANE)

        E = int(edges_i.shape[0])
        E_pad = _round_up(max(E, 1), P_SPLIT * TE)

        # single fused [E_pad, 4] int32 edge stream: (r_idx, rel, sub, obj); padded edges
        # carry obj = n_node_pad which falls outside the scatter one-hot and is dropped.
        cols = jnp.stack([edges_i[:, 0], edges_i[:, 2], edges_i[:, 4], edges_i[:, 5]],
                         axis=1).astype(jnp.int32)
        if E_pad > E:
            pad = jnp.broadcast_to(jnp.array([0, 0, 0, n_node_pad], jnp.int32),
                                   (E_pad - E, 4))
            cols = jnp.concatenate([cols, pad], axis=0)

        # TODO(synk): for graphs with thousands of nodes, pre-gather hs = hidden[sub] in
        # JAX (edge-tiled bf16 stream) and bucket edges by obj with PrefetchScalarGridSpec
        # so the scatter only touches a node tile per step instead of the full accumulator.
        hprev_b = jnp.pad(hidden, ((0, n_prev_pad - n_prev), (0, 0))).astype(jnp.bfloat16)
        hqr_tab = jnp.pad(lp['rela_embed'][relation.astype(jnp.int32)],
                          ((0, Qp - Q), (0, 0)))            # [Qp, HP] bf16 per-query rows

        partials = gnn_message_partials(cols, hprev_b, lp['rela_embed'], hqr_tab,
                                        lp, n_node_pad, TE, vmem_limit)

        # h0 = zeros(n_node, H).index_copy_(idx, h0_old)   (tiny glue)
        h0_l = jnp.zeros((n_node_pad, HP), jnp.float32).at[idx_i].set(h0)

        # W_h + relu + dropout (eval-mode identity) + single-step GRU
        hidden_pad = gru_epilogue(partials, h0_l, lp, gp, vmem_limit)
        hidden = hidden_pad[:n_node]
        h0 = hidden
        nodes = nodes_i

    # final scoring: per-node W_final row reduction (Pallas) + unique-(q,e) scatter (JAX)
    scores = node_scores(hidden, prep['W_final'], vmem_limit)
    qidx = nodes[:, 0].astype(jnp.int32)
    eidx = nodes[:, 1].astype(jnp.int32)
    return jnp.zeros((Q, num_entity), jnp.float32).at[qidx, eidx].set(scores)


# ----------------------------------------------------------------------------
# Pure-JAX f32 reference (mirrors the PyTorch forward) for a correctness check
# ----------------------------------------------------------------------------
def reference_forward(params, subject, relation, layer_graphs, num_entity):
    H = params['hidden_dim']
    Q = subject.shape[0]
    nodes = jnp.stack([jnp.arange(Q, dtype=jnp.int32), subject.astype(jnp.int32)], axis=1)
    hidden = jnp.zeros((Q, H), jnp.float32)
    h0 = jnp.zeros((Q, H), jnp.float32)
    g = params['gru']
    for i, (nodes_i, edges_i, idx_i) in enumerate(layer_graphs):
        lp = params['layers'][i]
        n_node = nodes_i.shape[0]
        ridx, rel = edges_i[:, 0], edges_i[:, 2]
        sub, obj = edges_i[:, 4], edges_i[:, 5]
        hs = hidden[sub]
        hr = lp['rela_embed'][rel]
        hqr = lp['rela_embed'][relation][ridx]
        pre = jnp.maximum(hs @ lp['Ws'] + hr @ lp['Wr'] + hqr @ lp['Wqr'] + lp['bqr'], 0.0)
        alpha = jax.nn.sigmoid(pre @ lp['wa'] + lp['ba'])
        msg = alpha * (hs + hr)
        agg = jnp.zeros((n_node, H), jnp.float32).at[obj].add(msg)
        hidden = jnp.maximum(agg @ lp['Wh'], 0.0)
        h0 = jnp.zeros((n_node, H), jnp.float32).at[idx_i].set(h0)
        gi = hidden @ g['Wih'] + g['bih']
        gh = h0 @ g['Whh'] + g['bhh']
        r = jax.nn.sigmoid(gi[:, :H] + gh[:, :H])
        z = jax.nn.sigmoid(gi[:, H:2 * H] + gh[:, H:2 * H])
        n = jnp.tanh(gi[:, 2 * H:] + r * gh[:, 2 * H:])
        hidden = (1.0 - z) * n + z * h0
        h0 = hidden
        nodes = nodes_i
    scores = (hidden @ params['W_final'])[:, 0]
    return jnp.zeros((Q, num_entity), jnp.float32).at[nodes[:, 0], nodes[:, 1]].set(scores)


# ----------------------------------------------------------------------------
# Main
# ----------------------------------------------------------------------------
if __name__ == "__main__":
    key = jax.random.PRNGKey(0)
    n_layer = 2
    H = 32          # hidden_dim (padded to 128 lanes for the kernels)
    A = 16          # attention_dim (padded to 128)
    n_rel = 5       # num_relation -> embedding rows = 2*n_rel+1 = 11
    num_entity = 64
    num_query = 4

    k_param, k_graph, k_inp = jax.random.split(key, 3)
    params = init_params(k_param, n_layer, H, A, n_rel)
    prep = prepare_params(params)

    subject = jax.random.randint(k_inp, (num_query,), 0, num_entity, dtype=jnp.int32)
    relation = jax.random.randint(jax.random.fold_in(k_inp, 1), (num_query,), 0,
                                  2 * n_rel + 1, dtype=jnp.int32)

    # TODO(synk): data.get_neighbors is a dataset-dependent CPU graph-sampling routine;
    # replaced by deterministic synthetic per-layer neighborhoods with the same schema
    # (nodes [n_node, 2], edges [n_edge, 6], idx = old_nodes_new_idx).
    layer_graphs = []
    prev_n = num_query
    n_nodes_per_layer = [8, 12]
    n_edges_per_layer = [24, 40]
    for i in range(n_layer):
        kg = jax.random.fold_in(k_graph, i)
        ks = jax.random.split(kg, 4)
        n_node = n_nodes_per_layer[i]
        n_edge = n_edges_per_layer[i]
        node_q = jnp.arange(n_node, dtype=jnp.int32) % num_query
        node_e = (7 * jnp.arange(n_node, dtype=jnp.int32)) % num_entity
        nodes_i = jnp.stack([node_q, node_e], axis=1)            # unique (q, e) pairs
        edges_i = jnp.stack([
            jax.random.randint(ks[0], (n_edge,), 0, num_query, dtype=jnp.int32),     # r_idx
            jnp.zeros((n_edge,), jnp.int32),                                          # unused
            jax.random.randint(ks[1], (n_edge,), 0, 2 * n_rel + 1, dtype=jnp.int32),  # rel
            jnp.zeros((n_edge,), jnp.int32),                                          # unused
            jax.random.randint(ks[2], (n_edge,), 0, prev_n, dtype=jnp.int32),         # sub
            jax.random.randint(ks[3], (n_edge,), 0, n_node, dtype=jnp.int32),         # obj
        ], axis=1)
        idx_i = jax.random.permutation(jax.random.fold_in(kg, 99), n_node)[:prev_n]
        layer_graphs.append((nodes_i, edges_i, idx_i))
        prev_n = n_node

    out = tred_gnn_forward(prep, subject, relation, layer_graphs, num_entity)
    out = jax.block_until_ready(out)
    assert out.shape == (num_query, num_entity) and out.dtype == jnp.float32

    ref = jax.block_until_ready(
        reference_forward(params, subject, relation, layer_graphs, num_entity))
    # bf16 MXU operands -> compare against the f32 reference with loosened tolerance
    assert bool(jnp.allclose(out, ref, rtol=5e-2, atol=5e-2)), \
        f"max abs diff {float(jnp.max(jnp.abs(out - ref)))}"

    print("KERNEL_OK")
</pallas_src>

<mosaic_0001>
module attributes {stable_mosaic.version = 11 : i64} {
  func.func @gnn_msg_kernel(%arg0: i32, %arg1: i32, %arg2: memref<256x4xi32, #tpu.memory_space<vmem>>, %arg3: memref<8x128xbf16, #tpu.memory_space<vmem>>, %arg4: memref<16x128xbf16, #tpu.memory_space<vmem>>, %arg5: memref<8x128xbf16, #tpu.memory_space<vmem>>, %arg6: memref<128x128xbf16, #tpu.memory_space<vmem>>, %arg7: memref<128x128xbf16, #tpu.memory_space<vmem>>, %arg8: memref<128x128xbf16, #tpu.memory_space<vmem>>, %arg9: memref<1x128xf32, #tpu.memory_space<vmem>>, %arg10: memref<1x128xf32, #tpu.memory_space<vmem>>, %arg11: memref<1x1xf32, #tpu.memory_space<vmem>>, %arg12: memref<1x8x128xf32, #tpu.memory_space<vmem>>) attributes {dimension_semantics = [#tpu.dimension_semantics<parallel>, #tpu.dimension_semantics<arbitrary>], iteration_bounds = array<i64: 2, 1>, scalar_prefetch = 0 : i64, scratch_operands = 0 : i64, tpu.core_type = #tpu.core_type<tc>, window_params = [{transform_indices = @transform_0, window_bounds = array<i64: 256, 4>}, {pipeline_mode = #tpu.pipeline_mode<synchronous>, transform_indices = @transform_1, window_bounds = array<i64: 8, 128>}, {pipeline_mode = #tpu.pipeline_mode<synchronous>, transform_indices = @transform_2, window_bounds = array<i64: 16, 128>}, {pipeline_mode = #tpu.pipeline_mode<synchronous>, transform_indices = @transform_3, window_bounds = array<i64: 8, 128>}, {pipeline_mode = #tpu.pipeline_mode<synchronous>, transform_indices = @transform_4, window_bounds = array<i64: 128, 128>}, {pipeline_mode = #tpu.pipeline_mode<synchronous>, transform_indices = @transform_5, window_bounds = array<i64: 128, 128>}, {pipeline_mode = #tpu.pipeline_mode<synchronous>, transform_indices = @transform_6, window_bounds = array<i64: 128, 128>}, {pipeline_mode = #tpu.pipeline_mode<synchronous>, transform_indices = @transform_7, window_bounds = array<i64: 1, 128>}, {pipeline_mode = #tpu.pipeline_mode<synchronous>, transform_indices = @transform_8, window_bounds = array<i64: 1, 128>}, {pipeline_mode = #tpu.pipeline_mode<synchronous>, transform_indices = @transform_9, window_bounds = array<i64: 1, 1>}, {transform_indices = @transform_10, window_bounds = array<i64: 1, 8, 128>}]} {
    %c0_i32 = arith.constant 0 : i32
    %0 = arith.cmpi eq, %arg1, %c0_i32 : i32
    %1 = arith.extui %0 : i1 to i32
    %c0_i32_0 = arith.constant 0 : i32
    %2 = arith.cmpi ne, %1, %c0_i32_0 : i32
    scf.if %2 {
      %cst_35 = arith.constant 0.000000e+00 : f32
      %79 = vector.broadcast %cst_35 : f32 to vector<8x128xf32>
      %c0_36 = arith.constant 0 : index
      %c0_37 = arith.constant 0 : index
      %c0_38 = arith.constant 0 : index
      %80 = vector.load %arg12[%c0_36, %c0_37, %c0_38] : memref<1x8x128xf32, #tpu.memory_space<vmem>>, vector<1x8x128xf32>
      %81 = vector.shape_cast %80 : vector<1x8x128xf32> to vector<8x128xf32>
      %82 = vector.shape_cast %79 : vector<8x128xf32> to vector<1x8x128xf32>
      tpu.vector_store %arg12[%c0_36, %c0_37, %c0_38], %82 {strides = array<i32>} : memref<1x8x128xf32, #tpu.memory_space<vmem>>, vector<1x8x128xf32>,
    } else {
    }
    %c0 = arith.constant 0 : index
    %c0_1 = arith.constant 0 : index
    %3 = vector.load %arg2[%c0, %c0_1] : memref<256x4xi32, #tpu.memory_space<vmem>>, vector<256x4xi32>
    %4 = vector.extract_strided_slice %3 {offsets = [0, 0], sizes = [256, 1], strides = [1, 1]} : vector<256x4xi32> to vector<256x1xi32>
    %5 = vector.extract_strided_slice %3 {offsets = [0, 1], sizes = [256, 1], strides = [1, 1]} : vector<256x4xi32> to vector<256x1xi32>
    %6 = vector.extract_strided_slice %3 {offsets = [0, 2], sizes = [256, 1], strides = [1, 1]} : vector<256x4xi32> to vector<256x1xi32>
    %7 = vector.extract_strided_slice %3 {offsets = [0, 3], sizes = [256, 1], strides = [1, 1]} : vector<256x4xi32> to vector<256x1xi32>
    %8 = tpu.iota {dimensions = array<i32: 1>} : vector<256x8xi32>
    %9 = vector.broadcast %6 : vector<256x1xi32> to vector<256x8xi32>
    %10 = arith.cmpi eq, %8, %9 : vector<256x8xi32>
    %11 = arith.extui %10 : vector<256x8xi1> to vector<256x8xi32>
    %12 = arith.sitofp %11 : vector<256x8xi32> to vector<256x8xf32>
    %13 = arith.truncf %12 : vector<256x8xf32> to vector<256x8xbf16>
    %c0_2 = arith.constant 0 : index
    %c0_3 = arith.constant 0 : index
    %14 = vector.load %arg3[%c0_2, %c0_3] : memref<8x128xbf16, #tpu.memory_space<vmem>>, vector<8x128xbf16>
    %cst = arith.constant dense<0.000000e+00> : vector<256x128xf32>
    %15 = tpu.matmul %13, %14, %cst {dimension_numbers = #tpu.dot_dimension_numbers<[1], [0], [0], [1], [0, 0, 1, 1], [], []>} : vector<256x8xbf16>, vector<8x128xbf16>, vector<256x128xf32> -> vector<256x128xf32>
    %16 = arith.truncf %15 : vector<256x128xf32> to vector<256x128xbf16>
    %17 = tpu.iota {dimensions = array<i32: 1>} : vector<256x16xi32>
    %18 = vector.broadcast %5 : vector<256x1xi32> to vector<256x16xi32>
    %19 = arith.cmpi eq, %17, %18 : vector<256x16xi32>
    %20 = arith.extui %19 : vector<256x16xi1> to vector<256x16xi32>
    %21 = arith.sitofp %20 : vector<256x16xi32> to vector<256x16xf32>
    %22 = arith.truncf %21 : vector<256x16xf32> to vector<256x16xbf16>
    %c0_4 = arith.constant 0 : index
    %c0_5 = arith.constant 0 : index
    %23 = vector.load %arg4[%c0_4, %c0_5] : memref<16x128xbf16, #tpu.memory_space<vmem>>, vector<16x128xbf16>
    %cst_6 = arith.constant dense<0.000000e+00> : vector<256x128xf32>
    %24 = tpu.matmul %22, %23, %cst_6 {dimension_numbers = #tpu.dot_dimension_numbers<[1], [0], [0], [1], [0, 0, 1, 1], [], []>} : vector<256x16xbf16>, vector<16x128xbf16>, vector<256x128xf32> -> vector<256x128xf32>
    %25 = arith.truncf %24 : vector<256x128xf32> to vector<256x128xbf16>
    %26 = tpu.iota {dimensions = array<i32: 1>} : vector<256x8xi32>
    %27 = vector.broadcast %4 : vector<256x1xi32> to vector<256x8xi32>
    %28 = arith.cmpi eq, %26, %27 : vector<256x8xi32>
    %29 = arith.extui %28 : vector<256x8xi1> to vector<256x8xi32>
    %30 = arith.sitofp %29 : vector<256x8xi32> to vector<256x8xf32>
    %31 = arith.truncf %30 : vector<256x8xf32> to vector<256x8xbf16>
    %c0_7 = arith.constant 0 : index
    %c0_8 = arith.constant 0 : index
    %32 = vector.load %arg5[%c0_7, %c0_8] : memref<8x128xbf16, #tpu.memory_space<vmem>>, vector<8x128xbf16>
    %cst_9 = arith.constant dense<0.000000e+00> : vector<256x128xf32>
    %33 = tpu.matmul %31, %32, %cst_9 {dimension_numbers = #tpu.dot_dimension_numbers<[1], [0], [0], [1], [0, 0, 1, 1], [], []>} : vector<256x8xbf16>, vector<8x128xbf16>, vector<256x128xf32> -> vector<256x128xf32>
    %34 = arith.truncf %33 : vector<256x128xf32> to vector<256x128xbf16>
    %c0_10 = arith.constant 0 : index
    %c0_11 = arith.constant 0 : index
    %35 = vector.load %arg6[%c0_10, %c0_11] : memref<128x128xbf16, #tpu.memory_space<vmem>>, vector<128x128xbf16>
    %cst_12 = arith.constant dense<0.000000e+00> : vector<256x128xf32>
    %36 = tpu.matmul %16, %35, %cst_12 {dimension_numbers = #tpu.dot_dimension_numbers<[1], [0], [0], [1], [0, 0, 1, 1], [], []>} : vector<256x128xbf16>, vector<128x128xbf16>, vector<256x128xf32> -> vector<256x128xf32>
    %c0_13 = arith.constant 0 : index
    %c0_14 = arith.constant 0 : index
    %37 = vector.load %arg7[%c0_13, %c0_14] : memref<128x128xbf16, #tpu.memory_space<vmem>>, vector<128x128xbf16>
    %cst_15 = arith.constant dense<0.000000e+00> : vector<256x128xf32>
    %38 = tpu.matmul %25, %37, %cst_15 {dimension_numbers = #tpu.dot_dimension_numbers<[1], [0], [0], [1], [0, 0, 1, 1], [], []>} : vector<256x128xbf16>, vector<128x128xbf16>, vector<256x128xf32> -> vector<256x128xf32>
    %39 = arith.addf %36, %38 : vector<256x128xf32>
    %c0_16 = arith.constant 0 : index
    %c0_17 = arith.constant 0 : index
    %40 = vector.load %arg8[%c0_16, %c0_17] : memref<128x128xbf16, #tpu.memory_space<vmem>>, vector<128x128xbf16>
    %cst_18 = arith.constant dense<0.000000e+00> : vector<256x128xf32>
    %41 = tpu.matmul %34, %40, %cst_18 {dimension_numbers = #tpu.dot_dimension_numbers<[1], [0], [0], [1], [0, 0, 1, 1], [], []>} : vector<256x128xbf16>, vector<128x128xbf16>, vector<256x128xf32> -> vector<256x128xf32>
    %42 = arith.addf %39, %41 : vector<256x128xf32>
    %c0_19 = arith.constant 0 : index
    %c0_20 = arith.constant 0 : index
    %43 = vector.load %arg9[%c0_19, %c0_20] : memref<1x128xf32, #tpu.memory_space<vmem>>, vector<1x128xf32>
    %44 = vector.broadcast %43 : vector<1x128xf32> to vector<256x128xf32>
    %45 = arith.addf %42, %44 : vector<256x128xf32>
    %cst_21 = arith.constant 0.000000e+00 : f32
    %46 = vector.broadcast %cst_21 : f32 to vector<256x128xf32>
    %47 = arith.maximumf %45, %46 : vector<256x128xf32>
    %c0_22 = arith.constant 0 : index
    %c0_23 = arith.constant 0 : index
    %48 = vector.load %arg10[%c0_22, %c0_23] : memref<1x128xf32, #tpu.memory_space<vmem>>, vector<1x128xf32>
    %49 = vector.broadcast %48 : vector<1x128xf32> to vector<256x128xf32>
    %50 = arith.mulf %47, %49 : vector<256x128xf32>
    %cst_24 = arith.constant dense<0.000000e+00> : vector<256xf32>
    %51 = vector.multi_reduction <add>, %50, %cst_24 [1] : vector<256x128xf32> to vector<256xf32>
    %52 = vector.shape_cast %51 : vector<256xf32> to vector<256x1xf32>
    %c0_25 = arith.constant 0 : index
    %c0_26 = arith.constant 0 : index
    %53 = vector.load %arg11[%c0_25, %c0_26] : memref<1x1xf32, #tpu.memory_space<vmem>>, vector<1x1xf32>
    %54 = vector.broadcast %53 : vector<1x1xf32> to vector<256x1xf32>
    %55 = arith.addf %52, %54 : vector<256x1xf32>
    %56 = arith.negf %55 : vector<256x1xf32>
    %57 = math.exp %56 : vector<256x1xf32>
    %cst_27 = arith.constant 1.000000e+00 : f32
    %58 = vector.broadcast %cst_27 : f32 to vector<256x1xf32>
    %59 = arith.addf %58, %57 : vector<256x1xf32>
    %60 = arith.divf %58, %59 : vector<256x1xf32>
    %61 = arith.addf %16, %25 : vector<256x128xbf16>
    %62 = arith.extf %61 : vector<256x128xbf16> to vector<256x128xf32>
    %63 = vector.broadcast %60 : vector<256x1xf32> to vector<256x128xf32>
    %64 = arith.mulf %63, %62 : vector<256x128xf32>
    %65 = arith.truncf %64 : vector<256x128xf32> to vector<256x128xbf16>
    %66 = tpu.iota {dimensions = array<i32: 1>} : vector<256x8xi32>
    %67 = vector.broadcast %7 : vector<256x1xi32> to vector<256x8xi32>
    %68 = arith.cmpi eq, %66, %67 : vector<256x8xi32>
    %69 = arith.extui %68 : vector<256x8xi1> to vector<256x8xi32>
    %70 = arith.sitofp %69 : vector<256x8xi32> to vector<256x8xf32>
    %71 = arith.truncf %70 : vector<256x8xf32> to vector<256x8xbf16>
    %c0_28 = arith.constant 0 : index
    %c0_29 = arith.constant 0 : index
    %c0_30 = arith.constant 0 : index
    %72 = vector.load %arg12[%c0_28, %c0_29, %c0_30] : memref<1x8x128xf32, #tpu.memory_space<vmem>>, vector<1x8x128xf32>
    %73 = vector.shape_cast %72 : vector<1x8x128xf32> to vector<8x128xf32>
    %cst_31 = arith.constant dense<0.000000e+00> : vector<8x128xf32>
    %74 = tpu.matmul %71, %65, %cst_31 {dimension_numbers = #tpu.dot_dimension_numbers<[0], [0], [1], [1], [0, 1, 1, 1], [], []>} : vector<256x8xbf16>, vector<256x128xbf16>, vector<8x128xf32> -> vector<8x128xf32>
    %75 = arith.addf %73, %74 : vector<8x128xf32>
    %c0_32 = arith.constant 0 : index
    %c0_33 = arith.constant 0 : index
    %c0_34 = arith.constant 0 : index
    %76 = vector.load %arg12[%c0_32, %c0_33, %c0_34] : memref<1x8x128xf32, #tpu.memory_space<vmem>>, vector<1x8x128xf32>
    %77 = vector.shape_cast %76 : vector<1x8x128xf32> to vector<8x128xf32>
    %78 = vector.shape_cast %75 : vector<8x128xf32> to vector<1x8x128xf32>
    tpu.vector_store %arg12[%c0_32, %c0_33, %c0_34], %78 {strides = array<i32>} : memref<1x8x128xf32, #tpu.memory_space<vmem>>, vector<1x8x128xf32>,
    return
  }
  func.func @transform_0(%arg0: i32, %arg1: i32) -> (i32, i32) {
    %c1_i32 = arith.constant 1 : i32
    %0 = arith.muli %arg0, %c1_i32 : i32
    %1 = arith.addi %0, %arg1 : i32
    %c0_i32 = arith.constant 0 : i32
    %c0_i32_0 = arith.constant 0 : i32
    return %1, %c0_i32 : i32, i32
  }
  func.func @transform_1(%arg0: i32, %arg1: i32) -> (i32, i32) {
    %c0_i32 = arith.constant 0 : i32
    %c0_i32_0 = arith.constant 0 : i32
    %c0_i32_1 = arith.constant 0 : i32
    return %c0_i32, %c0_i32_0 : i32, i32
  }
  func.func @transform_2(%arg0: i32, %arg1: i32) -> (i32, i32) {
    %c0_i32 = arith.constant 0 : i32
    %c0_i32_0 = arith.constant 0 : i32
    %c0_i32_1 = arith.constant 0 : i32
    return %c0_i32, %c0_i32_0 : i32, i32
  }
  func.func @transform_3(%arg0: i32, %arg1: i32) -> (i32, i32) {
    %c0_i32 = arith.constant 0 : i32
    %c0_i32_0 = arith.constant 0 : i32
    %c0_i32_1 = arith.constant 0 : i32
    return %c0_i32, %c0_i32_0 : i32, i32
  }
  func.func @transform_4(%arg0: i32, %arg1: i32) -> (i32, i32) {
    %c0_i32 = arith.constant 0 : i32
    %c0_i32_0 = arith.constant 0 : i32
    %c0_i32_1 = arith.constant 0 : i32
    return %c0_i32, %c0_i32_0 : i32, i32
  }
  func.func @transform_5(%arg0: i32, %arg1: i32) -> (i32, i32) {
    %c0_i32 = arith.constant 0 : i32
    %c0_i32_0 = arith.constant 0 : i32
    %c0_i32_1 = arith.constant 0 : i32
    return %c0_i32, %c0_i32_0 : i32, i32
  }
  func.func @transform_6(%arg0: i32, %arg1: i32) -> (i32, i32) {
    %c0_i32 = arith.constant 0 : i32
    %c0_i32_0 = arith.constant 0 : i32
    %c0_i32_1 = arith.constant 0 : i32
    return %c0_i32, %c0_i32_0 : i32, i32
  }
  func.func @transform_7(%arg0: i32, %arg1: i32) -> (i32, i32) {
    %c0_i32 = arith.constant 0 : i32
    %c0_i32_0 = arith.constant 0 : i32
    %c0_i32_1 = arith.constant 0 : i32
    return %c0_i32, %c0_i32_0 : i32, i32
  }
  func.func @transform_8(%arg0: i32, %arg1: i32) -> (i32, i32) {
    %c0_i32 = arith.constant 0 : i32
    %c0_i32_0 = arith.constant 0 : i32
    %c0_i32_1 = arith.constant 0 : i32
    return %c0_i32, %c0_i32_0 : i32, i32
  }
  func.func @transform_9(%arg0: i32, %arg1: i32) -> (i32, i32) {
    %c0_i32 = arith.constant 0 : i32
    %c0_i32_0 = arith.constant 0 : i32
    %c0_i32_1 = arith.constant 0 : i32
    return %c0_i32, %c0_i32_0 : i32, i32
  }
  func.func @transform_10(%arg0: i32, %arg1: i32) -> (i32, i32, i32) {
    %c0_i32 = arith.constant 0 : i32
    %c0_i32_0 = arith.constant 0 : i32
    %c0_i32_1 = arith.constant 0 : i32
    return %arg0, %c0_i32, %c0_i32_0 : i32, i32, i32
  }
}

module attributes {stable_mosaic.version = 11 : i64} {
  func.func @gnn_msg_kernel(%arg0: i32, %arg1: i32, %arg2: memref<256x4xi32, #tpu.memory_space<vmem>>, %arg3: memref<8x128xbf16, #tpu.memory_space<vmem>>, %arg4: memref<16x128xbf16, #tpu.memory_space<vmem>>, %arg5: memref<8x128xbf16, #tpu.memory_space<vmem>>, %arg6: memref<128x128xbf16, #tpu.memory_space<vmem>>, %arg7: memref<128x128xbf16, #tpu.memory_space<vmem>>, %arg8: memref<128x128xbf16, #tpu.memory_space<vmem>>, %arg9: memref<1x128xf32, #tpu.memory_space<vmem>>, %arg10: memref<1x128xf32, #tpu.memory_space<vmem>>, %arg11: memref<1x1xf32, #tpu.memory_space<vmem>>, %arg12: memref<1x8x128xf32, #tpu.memory_space<vmem>>) attributes {dimension_semantics = [#tpu.dimension_semantics<parallel>, #tpu.dimension_semantics<arbitrary>], iteration_bounds = array<i64: 2, 1>, scalar_prefetch = 0 : i64, scratch_operands = 0 : i64, tpu.core_type = #tpu.core_type<tc>, window_params = [{transform_indices = @transform_0, window_bounds = array<i64: 256, 4>}, {pipeline_mode = #tpu.pipeline_mode<synchronous>, transform_indices = @transform_1, window_bounds = array<i64: 8, 128>}, {pipeline_mode = #tpu.pipeline_mode<synchronous>, transform_indices = @transform_2, window_bounds = array<i64: 16, 128>}, {pipeline_mode = #tpu.pipeline_mode<synchronous>, transform_indices = @transform_3, window_bounds = array<i64: 8, 128>}, {pipeline_mode = #tpu.pipeline_mode<synchronous>, transform_indices = @transform_4, window_bounds = array<i64: 128, 128>}, {pipeline_mode = #tpu.pipeline_mode<synchronous>, transform_indices = @transform_5, window_bounds = array<i64: 128, 128>}, {pipeline_mode = #tpu.pipeline_mode<synchronous>, transform_indices = @transform_6, window_bounds = array<i64: 128, 128>}, {pipeline_mode = #tpu.pipeline_mode<synchronous>, transform_indices = @transform_7, window_bounds = array<i64: 1, 128>}, {pipeline_mode = #tpu.pipeline_mode<synchronous>, transform_indices = @transform_8, window_bounds = array<i64: 1, 128>}, {pipeline_mode = #tpu.pipeline_mode<synchronous>, transform_indices = @transform_9, window_bounds = array<i64: 1, 1>}, {transform_indices = @transform_10, window_bounds = array<i64: 1, 8, 128>}]} {
    %c0_i32 = arith.constant 0 : i32
    %0 = arith.cmpi eq, %arg1, %c0_i32 : i32
    %1 = arith.extui %0 : i1 to i32
    %c0_i32_0 = arith.constant 0 : i32
    %2 = arith.cmpi ne, %1, %c0_i32_0 : i32
    scf.if %2 {
      %cst_35 = arith.constant 0.000000e+00 : f32
      %79 = vector.broadcast %cst_35 : f32 to vector<8x128xf32>
      %c0_36 = arith.constant 0 : index
      %c0_37 = arith.constant 0 : index
      %c0_38 = arith.constant 0 : index
      %80 = vector.load %arg12[%c0_36, %c0_37, %c0_38] : memref<1x8x128xf32, #tpu.memory_space<vmem>>, vector<1x8x128xf32>
      %81 = vector.shape_cast %80 : vector<1x8x128xf32> to vector<8x128xf32>
      %82 = vector.shape_cast %79 : vector<8x128xf32> to vector<1x8x128xf32>
      tpu.vector_store %arg12[%c0_36, %c0_37, %c0_38], %82 {strides = array<i32>} : memref<1x8x128xf32, #tpu.memory_space<vmem>>, vector<1x8x128xf32>,
    } else {
    }
    %c0 = arith.constant 0 : index
    %c0_1 = arith.constant 0 : index
    %3 = vector.load %arg2[%c0, %c0_1] : memref<256x4xi32, #tpu.memory_space<vmem>>, vector<256x4xi32>
    %4 = vector.extract_strided_slice %3 {offsets = [0, 0], sizes = [256, 1], strides = [1, 1]} : vector<256x4xi32> to vector<256x1xi32>
    %5 = vector.extract_strided_slice %3 {offsets = [0, 1], sizes = [256, 1], strides = [1, 1]} : vector<256x4xi32> to vector<256x1xi32>
    %6 = vector.extract_strided_slice %3 {offsets = [0, 2], sizes = [256, 1], strides = [1, 1]} : vector<256x4xi32> to vector<256x1xi32>
    %7 = vector.extract_strided_slice %3 {offsets = [0, 3], sizes = [256, 1], strides = [1, 1]} : vector<256x4xi32> to vector<256x1xi32>
    %8 = tpu.iota {dimensions = array<i32: 1>} : vector<256x8xi32>
    %9 = vector.broadcast %6 : vector<256x1xi32> to vector<256x8xi32>
    %10 = arith.cmpi eq, %8, %9 : vector<256x8xi32>
    %11 = arith.extui %10 : vector<256x8xi1> to vector<256x8xi32>
    %12 = arith.sitofp %11 : vector<256x8xi32> to vector<256x8xf32>
    %13 = arith.truncf %12 : vector<256x8xf32> to vector<256x8xbf16>
    %c0_2 = arith.constant 0 : index
    %c0_3 = arith.constant 0 : index
    %14 = vector.load %arg3[%c0_2, %c0_3] : memref<8x128xbf16, #tpu.memory_space<vmem>>, vector<8x128xbf16>
    %cst = arith.constant dense<0.000000e+00> : vector<256x128xf32>
    %15 = tpu.matmul %13, %14, %cst {dimension_numbers = #tpu.dot_dimension_numbers<[1], [0], [0], [1], [0, 0, 1, 1], [], []>} : vector<256x8xbf16>, vector<8x128xbf16>, vector<256x128xf32> -> vector<256x128xf32>
    %16 = arith.truncf %15 : vector<256x128xf32> to vector<256x128xbf16>
    %17 = tpu.iota {dimensions = array<i32: 1>} : vector<256x16xi32>
    %18 = vector.broadcast %5 : vector<256x1xi32> to vector<256x16xi32>
    %19 = arith.cmpi eq, %17, %18 : vector<256x16xi32>
    %20 = arith.extui %19 : vector<256x16xi1> to vector<256x16xi32>
    %21 = arith.sitofp %20 : vector<256x16xi32> to vector<256x16xf32>
    %22 = arith.truncf %21 : vector<256x16xf32> to vector<256x16xbf16>
    %c0_4 = arith.constant 0 : index
    %c0_5 = arith.constant 0 : index
    %23 = vector.load %arg4[%c0_4, %c0_5] : memref<16x128xbf16, #tpu.memory_space<vmem>>, vector<16x128xbf16>
    %cst_6 = arith.constant dense<0.000000e+00> : vector<256x128xf32>
    %24 = tpu.matmul %22, %23, %cst_6 {dimension_numbers = #tpu.dot_dimension_numbers<[1], [0], [0], [1], [0, 0, 1, 1], [], []>} : vector<256x16xbf16>, vector<16x128xbf16>, vector<256x128xf32> -> vector<256x128xf32>
    %25 = arith.truncf %24 : vector<256x128xf32> to vector<256x128xbf16>
    %26 = tpu.iota {dimensions = array<i32: 1>} : vector<256x8xi32>
    %27 = vector.broadcast %4 : vector<256x1xi32> to vector<256x8xi32>
    %28 = arith.cmpi eq, %26, %27 : vector<256x8xi32>
    %29 = arith.extui %28 : vector<256x8xi1> to vector<256x8xi32>
    %30 = arith.sitofp %29 : vector<256x8xi32> to vector<256x8xf32>
    %31 = arith.truncf %30 : vector<256x8xf32> to vector<256x8xbf16>
    %c0_7 = arith.constant 0 : index
    %c0_8 = arith.constant 0 : index
    %32 = vector.load %arg5[%c0_7, %c0_8] : memref<8x128xbf16, #tpu.memory_space<vmem>>, vector<8x128xbf16>
    %cst_9 = arith.constant dense<0.000000e+00> : vector<256x128xf32>
    %33 = tpu.matmul %31, %32, %cst_9 {dimension_numbers = #tpu.dot_dimension_numbers<[1], [0], [0], [1], [0, 0, 1, 1], [], []>} : vector<256x8xbf16>, vector<8x128xbf16>, vector<256x128xf32> -> vector<256x128xf32>
    %34 = arith.truncf %33 : vector<256x128xf32> to vector<256x128xbf16>
    %c0_10 = arith.constant 0 : index
    %c0_11 = arith.constant 0 : index
    %35 = vector.load %arg6[%c0_10, %c0_11] : memref<128x128xbf16, #tpu.memory_space<vmem>>, vector<128x128xbf16>
    %cst_12 = arith.constant dense<0.000000e+00> : vector<256x128xf32>
    %36 = tpu.matmul %16, %35, %cst_12 {dimension_numbers = #tpu.dot_dimension_numbers<[1], [0], [0], [1], [0, 0, 1, 1], [], []>} : vector<256x128xbf16>, vector<128x128xbf16>, vector<256x128xf32> -> vector<256x128xf32>
    %c0_13 = arith.constant 0 : index
    %c0_14 = arith.constant 0 : index
    %37 = vector.load %arg7[%c0_13, %c0_14] : memref<128x128xbf16, #tpu.memory_space<vmem>>, vector<128x128xbf16>
    %cst_15 = arith.constant dense<0.000000e+00> : vector<256x128xf32>
    %38 = tpu.matmul %25, %37, %cst_15 {dimension_numbers = #tpu.dot_dimension_numbers<[1], [0], [0], [1], [0, 0, 1, 1], [], []>} : vector<256x128xbf16>, vector<128x128xbf16>, vector<256x128xf32> -> vector<256x128xf32>
    %39 = arith.addf %36, %38 : vector<256x128xf32>
    %c0_16 = arith.constant 0 : index
    %c0_17 = arith.constant 0 : index
    %40 = vector.load %arg8[%c0_16, %c0_17] : memref<128x128xbf16, #tpu.memory_space<vmem>>, vector<128x128xbf16>
    %cst_18 = arith.constant dense<0.000000e+00> : vector<256x128xf32>
    %41 = tpu.matmul %34, %40, %cst_18 {dimension_numbers = #tpu.dot_dimension_numbers<[1], [0], [0], [1], [0, 0, 1, 1], [], []>} : vector<256x128xbf16>, vector<128x128xbf16>, vector<256x128xf32> -> vector<256x128xf32>
    %42 = arith.addf %39, %41 : vector<256x128xf32>
    %c0_19 = arith.constant 0 : index
    %c0_20 = arith.constant 0 : index
    %43 = vector.load %arg9[%c0_19, %c0_20] : memref<1x128xf32, #tpu.memory_space<vmem>>, vector<1x128xf32>
    %44 = vector.broadcast %43 : vector<1x128xf32> to vector<256x128xf32>
    %45 = arith.addf %42, %44 : vector<256x128xf32>
    %cst_21 = arith.constant 0.000000e+00 : f32
    %46 = vector.broadcast %cst_21 : f32 to vector<256x128xf32>
    %47 = arith.maximumf %45, %46 : vector<256x128xf32>
    %c0_22 = arith.constant 0 : index
    %c0_23 = arith.constant 0 : index
    %48 = vector.load %arg10[%c0_22, %c0_23] : memref<1x128xf32, #tpu.memory_space<vmem>>, vector<1x128xf32>
    %49 = vector.broadcast %48 : vector<1x128xf32> to vector<256x128xf32>
    %50 = arith.mulf %47, %49 : vector<256x128xf32>
    %cst_24 = arith.constant dense<0.000000e+00> : vector<256xf32>
    %51 = vector.multi_reduction <add>, %50, %cst_24 [1] : vector<256x128xf32> to vector<256xf32>
    %52 = vector.shape_cast %51 : vector<256xf32> to vector<256x1xf32>
    %c0_25 = arith.constant 0 : index
    %c0_26 = arith.constant 0 : index
    %53 = vector.load %arg11[%c0_25, %c0_26] : memref<1x1xf32, #tpu.memory_space<vmem>>, vector<1x1xf32>
    %54 = vector.broadcast %53 : vector<1x1xf32> to vector<256x1xf32>
    %55 = arith.addf %52, %54 : vector<256x1xf32>
    %56 = arith.negf %55 : vector<256x1xf32>
    %57 = math.exp %56 : vector<256x1xf32>
    %cst_27 = arith.constant 1.000000e+00 : f32
    %58 = vector.broadcast %cst_27 : f32 to vector<256x1xf32>
    %59 = arith.addf %58, %57 : vector<256x1xf32>
    %60 = arith.divf %58, %59 : vector<256x1xf32>
    %61 = arith.addf %16, %25 : vector<256x128xbf16>
    %62 = arith.extf %61 : vector<256x128xbf16> to vector<256x128xf32>
    %63 = vector.broadcast %60 : vector<256x1xf32> to vector<256x128xf32>
    %64 = arith.mulf %63, %62 : vector<256x128xf32>
    %65 = arith.truncf %64 : vector<256x128xf32> to vector<256x128xbf16>
    %66 = tpu.iota {dimensions = array<i32: 1>} : vector<256x8xi32>
    %67 = vector.broadcast %7 : vector<256x1xi32> to vector<256x8xi32>
    %68 = arith.cmpi eq, %66, %67 : vector<256x8xi32>
    %69 = arith.extui %68 : vector<256x8xi1> to vector<256x8xi32>
    %70 = arith.sitofp %69 : vector<256x8xi32> to vector<256x8xf32>
    %71 = arith.truncf %70 : vector<256x8xf32> to vector<256x8xbf16>
    %c0_28 = arith.constant 0 : index
    %c0_29 = arith.constant 0 : index
    %c0_30 = arith.constant 0 : index
    %72 = vector.load %arg12[%c0_28, %c0_29, %c0_30] : memref<1x8x128xf32, #tpu.memory_space<vmem>>, vector<1x8x128xf32>
    %73 = vector.shape_cast %72 : vector<1x8x128xf32> to vector<8x128xf32>
    %cst_31 = arith.constant dense<0.000000e+00> : vector<8x128xf32>
    %74 = tpu.matmul %71, %65, %cst_31 {dimension_numbers = #tpu.dot_dimension_numbers<[0], [0], [1], [1], [0, 1, 1, 1], [], []>} : vector<256x8xbf16>, vector<256x128xbf16>, vector<8x128xf32> -> vector<8x128xf32>
    %75 = arith.addf %73, %74 : vector<8x128xf32>
    %c0_32 = arith.constant 0 : index
    %c0_33 = arith.constant 0 : index
    %c0_34 = arith.constant 0 : index
    %76 = vector.load %arg12[%c0_32, %c0_33, %c0_34] : memref<1x8x128xf32, #tpu.memory_space<vmem>>, vector<1x8x128xf32>
    %77 = vector.shape_cast %76 : vector<1x8x128xf32> to vector<8x128xf32>
    %78 = vector.shape_cast %75 : vector<8x128xf32> to vector<1x8x128xf32>
    tpu.vector_store %arg12[%c0_32, %c0_33, %c0_34], %78 {strides = array<i32>} : memref<1x8x128xf32, #tpu.memory_space<vmem>>, vector<1x8x128xf32>,
    return
  }
  func.func @transform_0(%arg0: i32, %arg1: i32) -> (i32, i32) {
    %c1_i32 = arith.constant 1 : i32
    %0 = arith.muli %arg0, %c1_i32 : i32
    %1 = arith.addi %0, %arg1 : i32
    %c0_i32 = arith.constant 0 : i32
    %c0_i32_0 = arith.constant 0 : i32
    return %1, %c0_i32 : i32, i32
  }
  func.func @transform_1(%arg0: i32, %arg1: i32) -> (i32, i32) {
    %c0_i32 = arith.constant 0 : i32
    %c0_i32_0 = arith.constant 0 : i32
    %c0_i32_1 = arith.constant 0 : i32
    return %c0_i32, %c0_i32_0 : i32, i32
  }
  func.func @transform_2(%arg0: i32, %arg1: i32) -> (i32, i32) {
    %c0_i32 = arith.constant 0 : i32
    %c0_i32_0 = arith.constant 0 : i32
    %c0_i32_1 = arith.constant 0 : i32
    return %c0_i32, %c0_i32_0 : i32, i32
  }
  func.func @transform_3(%arg0: i32, %arg1: i32) -> (i32, i32) {
    %c0_i32 = arith.constant 0 : i32
    %c0_i32_0 = arith.constant 0 : i32
    %c0_i32_1 = arith.constant 0 : i32
    return %c0_i32, %c0_i32_0 : i32, i32
  }
  func.func @transform_4(%arg0: i32, %arg1: i32) -> (i32, i32) {
    %c0_i32 = arith.constant 0 : i32
    %c0_i32_0 = arith.constant 0 : i32
    %c0_i32_1 = arith.constant 0 : i32
    return %c0_i32, %c0_i32_0 : i32, i32
  }
  func.func @transform_5(%arg0: i32, %arg1: i32) -> (i32, i32) {
    %c0_i32 = arith.constant 0 : i32
    %c0_i32_0 = arith.constant 0 : i32
    %c0_i32_1 = arith.constant 0 : i32
    return %c0_i32, %c0_i32_0 : i32, i32
  }
  func.func @transform_6(%arg0: i32, %arg1: i32) -> (i32, i32) {
    %c0_i32 = arith.constant 0 : i32
    %c0_i32_0 = arith.constant 0 : i32
    %c0_i32_1 = arith.constant 0 : i32
    return %c0_i32, %c0_i32_0 : i32, i32
  }
  func.func @transform_7(%arg0: i32, %arg1: i32) -> (i32, i32) {
    %c0_i32 = arith.constant 0 : i32
    %c0_i32_0 = arith.constant 0 : i32
    %c0_i32_1 = arith.constant 0 : i32
    return %c0_i32, %c0_i32_0 : i32, i32
  }
  func.func @transform_8(%arg0: i32, %arg1: i32) -> (i32, i32) {
    %c0_i32 = arith.constant 0 : i32
    %c0_i32_0 = arith.constant 0 : i32
    %c0_i32_1 = arith.constant 0 : i32
    return %c0_i32, %c0_i32_0 : i32, i32
  }
  func.func @transform_9(%arg0: i32, %arg1: i32) -> (i32, i32) {
    %c0_i32 = arith.constant 0 : i32
    %c0_i32_0 = arith.constant 0 : i32
    %c0_i32_1 = arith.constant 0 : i32
    return %c0_i32, %c0_i32_0 : i32, i32
  }
  func.func @transform_10(%arg0: i32, %arg1: i32) -> (i32, i32, i32) {
    %c0_i32 = arith.constant 0 : i32
    %c0_i32_0 = arith.constant 0 : i32
    %c0_i32_1 = arith.constant 0 : i32
    return %arg0, %c0_i32, %c0_i32_0 : i32, i32, i32
  }
}

</mosaic_0001>

<llo_original>
// kernel: tpu_custom_call.1
$region0: #{tpu_custom_call.1}
  #allocation0 [shape = 'u32[]', space=smem, size = 0x4, offset = 0x4, fixed_abs, tag = 'smem constant byte address 0x4 - core index']
  #allocation1 [shape = 'u32[144,128]{1,0:T(1,128)}', space=vmem, size = 0x12000, scoped, tag = 'internal scratch']
  #allocation2 [shape = 'f32[1,1]{1,0:T(1,128)S(1)}', space=vmem, size = 0x200, scoped, tag = 'scoped memory for tpu_custom_call.1']
  %s0 = inlined_call_operand.vmem [shape: s32[512,4], index: 0, kind: input, shape index: {}]
  %s1 = inlined_call_operand.vmem [shape: bf16[8,128], index: 1, kind: input, shape index: {}]
  %s2 = inlined_call_operand.vmem [shape: bf16[16,128], index: 2, kind: input, shape index: {}]
  %s3 = inlined_call_operand.vmem [shape: bf16[8,128], index: 3, kind: input, shape index: {}]
  %s4 = inlined_call_operand.vmem [shape: bf16[128,128], index: 4, kind: input, shape index: {}]
  %s5 = inlined_call_operand.vmem [shape: bf16[128,128], index: 5, kind: input, shape index: {}]
  %s6 = inlined_call_operand.vmem [shape: bf16[128,128], index: 6, kind: input, shape index: {}]
  %s7 = inlined_call_operand.vmem [shape: f32[1,128], index: 7, kind: input, shape index: {}]
  %s8 = inlined_call_operand.vmem [shape: f32[1,128], index: 8, kind: input, shape index: {}]
  %s9 = inlined_call_operand.<no memory space> [shape: f32[1,1], index: 9, kind: input, shape index: {}]
  %s10 = inlined_call_operand.hbm [shape: f32[2,8,128], index: 10, kind: output, shape index: {}]
  %s11 = sld [smem:[#allocation0]]
  $region77: #{tpu_custom_call.1} parent=0
    _
  %s13 = ssub.s32 1, %s11
  %s14 = scalar_select 0, %s13, %s11
  %v15 = vstv %s9
  %16 = vst [vmem:[#allocation2] sm:$0x1] %v15
  $region1: #{tpu_custom_call.1} parent=0
    #allocation3 [shape = 'u8[8192]{0}', space=vmem, size = 0x2000, scoped, tag = 'output window, operand 0']
    #allocation4 [shape = 's32[2]{0}', space=sflag, size = 0x8, scoped, tag = 'scoped memory for tpu_custom_call.1']
    %17 = vsyncpa [#allocation4], 0
    %s18 = scalar_lea.sflag [#allocation4], 1
    %19 = vsyncpa %s18, 0
    loop: start=0, step=1, limit=4
    $region2: #{tpu_custom_call.1} parent=1 // loop_pre_header
      _
    $region3: #{tpu_custom_call.1} parent=1 // loop_header
      %s21 = sphi 0, %s25
      %p22 = scmp.ge.s32.totalorder %s21, 4
      %s28 = sphi 0, %s40
      %s29 = sphi 0, %s36
      %s30 = sphi 0, %s28
      %s31 = sphi 0, %s29
      %s32 = sphi 0, %s30
      %s33 = sphi 0, %s31
      %s45 = sphi 0, %s47
      %s48 = sphi 0, %s45
      %s49 = sphi 0, %s48
      %s65 = sphi 0, %s49
      %s69 = sphi 0, %s69
      %s71 = sphi 0, %s69
      %s72 = sphi 0, %s71
      %s86 = sphi 0, %s72
      %s90 = sphi 0, %s90
      %s92 = sphi 0, %s90
      %s93 = sphi 0, %s92
      %s107 = sphi 0, %s93
      %s111 = sphi 0, %s111
      %s113 = sphi 0, %s111
      %s114 = sphi 0, %s113
      %s128 = sphi 0, %s114
      %s132 = sphi 0, %s132
      %s134 = sphi 0, %s132
      %s135 = sphi 0, %s134
      %s149 = sphi 0, %s135
      %s153 = sphi 0, %s153
      %s155 = sphi 0, %s153
      %s156 = sphi 0, %s155
      %s170 = sphi 0, %s156
      %s174 = sphi 0, %s174
      %s176 = sphi 0, %s174
      %s177 = sphi 0, %s176
      %s191 = sphi 0, %s177
      %s195 = sphi 0, %s195
      %s197 = sphi 0, %s195
      %s198 = sphi 0, %s197
      %s212 = sphi 0, %s198
      %s216 = sphi 0, %s216
      %s218 = sphi 0, %s216
      %s219 = sphi 0, %s218
      %s233 = sphi 0, %s219
      %s237 = sphi 0, %s237
      %s239 = sphi 0, %s237
      %s240 = sphi 0, %s239
      %s254 = sphi 0, %s240
      %s260 = sphi 0, %s262
      %s263 = sphi 0, %s260
      %s264 = sphi 0, %s263
      %s280 = sphi 0, %s264
    $region4: #{tpu_custom_call.1} parent=1 // loop_header_branch
      %24 = sbr.rel (%p22) target = $region8
    $region5: #{tpu_custom_call.1} parent=1 // loop_body
      %s26 = ssub.s32 %s21, 1
      %s27 = ssub.s32 %s21, 2
      %s34 = sadd.s32 1, %s29
      %p35 = scmp.ge.s32.totalorder %s34, 1
      %s36 = scalar_select %p35, 0, %s34
      %s37 = sadd.s32 1, %s28
      %s38 = scalar_select %p35, %s37, %s28
      %p39 = scmp.ge.s32.totalorder %s38, 2
      %s40 = scalar_select %p39, 0, %s38
      %s41 = sadd.s32 %s28, %s29
      %s42 = sadd.s32 %s40, %s36
      %s43 = ssub.s32 %s41, %s42
      %p44 = scmp.eq.s32.totalorder %s43, 0
      %s46 = sadd.s32 %s45, 1
      %s47 = scalar_select %p44, %s45, %s46
      %p50 = pneg %p44
      %p51 = scmp.eq.s32.totalorder %s21, 1
      %p52 = por %p50, %p51
      %p53 = scmp.ne.s32.totalorder %s45, %s48
      %p54 = scmp.eq.s32.totalorder %s21, 0
      %p55 = por %p53, %p54
      %p56 = scmp.ne.s32.totalorder %s45, %s48
      %p57 = scmp.eq.s32.totalorder %s26, 1
      %p58 = por %p56, %p57
      %p59 = scmp.ne.s32.totalorder %s48, %s49
      %p60 = scmp.eq.s32.totalorder %s26, 0
      %p61 = por %p59, %p60
      %p62 = scmp.ne.s32.totalorder %s48, %s49
      %p63 = scmp.eq.s32.totalorder %s27, 1
      %p64 = por %p62, %p63
      %p66 = scmp.ne.s32.totalorder %s49, %s65
      %p67 = scmp.eq.s32.totalorder %s27, 0
      %p68 = por %p66, %p67
      %s70 = sadd.s32 %s69, 1
      %p73 = scmp.eq.s32.totalorder %s21, 1
      %p74 = scmp.ne.s32.totalorder %s69, %s71
      %p75 = scmp.eq.s32.totalorder %s21, 0
      %p76 = por %p74, %p75
      %p77 = scmp.ne.s32.totalorder %s69, %s71
      %p78 = scmp.eq.s32.totalorder %s26, 1
      %p79 = por %p77, %p78
      %p80 = scmp.ne.s32.totalorder %s71, %s72
      %p81 = scmp.eq.s32.totalorder %s26, 0
      %p82 = por %p80, %p81
      %p83 = scmp.ne.s32.totalorder %s71, %s72
      %p84 = scmp.eq.s32.totalorder %s27, 1
      %p85 = por %p83, %p84
      %p87 = scmp.ne.s32.totalorder %s72, %s86
      %p88 = scmp.eq.s32.totalorder %s27, 0
      %p89 = por %p87, %p88
      %s91 = sadd.s32 %s90, 1
      %p94 = scmp.eq.s32.totalorder %s21, 1
      %p95 = scmp.ne.s32.totalorder %s90, %s92
      %p96 = scmp.eq.s32.totalorder %s21, 0
      %p97 = por %p95, %p96
      %p98 = scmp.ne.s32.totalorder %s90, %s92
      %p99 = scmp.eq.s32.totalorder %s26, 1
      %p100 = por %p98, %p99
      %p101 = scmp.ne.s32.totalorder %s92, %s93
      %p102 = scmp.eq.s32.totalorder %s26, 0
      %p103 = por %p101, %p102
      %p104 = scmp.ne.s32.totalorder %s92, %s93
      %p105 = scmp.eq.s32.totalorder %s27, 1
      %p106 = por %p104, %p105
      %p108 = scmp.ne.s32.totalorder %s93, %s107
      %p109 = scmp.eq.s32.totalorder %s27, 0
      %p110 = por %p108, %p109
      %s112 = sadd.s32 %s111, 1
      %p115 = scmp.eq.s32.totalorder %s21, 1
      %p116 = scmp.ne.s32.totalorder %s111, %s113
      %p117 = scmp.eq.s32.totalorder %s21, 0
      %p118 = por %p116, %p117
      %p119 = scmp.ne.s32.totalorder %s111, %s113
      %p120 = scmp.eq.s32.totalorder %s26, 1
      %p121 = por %p119, %p120
      %p122 = scmp.ne.s32.totalorder %s113, %s114
      %p123 = scmp.eq.s32.totalorder %s26, 0
      %p124 = por %p122, %p123
      %p125 = scmp.ne.s32.totalorder %s113, %s114
      %p126 = scmp.eq.s32.totalorder %s27, 1
      %p127 = por %p125, %p126
      %p129 = scmp.ne.s32.totalorder %s114, %s128
      %p130 = scmp.eq.s32.totalorder %s27, 0
      %p131 = por %p129, %p130
      %s133 = sadd.s32 %s132, 1
      %p136 = scmp.eq.s32.totalorder %s21, 1
      %p137 = scmp.ne.s32.totalorder %s132, %s134
      %p138 = scmp.eq.s32.totalorder %s21, 0
      %p139 = por %p137, %p138
      %p140 = scmp.ne.s32.totalorder %s132, %s134
      %p141 = scmp.eq.s32.totalorder %s26, 1
      %p142 = por %p140, %p141
      %p143 = scmp.ne.s32.totalorder %s134, %s135
      %p144 = scmp.eq.s32.totalorder %s26, 0
      %p145 = por %p143, %p144
      %p146 = scmp.ne.s32.totalorder %s134, %s135
      %p147 = scmp.eq.s32.totalorder %s27, 1
      %p148 = por %p146, %p147
      %p150 = scmp.ne.s32.totalorder %s135, %s149
      %p151 = scmp.eq.s32.totalorder %s27, 0
      %p152 = por %p150, %p151
      %s154 = sadd.s32 %s153, 1
      %p157 = scmp.eq.s32.totalorder %s21, 1
      %p158 = scmp.ne.s32.totalorder %s153, %s155
      %p159 = scmp.eq.s32.totalorder %s21, 0
      %p160 = por %p158, %p159
      %p161 = scmp.ne.s32.totalorder %s153, %s155
      %p162 = scmp.eq.s32.totalorder %s26, 1
      %p163 = por %p161, %p162
      %p164 = scmp.ne.s32.totalorder %s155, %s156
      %p165 = scmp.eq.s32.totalorder %s26, 0
      %p166 = por %p164, %p165
      %p167 = scmp.ne.s32.totalorder %s155, %s156
      %p168 = scmp.eq.s32.totalorder %s27, 1
      %p169 = por %p167, %p168
      %p171 = scmp.ne.s32.totalorder %s156, %s170
      %p172 = scmp.eq.s32.totalorder %s27, 0
      %p173 = por %p171, %p172
      %s175 = sadd.s32 %s174, 1
      %p178 = scmp.eq.s32.totalorder %s21, 1
      %p179 = scmp.ne.s32.totalorder %s174, %s176
      %p180 = scmp.eq.s32.totalorder %s21, 0
      %p181 = por %p179, %p180
      %p182 = scmp.ne.s32.totalorder %s174, %s176
      %p183 = scmp.eq.s32.totalorder %s26, 1
      %p184 = por %p182, %p183
      %p185 = scmp.ne.s32.totalorder %s176, %s177
      %p186 = scmp.eq.s32.totalorder %s26, 0
      %p187 = por %p185, %p186
      %p188 = scmp.ne.s32.totalorder %s176, %s177
      %p189 = scmp.eq.s32.totalorder %s27, 1
      %p190 = por %p188, %p189
      %p192 = scmp.ne.s32.totalorder %s177, %s191
      %p193 = scmp.eq.s32.totalorder %s27, 0
      %p194 = por %p192, %p193
      %s196 = sadd.s32 %s195, 1
      %p199 = scmp.eq.s32.totalorder %s21, 1
      %p200 = scmp.ne.s32.totalorder %s195, %s197
      %p201 = scmp.eq.s32.totalorder %s21, 0
      %p202 = por %p200, %p201
      %p203 = scmp.ne.s32.totalorder %s195, %s197
      %p204 = scmp.eq.s32.totalorder %s26, 1
      %p205 = por %p203, %p204
      %p206 = scmp.ne.s32.totalorder %s197, %s198
      %p207 = scmp.eq.s32.totalorder %s26, 0
      %p208 = por %p206, %p207
      %p209 = scmp.ne.s32.totalorder %s197, %s198
      %p210 = scmp.eq.s32.totalorder %s27, 1
      %p211 = por %p209, %p210
      %p213 = scmp.ne.s32.totalorder %s198, %s212
      %p214 = scmp.eq.s32.totalorder %s27, 0
      %p215 = por %p213, %p214
      %s217 = sadd.s32 %s216, 1
      %p220 = scmp.eq.s32.totalorder %s21, 1
      %p221 = scmp.ne.s32.totalorder %s216, %s218
      %p222 = scmp.eq.s32.totalorder %s21, 0
      %p223 = por %p221, %p222
      %p224 = scmp.ne.s32.totalorder %s216, %s218
      %p225 = scmp.eq.s32.totalorder %s26, 1
      %p226 = por %p224, %p225
      %p227 = scmp.ne.s32.totalorder %s218, %s219
      %p228 = scmp.eq.s32.totalorder %s26, 0
      %p229 = por %p227, %p228
      %p230 = scmp.ne.s32.totalorder %s218, %s219
      %p231 = scmp.eq.s32.totalorder %s27, 1
      %p232 = por %p230, %p231
      %p234 = scmp.ne.s32.totalorder %s219, %s233
      %p235 = scmp.eq.s32.totalorder %s27, 0
      %p236 = por %p234, %p235
      %s238 = sadd.s32 %s237, 1
      %p241 = scmp.eq.s32.totalorder %s21, 1
      %p242 = scmp.ne.s32.totalorder %s237, %s239
      %p243 = scmp.eq.s32.totalorder %s21, 0
      %p244 = por %p242, %p243
      %p245 = scmp.ne.s32.totalorder %s237, %s239
      %p246 = scmp.eq.s32.totalorder %s26, 1
      %p247 = por %p245, %p246
      %p248 = scmp.ne.s32.totalorder %s239, %s240
      %p249 = scmp.eq.s32.totalorder %s26, 0
      %p250 = por %p248, %p249
      %p251 = scmp.ne.s32.totalorder %s239, %s240
      %p252 = scmp.eq.s32.totalorder %s27, 1
      %p253 = por %p251, %p252
      %p255 = scmp.ne.s32.totalorder %s240, %s254
      %p256 = scmp.eq.s32.totalorder %s27, 0
      %p257 = por %p255, %p256
      %s258 = ssub.s32 %s28, %s40
      %p259 = scmp.eq.s32.totalorder %s258, 0
      %s261 = sadd.s32 %s260, 1
      %s262 = scalar_select %p259, %s260, %s261
      %p265 = pneg %p259
      %p266 = scmp.eq.s32.totalorder %s21, 1
      %p267 = por %p265, %p266
      %p268 = scmp.ne.s32.totalorder %s260, %s263
      %p269 = scmp.eq.s32.totalorder %s21, 0
      %p270 = por %p268, %p269
      %p271 = scmp.ne.s32.totalorder %s260, %s263
      %p272 = scmp.eq.s32.totalorder %s26, 1
      %p273 = por %p271, %p272
      %p274 = scmp.ne.s32.totalorder %s263, %s264
      %p275 = scmp.eq.s32.totalorder %s26, 0
      %p276 = por %p274, %p275
      %p277 = scmp.ne.s32.totalorder %s263, %s264
      %p278 = scmp.eq.s32.totalorder %s27, 1
      %p279 = por %p277, %p278
      %p281 = scmp.ne.s32.totalorder %s264, %s280
      %p282 = scmp.eq.s32.totalorder %s27, 0
      %p283 = por %p281, %p282
      %p284 = scmp.le.s32.totalorder 1, %s21
      %p285 = scmp.lt.s32.totalorder %s21, 3
      %p286 = pnand %p284, %p285
      %p287 = pneg %p286
      // Predicated region
      $region9: #{tpu_custom_call.1} parent=5 // pred_check
        _
      $region10: #{tpu_custom_call.1} parent=5 // pred_check_branch
        %289 = sbr.rel (%p286) target = $region12
      $region11: #{tpu_custom_call.1} parent=5 // pred_region
        %s290 = ssub.s32 %s21, 1
        // Predicated region
        $region13: #{tpu_custom_call.1} parent=11 // pred_check
          %p291 = pneg %p82
        $region14: #{tpu_custom_call.1} parent=11 // pred_check_branch
          %293 = sbr.rel (%p291) target = $region16
        $region15: #{tpu_custom_call.1} parent=11 // pred_region
          _
        $region16: #{tpu_custom_call.1} parent=11 // pred_fallthru
          _
        // Predicated region
        $region17: #{tpu_custom_call.1} parent=11 // pred_check
          %p294 = pneg %p103
        $region18: #{tpu_custom_call.1} parent=11 // pred_check_branch
          %296 = sbr.rel (%p294) target = $region20
        $region19: #{tpu_custom_call.1} parent=11 // pred_region
          _
        $region20: #{tpu_custom_call.1} parent=11 // pred_fallthru
          _
        // Predicated region
        $region21: #{tpu_custom_call.1} parent=11 // pred_check
          %p297 = pneg %p124
        $region22: #{tpu_custom_call.1} parent=11 // pred_check_branch
          %299 = sbr.rel (%p297) target = $region24
        $region23: #{tpu_custom_call.1} parent=11 // pred_region
          _
        $region24: #{tpu_custom_call.1} parent=11 // pred_fallthru
          _
        // Predicated region
        $region25: #{tpu_custom_call.1} parent=11 // pred_check
          %p300 = pneg %p145
        $region26: #{tpu_custom_call.1} parent=11 // pred_check_branch
          %302 = sbr.rel (%p300) target = $region28
        $region27: #{tpu_custom_call.1} parent=11 // pred_region
          _
        $region28: #{tpu_custom_call.1} parent=11 // pred_fallthru
          _
        // Predicated region
        $region29: #{tpu_custom_call.1} parent=11 // pred_check
          %p303 = pneg %p166
        $region30: #{tpu_custom_call.1} parent=11 // pred_check_branch
          %305 = sbr.rel (%p303) target = $region32
        $region31: #{tpu_custom_call.1} parent=11 // pred_region
          _
        $region32: #{tpu_custom_call.1} parent=11 // pred_fallthru
          _
        // Predicated region
        $region33: #{tpu_custom_call.1} parent=11 // pred_check
          %p306 = pneg %p187
        $region34: #{tpu_custom_call.1} parent=11 // pred_check_branch
          %308 = sbr.rel (%p306) target = $region36
        $region35: #{tpu_custom_call.1} parent=11 // pred_region
          _
        $region36: #{tpu_custom_call.1} parent=11 // pred_fallthru
          _
        // Predicated region
        $region37: #{tpu_custom_call.1} parent=11 // pred_check
          %p309 = pneg %p208
        $region38: #{tpu_custom_call.1} parent=11 // pred_check_branch
          %311 = sbr.rel (%p309) target = $region40
        $region39: #{tpu_custom_call.1} parent=11 // pred_region
          _
        $region40: #{tpu_custom_call.1} parent=11 // pred_fallthru
          _
        // Predicated region
        $region41: #{tpu_custom_call.1} parent=11 // pred_check
          %p312 = pneg %p229
        $region42: #{tpu_custom_call.1} parent=11 // pred_check_branch
          %314 = sbr.rel (%p312) target = $region44
        $region43: #{tpu_custom_call.1} parent=11 // pred_region
          _
        $region44: #{tpu_custom_call.1} parent=11 // pred_fallthru
          _
        // Predicated region
        $region45: #{tpu_custom_call.1} parent=11 // pred_check
          %p315 = pneg %p250
        $region46: #{tpu_custom_call.1} parent=11 // pred_check_branch
          %317 = sbr.rel (%p315) target = $region48
        $region47: #{tpu_custom_call.1} parent=11 // pred_region
          _
        $region48: #{tpu_custom_call.1} parent=11 // pred_fallthru
          _
      $region12: #{tpu_custom_call.1} parent=5 // pred_fallthru
        _
      %p318 = scmp.lt.s32.totalorder %s21, 2
      // Predicated region
      $region49: #{tpu_custom_call.1} parent=5 // pred_check
        %p319 = pneg %p318
      $region50: #{tpu_custom_call.1} parent=5 // pred_check_branch
        %321 = sbr.rel (%p319) target = $region52
      $region51: #{tpu_custom_call.1} parent=5 // pred_region
        // Predicated region
        $region53: #{tpu_custom_call.1} parent=51 // pred_check
          %p322 = pneg %p55
        $region54: #{tpu_custom_call.1} parent=51 // pred_check_branch
          %324 = sbr.rel (%p322) target = $region56
        $region55: #{tpu_custom_call.1} parent=51 // pred_region
          %s325 = sadd.s32 %s28, %s29
          %s326 = smul.u32 32, %s325
          %p327 = scmp.lt.s32.totalorder %s326, 63
          %s328 = scalar_select %p327, %s326, 63
          %s329 = smul.addr %s328, 8
          %s330 = scalar_lea.vmem %s0, %s329
          %s331 = sadd.s32 %s28, %s29
          %s332 = smul.u32 32, %s331
        $region56: #{tpu_custom_call.1} parent=51 // pred_fallthru
          _
      $region52: #{tpu_custom_call.1} parent=5 // pred_fallthru
        _
      %p333 = scmp.le.s32.totalorder 1, %s21
      %p334 = scmp.lt.s32.totalorder %s21, 3
      %p335 = pnand %p333, %p334
      %p336 = pneg %p335
      // Predicated region
      $region57: #{tpu_custom_call.1} parent=5 // pred_check
        _
      $region58: #{tpu_custom_call.1} parent=5 // pred_check_branch
        %338 = sbr.rel (%p335) target = $region60
      $region59: #{tpu_custom_call.1} parent=5 // pred_region
        %s339 = ssub.s32 %s21, 1
        %s340 = sadd.s32 %s30, %s31
        %s341 = smul.u32 32, %s340
        %p342 = scmp.lt.s32.totalorder %s341, 63
        %s343 = scalar_select %p342, %s341, 63
        %s344 = smul.addr %s343, 8
        %s345 = scalar_lea.vmem %s0, %s344
        %p346 = pneg %p61
        %p347 = pneg %p58
        %p348 = pneg %p82
        %p349 = pneg %p79
        %p350 = pneg %p103
        %p351 = pneg %p100
        %p352 = pneg %p124
        %p353 = pneg %p121
        %p354 = pneg %p145
        %p355 = pneg %p142
        %p356 = pneg %p166
        %p357 = pneg %p163
        %p358 = pneg %p187
        %p359 = pneg %p184
        %p360 = pneg %p208
        %p361 = pneg %p205
        %p362 = pneg %p229
        %p363 = pneg %p226
        %p364 = pneg %p250
        %p365 = pneg %p247
        %p366 = pneg %p276
        %p367 = pneg %p273
        %s368 = sand.u32 %s263, 1
        %s369 = scalar_lea.sflag [#allocation4], %s368
        %s370 = sand.u32 %s263, 1
        %s371 = smul.addr %s370, 8
        %s372 = scalar_lea.vmem [#allocation3], %s371
        %s373 = sadd.s32 %s30, %s31
        %s374 = smul.u32 32, %s373
        %p375 = scmp.lt.s32.totalorder %s374, 63
        %s376 = scalar_select %p375, %s374, 63
        %s377 = smul.addr %s376, 8
        %s378 = scalar_lea.vmem %s0, %s377
        %s379 = sadd.s32 %s30, %s31
        %s380 = smul.u32 32, %s379
        %p382 = scmp.eq.s32.totalorder %s31, 0
        // Predicated region
        $region61: #{tpu_custom_call.1} parent=59 // pred_check
          %p383 = pneg %p382
        $region62: #{tpu_custom_call.1} parent=59 // pred_check_branch
          %385 = sbr.rel (%p383) target = $region64
        $region63: #{tpu_custom_call.1} parent=59 // pred_region
          %386 = vst [vmem:[%s372] sm:$0xff] 0.0
        $region64: #{tpu_custom_call.1} parent=59 // pred_fallthru
          _
        %v387 = vld [vmem:[%s378] sm:$0xff]
        %v388 = vld [vmem:[%s378 + $0x8] sm:$0xff]
        %v389 = vld [vmem:[%s378 + $0x10] sm:$0xff]
        %v390 = vld [vmem:[%s378 + $0x18] sm:$0xff]
        %v391 = vld [vmem:[%s378 + $0x20] sm:$0xff]
        %v392 = vld [vmem:[%s378 + $0x28] sm:$0xff]
        %v393 = vld [vmem:[%s378 + $0x30] sm:$0xff]
        %v394 = vld [vmem:[%s378 + $0x38] sm:$0xff]
        %v395 = vld [vmem:[%s378 + $0x40] sm:$0xff]
        %v396 = vld [vmem:[%s378 + $0x48] sm:$0xff]
        %v397 = vld [vmem:[%s378 + $0x50] sm:$0xff]
        %v398 = vld [vmem:[%s378 + $0x58] sm:$0xff]
        %v399 = vld [vmem:[%s378 + $0x60] sm:$0xff]
        %v400 = vld [vmem:[%s378 + $0x68] sm:$0xff]
        %v401 = vld [vmem:[%s378 + $0x70] sm:$0xff]
        %v402 = vld [vmem:[%s378 + $0x78] sm:$0xff]
        %v403 = vld [vmem:[%s378 + $0x80] sm:$0xff]
        %v404 = vld [vmem:[%s378 + $0x88] sm:$0xff]
        %v405 = vld [vmem:[%s378 + $0x90] sm:$0xff]
        %v406 = vld [vmem:[%s378 + $0x98] sm:$0xff]
        %v407 = vld [vmem:[%s378 + $0xa0] sm:$0xff]
        %v408 = vld [vmem:[%s378 + $0xa8] sm:$0xff]
        %v409 = vld [vmem:[%s378 + $0xb0] sm:$0xff]
        %v410 = vld [vmem:[%s378 + $0xb8] sm:$0xff]
        %v411 = vld [vmem:[%s378 + $0xc0] sm:$0xff]
        %v412 = vld [vmem:[%s378 + $0xc8] sm:$0xff]
        %v413 = vld [vmem:[%s378 + $0xd0] sm:$0xff]
        %v414 = vld [vmem:[%s378 + $0xd8] sm:$0xff]
        %v415 = vld [vmem:[%s378 + $0xe0] sm:$0xff]
        %v416 = vld [vmem:[%s378 + $0xe8] sm:$0xff]
        %v417 = vld [vmem:[%s378 + $0xf0] sm:$0xff]
        %v418 = vld [vmem:[%s378 + $0xf8] sm:$0xff]
        %v419 = vlaneseq
        %v420 = vand.u32 %v419, 127
        %421 = vset.pattern.permute.xlu0 2
        %422 = vperm.xlu0 %421, %v387
        %v423 = vpop.permute.xlu0 %422
        %424 = vset.pattern.permute.xlu0 2
        %425 = vperm.xlu0 %424, %v388
        %v426 = vpop.permute.xlu0 %425
        %427 = vset.pattern.permute.xlu0 2
        %428 = vperm.xlu0 %427, %v389
        %v429 = vpop.permute.xlu0 %428
        %430 = vset.pattern.permute.xlu0 2
        %431 = vperm.xlu0 %430, %v390
        %v432 = vpop.permute.xlu0 %431
        %433 = vset.pattern.permute.xlu0 2
        %434 = vperm.xlu0 %433, %v391
        %v435 = vpop.permute.xlu0 %434
        %436 = vset.pattern.permute.xlu0 2
        %437 = vperm.xlu0 %436, %v392
        %v438 = vpop.permute.xlu0 %437
        %439 = vset.pattern.permute.xlu0 2
        %440 = vperm.xlu0 %439, %v393
        %v441 = vpop.permute.xlu0 %440
        %442 = vset.pattern.permute.xlu0 2
        %443 = vperm.xlu0 %442, %v394
        %v444 = vpop.permute.xlu0 %443
        %445 = vset.pattern.permute.xlu0 2
        %446 = vperm.xlu0 %445, %v395
        %v447 = vpop.permute.xlu0 %446
        %448 = vset.pattern.permute.xlu0 2
        %449 = vperm.xlu0 %448, %v396
        %v450 = vpop.permute.xlu0 %449
        %451 = vset.pattern.permute.xlu0 2
        %452 = vperm.xlu0 %451, %v397
        %v453 = vpop.permute.xlu0 %452
        %454 = vset.pattern.permute.xlu0 2
        %455 = vperm.xlu0 %454, %v398
        %v456 = vpop.permute.xlu0 %455
        %457 = vset.pattern.permute.xlu0 2
        %458 = vperm.xlu0 %457, %v399
        %v459 = vpop.permute.xlu0 %458
        %460 = vset.pattern.permute.xlu0 2
        %461 = vperm.xlu0 %460, %v400
        %v462 = vpop.permute.xlu0 %461
        %463 = vset.pattern.permute.xlu0 2
        %464 = vperm.xlu0 %463, %v401
        %v465 = vpop.permute.xlu0 %464
        %466 = vset.pattern.permute.xlu0 2
        %467 = vperm.xlu0 %466, %v402
        %v468 = vpop.permute.xlu0 %467
        %469 = vset.pattern.permute.xlu0 2
        %470 = vperm.xlu0 %469, %v403
        %v471 = vpop.permute.xlu0 %470
        %472 = vset.pattern.permute.xlu0 2
        %473 = vperm.xlu0 %472, %v404
        %v474 = vpop.permute.xlu0 %473
        %475 = vset.pattern.permute.xlu0 2
        %476 = vperm.xlu0 %475, %v405
        %v477 = vpop.permute.xlu0 %476
        %478 = vset.pattern.permute.xlu0 2
        %479 = vperm.xlu0 %478, %v406
        %v480 = vpop.permute.xlu0 %479
        %481 = vset.pattern.permute.xlu0 2
        %482 = vperm.xlu0 %481, %v407
        %v483 = vpop.permute.xlu0 %482
        %484 = vset.pattern.permute.xlu0 2
        %485 = vperm.xlu0 %484, %v408
        %v486 = vpop.permute.xlu0 %485
        %487 = vset.pattern.permute.xlu0 2
        %488 = vperm.xlu0 %487, %v409
        %v489 = vpop.permute.xlu0 %488
        %490 = vset.pattern.permute.xlu0 2
        %491 = vperm.xlu0 %490, %v410
        %v492 = vpop.permute.xlu0 %491
        %493 = vset.pattern.permute.xlu0 2
        %494 = vperm.xlu0 %493, %v411
        %v495 = vpop.permute.xlu0 %494
        %496 = vset.pattern.permute.xlu0 2
        %497 = vperm.xlu0 %496, %v412
        %v498 = vpop.permute.xlu0 %497
        %499 = vset.pattern.permute.xlu0 2
        %500 = vperm.xlu0 %499, %v413
        %v501 = vpop.permute.xlu0 %500
        %502 = vset.pattern.permute.xlu0 2
        %503 = vperm.xlu0 %502, %v414
        %v504 = vpop.permute.xlu0 %503
        %505 = vset.pattern.permute.xlu0 2
        %506 = vperm.xlu0 %505, %v415
        %v507 = vpop.permute.xlu0 %506
        %508 = vset.pattern.permute.xlu0 2
        %509 = vperm.xlu0 %508, %v416
        %v510 = vpop.permute.xlu0 %509
        %511 = vset.pattern.permute.xlu0 2
        %512 = vperm.xlu0 %511, %v417
        %v513 = vpop.permute.xlu0 %512
        %514 = vset.pattern.permute.xlu0 2
        %515 = vperm.xlu0 %514, %v418
        %v516 = vpop.permute.xlu0 %515
        %vm517 = vcmp.eq.s32.totalorder %v420, %v423
        %vm518 = vcmp.eq.s32.totalorder %v420, %v426
        %vm519 = vcmp.eq.s32.totalorder %v420, %v429
        %vm520 = vcmp.eq.s32.totalorder %v420, %v432
        %vm521 = vcmp.eq.s32.totalorder %v420, %v435
        %vm522 = vcmp.eq.s32.totalorder %v420, %v438
        %vm523 = vcmp.eq.s32.totalorder %v420, %v441
        %vm524 = vcmp.eq.s32.totalorder %v420, %v444
        %vm525 = vcmp.eq.s32.totalorder %v420, %v447
        %vm526 = vcmp.eq.s32.totalorder %v420, %v450
        %vm527 = vcmp.eq.s32.totalorder %v420, %v453
        %vm528 = vcmp.eq.s32.totalorder %v420, %v456
        %vm529 = vcmp.eq.s32.totalorder %v420, %v459
        %vm530 = vcmp.eq.s32.totalorder %v420, %v462
        %vm531 = vcmp.eq.s32.totalorder %v420, %v465
        %vm532 = vcmp.eq.s32.totalorder %v420, %v468
        %vm533 = vcmp.eq.s32.totalorder %v420, %v471
        %vm534 = vcmp.eq.s32.totalorder %v420, %v474
        %vm535 = vcmp.eq.s32.totalorder %v420, %v477
        %vm536 = vcmp.eq.s32.totalorder %v420, %v480
        %vm537 = vcmp.eq.s32.totalorder %v420, %v483
        %vm538 = vcmp.eq.s32.totalorder %v420, %v486
        %vm539 = vcmp.eq.s32.totalorder %v420, %v489
        %vm540 = vcmp.eq.s32.totalorder %v420, %v492
        %vm541 = vcmp.eq.s32.totalorder %v420, %v495
        %vm542 = vcmp.eq.s32.totalorder %v420, %v498
        %vm543 = vcmp.eq.s32.totalorder %v420, %v501
        %vm544 = vcmp.eq.s32.totalorder %v420, %v504
        %vm545 = vcmp.eq.s32.totalorder %v420, %v507
        %vm546 = vcmp.eq.s32.totalorder %v420, %v510
        %vm547 = vcmp.eq.s32.totalorder %v420, %v513
        %vm548 = vcmp.eq.s32.totalorder %v420, %v516
        %v549 = vsel %vm517, 1, 0
        %v550 = vsel %vm518, 1, 0
        %v551 = vsel %vm519, 1, 0
        %v552 = vsel %vm520, 1, 0
        %v553 = vsel %vm521, 1, 0
        %v554 = vsel %vm522, 1, 0
        %v555 = vsel %vm523, 1, 0
        %v556 = vsel %vm524, 1, 0
        %v557 = vsel %vm525, 1, 0
        %v558 = vsel %vm526, 1, 0
        %v559 = vsel %vm527, 1, 0
        %v560 = vsel %vm528, 1, 0
        %v561 = vsel %vm529, 1, 0
        %v562 = vsel %vm530, 1, 0
        %v563 = vsel %vm531, 1, 0
        %v564 = vsel %vm532, 1, 0
        %v565 = vsel %vm533, 1, 0
        %v566 = vsel %vm534, 1, 0
        %v567 = vsel %vm535, 1, 0
        %v568 = vsel %vm536, 1, 0
        %v569 = vsel %vm537, 1, 0
        %v570 = vsel %vm538, 1, 0
        %v571 = vsel %vm539, 1, 0
        %v572 = vsel %vm540, 1, 0
        %v573 = vsel %vm541, 1, 0
        %v574 = vsel %vm542, 1, 0
        %v575 = vsel %vm543, 1, 0
        %v576 = vsel %vm544, 1, 0
        %v577 = vsel %vm545, 1, 0
        %v578 = vsel %vm546, 1, 0
        %v579 = vsel %vm547, 1, 0
        %v580 = vsel %vm548, 1, 0
        %v581 = vcvt.s32.f32 %v549
        %v582 = vcvt.s32.f32 %v550
        %v583 = vcvt.s32.f32 %v551
        %v584 = vcvt.s32.f32 %v552
        %v585 = vcvt.s32.f32 %v553
        %v586 = vcvt.s32.f32 %v554
        %v587 = vcvt.s32.f32 %v555
        %v588 = vcvt.s32.f32 %v556
        %v589 = vcvt.s32.f32 %v557
        %v590 = vcvt.s32.f32 %v558
        %v591 = vcvt.s32.f32 %v559
        %v592 = vcvt.s32.f32 %v560
        %v593 = vcvt.s32.f32 %v561
        %v594 = vcvt.s32.f32 %v562
        %v595 = vcvt.s32.f32 %v563
        %v596 = vcvt.s32.f32 %v564
        %v597 = vcvt.s32.f32 %v565
        %v598 = vcvt.s32.f32 %v566
        %v599 = vcvt.s32.f32 %v567
        %v600 = vcvt.s32.f32 %v568
        %v601 = vcvt.s32.f32 %v569
        %v602 = vcvt.s32.f32 %v570
        %v603 = vcvt.s32.f32 %v571
        %v604 = vcvt.s32.f32 %v572
        %v605 = vcvt.s32.f32 %v573
        %v606 = vcvt.s32.f32 %v574
        %v607 = vcvt.s32.f32 %v575
        %v608 = vcvt.s32.f32 %v576
        %v609 = vcvt.s32.f32 %v577
        %v610 = vcvt.s32.f32 %v578
        %v611 = vcvt.s32.f32 %v579
        %v612 = vcvt.s32.f32 %v580
        %v613 = vpack.c.bf16 %v582, %v581
        %v614 = vpack.c.bf16 %v584, %v583
        %v615 = vpack.c.bf16 %v586, %v585
        %v616 = vpack.c.bf16 %v588, %v587
        %v617 = vpack.c.bf16 %v590, %v589
        %v618 = vpack.c.bf16 %v592, %v591
        %v619 = vpack.c.bf16 %v594, %v593
        %v620 = vpack.c.bf16 %v596, %v595
        %v621 = vpack.c.bf16 %v598, %v597
        %v622 = vpack.c.bf16 %v600, %v599
        %v623 = vpack.c.bf16 %v602, %v601
        %v624 = vpack.c.bf16 %v604, %v603
        %v625 = vpack.c.bf16 %v606, %v605
        %v626 = vpack.c.bf16 %v608, %v607
        %v627 = vpack.c.bf16 %v610, %v609
        %v628 = vpack.c.bf16 %v612, %v611
        %v629 = vld [vmem:[%s1] sm:$0xf]
        %vm630 = vcmask 64512
        %v632 = vsel %vm630, %v613, 0
        %v635 = vsel %vm630, %v614, 0
        %v638 = vsel %vm630, %v615, 0
        %v641 = vsel %vm630, %v616, 0
        %v644 = vsel %vm630, %v617, 0
        %v647 = vsel %vm630, %v618, 0
        %v650 = vsel %vm630, %v619, 0
        %v653 = vsel %vm630, %v620, 0
        %v656 = vsel %vm630, %v621, 0
        %v659 = vsel %vm630, %v622, 0
        %v662 = vsel %vm630, %v623, 0
        %v665 = vsel %vm630, %v624, 0
        %v668 = vsel %vm630, %v625, 0
        %v671 = vsel %vm630, %v626, 0
        %v674 = vsel %vm630, %v627, 0
        %v677 = vsel %vm630, %v628, 0
        %vm679 = vcmask 1043456
        %v681 = vsel %vm679, %v629, 0
        %683 = vmatprep.subr.bf16.mxu0 0
        %684 = vmatpush1.bf16.msra.mxu0 0
        %685 = vmatprep.subr.bf16.mxu0 0
        %686 = vmatpush1.bf16.msra.mxu0 0
        %687 = vmatprep.subr.bf16.mxu0 0
        %688 = vmatpush1.bf16.msra.mxu0 0
        %689 = vmatprep.subr.bf16.mxu0 0
        %690 = vmatpush1.bf16.msra.mxu0 0
        %691 = vmatprep.subr.bf16.mxu0 0
        %692 = vmatpush1.bf16.msra.mxu0 0
        %693 = vmatprep.subr.bf16.mxu0 0
        %694 = vmatpush1.bf16.msra.mxu0 0
        %695 = vmatprep.subr.bf16.mxu0 0
        %696 = vmatpush1.bf16.msra.mxu0 0
        %697 = vmatprep.subr.bf16.mxu0 0
        %698 = vmatpush1.bf16.msra.mxu0 %v681
        %699 = vmatprep.subr.bf16.mxu0 0
        %700 = vmatpush2.bf16.msra.mxu0 0
        %701 = vmatprep.subr.bf16.mxu0 0
        %702 = vmatpush2.bf16.msra.mxu0 0
        %703 = vmatprep.subr.bf16.mxu0 0
        %704 = vmatpush2.bf16.msra.mxu0 0
        %705 = vmatprep.subr.bf16.mxu0 0
        %706 = vmatpush2.bf16.msra.mxu0 0
        %707 = vmatprep.subr.bf16.mxu0 0
        %708 = vmatpush2.bf16.msra.mxu0 0
        %709 = vmatprep.subr.bf16.mxu0 0
        %710 = vmatpush2.bf16.msra.mxu0 0
        %711 = vmatprep.subr.bf16.mxu0 0
        %712 = vmatpush2.bf16.msra.mxu0 0
        %713 = vmatprep.subr.bf16.mxu0 0
        %714 = vmatpush2.bf16.msra.mxu0 0
        %715 = vmatprep.mubr.bf16.mxu0 0
        %716 = vmatmul.mubr.bf16.gmra.mxu0 %v632
        %v717 = vpop.f32.mrf.mxu0
        %v718 = vadd.f32 0.0, %v717
        %v719 = vpop.f32.mrf.mxu0
        %v720 = vpop.f32.mrf.mxu0
        %v721 = vadd.f32 0.0, %v720
        %v722 = vpop.f32.mrf.mxu0
        %723 = vmatprep.mubr.bf16.mxu0 0
        %724 = vmatmul.mubr.bf16.gmra.mxu0 %v635
        %v725 = vpop.f32.mrf.mxu0
        %v726 = vadd.f32 0.0, %v725
        %v727 = vpop.f32.mrf.mxu0
        %v728 = vpop.f32.mrf.mxu0
        %v729 = vadd.f32 0.0, %v728
        %v730 = vpop.f32.mrf.mxu0
        %731 = vmatprep.mubr.bf16.mxu0 0
        %732 = vmatmul.mubr.bf16.gmra.mxu0 %v638
        %v733 = vpop.f32.mrf.mxu0
        %v734 = vadd.f32 0.0, %v733
        %v735 = vpop.f32.mrf.mxu0
        %v736 = vpop.f32.mrf.mxu0
        %v737 = vadd.f32 0.0, %v736
        %v738 = vpop.f32.mrf.mxu0
        %739 = vmatprep.mubr.bf16.mxu0 0
        %740 = vmatmul.mubr.bf16.gmra.mxu0 %v641
        %v741 = vpop.f32.mrf.mxu0
        %v742 = vadd.f32 0.0, %v741
        %v743 = vpop.f32.mrf.mxu0
        %v744 = vpop.f32.mrf.mxu0
        %v745 = vadd.f32 0.0, %v744
        %v746 = vpop.f32.mrf.mxu0
        %747 = vmatprep.mubr.bf16.mxu0 0
        %748 = vmatmul.mubr.bf16.gmra.mxu0 %v644
        %v749 = vpop.f32.mrf.mxu0
        %v750 = vadd.f32 0.0, %v749
        %v751 = vpop.f32.mrf.mxu0
        %v752 = vpop.f32.mrf.mxu0
        %v753 = vadd.f32 0.0, %v752
        %v754 = vpop.f32.mrf.mxu0
        %755 = vmatprep.mubr.bf16.mxu0 0
        %756 = vmatmul.mubr.bf16.gmra.mxu0 %v647
        %v757 = vpop.f32.mrf.mxu0
        %v758 = vadd.f32 0.0, %v757
        %v759 = vpop.f32.mrf.mxu0
        %v760 = vpop.f32.mrf.mxu0
        %v761 = vadd.f32 0.0, %v760
        %v762 = vpop.f32.mrf.mxu0
        %763 = vmatprep.mubr.bf16.mxu0 0
        %764 = vmatmul.mubr.bf16.gmra.mxu0 %v650
        %v765 = vpop.f32.mrf.mxu0
        %v766 = vadd.f32 0.0, %v765
        %v767 = vpop.f32.mrf.mxu0
        %v768 = vpop.f32.mrf.mxu0
        %v769 = vadd.f32 0.0, %v768
        %v770 = vpop.f32.mrf.mxu0
        %771 = vmatprep.mubr.bf16.mxu0 0
        %772 = vmatmul.mubr.bf16.gmra.mxu0 %v653
        %v773 = vpop.f32.mrf.mxu0
        %v774 = vadd.f32 0.0, %v773
        %v775 = vpop.f32.mrf.mxu0
        %v776 = vpop.f32.mrf.mxu0
        %v777 = vadd.f32 0.0, %v776
        %v778 = vpop.f32.mrf.mxu0
        %779 = vmatprep.mubr.bf16.mxu0 0
        %780 = vmatmul.mubr.bf16.gmra.mxu0 %v656
        %v781 = vpop.f32.mrf.mxu0
        %v782 = vadd.f32 0.0, %v781
        %v783 = vpop.f32.mrf.mxu0
        %v784 = vpop.f32.mrf.mxu0
        %v785 = vadd.f32 0.0, %v784
        %v786 = vpop.f32.mrf.mxu0
        %787 = vmatprep.mubr.bf16.mxu0 0
        %788 = vmatmul.mubr.bf16.gmra.mxu0 %v659
        %v789 = vpop.f32.mrf.mxu0
        %v790 = vadd.f32 0.0, %v789
        %v791 = vpop.f32.mrf.mxu0
        %v792 = vpop.f32.mrf.mxu0
        %v793 = vadd.f32 0.0, %v792
        %v794 = vpop.f32.mrf.mxu0
        %795 = vmatprep.mubr.bf16.mxu0 0
        %796 = vmatmul.mubr.bf16.gmra.mxu0 %v662
        %v797 = vpop.f32.mrf.mxu0
        %v798 = vadd.f32 0.0, %v797
        %v799 = vpop.f32.mrf.mxu0
        %v800 = vpop.f32.mrf.mxu0
        %v801 = vadd.f32 0.0, %v800
        %v802 = vpop.f32.mrf.mxu0
        %803 = vmatprep.mubr.bf16.mxu0 0
        %804 = vmatmul.mubr.bf16.gmra.mxu0 %v665
        %v805 = vpop.f32.mrf.mxu0
        %v806 = vadd.f32 0.0, %v805
        %v807 = vpop.f32.mrf.mxu0
        %v808 = vpop.f32.mrf.mxu0
        %v809 = vadd.f32 0.0, %v808
        %v810 = vpop.f32.mrf.mxu0
        %811 = vmatprep.mubr.bf16.mxu0 0
        %812 = vmatmul.mubr.bf16.gmra.mxu0 %v668
        %v813 = vpop.f32.mrf.mxu0
        %v814 = vadd.f32 0.0, %v813
        %v815 = vpop.f32.mrf.mxu0
        %v816 = vpop.f32.mrf.mxu0
        %v817 = vadd.f32 0.0, %v816
        %v818 = vpop.f32.mrf.mxu0
        %819 = vmatprep.mubr.bf16.mxu0 0
        %820 = vmatmul.mubr.bf16.gmra.mxu0 %v671
        %v821 = vpop.f32.mrf.mxu0
        %v822 = vadd.f32 0.0, %v821
        %v823 = vpop.f32.mrf.mxu0
        %v824 = vpop.f32.mrf.mxu0
        %v825 = vadd.f32 0.0, %v824
        %v826 = vpop.f32.mrf.mxu0
        %827 = vmatprep.mubr.bf16.mxu0 0
        %828 = vmatmul.mubr.bf16.gmra.mxu0 %v674
        %v829 = vpop.f32.mrf.mxu0
        %v830 = vadd.f32 0.0, %v829
        %v831 = vpop.f32.mrf.mxu0
        %v832 = vpop.f32.mrf.mxu0
        %v833 = vadd.f32 0.0, %v832
        %v834 = vpop.f32.mrf.mxu0
        %835 = vmatprep.mubr.bf16.mxu0 0
        %836 = vmatmul.mubr.bf16.gmra.mxu0 %v677
        %v837 = vpop.f32.mrf.mxu0
        %v838 = vadd.f32 0.0, %v837
        %v839 = vpop.f32.mrf.mxu0
        %v840 = vpop.f32.mrf.mxu0
        %v841 = vadd.f32 0.0, %v840
        %v842 = vpop.f32.mrf.mxu0
        %843 = vdwg.mxu0
        %v844 = vpack.c.bf16 %v721, %v718
        %v845 = vpack.c.bf16 %v729, %v726
        %v846 = vpack.c.bf16 %v737, %v734
        %v847 = vpack.c.bf16 %v745, %v742
        %v848 = vpack.c.bf16 %v753, %v750
        %v849 = vpack.c.bf16 %v761, %v758
        %v850 = vpack.c.bf16 %v769, %v766
        %v851 = vpack.c.bf16 %v777, %v774
        %v852 = vpack.c.bf16 %v785, %v782
        %v853 = vpack.c.bf16 %v793, %v790
        %v854 = vpack.c.bf16 %v801, %v798
        %v855 = vpack.c.bf16 %v809, %v806
        %v856 = vpack.c.bf16 %v817, %v814
        %v857 = vpack.c.bf16 %v825, %v822
        %v858 = vpack.c.bf16 %v833, %v830
        %v859 = vpack.c.bf16 %v841, %v838
        %860 = vset.pattern.permute.xlu0 1
        %861 = vperm.xlu0 %860, %v387
        %v862 = vpop.permute.xlu0 %861
        %863 = vset.pattern.permute.xlu0 1
        %864 = vperm.xlu0 %863, %v388
        %v865 = vpop.permute.xlu0 %864
        %866 = vset.pattern.permute.xlu0 1
        %867 = vperm.xlu0 %866, %v389
        %v868 = vpop.permute.xlu0 %867
        %869 = vset.pattern.permute.xlu0 1
        %870 = vperm.xlu0 %869, %v390
        %v871 = vpop.permute.xlu0 %870
        %872 = vset.pattern.permute.xlu0 1
        %873 = vperm.xlu0 %872, %v391
        %v874 = vpop.permute.xlu0 %873
        %875 = vset.pattern.permute.xlu0 1
        %876 = vperm.xlu0 %875, %v392
        %v877 = vpop.permute.xlu0 %876
        %878 = vset.pattern.permute.xlu0 1
        %879 = vperm.xlu0 %878, %v393
        %v880 = vpop.permute.xlu0 %879
        %881 = vset.pattern.permute.xlu0 1
        %882 = vperm.xlu0 %881, %v394
        %v883 = vpop.permute.xlu0 %882
        %884 = vset.pattern.permute.xlu0 1
        %885 = vperm.xlu0 %884, %v395
        %v886 = vpop.permute.xlu0 %885
        %887 = vset.pattern.permute.xlu0 1
        %888 = vperm.xlu0 %887, %v396
        %v889 = vpop.permute.xlu0 %888
        %890 = vset.pattern.permute.xlu0 1
        %891 = vperm.xlu0 %890, %v397
        %v892 = vpop.permute.xlu0 %891
        %893 = vset.pattern.permute.xlu0 1
        %894 = vperm.xlu0 %893, %v398
        %v895 = vpop.permute.xlu0 %894
        %896 = vset.pattern.permute.xlu0 1
        %897 = vperm.xlu0 %896, %v399
        %v898 = vpop.permute.xlu0 %897
        %899 = vset.pattern.permute.xlu0 1
        %900 = vperm.xlu0 %899, %v400
        %v901 = vpop.permute.xlu0 %900
        %902 = vset.pattern.permute.xlu0 1
        %903 = vperm.xlu0 %902, %v401
        %v904 = vpop.permute.xlu0 %903
        %905 = vset.pattern.permute.xlu0 1
        %906 = vperm.xlu0 %905, %v402
        %v907 = vpop.permute.xlu0 %906
        %908 = vset.pattern.permute.xlu0 1
        %909 = vperm.xlu0 %908, %v403
        %v910 = vpop.permute.xlu0 %909
        %911 = vset.pattern.permute.xlu0 1
        %912 = vperm.xlu0 %911, %v404
        %v913 = vpop.permute.xlu0 %912
        %914 = vset.pattern.permute.xlu0 1
        %915 = vperm.xlu0 %914, %v405
        %v916 = vpop.permute.xlu0 %915
        %917 = vset.pattern.permute.xlu0 1
        %918 = vperm.xlu0 %917, %v406
        %v919 = vpop.permute.xlu0 %918
        %920 = vset.pattern.permute.xlu0 1
        %921 = vperm.xlu0 %920, %v407
        %v922 = vpop.permute.xlu0 %921
        %923 = vset.pattern.permute.xlu0 1
        %924 = vperm.xlu0 %923, %v408
        %v925 = vpop.permute.xlu0 %924
        %926 = vset.pattern.permute.xlu0 1
        %927 = vperm.xlu0 %926, %v409
        %v928 = vpop.permute.xlu0 %927
        %929 = vset.pattern.permute.xlu0 1
        %930 = vperm.xlu0 %929, %v410
        %v931 = vpop.permute.xlu0 %930
        %932 = vset.pattern.permute.xlu0 1
        %933 = vperm.xlu0 %932, %v411
        %v934 = vpop.permute.xlu0 %933
        %935 = vset.pattern.permute.xlu0 1
        %936 = vperm.xlu0 %935, %v412
        %v937 = vpop.permute.xlu0 %936
        %938 = vset.pattern.permute.xlu0 1
        %939 = vperm.xlu0 %938, %v413
        %v940 = vpop.permute.xlu0 %939
        %941 = vset.pattern.permute.xlu0 1
        %942 = vperm.xlu0 %941, %v414
        %v943 = vpop.permute.xlu0 %942
        %944 = vset.pattern.permute.xlu0 1
        %945 = vperm.xlu0 %944, %v415
        %v946 = vpop.permute.xlu0 %945
        %947 = vset.pattern.permute.xlu0 1
        %948 = vperm.xlu0 %947, %v416
        %v949 = vpop.permute.xlu0 %948
        %950 = vset.pattern.permute.xlu0 1
        %951 = vperm.xlu0 %950, %v417
        %v952 = vpop.permute.xlu0 %951
        %953 = vset.pattern.permute.xlu0 1
        %954 = vperm.xlu0 %953, %v418
        %v955 = vpop.permute.xlu0 %954
        %vm956 = vcmp.eq.s32.totalorder %v420, %v862
        %vm957 = vcmp.eq.s32.totalorder %v420, %v865
        %vm958 = vcmp.eq.s32.totalorder %v420, %v868
        %vm959 = vcmp.eq.s32.totalorder %v420, %v871
        %vm960 = vcmp.eq.s32.totalorder %v420, %v874
        %vm961 = vcmp.eq.s32.totalorder %v420, %v877
        %vm962 = vcmp.eq.s32.totalorder %v420, %v880
        %vm963 = vcmp.eq.s32.totalorder %v420, %v883
        %vm964 = vcmp.eq.s32.totalorder %v420, %v886
        %vm965 = vcmp.eq.s32.totalorder %v420, %v889
        %vm966 = vcmp.eq.s32.totalorder %v420, %v892
        %vm967 = vcmp.eq.s32.totalorder %v420, %v895
        %vm968 = vcmp.eq.s32.totalorder %v420, %v898
        %vm969 = vcmp.eq.s32.totalorder %v420, %v901
        %vm970 = vcmp.eq.s32.totalorder %v420, %v904
        %vm971 = vcmp.eq.s32.totalorder %v420, %v907
        %vm972 = vcmp.eq.s32.totalorder %v420, %v910
        %vm973 = vcmp.eq.s32.totalorder %v420, %v913
        %vm974 = vcmp.eq.s32.totalorder %v420, %v916
        %vm975 = vcmp.eq.s32.totalorder %v420, %v919
        %vm976 = vcmp.eq.s32.totalorder %v420, %v922
        %vm977 = vcmp.eq.s32.totalorder %v420, %v925
        %vm978 = vcmp.eq.s32.totalorder %v420, %v928
        %vm979 = vcmp.eq.s32.totalorder %v420, %v931
        %vm980 = vcmp.eq.s32.totalorder %v420, %v934
        %vm981 = vcmp.eq.s32.totalorder %v420, %v937
        %vm982 = vcmp.eq.s32.totalorder %v420, %v940
        %vm983 = vcmp.eq.s32.totalorder %v420, %v943
        %vm984 = vcmp.eq.s32.totalorder %v420, %v946
        %vm985 = vcmp.eq.s32.totalorder %v420, %v949
        %vm986 = vcmp.eq.s32.totalorder %v420, %v952
        %vm987 = vcmp.eq.s32.totalorder %v420, %v955
        %v988 = vsel %vm956, 1, 0
        %v989 = vsel %vm957, 1, 0
        %v990 = vsel %vm958, 1, 0
        %v991 = vsel %vm959, 1, 0
        %v992 = vsel %vm960, 1, 0
        %v993 = vsel %vm961, 1, 0
        %v994 = vsel %vm962, 1, 0
        %v995 = vsel %vm963, 1, 0
        %v996 = vsel %vm964, 1, 0
        %v997 = vsel %vm965, 1, 0
        %v998 = vsel %vm966, 1, 0
        %v999 = vsel %vm967, 1, 0
        %v1000 = vsel %vm968, 1, 0
        %v1001 = vsel %vm969, 1, 0
        %v1002 = vsel %vm970, 1, 0
        %v1003 = vsel %vm971, 1, 0
        %v1004 = vsel %vm972, 1, 0
        %v1005 = vsel %vm973, 1, 0
        %v1006 = vsel %vm974, 1, 0
        %v1007 = vsel %vm975, 1, 0
        %v1008 = vsel %vm976, 1, 0
        %v1009 = vsel %vm977, 1, 0
        %v1010 = vsel %vm978, 1, 0
        %v1011 = vsel %vm979, 1, 0
        %v1012 = vsel %vm980, 1, 0
        %v1013 = vsel %vm981, 1, 0
        %v1014 = vsel %vm982, 1, 0
        %v1015 = vsel %vm983, 1, 0
        %v1016 = vsel %vm984, 1, 0
        %v1017 = vsel %vm985, 1, 0
        %v1018 = vsel %vm986, 1, 0
        %v1019 = vsel %vm987, 1, 0
        %v1020 = vcvt.s32.f32 %v988
        %v1021 = vcvt.s32.f32 %v989
        %v1022 = vcvt.s32.f32 %v990
        %v1023 = vcvt.s32.f32 %v991
        %v1024 = vcvt.s32.f32 %v992
        %v1025 = vcvt.s32.f32 %v993
        %v1026 = vcvt.s32.f32 %v994
        %v1027 = vcvt.s32.f32 %v995
        %v1028 = vcvt.s32.f32 %v996
        %v1029 = vcvt.s32.f32 %v997
        %v1030 = vcvt.s32.f32 %v998
        %v1031 = vcvt.s32.f32 %v999
        %v1032 = vcvt.s32.f32 %v1000
        %v1033 = vcvt.s32.f32 %v1001
        %v1034 = vcvt.s32.f32 %v1002
        %v1035 = vcvt.s32.f32 %v1003
        %v1036 = vcvt.s32.f32 %v1004
        %v1037 = vcvt.s32.f32 %v1005
        %v1038 = vcvt.s32.f32 %v1006
        %v1039 = vcvt.s32.f32 %v1007
        %v1040 = vcvt.s32.f32 %v1008
        %v1041 = vcvt.s32.f32 %v1009
        %v1042 = vcvt.s32.f32 %v1010
        %v1043 = vcvt.s32.f32 %v1011
        %v1044 = vcvt.s32.f32 %v1012
        %v1045 = vcvt.s32.f32 %v1013
        %v1046 = vcvt.s32.f32 %v1014
        %v1047 = vcvt.s32.f32 %v1015
        %v1048 = vcvt.s32.f32 %v1016
        %v1049 = vcvt.s32.f32 %v1017
        %v1050 = vcvt.s32.f32 %v1018
        %v1051 = vcvt.s32.f32 %v1019
        %v1052 = vpack.c.bf16 %v1021, %v1020
        %v1053 = vpack.c.bf16 %v1023, %v1022
        %v1054 = vpack.c.bf16 %v1025, %v1024
        %v1055 = vpack.c.bf16 %v1027, %v1026
        %v1056 = vpack.c.bf16 %v1029, %v1028
        %v1057 = vpack.c.bf16 %v1031, %v1030
        %v1058 = vpack.c.bf16 %v1033, %v1032
        %v1059 = vpack.c.bf16 %v1035, %v1034
        %v1060 = vpack.c.bf16 %v1037, %v1036
        %v1061 = vpack.c.bf16 %v1039, %v1038
        %v1062 = vpack.c.bf16 %v1041, %v1040
        %v1063 = vpack.c.bf16 %v1043, %v1042
        %v1064 = vpack.c.bf16 %v1045, %v1044
        %v1065 = vpack.c.bf16 %v1047, %v1046
        %v1066 = vpack.c.bf16 %v1049, %v1048
        %v1067 = vpack.c.bf16 %v1051, %v1050
        %v1068 = vld [vmem:[%s2] sm:$0xf]
        %v1069 = vld [vmem:[%s2 + $0x4] sm:$0xf]
        %v1072 = vunpack.c.l.b16 %v1068
        %v1073 = vunpack.c.l.b16 %v1069
        %v1074 = vpack.c.b16 %v1073, %v1072
        %vm1076 = vcmask 130048
        %v1078 = vsel %vm1076, %v1052, 0
        %v1081 = vsel %vm1076, %v1053, 0
        %v1084 = vsel %vm1076, %v1054, 0
        %v1087 = vsel %vm1076, %v1055, 0
        %v1090 = vsel %vm1076, %v1056, 0
        %v1093 = vsel %vm1076, %v1057, 0
        %v1096 = vsel %vm1076, %v1058, 0
        %v1099 = vsel %vm1076, %v1059, 0
        %v1102 = vsel %vm1076, %v1060, 0
        %v1105 = vsel %vm1076, %v1061, 0
        %v1108 = vsel %vm1076, %v1062, 0
        %v1111 = vsel %vm1076, %v1063, 0
        %v1114 = vsel %vm1076, %v1064, 0
        %v1117 = vsel %vm1076, %v1065, 0
        %v1120 = vsel %vm1076, %v1066, 0
        %v1123 = vsel %vm1076, %v1067, 0
        %1125 = vmatprep.subr.bf16.mxu0 0
        %1126 = vmatpush1.bf16.msra.mxu0 0
        %1127 = vmatprep.subr.bf16.mxu0 0
        %1128 = vmatpush1.bf16.msra.mxu0 0
        %1129 = vmatprep.subr.bf16.mxu0 0
        %1130 = vmatpush1.bf16.msra.mxu0 0
        %1131 = vmatprep.subr.bf16.mxu0 0
        %1132 = vmatpush1.bf16.msra.mxu0 0
        %1133 = vmatprep.subr.bf16.mxu0 0
        %1134 = vmatpush1.bf16.msra.mxu0 0
        %1135 = vmatprep.subr.bf16.mxu0 0
        %1136 = vmatpush1.bf16.msra.mxu0 0
        %1137 = vmatprep.subr.bf16.mxu0 0
        %1138 = vmatpush1.bf16.msra.mxu0 0
        %1139 = vmatprep.subr.bf16.mxu0 0
        %1140 = vmatpush1.bf16.msra.mxu0 %v1074
        %1141 = vmatprep.subr.bf16.mxu0 0
        %1142 = vmatpush2.bf16.msra.mxu0 0
        %1143 = vmatprep.subr.bf16.mxu0 0
        %1144 = vmatpush2.bf16.msra.mxu0 0
        %1145 = vmatprep.subr.bf16.mxu0 0
        %1146 = vmatpush2.bf16.msra.mxu0 0
        %1147 = vmatprep.subr.bf16.mxu0 0
        %1148 = vmatpush2.bf16.msra.mxu0 0
        %1149 = vmatprep.subr.bf16.mxu0 0
        %1150 = vmatpush2.bf16.msra.mxu0 0
        %1151 = vmatprep.subr.bf16.mxu0 0
        %1152 = vmatpush2.bf16.msra.mxu0 0
        %1153 = vmatprep.subr.bf16.mxu0 0
        %1154 = vmatpush2.bf16.msra.mxu0 0
        %1155 = vmatprep.subr.bf16.mxu0 0
        %1156 = vmatpush2.bf16.msra.mxu0 0
        %1157 = vmatprep.mubr.bf16.mxu0 0
        %1158 = vmatmul.mubr.bf16.gmra.mxu0 %v1078
        %v1159 = vpop.f32.mrf.mxu0
        %v1160 = vadd.f32 0.0, %v1159
        %v1161 = vpop.f32.mrf.mxu0
        %v1162 = vpop.f32.mrf.mxu0
        %v1163 = vadd.f32 0.0, %v1162
        %v1164 = vpop.f32.mrf.mxu0
        %1165 = vmatprep.mubr.bf16.mxu0 0
        %1166 = vmatmul.mubr.bf16.gmra.mxu0 %v1081
        %v1167 = vpop.f32.mrf.mxu0
        %v1168 = vadd.f32 0.0, %v1167
        %v1169 = vpop.f32.mrf.mxu0
        %v1170 = vpop.f32.mrf.mxu0
        %v1171 = vadd.f32 0.0, %v1170
        %v1172 = vpop.f32.mrf.mxu0
        %1173 = vmatprep.mubr.bf16.mxu0 0
        %1174 = vmatmul.mubr.bf16.gmra.mxu0 %v1084
        %v1175 = vpop.f32.mrf.mxu0
        %v1176 = vadd.f32 0.0, %v1175
        %v1177 = vpop.f32.mrf.mxu0
        %v1178 = vpop.f32.mrf.mxu0
        %v1179 = vadd.f32 0.0, %v1178
        %v1180 = vpop.f32.mrf.mxu0
        %1181 = vmatprep.mubr.bf16.mxu0 0
        %1182 = vmatmul.mubr.bf16.gmra.mxu0 %v1087
        %v1183 = vpop.f32.mrf.mxu0
        %v1184 = vadd.f32 0.0, %v1183
        %v1185 = vpop.f32.mrf.mxu0
        %v1186 = vpop.f32.mrf.mxu0
        %v1187 = vadd.f32 0.0, %v1186
        %v1188 = vpop.f32.mrf.mxu0
        %1189 = vmatprep.mubr.bf16.mxu0 0
        %1190 = vmatmul.mubr.bf16.gmra.mxu0 %v1090
        %v1191 = vpop.f32.mrf.mxu0
        %v1192 = vadd.f32 0.0, %v1191
        %v1193 = vpop.f32.mrf.mxu0
        %v1194 = vpop.f32.mrf.mxu0
        %v1195 = vadd.f32 0.0, %v1194
        %v1196 = vpop.f32.mrf.mxu0
        %1197 = vmatprep.mubr.bf16.mxu0 0
        %1198 = vmatmul.mubr.bf16.gmra.mxu0 %v1093
        %v1199 = vpop.f32.mrf.mxu0
        %v1200 = vadd.f32 0.0, %v1199
        %v1201 = vpop.f32.mrf.mxu0
        %v1202 = vpop.f32.mrf.mxu0
        %v1203 = vadd.f32 0.0, %v1202
        %v1204 = vpop.f32.mrf.mxu0
        %1205 = vmatprep.mubr.bf16.mxu0 0
        %1206 = vmatmul.mubr.bf16.gmra.mxu0 %v1096
        %v1207 = vpop.f32.mrf.mxu0
        %v1208 = vadd.f32 0.0, %v1207
        %v1209 = vpop.f32.mrf.mxu0
        %v1210 = vpop.f32.mrf.mxu0
        %v1211 = vadd.f32 0.0, %v1210
        %v1212 = vpop.f32.mrf.mxu0
        %1213 = vmatprep.mubr.bf16.mxu0 0
        %1214 = vmatmul.mubr.bf16.gmra.mxu0 %v1099
        %v1215 = vpop.f32.mrf.mxu0
        %v1216 = vadd.f32 0.0, %v1215
        %v1217 = vpop.f32.mrf.mxu0
        %v1218 = vpop.f32.mrf.mxu0
        %v1219 = vadd.f32 0.0, %v1218
        %v1220 = vpop.f32.mrf.mxu0
        %1221 = vmatprep.mubr.bf16.mxu0 0
        %1222 = vmatmul.mubr.bf16.gmra.mxu0 %v1102
        %v1223 = vpop.f32.mrf.mxu0
        %v1224 = vadd.f32 0.0, %v1223
        %v1225 = vpop.f32.mrf.mxu0
        %v1226 = vpop.f32.mrf.mxu0
        %v1227 = vadd.f32 0.0, %v1226
        %v1228 = vpop.f32.mrf.mxu0
        %1229 = vmatprep.mubr.bf16.mxu0 0
        %1230 = vmatmul.mubr.bf16.gmra.mxu0 %v1105
        %v1231 = vpop.f32.mrf.mxu0
        %v1232 = vadd.f32 0.0, %v1231
        %v1233 = vpop.f32.mrf.mxu0
        %v1234 = vpop.f32.mrf.mxu0
        %v1235 = vadd.f32 0.0, %v1234
        %v1236 = vpop.f32.mrf.mxu0
        %1237 = vmatprep.mubr.bf16.mxu0 0
        %1238 = vmatmul.mubr.bf16.gmra.mxu0 %v1108
        %v1239 = vpop.f32.mrf.mxu0
        %v1240 = vadd.f32 0.0, %v1239
        %v1241 = vpop.f32.mrf.mxu0
        %v1242 = vpop.f32.mrf.mxu0
        %v1243 = vadd.f32 0.0, %v1242
        %v1244 = vpop.f32.mrf.mxu0
        %1245 = vmatprep.mubr.bf16.mxu0 0
        %1246 = vmatmul.mubr.bf16.gmra.mxu0 %v1111
        %v1247 = vpop.f32.mrf.mxu0
        %v1248 = vadd.f32 0.0, %v1247
        %v1249 = vpop.f32.mrf.mxu0
        %v1250 = vpop.f32.mrf.mxu0
        %v1251 = vadd.f32 0.0, %v1250
        %v1252 = vpop.f32.mrf.mxu0
        %1253 = vmatprep.mubr.bf16.mxu0 0
        %1254 = vmatmul.mubr.bf16.gmra.mxu0 %v1114
        %v1255 = vpop.f32.mrf.mxu0
        %v1256 = vadd.f32 0.0, %v1255
        %v1257 = vpop.f32.mrf.mxu0
        %v1258 = vpop.f32.mrf.mxu0
        %v1259 = vadd.f32 0.0, %v1258
        %v1260 = vpop.f32.mrf.mxu0
        %1261 = vmatprep.mubr.bf16.mxu0 0
        %1262 = vmatmul.mubr.bf16.gmra.mxu0 %v1117
        %v1263 = vpop.f32.mrf.mxu0
        %v1264 = vadd.f32 0.0, %v1263
        %v1265 = vpop.f32.mrf.mxu0
        %v1266 = vpop.f32.mrf.mxu0
        %v1267 = vadd.f32 0.0, %v1266
        %v1268 = vpop.f32.mrf.mxu0
        %1269 = vmatprep.mubr.bf16.mxu0 0
        %1270 = vmatmul.mubr.bf16.gmra.mxu0 %v1120
        %v1271 = vpop.f32.mrf.mxu0
        %v1272 = vadd.f32 0.0, %v1271
        %v1273 = vpop.f32.mrf.mxu0
        %v1274 = vpop.f32.mrf.mxu0
        %v1275 = vadd.f32 0.0, %v1274
        %v1276 = vpop.f32.mrf.mxu0
        %1277 = vmatprep.mubr.bf16.mxu0 0
        %1278 = vmatmul.mubr.bf16.gmra.mxu0 %v1123
        %v1279 = vpop.f32.mrf.mxu0
        %v1280 = vadd.f32 0.0, %v1279
        %v1281 = vpop.f32.mrf.mxu0
        %v1282 = vpop.f32.mrf.mxu0
        %v1283 = vadd.f32 0.0, %v1282
        %v1284 = vpop.f32.mrf.mxu0
        %1285 = vdwg.mxu0
        %v1286 = vpack.c.bf16 %v1163, %v1160
        %v1287 = vpack.c.bf16 %v1171, %v1168
        %v1288 = vpack.c.bf16 %v1179, %v1176
        %v1289 = vpack.c.bf16 %v1187, %v1184
        %v1290 = vpack.c.bf16 %v1195, %v1192
        %v1291 = vpack.c.bf16 %v1203, %v1200
        %v1292 = vpack.c.bf16 %v1211, %v1208
        %v1293 = vpack.c.bf16 %v1219, %v1216
        %v1294 = vpack.c.bf16 %v1227, %v1224
        %v1295 = vpack.c.bf16 %v1235, %v1232
        %v1296 = vpack.c.bf16 %v1243, %v1240
        %v1297 = vpack.c.bf16 %v1251, %v1248
        %v1298 = vpack.c.bf16 %v1259, %v1256
        %v1299 = vpack.c.bf16 %v1267, %v1264
        %v1300 = vpack.c.bf16 %v1275, %v1272
        %v1301 = vpack.c.bf16 %v1283, %v1280
        %1302 = vset.pattern.permute.xlu0 0
        %1303 = vperm.xlu0 %1302, %v387
        %v1304 = vpop.permute.xlu0 %1303
        %1305 = vset.pattern.permute.xlu0 0
        %1306 = vperm.xlu0 %1305, %v388
        %v1307 = vpop.permute.xlu0 %1306
        %1308 = vset.pattern.permute.xlu0 0
        %1309 = vperm.xlu0 %1308, %v389
        %v1310 = vpop.permute.xlu0 %1309
        %1311 = vset.pattern.permute.xlu0 0
        %1312 = vperm.xlu0 %1311, %v390
        %v1313 = vpop.permute.xlu0 %1312
        %1314 = vset.pattern.permute.xlu0 0
        %1315 = vperm.xlu0 %1314, %v391
        %v1316 = vpop.permute.xlu0 %1315
        %1317 = vset.pattern.permute.xlu0 0
        %1318 = vperm.xlu0 %1317, %v392
        %v1319 = vpop.permute.xlu0 %1318
        %1320 = vset.pattern.permute.xlu0 0
        %1321 = vperm.xlu0 %1320, %v393
        %v1322 = vpop.permute.xlu0 %1321
        %1323 = vset.pattern.permute.xlu0 0
        %1324 = vperm.xlu0 %1323, %v394
        %v1325 = vpop.permute.xlu0 %1324
        %1326 = vset.pattern.permute.xlu0 0
        %1327 = vperm.xlu0 %1326, %v395
        %v1328 = vpop.permute.xlu0 %1327
        %1329 = vset.pattern.permute.xlu0 0
        %1330 = vperm.xlu0 %1329, %v396
        %v1331 = vpop.permute.xlu0 %1330
        %1332 = vset.pattern.permute.xlu0 0
        %1333 = vperm.xlu0 %1332, %v397
        %v1334 = vpop.permute.xlu0 %1333
        %1335 = vset.pattern.permute.xlu0 0
        %1336 = vperm.xlu0 %1335, %v398
        %v1337 = vpop.permute.xlu0 %1336
        %1338 = vset.pattern.permute.xlu0 0
        %1339 = vperm.xlu0 %1338, %v399
        %v1340 = vpop.permute.xlu0 %1339
        %1341 = vset.pattern.permute.xlu0 0
        %1342 = vperm.xlu0 %1341, %v400
        %v1343 = vpop.permute.xlu0 %1342
        %1344 = vset.pattern.permute.xlu0 0
        %1345 = vperm.xlu0 %1344, %v401
        %v1346 = vpop.permute.xlu0 %1345
        %1347 = vset.pattern.permute.xlu0 0
        %1348 = vperm.xlu0 %1347, %v402
        %v1349 = vpop.permute.xlu0 %1348
        %1350 = vset.pattern.permute.xlu0 0
        %1351 = vperm.xlu0 %1350, %v403
        %v1352 = vpop.permute.xlu0 %1351
        %1353 = vset.pattern.permute.xlu0 0
        %1354 = vperm.xlu0 %1353, %v404
        %v1355 = vpop.permute.xlu0 %1354
        %1356 = vset.pattern.permute.xlu0 0
        %1357 = vperm.xlu0 %1356, %v405
        %v1358 = vpop.permute.xlu0 %1357
        %1359 = vset.pattern.permute.xlu0 0
        %1360 = vperm.xlu0 %1359, %v406
        %v1361 = vpop.permute.xlu0 %1360
        %1362 = vset.pattern.permute.xlu0 0
        %1363 = vperm.xlu0 %1362, %v407
        %v1364 = vpop.permute.xlu0 %1363
        %1365 = vset.pattern.permute.xlu0 0
        %1366 = vperm.xlu0 %1365, %v408
        %v1367 = vpop.permute.xlu0 %1366
        %1368 = vset.pattern.permute.xlu0 0
        %1369 = vperm.xlu0 %1368, %v409
        %v1370 = vpop.permute.xlu0 %1369
        %1371 = vset.pattern.permute.xlu0 0
        %1372 = vperm.xlu0 %1371, %v410
        %v1373 = vpop.permute.xlu0 %1372
        %1374 = vset.pattern.permute.xlu0 0
        %1375 = vperm.xlu0 %1374, %v411
        %v1376 = vpop.permute.xlu0 %1375
        %1377 = vset.pattern.permute.xlu0 0
        %1378 = vperm.xlu0 %1377, %v412
        %v1379 = vpop.permute.xlu0 %1378
        %1380 = vset.pattern.permute.xlu0 0
        %1381 = vperm.xlu0 %1380, %v413
        %v1382 = vpop.permute.xlu0 %1381
        %1383 = vset.pattern.permute.xlu0 0
        %1384 = vperm.xlu0 %1383, %v414
        %v1385 = vpop.permute.xlu0 %1384
        %1386 = vset.pattern.permute.xlu0 0
        %1387 = vperm.xlu0 %1386, %v415
        %v1388 = vpop.permute.xlu0 %1387
        %1389 = vset.pattern.permute.xlu0 0
        %1390 = vperm.xlu0 %1389, %v416
        %v1391 = vpop.permute.xlu0 %1390
        %1392 = vset.pattern.permute.xlu0 0
        %1393 = vperm.xlu0 %1392, %v417
        %v1394 = vpop.permute.xlu0 %1393
        %1395 = vset.pattern.permute.xlu0 0
        %1396 = vperm.xlu0 %1395, %v418
        %v1397 = vpop.permute.xlu0 %1396
        %vm1398 = vcmp.eq.s32.totalorder %v420, %v1304
        %vm1399 = vcmp.eq.s32.totalorder %v420, %v1307
        %vm1400 = vcmp.eq.s32.totalorder %v420, %v1310
        %vm1401 = vcmp.eq.s32.totalorder %v420, %v1313
        %vm1402 = vcmp.eq.s32.totalorder %v420, %v1316
        %vm1403 = vcmp.eq.s32.totalorder %v420, %v1319
        %vm1404 = vcmp.eq.s32.totalorder %v420, %v1322
        %vm1405 = vcmp.eq.s32.totalorder %v420, %v1325
        %vm1406 = vcmp.eq.s32.totalorder %v420, %v1328
        %vm1407 = vcmp.eq.s32.totalorder %v420, %v1331
        %vm1408 = vcmp.eq.s32.totalorder %v420, %v1334
        %vm1409 = vcmp.eq.s32.totalorder %v420, %v1337
        %vm1410 = vcmp.eq.s32.totalorder %v420, %v1340
        %vm1411 = vcmp.eq.s32.totalorder %v420, %v1343
        %vm1412 = vcmp.eq.s32.totalorder %v420, %v1346
        %vm1413 = vcmp.eq.s32.totalorder %v420, %v1349
        %vm1414 = vcmp.eq.s32.totalorder %v420, %v1352
        %vm1415 = vcmp.eq.s32.totalorder %v420, %v1355
        %vm1416 = vcmp.eq.s32.totalorder %v420, %v1358
        %vm1417 = vcmp.eq.s32.totalorder %v420, %v1361
        %vm1418 = vcmp.eq.s32.totalorder %v420, %v1364
        %vm1419 = vcmp.eq.s32.totalorder %v420, %v1367
        %vm1420 = vcmp.eq.s32.totalorder %v420, %v1370
        %vm1421 = vcmp.eq.s32.totalorder %v420, %v1373
        %vm1422 = vcmp.eq.s32.totalorder %v420, %v1376
        %vm1423 = vcmp.eq.s32.totalorder %v420, %v1379
        %vm1424 = vcmp.eq.s32.totalorder %v420, %v1382
        %vm1425 = vcmp.eq.s32.totalorder %v420, %v1385
        %vm1426 = vcmp.eq.s32.totalorder %v420, %v1388
        %vm1427 = vcmp.eq.s32.totalorder %v420, %v1391
        %vm1428 = vcmp.eq.s32.totalorder %v420, %v1394
        %vm1429 = vcmp.eq.s32.totalorder %v420, %v1397
        %v1430 = vsel %vm1398, 1, 0
        %v1431 = vsel %vm1399, 1, 0
        %v1432 = vsel %vm1400, 1, 0
        %v1433 = vsel %vm1401, 1, 0
        %v1434 = vsel %vm1402, 1, 0
        %v1435 = vsel %vm1403, 1, 0
        %v1436 = vsel %vm1404, 1, 0
        %v1437 = vsel %vm1405, 1, 0
        %v1438 = vsel %vm1406, 1, 0
        %v1439 = vsel %vm1407, 1, 0
        %v1440 = vsel %vm1408, 1, 0
        %v1441 = vsel %vm1409, 1, 0
        %v1442 = vsel %vm1410, 1, 0
        %v1443 = vsel %vm1411, 1, 0
        %v1444 = vsel %vm1412, 1, 0
        %v1445 = vsel %vm1413, 1, 0
        %v1446 = vsel %vm1414, 1, 0
        %v1447 = vsel %vm1415, 1, 0
        %v1448 = vsel %vm1416, 1, 0
        %v1449 = vsel %vm1417, 1, 0
        %v1450 = vsel %vm1418, 1, 0
        %v1451 = vsel %vm1419, 1, 0
        %v1452 = vsel %vm1420, 1, 0
        %v1453 = vsel %vm1421, 1, 0
        %v1454 = vsel %vm1422, 1, 0
        %v1455 = vsel %vm1423, 1, 0
        %v1456 = vsel %vm1424, 1, 0
        %v1457 = vsel %vm1425, 1, 0
        %v1458 = vsel %vm1426, 1, 0
        %v1459 = vsel %vm1427, 1, 0
        %v1460 = vsel %vm1428, 1, 0
        %v1461 = vsel %vm1429, 1, 0
        %v1462 = vcvt.s32.f32 %v1430
        %v1463 = vcvt.s32.f32 %v1431
        %v1464 = vcvt.s32.f32 %v1432
        %v1465 = vcvt.s32.f32 %v1433
        %v1466 = vcvt.s32.f32 %v1434
        %v1467 = vcvt.s32.f32 %v1435
        %v1468 = vcvt.s32.f32 %v1436
        %v1469 = vcvt.s32.f32 %v1437
        %v1470 = vcvt.s32.f32 %v1438
        %v1471 = vcvt.s32.f32 %v1439
        %v1472 = vcvt.s32.f32 %v1440
        %v1473 = vcvt.s32.f32 %v1441
        %v1474 = vcvt.s32.f32 %v1442
        %v1475 = vcvt.s32.f32 %v1443
        %v1476 = vcvt.s32.f32 %v1444
        %v1477 = vcvt.s32.f32 %v1445
        %v1478 = vcvt.s32.f32 %v1446
        %v1479 = vcvt.s32.f32 %v1447
        %v1480 = vcvt.s32.f32 %v1448
        %v1481 = vcvt.s32.f32 %v1449
        %v1482 = vcvt.s32.f32 %v1450
        %v1483 = vcvt.s32.f32 %v1451
        %v1484 = vcvt.s32.f32 %v1452
        %v1485 = vcvt.s32.f32 %v1453
        %v1486 = vcvt.s32.f32 %v1454
        %v1487 = vcvt.s32.f32 %v1455
        %v1488 = vcvt.s32.f32 %v1456
        %v1489 = vcvt.s32.f32 %v1457
        %v1490 = vcvt.s32.f32 %v1458
        %v1491 = vcvt.s32.f32 %v1459
        %v1492 = vcvt.s32.f32 %v1460
        %v1493 = vcvt.s32.f32 %v1461
        %v1494 = vpack.c.bf16 %v1463, %v1462
        %v1495 = vpack.c.bf16 %v1465, %v1464
        %v1496 = vpack.c.bf16 %v1467, %v1466
        %v1497 = vpack.c.bf16 %v1469, %v1468
        %v1498 = vpack.c.bf16 %v1471, %v1470
        %v1499 = vpack.c.bf16 %v1473, %v1472
        %v1500 = vpack.c.bf16 %v1475, %v1474
        %v1501 = vpack.c.bf16 %v1477, %v1476
        %v1502 = vpack.c.bf16 %v1479, %v1478
        %v1503 = vpack.c.bf16 %v1481, %v1480
        %v1504 = vpack.c.bf16 %v1483, %v1482
        %v1505 = vpack.c.bf16 %v1485, %v1484
        %v1506 = vpack.c.bf16 %v1487, %v1486
        %v1507 = vpack.c.bf16 %v1489, %v1488
        %v1508 = vpack.c.bf16 %v1491, %v1490
        %v1509 = vpack.c.bf16 %v1493, %v1492
        %v1510 = vld [vmem:[%s3] sm:$0xf]
        %v1512 = vsel %vm630, %v1494, 0
        %v1515 = vsel %vm630, %v1495, 0
        %v1518 = vsel %vm630, %v1496, 0
        %v1521 = vsel %vm630, %v1497, 0
        %v1524 = vsel %vm630, %v1498, 0
        %v1527 = vsel %vm630, %v1499, 0
        %v1530 = vsel %vm630, %v1500, 0
        %v1533 = vsel %vm630, %v1501, 0
        %v1536 = vsel %vm630, %v1502, 0
        %v1539 = vsel %vm630, %v1503, 0
        %v1542 = vsel %vm630, %v1504, 0
        %v1545 = vsel %vm630, %v1505, 0
        %v1548 = vsel %vm630, %v1506, 0
        %v1551 = vsel %vm630, %v1507, 0
        %v1554 = vsel %vm630, %v1508, 0
        %v1557 = vsel %vm630, %v1509, 0
        %v1560 = vsel %vm679, %v1510, 0
        %1562 = vmatprep.subr.bf16.mxu0 0
        %1563 = vmatpush1.bf16.msra.mxu0 0
        %1564 = vmatprep.subr.bf16.mxu0 0
        %1565 = vmatpush1.bf16.msra.mxu0 0
        %1566 = vmatprep.subr.bf16.mxu0 0
        %1567 = vmatpush1.bf16.msra.mxu0 0
        %1568 = vmatprep.subr.bf16.mxu0 0
        %1569 = vmatpush1.bf16.msra.mxu0 0
        %1570 = vmatprep.subr.bf16.mxu0 0
        %1571 = vmatpush1.bf16.msra.mxu0 0
        %1572 = vmatprep.subr.bf16.mxu0 0
        %1573 = vmatpush1.bf16.msra.mxu0 0
        %1574 = vmatprep.subr.bf16.mxu0 0
        %1575 = vmatpush1.bf16.msra.mxu0 0
        %1576 = vmatprep.subr.bf16.mxu0 0
        %1577 = vmatpush1.bf16.msra.mxu0 %v1560
        %1578 = vmatprep.subr.bf16.mxu0 0
        %1579 = vmatpush2.bf16.msra.mxu0 0
        %1580 = vmatprep.subr.bf16.mxu0 0
        %1581 = vmatpush2.bf16.msra.mxu0 0
        %1582 = vmatprep.subr.bf16.mxu0 0
        %1583 = vmatpush2.bf16.msra.mxu0 0
        %1584 = vmatprep.subr.bf16.mxu0 0
        %1585 = vmatpush2.bf16.msra.mxu0 0
        %1586 = vmatprep.subr.bf16.mxu0 0
        %1587 = vmatpush2.bf16.msra.mxu0 0
        %1588 = vmatprep.subr.bf16.mxu0 0
        %1589 = vmatpush2.bf16.msra.mxu0 0
        %1590 = vmatprep.subr.bf16.mxu0 0
        %1591 = vmatpush2.bf16.msra.mxu0 0
        %1592 = vmatprep.subr.bf16.mxu0 0
        %1593 = vmatpush2.bf16.msra.mxu0 0
        %1594 = vmatprep.mubr.bf16.mxu0 0
        %1595 = vmatmul.mubr.bf16.gmra.mxu0 %v1512
        %v1596 = vpop.f32.mrf.mxu0
        %v1597 = vadd.f32 0.0, %v1596
        %v1598 = vpop.f32.mrf.mxu0
        %v1599 = vpop.f32.mrf.mxu0
        %v1600 = vadd.f32 0.0, %v1599
        %v1601 = vpop.f32.mrf.mxu0
        %1602 = vmatprep.mubr.bf16.mxu0 0
        %1603 = vmatmul.mubr.bf16.gmra.mxu0 %v1515
        %v1604 = vpop.f32.mrf.mxu0
        %v1605 = vadd.f32 0.0, %v1604
        %v1606 = vpop.f32.mrf.mxu0
        %v1607 = vpop.f32.mrf.mxu0
        %v1608 = vadd.f32 0.0, %v1607
        %v1609 = vpop.f32.mrf.mxu0
        %1610 = vmatprep.mubr.bf16.mxu0 0
        %1611 = vmatmul.mubr.bf16.gmra.mxu0 %v1518
        %v1612 = vpop.f32.mrf.mxu0
        %v1613 = vadd.f32 0.0, %v1612
        %v1614 = vpop.f32.mrf.mxu0
        %v1615 = vpop.f32.mrf.mxu0
        %v1616 = vadd.f32 0.0, %v1615
        %v1617 = vpop.f32.mrf.mxu0
        %1618 = vmatprep.mubr.bf16.mxu0 0
        %1619 = vmatmul.mubr.bf16.gmra.mxu0 %v1521
        %v1620 = vpop.f32.mrf.mxu0
        %v1621 = vadd.f32 0.0, %v1620
        %v1622 = vpop.f32.mrf.mxu0
        %v1623 = vpop.f32.mrf.mxu0
        %v1624 = vadd.f32 0.0, %v1623
        %v1625 = vpop.f32.mrf.mxu0
        %1626 = vmatprep.mubr.bf16.mxu0 0
        %1627 = vmatmul.mubr.bf16.gmra.mxu0 %v1524
        %v1628 = vpop.f32.mrf.mxu0
        %v1629 = vadd.f32 0.0, %v1628
        %v1630 = vpop.f32.mrf.mxu0
        %v1631 = vpop.f32.mrf.mxu0
        %v1632 = vadd.f32 0.0, %v1631
        %v1633 = vpop.f32.mrf.mxu0
        %1634 = vmatprep.mubr.bf16.mxu0 0
        %1635 = vmatmul.mubr.bf16.gmra.mxu0 %v1527
        %v1636 = vpop.f32.mrf.mxu0
        %v1637 = vadd.f32 0.0, %v1636
        %v1638 = vpop.f32.mrf.mxu0
        %v1639 = vpop.f32.mrf.mxu0
        %v1640 = vadd.f32 0.0, %v1639
        %v1641 = vpop.f32.mrf.mxu0
        %1642 = vmatprep.mubr.bf16.mxu0 0
        %1643 = vmatmul.mubr.bf16.gmra.mxu0 %v1530
        %v1644 = vpop.f32.mrf.mxu0
        %v1645 = vadd.f32 0.0, %v1644
        %v1646 = vpop.f32.mrf.mxu0
        %v1647 = vpop.f32.mrf.mxu0
        %v1648 = vadd.f32 0.0, %v1647
        %v1649 = vpop.f32.mrf.mxu0
        %1650 = vmatprep.mubr.bf16.mxu0 0
        %1651 = vmatmul.mubr.bf16.gmra.mxu0 %v1533
        %v1652 = vpop.f32.mrf.mxu0
        %v1653 = vadd.f32 0.0, %v1652
        %v1654 = vpop.f32.mrf.mxu0
        %v1655 = vpop.f32.mrf.mxu0
        %v1656 = vadd.f32 0.0, %v1655
        %v1657 = vpop.f32.mrf.mxu0
        %1658 = vmatprep.mubr.bf16.mxu0 0
        %1659 = vmatmul.mubr.bf16.gmra.mxu0 %v1536
        %v1660 = vpop.f32.mrf.mxu0
        %v1661 = vadd.f32 0.0, %v1660
        %v1662 = vpop.f32.mrf.mxu0
        %v1663 = vpop.f32.mrf.mxu0
        %v1664 = vadd.f32 0.0, %v1663
        %v1665 = vpop.f32.mrf.mxu0
        %1666 = vmatprep.mubr.bf16.mxu0 0
        %1667 = vmatmul.mubr.bf16.gmra.mxu0 %v1539
        %v1668 = vpop.f32.mrf.mxu0
        %v1669 = vadd.f32 0.0, %v1668
        %v1670 = vpop.f32.mrf.mxu0
        %v1671 = vpop.f32.mrf.mxu0
        %v1672 = vadd.f32 0.0, %v1671
        %v1673 = vpop.f32.mrf.mxu0
        %1674 = vmatprep.mubr.bf16.mxu0 0
        %1675 = vmatmul.mubr.bf16.gmra.mxu0 %v1542
        %v1676 = vpop.f32.mrf.mxu0
        %v1677 = vadd.f32 0.0, %v1676
        %v1678 = vpop.f32.mrf.mxu0
        %v1679 = vpop.f32.mrf.mxu0
        %v1680 = vadd.f32 0.0, %v1679
        %v1681 = vpop.f32.mrf.mxu0
        %1682 = vmatprep.mubr.bf16.mxu0 0
        %1683 = vmatmul.mubr.bf16.gmra.mxu0 %v1545
        %v1684 = vpop.f32.mrf.mxu0
        %v1685 = vadd.f32 0.0, %v1684
        %v1686 = vpop.f32.mrf.mxu0
        %v1687 = vpop.f32.mrf.mxu0
        %v1688 = vadd.f32 0.0, %v1687
        %v1689 = vpop.f32.mrf.mxu0
        %1690 = vmatprep.mubr.bf16.mxu0 0
        %1691 = vmatmul.mubr.bf16.gmra.mxu0 %v1548
        %v1692 = vpop.f32.mrf.mxu0
        %v1693 = vadd.f32 0.0, %v1692
        %v1694 = vpop.f32.mrf.mxu0
        %v1695 = vpop.f32.mrf.mxu0
        %v1696 = vadd.f32 0.0, %v1695
        %v1697 = vpop.f32.mrf.mxu0
        %1698 = vmatprep.mubr.bf16.mxu0 0
        %1699 = vmatmul.mubr.bf16.gmra.mxu0 %v1551
        %v1700 = vpop.f32.mrf.mxu0
        %v1701 = vadd.f32 0.0, %v1700
        %v1702 = vpop.f32.mrf.mxu0
        %v1703 = vpop.f32.mrf.mxu0
        %v1704 = vadd.f32 0.0, %v1703
        %v1705 = vpop.f32.mrf.mxu0
        %1706 = vmatprep.mubr.bf16.mxu0 0
        %1707 = vmatmul.mubr.bf16.gmra.mxu0 %v1554
        %v1708 = vpop.f32.mrf.mxu0
        %v1709 = vadd.f32 0.0, %v1708
        %v1710 = vpop.f32.mrf.mxu0
        %v1711 = vpop.f32.mrf.mxu0
        %v1712 = vadd.f32 0.0, %v1711
        %v1713 = vpop.f32.mrf.mxu0
        %1714 = vmatprep.mubr.bf16.mxu0 0
        %1715 = vmatmul.mubr.bf16.gmra.mxu0 %v1557
        %v1716 = vpop.f32.mrf.mxu0
        %v1717 = vadd.f32 0.0, %v1716
        %v1718 = vpop.f32.mrf.mxu0
        %v1719 = vpop.f32.mrf.mxu0
        %v1720 = vadd.f32 0.0, %v1719
        %v1721 = vpop.f32.mrf.mxu0
        %1722 = vdwg.mxu0
        %v1723 = vpack.c.bf16 %v1600, %v1597
        %v1724 = vpack.c.bf16 %v1608, %v1605
        %v1725 = vpack.c.bf16 %v1616, %v1613
        %v1726 = vpack.c.bf16 %v1624, %v1621
        %v1727 = vpack.c.bf16 %v1632, %v1629
        %v1728 = vpack.c.bf16 %v1640, %v1637
        %v1729 = vpack.c.bf16 %v1648, %v1645
        %v1730 = vpack.c.bf16 %v1656, %v1653
        %v1731 = vpack.c.bf16 %v1664, %v1661
        %v1732 = vpack.c.bf16 %v1672, %v1669
        %v1733 = vpack.c.bf16 %v1680, %v1677
        %v1734 = vpack.c.bf16 %v1688, %v1685
        %v1735 = vpack.c.bf16 %v1696, %v1693
        %v1736 = vpack.c.bf16 %v1704, %v1701
        %v1737 = vpack.c.bf16 %v1712, %v1709
        %v1738 = vpack.c.bf16 %v1720, %v1717
        %v1739 = vld [vmem:[%s4] sm:$0xf]
        %v1740 = vld [vmem:[%s4 + $0x4] sm:$0xf]
        %v1741 = vld [vmem:[%s4 + $0x8] sm:$0xf]
        %v1742 = vld [vmem:[%s4 + $0xc] sm:$0xf]
        %v1743 = vld [vmem:[%s4 + $0x10] sm:$0xf]
        %v1744 = vld [vmem:[%s4 + $0x14] sm:$0xf]
        %v1745 = vld [vmem:[%s4 + $0x18] sm:$0xf]
        %v1746 = vld [vmem:[%s4 + $0x1c] sm:$0xf]
        %v1747 = vld [vmem:[%s4 + $0x20] sm:$0xf]
        %v1748 = vld [vmem:[%s4 + $0x24] sm:$0xf]
        %v1749 = vld [vmem:[%s4 + $0x28] sm:$0xf]
        %v1750 = vld [vmem:[%s4 + $0x2c] sm:$0xf]
        %v1751 = vld [vmem:[%s4 + $0x30] sm:$0xf]
        %v1752 = vld [vmem:[%s4 + $0x34] sm:$0xf]
        %v1753 = vld [vmem:[%s4 + $0x38] sm:$0xf]
        %v1754 = vld [vmem:[%s4 + $0x3c] sm:$0xf]
        %v1755 = vld [vmem:[%s5] sm:$0xf]
        %v1756 = vld [vmem:[%s5 + $0x4] sm:$0xf]
        %v1757 = vld [vmem:[%s5 + $0x8] sm:$0xf]
        %v1758 = vld [vmem:[%s5 + $0xc] sm:$0xf]
        %v1759 = vld [vmem:[%s5 + $0x10] sm:$0xf]
        %v1760 = vld [vmem:[%s5 + $0x14] sm:$0xf]
        %v1761 = vld [vmem:[%s5 + $0x18] sm:$0xf]
        %v1762 = vld [vmem:[%s5 + $0x1c] sm:$0xf]
        %v1763 = vld [vmem:[%s5 + $0x20] sm:$0xf]
        %v1764 = vld [vmem:[%s5 + $0x24] sm:$0xf]
        %v1765 = vld [vmem:[%s5 + $0x28] sm:$0xf]
        %v1766 = vld [vmem:[%s5 + $0x2c] sm:$0xf]
        %v1767 = vld [vmem:[%s5 + $0x30] sm:$0xf]
        %v1768 = vld [vmem:[%s5 + $0x34] sm:$0xf]
        %v1769 = vld [vmem:[%s5 + $0x38] sm:$0xf]
        %v1770 = vld [vmem:[%s5 + $0x3c] sm:$0xf]
        %v1787 = vunpack.c.l.b16 %v1755
        %v1788 = vunpack.c.l.b16 %v1756
        %v1789 = vunpack.c.l.b16 %v1757
        %v1790 = vunpack.c.l.b16 %v1758
        %v1791 = vunpack.c.l.b16 %v1759
        %v1792 = vunpack.c.l.b16 %v1760
        %v1793 = vunpack.c.l.b16 %v1761
        %v1794 = vunpack.c.l.b16 %v1762
        %v1795 = vunpack.c.l.b16 %v1763
        %v1796 = vunpack.c.l.b16 %v1764
        %v1797 = vunpack.c.l.b16 %v1765
        %v1798 = vunpack.c.l.b16 %v1766
        %v1799 = vunpack.c.l.b16 %v1767
        %v1800 = vunpack.c.l.b16 %v1768
        %v1801 = vunpack.c.l.b16 %v1769
        %v1802 = vunpack.c.l.b16 %v1770
        %v1803 = vpack.c.b16 %v1788, %v1787
        %v1804 = vpack.c.b16 %v1790, %v1789
        %v1805 = vpack.c.b16 %v1792, %v1791
        %v1806 = vpack.c.b16 %v1794, %v1793
        %v1807 = vpack.c.b16 %v1796, %v1795
        %v1808 = vpack.c.b16 %v1798, %v1797
        %v1809 = vpack.c.b16 %v1800, %v1799
        %v1810 = vpack.c.b16 %v1802, %v1801
        %1819 = vmatprep.subr.bf16.mxu0 0
        %1820 = vmatpush1.bf16.msra.mxu0 %v1810
        %1821 = vmatprep.subr.bf16.mxu0 0
        %1822 = vmatpush1.bf16.msra.mxu0 %v1809
        %1823 = vmatprep.subr.bf16.mxu0 0
        %1824 = vmatpush1.bf16.msra.mxu0 %v1808
        %1825 = vmatprep.subr.bf16.mxu0 0
        %1826 = vmatpush1.bf16.msra.mxu0 %v1807
        %1827 = vmatprep.subr.bf16.mxu0 0
        %1828 = vmatpush1.bf16.msra.mxu0 %v1806
        %1829 = vmatprep.subr.bf16.mxu0 0
        %1830 = vmatpush1.bf16.msra.mxu0 %v1805
        %1831 = vmatprep.subr.bf16.mxu0 0
        %1832 = vmatpush1.bf16.msra.mxu0 %v1804
        %1833 = vmatprep.subr.bf16.mxu0 0
        %1834 = vmatpush1.bf16.msra.mxu0 %v1803
        %1835 = vmatprep.subr.bf16.mxu0 0
        %1836 = vmatpush2.bf16.msra.mxu0 0
        %1837 = vmatprep.subr.bf16.mxu0 0
        %1838 = vmatpush2.bf16.msra.mxu0 0
        %1839 = vmatprep.subr.bf16.mxu0 0
        %1840 = vmatpush2.bf16.msra.mxu0 0
        %1841 = vmatprep.subr.bf16.mxu0 0
        %1842 = vmatpush2.bf16.msra.mxu0 0
        %1843 = vmatprep.subr.bf16.mxu0 0
        %1844 = vmatpush2.bf16.msra.mxu0 0
        %1845 = vmatprep.subr.bf16.mxu0 0
        %1846 = vmatpush2.bf16.msra.mxu0 0
        %1847 = vmatprep.subr.bf16.mxu0 0
        %1848 = vmatpush2.bf16.msra.mxu0 0
        %1849 = vmatprep.subr.bf16.mxu0 0
        %1850 = vmatpush2.bf16.msra.mxu0 0
        %1851 = vmatprep.mubr.bf16.mxu0 0
        %1852 = vmatmul.mubr.bf16.gmra.mxu0 %v1286
        %v1853 = vpop.f32.mrf.mxu0
        %v1854 = vadd.f32 0.0, %v1853
        %v1855 = vpop.f32.mrf.mxu0
        %v1856 = vpop.f32.mrf.mxu0
        %v1857 = vadd.f32 0.0, %v1856
        %v1858 = vpop.f32.mrf.mxu0
        %1859 = vmatprep.mubr.bf16.mxu0 0
        %1860 = vmatmul.mubr.bf16.gmra.mxu0 %v1287
        %v1861 = vpop.f32.mrf.mxu0
        %v1862 = vadd.f32 0.0, %v1861
        %v1863 = vpop.f32.mrf.mxu0
        %v1864 = vpop.f32.mrf.mxu0
        %v1865 = vadd.f32 0.0, %v1864
        %v1866 = vpop.f32.mrf.mxu0
        %1867 = vmatprep.mubr.bf16.mxu0 0
        %1868 = vmatmul.mubr.bf16.gmra.mxu0 %v1288
        %v1869 = vpop.f32.mrf.mxu0
        %v1870 = vadd.f32 0.0, %v1869
        %v1871 = vpop.f32.mrf.mxu0
        %v1872 = vpop.f32.mrf.mxu0
        %v1873 = vadd.f32 0.0, %v1872
        %v1874 = vpop.f32.mrf.mxu0
        %1875 = vmatprep.mubr.bf16.mxu0 0
        %1876 = vmatmul.mubr.bf16.gmra.mxu0 %v1289
        %v1877 = vpop.f32.mrf.mxu0
        %v1878 = vadd.f32 0.0, %v1877
        %v1879 = vpop.f32.mrf.mxu0
        %v1880 = vpop.f32.mrf.mxu0
        %v1881 = vadd.f32 0.0, %v1880
        %v1882 = vpop.f32.mrf.mxu0
        %1883 = vmatprep.mubr.bf16.mxu0 0
        %1884 = vmatmul.mubr.bf16.gmra.mxu0 %v1290
        %v1885 = vpop.f32.mrf.mxu0
        %v1886 = vadd.f32 0.0, %v1885
        %v1887 = vpop.f32.mrf.mxu0
        %v1888 = vpop.f32.mrf.mxu0
        %v1889 = vadd.f32 0.0, %v1888
        %v1890 = vpop.f32.mrf.mxu0
        %1891 = vmatprep.mubr.bf16.mxu0 0
        %1892 = vmatmul.mubr.bf16.gmra.mxu0 %v1291
        %v1893 = vpop.f32.mrf.mxu0
        %v1894 = vadd.f32 0.0, %v1893
        %v1895 = vpop.f32.mrf.mxu0
        %v1896 = vpop.f32.mrf.mxu0
        %v1897 = vadd.f32 0.0, %v1896
        %v1898 = vpop.f32.mrf.mxu0
        %1899 = vmatprep.mubr.bf16.mxu0 0
        %1900 = vmatmul.mubr.bf16.gmra.mxu0 %v1292
        %v1901 = vpop.f32.mrf.mxu0
        %v1902 = vadd.f32 0.0, %v1901
        %v1903 = vpop.f32.mrf.mxu0
        %v1904 = vpop.f32.mrf.mxu0
        %v1905 = vadd.f32 0.0, %v1904
        %v1906 = vpop.f32.mrf.mxu0
        %1907 = vmatprep.mubr.bf16.mxu0 0
        %1908 = vmatmul.mubr.bf16.gmra.mxu0 %v1293
        %v1909 = vpop.f32.mrf.mxu0
        %v1910 = vadd.f32 0.0, %v1909
        %v1911 = vpop.f32.mrf.mxu0
        %v1912 = vpop.f32.mrf.mxu0
        %v1913 = vadd.f32 0.0, %v1912
        %v1914 = vpop.f32.mrf.mxu0
        %1915 = vmatprep.mubr.bf16.mxu0 0
        %1916 = vmatmul.mubr.bf16.gmra.mxu0 %v1294
        %v1917 = vpop.f32.mrf.mxu0
        %v1918 = vadd.f32 0.0, %v1917
        %v1919 = vpop.f32.mrf.mxu0
        %v1920 = vpop.f32.mrf.mxu0
        %v1921 = vadd.f32 0.0, %v1920
        %v1922 = vpop.f32.mrf.mxu0
        %1923 = vmatprep.mubr.bf16.mxu0 0
        %1924 = vmatmul.mubr.bf16.gmra.mxu0 %v1295
        %v1925 = vpop.f32.mrf.mxu0
        %v1926 = vadd.f32 0.0, %v1925
        %v1927 = vpop.f32.mrf.mxu0
        %v1928 = vpop.f32.mrf.mxu0
        %v1929 = vadd.f32 0.0, %v1928
        %v1930 = vpop.f32.mrf.mxu0
        %1931 = vmatprep.mubr.bf16.mxu0 0
        %1932 = vmatmul.mubr.bf16.gmra.mxu0 %v1296
        %v1933 = vpop.f32.mrf.mxu0
        %v1934 = vadd.f32 0.0, %v1933
        %v1935 = vpop.f32.mrf.mxu0
        %v1936 = vpop.f32.mrf.mxu0
        %v1937 = vadd.f32 0.0, %v1936
        %v1938 = vpop.f32.mrf.mxu0
        %1939 = vmatprep.mubr.bf16.mxu0 0
        %1940 = vmatmul.mubr.bf16.gmra.mxu0 %v1297
        %v1941 = vpop.f32.mrf.mxu0
        %v1942 = vadd.f32 0.0, %v1941
        %v1943 = vpop.f32.mrf.mxu0
        %v1944 = vpop.f32.mrf.mxu0
        %v1945 = vadd.f32 0.0, %v1944
        %v1946 = vpop.f32.mrf.mxu0
        %1947 = vmatprep.mubr.bf16.mxu0 0
        %1948 = vmatmul.mubr.bf16.gmra.mxu0 %v1298
        %v1949 = vpop.f32.mrf.mxu0
        %v1950 = vadd.f32 0.0, %v1949
        %v1951 = vpop.f32.mrf.mxu0
        %v1952 = vpop.f32.mrf.mxu0
        %v1953 = vadd.f32 0.0, %v1952
        %v1954 = vpop.f32.mrf.mxu0
        %1955 = vmatprep.mubr.bf16.mxu0 0
        %1956 = vmatmul.mubr.bf16.gmra.mxu0 %v1299
        %v1957 = vpop.f32.mrf.mxu0
        %v1958 = vadd.f32 0.0, %v1957
        %v1959 = vpop.f32.mrf.mxu0
        %v1960 = vpop.f32.mrf.mxu0
        %v1961 = vadd.f32 0.0, %v1960
        %v1962 = vpop.f32.mrf.mxu0
        %1963 = vmatprep.mubr.bf16.mxu0 0
        %1964 = vmatmul.mubr.bf16.gmra.mxu0 %v1300
        %v1965 = vpop.f32.mrf.mxu0
        %v1966 = vadd.f32 0.0, %v1965
        %v1967 = vpop.f32.mrf.mxu0
        %v1968 = vpop.f32.mrf.mxu0
        %v1969 = vadd.f32 0.0, %v1968
        %v1970 = vpop.f32.mrf.mxu0
        %1971 = vmatprep.mubr.bf16.mxu0 0
        %1972 = vmatmul.mubr.bf16.gmra.mxu0 %v1301
        %v1973 = vpop.f32.mrf.mxu0
        %v1974 = vadd.f32 0.0, %v1973
        %v1975 = vpop.f32.mrf.mxu0
        %v1976 = vpop.f32.mrf.mxu0
        %v1977 = vadd.f32 0.0, %v1976
        %v1978 = vpop.f32.mrf.mxu0
        %1979 = vdwg.mxu0
        %v1996 = vunpack.c.l.b16 %v1739
        %v1997 = vunpack.c.l.b16 %v1740
        %v1998 = vunpack.c.l.b16 %v1741
        %v1999 = vunpack.c.l.b16 %v1742
        %v2000 = vunpack.c.l.b16 %v1743
        %v2001 = vunpack.c.l.b16 %v1744
        %v2002 = vunpack.c.l.b16 %v1745
        %v2003 = vunpack.c.l.b16 %v1746
        %v2004 = vunpack.c.l.b16 %v1747
        %v2005 = vunpack.c.l.b16 %v1748
        %v2006 = vunpack.c.l.b16 %v1749
        %v2007 = vunpack.c.l.b16 %v1750
        %v2008 = vunpack.c.l.b16 %v1751
        %v2009 = vunpack.c.l.b16 %v1752
        %v2010 = vunpack.c.l.b16 %v1753
        %v2011 = vunpack.c.l.b16 %v1754
        %v2012 = vpack.c.b16 %v1997, %v1996
        %v2013 = vpack.c.b16 %v1999, %v1998
        %v2014 = vpack.c.b16 %v2001, %v2000
        %v2015 = vpack.c.b16 %v2003, %v2002
        %v2016 = vpack.c.b16 %v2005, %v2004
        %v2017 = vpack.c.b16 %v2007, %v2006
        %v2018 = vpack.c.b16 %v2009, %v2008
        %v2019 = vpack.c.b16 %v2011, %v2010
        %2028 = vmatprep.subr.bf16.mxu0 0
        %2029 = vmatpush1.bf16.msra.mxu0 %v2019
        %2030 = vmatprep.subr.bf16.mxu0 0
        %2031 = vmatpush1.bf16.msra.mxu0 %v2018
        %2032 = vmatprep.subr.bf16.mxu0 0
        %2033 = vmatpush1.bf16.msra.mxu0 %v2017
        %2034 = vmatprep.subr.bf16.mxu0 0
        %2035 = vmatpush1.bf16.msra.mxu0 %v2016
        %2036 = vmatprep.subr.bf16.mxu0 0
        %2037 = vmatpush1.bf16.msra.mxu0 %v2015
        %2038 = vmatprep.subr.bf16.mxu0 0
        %2039 = vmatpush1.bf16.msra.mxu0 %v2014
        %2040 = vmatprep.subr.bf16.mxu0 0
        %2041 = vmatpush1.bf16.msra.mxu0 %v2013
        %2042 = vmatprep.subr.bf16.mxu0 0
        %2043 = vmatpush1.bf16.msra.mxu0 %v2012
        %2044 = vmatprep.subr.bf16.mxu0 0
        %2045 = vmatpush2.bf16.msra.mxu0 0
        %2046 = vmatprep.subr.bf16.mxu0 0
        %2047 = vmatpush2.bf16.msra.mxu0 0
        %2048 = vmatprep.subr.bf16.mxu0 0
        %2049 = vmatpush2.bf16.msra.mxu0 0
        %2050 = vmatprep.subr.bf16.mxu0 0
        %2051 = vmatpush2.bf16.msra.mxu0 0
        %2052 = vmatprep.subr.bf16.mxu0 0
        %2053 = vmatpush2.bf16.msra.mxu0 0
        %2054 = vmatprep.subr.bf16.mxu0 0
        %2055 = vmatpush2.bf16.msra.mxu0 0
        %2056 = vmatprep.subr.bf16.mxu0 0
        %2057 = vmatpush2.bf16.msra.mxu0 0
        %2058 = vmatprep.subr.bf16.mxu0 0
        %2059 = vmatpush2.bf16.msra.mxu0 0
        %2060 = vmatprep.mubr.bf16.mxu0 0
        %2061 = vmatmul.mubr.bf16.gmra.mxu0 %v844
        %v2062 = vpop.f32.mrf.mxu0
        %v2063 = vadd.f32 %v1854, %v2062
        %v2064 = vpop.f32.mrf.mxu0
        %v2065 = vpop.f32.mrf.mxu0
        %v2066 = vadd.f32 %v1857, %v2065
        %v2067 = vpop.f32.mrf.mxu0
        %2068 = vmatprep.mubr.bf16.mxu0 0
        %2069 = vmatmul.mubr.bf16.gmra.mxu0 %v845
        %v2070 = vpop.f32.mrf.mxu0
        %v2071 = vadd.f32 %v1862, %v2070
        %v2072 = vpop.f32.mrf.mxu0
        %v2073 = vpop.f32.mrf.mxu0
        %v2074 = vadd.f32 %v1865, %v2073
        %v2075 = vpop.f32.mrf.mxu0
        %2076 = vmatprep.mubr.bf16.mxu0 0
        %2077 = vmatmul.mubr.bf16.gmra.mxu0 %v846
        %v2078 = vpop.f32.mrf.mxu0
        %v2079 = vadd.f32 %v1870, %v2078
        %v2080 = vpop.f32.mrf.mxu0
        %v2081 = vpop.f32.mrf.mxu0
        %v2082 = vadd.f32 %v1873, %v2081
        %v2083 = vpop.f32.mrf.mxu0
        %2084 = vmatprep.mubr.bf16.mxu0 0
        %2085 = vmatmul.mubr.bf16.gmra.mxu0 %v847
        %v2086 = vpop.f32.mrf.mxu0
        %v2087 = vadd.f32 %v1878, %v2086
        %v2088 = vpop.f32.mrf.mxu0
        %v2089 = vpop.f32.mrf.mxu0
        %v2090 = vadd.f32 %v1881, %v2089
        %v2091 = vpop.f32.mrf.mxu0
        %2092 = vmatprep.mubr.bf16.mxu0 0
        %2093 = vmatmul.mubr.bf16.gmra.mxu0 %v848
        %v2094 = vpop.f32.mrf.mxu0
        %v2095 = vadd.f32 %v1886, %v2094
        %v2096 = vpop.f32.mrf.mxu0
        %v2097 = vpop.f32.mrf.mxu0
        %v2098 = vadd.f32 %v1889, %v2097
        %v2099 = vpop.f32.mrf.mxu0
        %2100 = vmatprep.mubr.bf16.mxu0 0
        %2101 = vmatmul.mubr.bf16.gmra.mxu0 %v849
        %v2102 = vpop.f32.mrf.mxu0
        %v2103 = vadd.f32 %v1894, %v2102
        %v2104 = vpop.f32.mrf.mxu0
        %v2105 = vpop.f32.mrf.mxu0
        %v2106 = vadd.f32 %v1897, %v2105
        %v2107 = vpop.f32.mrf.mxu0
        %2108 = vmatprep.mubr.bf16.mxu0 0
        %2109 = vmatmul.mubr.bf16.gmra.mxu0 %v850
        %v2110 = vpop.f32.mrf.mxu0
        %v2111 = vadd.f32 %v1902, %v2110
        %v2112 = vpop.f32.mrf.mxu0
        %v2113 = vpop.f32.mrf.mxu0
        %v2114 = vadd.f32 %v1905, %v2113
        %v2115 = vpop.f32.mrf.mxu0
        %2116 = vmatprep.mubr.bf16.mxu0 0
        %2117 = vmatmul.mubr.bf16.gmra.mxu0 %v851
        %v2118 = vpop.f32.mrf.mxu0
        %v2119 = vadd.f32 %v1910, %v2118
        %v2120 = vpop.f32.mrf.mxu0
        %v2121 = vpop.f32.mrf.mxu0
        %v2122 = vadd.f32 %v1913, %v2121
        %v2123 = vpop.f32.mrf.mxu0
        %2124 = vmatprep.mubr.bf16.mxu0 0
        %2125 = vmatmul.mubr.bf16.gmra.mxu0 %v852
        %v2126 = vpop.f32.mrf.mxu0
        %v2127 = vadd.f32 %v1918, %v2126
        %v2128 = vpop.f32.mrf.mxu0
        %v2129 = vpop.f32.mrf.mxu0
        %v2130 = vadd.f32 %v1921, %v2129
        %v2131 = vpop.f32.mrf.mxu0
        %2132 = vmatprep.mubr.bf16.mxu0 0
        %2133 = vmatmul.mubr.bf16.gmra.mxu0 %v853
        %v2134 = vpop.f32.mrf.mxu0
        %v2135 = vadd.f32 %v1926, %v2134
        %v2136 = vpop.f32.mrf.mxu0
        %v2137 = vpop.f32.mrf.mxu0
        %v2138 = vadd.f32 %v1929, %v2137
        %v2139 = vpop.f32.mrf.mxu0
        %2140 = vmatprep.mubr.bf16.mxu0 0
        %2141 = vmatmul.mubr.bf16.gmra.mxu0 %v854
        %v2142 = vpop.f32.mrf.mxu0
        %v2143 = vadd.f32 %v1934, %v2142
        %v2144 = vpop.f32.mrf.mxu0
        %v2145 = vpop.f32.mrf.mxu0
        %v2146 = vadd.f32 %v1937, %v2145
        %v2147 = vpop.f32.mrf.mxu0
        %2148 = vmatprep.mubr.bf16.mxu0 0
        %2149 = vmatmul.mubr.bf16.gmra.mxu0 %v855
        %v2150 = vpop.f32.mrf.mxu0
        %v2151 = vadd.f32 %v1942, %v2150
        %v2152 = vpop.f32.mrf.mxu0
        %v2153 = vpop.f32.mrf.mxu0
        %v2154 = vadd.f32 %v1945, %v2153
        %v2155 = vpop.f32.mrf.mxu0
        %2156 = vmatprep.mubr.bf16.mxu0 0
        %2157 = vmatmul.mubr.bf16.gmra.mxu0 %v856
        %v2158 = vpop.f32.mrf.mxu0
        %v2159 = vadd.f32 %v1950, %v2158
        %v2160 = vpop.f32.mrf.mxu0
        %v2161 = vpop.f32.mrf.mxu0
        %v2162 = vadd.f32 %v1953, %v2161
        %v2163 = vpop.f32.mrf.mxu0
        %2164 = vmatprep.mubr.bf16.mxu0 0
        %2165 = vmatmul.mubr.bf16.gmra.mxu0 %v857
        %v2166 = vpop.f32.mrf.mxu0
        %v2167 = vadd.f32 %v1958, %v2166
        %v2168 = vpop.f32.mrf.mxu0
        %v2169 = vpop.f32.mrf.mxu0
        %v2170 = vadd.f32 %v1961, %v2169
        %v2171 = vpop.f32.mrf.mxu0
        %2172 = vmatprep.mubr.bf16.mxu0 0
        %2173 = vmatmul.mubr.bf16.gmra.mxu0 %v858
        %v2174 = vpop.f32.mrf.mxu0
        %v2175 = vadd.f32 %v1966, %v2174
        %v2176 = vpop.f32.mrf.mxu0
        %v2177 = vpop.f32.mrf.mxu0
        %v2178 = vadd.f32 %v1969, %v2177
        %v2179 = vpop.f32.mrf.mxu0
        %2180 = vmatprep.mubr.bf16.mxu0 0
        %2181 = vmatmul.mubr.bf16.gmra.mxu0 %v859
        %v2182 = vpop.f32.mrf.mxu0
        %v2183 = vadd.f32 %v1974, %v2182
        %v2184 = vpop.f32.mrf.mxu0
        %v2185 = vpop.f32.mrf.mxu0
        %v2186 = vadd.f32 %v1977, %v2185
        %v2187 = vpop.f32.mrf.mxu0
        %2188 = vdwg.mxu0
        %v2189 = vld [vmem:[%s6] sm:$0xf]
        %v2190 = vld [vmem:[%s6 + $0x4] sm:$0xf]
        %v2191 = vld [vmem:[%s6 + $0x8] sm:$0xf]
        %v2192 = vld [vmem:[%s6 + $0xc] sm:$0xf]
        %v2193 = vld [vmem:[%s6 + $0x10] sm:$0xf]
        %v2194 = vld [vmem:[%s6 + $0x14] sm:$0xf]
        %v2195 = vld [vmem:[%s6 + $0x18] sm:$0xf]
        %v2196 = vld [vmem:[%s6 + $0x1c] sm:$0xf]
        %v2197 = vld [vmem:[%s6 + $0x20] sm:$0xf]
        %v2198 = vld [vmem:[%s6 + $0x24] sm:$0xf]
        %v2199 = vld [vmem:[%s6 + $0x28] sm:$0xf]
        %v2200 = vld [vmem:[%s6 + $0x2c] sm:$0xf]
        %v2201 = vld [vmem:[%s6 + $0x30] sm:$0xf]
        %v2202 = vld [vmem:[%s6 + $0x34] sm:$0xf]
        %v2203 = vld [vmem:[%s6 + $0x38] sm:$0xf]
        %v2204 = vld [vmem:[%s6 + $0x3c] sm:$0xf]
        %v2221 = vunpack.c.l.b16 %v2189
        %v2222 = vunpack.c.l.b16 %v2190
        %v2223 = vunpack.c.l.b16 %v2191
        %v2224 = vunpack.c.l.b16 %v2192
        %v2225 = vunpack.c.l.b16 %v2193
        %v2226 = vunpack.c.l.b16 %v2194
        %v2227 = vunpack.c.l.b16 %v2195
        %v2228 = vunpack.c.l.b16 %v2196
        %v2229 = vunpack.c.l.b16 %v2197
        %v2230 = vunpack.c.l.b16 %v2198
        %v2231 = vunpack.c.l.b16 %v2199
        %v2232 = vunpack.c.l.b16 %v2200
        %v2233 = vunpack.c.l.b16 %v2201
        %v2234 = vunpack.c.l.b16 %v2202
        %v2235 = vunpack.c.l.b16 %v2203
        %v2236 = vunpack.c.l.b16 %v2204
        %v2237 = vpack.c.b16 %v2222, %v2221
        %v2238 = vpack.c.b16 %v2224, %v2223
        %v2239 = vpack.c.b16 %v2226, %v2225
        %v2240 = vpack.c.b16 %v2228, %v2227
        %v2241 = vpack.c.b16 %v2230, %v2229
        %v2242 = vpack.c.b16 %v2232, %v2231
        %v2243 = vpack.c.b16 %v2234, %v2233
        %v2244 = vpack.c.b16 %v2236, %v2235
        %2253 = vmatprep.subr.bf16.mxu0 0
        %2254 = vmatpush1.bf16.msra.mxu0 %v2244
        %2255 = vmatprep.subr.bf16.mxu0 0
        %2256 = vmatpush1.bf16.msra.mxu0 %v2243
        %2257 = vmatprep.subr.bf16.mxu0 0
        %2258 = vmatpush1.bf16.msra.mxu0 %v2242
        %2259 = vmatprep.subr.bf16.mxu0 0
        %2260 = vmatpush1.bf16.msra.mxu0 %v2241
        %2261 = vmatprep.subr.bf16.mxu0 0
        %2262 = vmatpush1.bf16.msra.mxu0 %v2240
        %2263 = vmatprep.subr.bf16.mxu0 0
        %2264 = vmatpush1.bf16.msra.mxu0 %v2239
        %2265 = vmatprep.subr.bf16.mxu0 0
        %2266 = vmatpush1.bf16.msra.mxu0 %v2238
        %2267 = vmatprep.subr.bf16.mxu0 0
        %2268 = vmatpush1.bf16.msra.mxu0 %v2237
        %2269 = vmatprep.subr.bf16.mxu0 0
        %2270 = vmatpush2.bf16.msra.mxu0 0
        %2271 = vmatprep.subr.bf16.mxu0 0
        %2272 = vmatpush2.bf16.msra.mxu0 0
        %2273 = vmatprep.subr.bf16.mxu0 0
        %2274 = vmatpush2.bf16.msra.mxu0 0
        %2275 = vmatprep.subr.bf16.mxu0 0
        %2276 = vmatpush2.bf16.msra.mxu0 0
        %2277 = vmatprep.subr.bf16.mxu0 0
        %2278 = vmatpush2.bf16.msra.mxu0 0
        %2279 = vmatprep.subr.bf16.mxu0 0
        %2280 = vmatpush2.bf16.msra.mxu0 0
        %2281 = vmatprep.subr.bf16.mxu0 0
        %2282 = vmatpush2.bf16.msra.mxu0 0
        %2283 = vmatprep.subr.bf16.mxu0 0
        %2284 = vmatpush2.bf16.msra.mxu0 0
        %2285 = vmatprep.mubr.bf16.mxu0 0
        %2286 = vmatmul.mubr.bf16.gmra.mxu0 %v1723
        %v2287 = vpop.f32.mrf.mxu0
        %v2288 = vadd.f32 0.0, %v2287
        %v2289 = vpop.f32.mrf.mxu0
        %v2290 = vpop.f32.mrf.mxu0
        %v2291 = vadd.f32 0.0, %v2290
        %v2292 = vpop.f32.mrf.mxu0
        %2293 = vmatprep.mubr.bf16.mxu0 0
        %2294 = vmatmul.mubr.bf16.gmra.mxu0 %v1724
        %v2295 = vpop.f32.mrf.mxu0
        %v2296 = vadd.f32 0.0, %v2295
        %v2297 = vpop.f32.mrf.mxu0
        %v2298 = vpop.f32.mrf.mxu0
        %v2299 = vadd.f32 0.0, %v2298
        %v2300 = vpop.f32.mrf.mxu0
        %2301 = vmatprep.mubr.bf16.mxu0 0
        %2302 = vmatmul.mubr.bf16.gmra.mxu0 %v1725
        %v2303 = vpop.f32.mrf.mxu0
        %v2304 = vadd.f32 0.0, %v2303
        %v2305 = vpop.f32.mrf.mxu0
        %v2306 = vpop.f32.mrf.mxu0
        %v2307 = vadd.f32 0.0, %v2306
        %v2308 = vpop.f32.mrf.mxu0
        %2309 = vmatprep.mubr.bf16.mxu0 0
        %2310 = vmatmul.mubr.bf16.gmra.mxu0 %v1726
        %v2311 = vpop.f32.mrf.mxu0
        %v2312 = vadd.f32 0.0, %v2311
        %v2313 = vpop.f32.mrf.mxu0
        %v2314 = vpop.f32.mrf.mxu0
        %v2315 = vadd.f32 0.0, %v2314
        %v2316 = vpop.f32.mrf.mxu0
        %2317 = vmatprep.mubr.bf16.mxu0 0
        %2318 = vmatmul.mubr.bf16.gmra.mxu0 %v1727
        %v2319 = vpop.f32.mrf.mxu0
        %v2320 = vadd.f32 0.0, %v2319
        %v2321 = vpop.f32.mrf.mxu0
        %v2322 = vpop.f32.mrf.mxu0
        %v2323 = vadd.f32 0.0, %v2322
        %v2324 = vpop.f32.mrf.mxu0
        %2325 = vmatprep.mubr.bf16.mxu0 0
        %2326 = vmatmul.mubr.bf16.gmra.mxu0 %v1728
        %v2327 = vpop.f32.mrf.mxu0
        %v2328 = vadd.f32 0.0, %v2327
        %v2329 = vpop.f32.mrf.mxu0
        %v2330 = vpop.f32.mrf.mxu0
        %v2331 = vadd.f32 0.0, %v2330
        %v2332 = vpop.f32.mrf.mxu0
        %2333 = vmatprep.mubr.bf16.mxu0 0
        %2334 = vmatmul.mubr.bf16.gmra.mxu0 %v1729
        %v2335 = vpop.f32.mrf.mxu0
        %v2336 = vadd.f32 0.0, %v2335
        %v2337 = vpop.f32.mrf.mxu0
        %v2338 = vpop.f32.mrf.mxu0
        %v2339 = vadd.f32 0.0, %v2338
        %v2340 = vpop.f32.mrf.mxu0
        %2341 = vmatprep.mubr.bf16.mxu0 0
        %2342 = vmatmul.mubr.bf16.gmra.mxu0 %v1730
        %v2343 = vpop.f32.mrf.mxu0
        %v2344 = vadd.f32 0.0, %v2343
        %v2345 = vpop.f32.mrf.mxu0
        %v2346 = vpop.f32.mrf.mxu0
        %v2347 = vadd.f32 0.0, %v2346
        %v2348 = vpop.f32.mrf.mxu0
        %2349 = vmatprep.mubr.bf16.mxu0 0
        %2350 = vmatmul.mubr.bf16.gmra.mxu0 %v1731
        %v2351 = vpop.f32.mrf.mxu0
        %v2352 = vadd.f32 0.0, %v2351
        %v2353 = vpop.f32.mrf.mxu0
        %v2354 = vpop.f32.mrf.mxu0
        %v2355 = vadd.f32 0.0, %v2354
        %v2356 = vpop.f32.mrf.mxu0
        %2357 = vmatprep.mubr.bf16.mxu0 0
        %2358 = vmatmul.mubr.bf16.gmra.mxu0 %v1732
        %v2359 = vpop.f32.mrf.mxu0
        %v2360 = vadd.f32 0.0, %v2359
        %v2361 = vpop.f32.mrf.mxu0
        %v2362 = vpop.f32.mrf.mxu0
        %v2363 = vadd.f32 0.0, %v2362
        %v2364 = vpop.f32.mrf.mxu0
        %2365 = vmatprep.mubr.bf16.mxu0 0
        %2366 = vmatmul.mubr.bf16.gmra.mxu0 %v1733
        %v2367 = vpop.f32.mrf.mxu0
        %v2368 = vadd.f32 0.0, %v2367
        %v2369 = vpop.f32.mrf.mxu0
        %v2370 = vpop.f32.mrf.mxu0
        %v2371 = vadd.f32 0.0, %v2370
        %v2372 = vpop.f32.mrf.mxu0
        %2373 = vmatprep.mubr.bf16.mxu0 0
        %2374 = vmatmul.mubr.bf16.gmra.mxu0 %v1734
        %v2375 = vpop.f32.mrf.mxu0
        %v2376 = vadd.f32 0.0, %v2375
        %v2377 = vpop.f32.mrf.mxu0
        %v2378 = vpop.f32.mrf.mxu0
        %v2379 = vadd.f32 0.0, %v2378
        %v2380 = vpop.f32.mrf.mxu0
        %2381 = vmatprep.mubr.bf16.mxu0 0
        %2382 = vmatmul.mubr.bf16.gmra.mxu0 %v1735
        %v2383 = vpop.f32.mrf.mxu0
        %v2384 = vadd.f32 0.0, %v2383
        %v2385 = vpop.f32.mrf.mxu0
        %v2386 = vpop.f32.mrf.mxu0
        %v2387 = vadd.f32 0.0, %v2386
        %v2388 = vpop.f32.mrf.mxu0
        %2389 = vmatprep.mubr.bf16.mxu0 0
        %2390 = vmatmul.mubr.bf16.gmra.mxu0 %v1736
        %v2391 = vpop.f32.mrf.mxu0
        %v2392 = vadd.f32 0.0, %v2391
        %v2393 = vpop.f32.mrf.mxu0
        %v2394 = vpop.f32.mrf.mxu0
        %v2395 = vadd.f32 0.0, %v2394
        %v2396 = vpop.f32.mrf.mxu0
        %2397 = vmatprep.mubr.bf16.mxu0 0
        %2398 = vmatmul.mubr.bf16.gmra.mxu0 %v1737
        %v2399 = vpop.f32.mrf.mxu0
        %v2400 = vadd.f32 0.0, %v2399
        %v2401 = vpop.f32.mrf.mxu0
        %v2402 = vpop.f32.mrf.mxu0
        %v2403 = vadd.f32 0.0, %v2402
        %v2404 = vpop.f32.mrf.mxu0
        %2405 = vmatprep.mubr.bf16.mxu0 0
        %2406 = vmatmul.mubr.bf16.gmra.mxu0 %v1738
        %v2407 = vpop.f32.mrf.mxu0
        %v2408 = vadd.f32 0.0, %v2407
        %v2409 = vpop.f32.mrf.mxu0
        %v2410 = vpop.f32.mrf.mxu0
        %v2411 = vadd.f32 0.0, %v2410
        %v2412 = vpop.f32.mrf.mxu0
        %2413 = vdwg.mxu0
        %v2414 = vadd.f32 %v2063, %v2288
        %v2415 = vadd.f32 %v2066, %v2291
        %v2416 = vadd.f32 %v2071, %v2296
        %v2417 = vadd.f32 %v2074, %v2299
        %v2418 = vadd.f32 %v2079, %v2304
        %v2419 = vadd.f32 %v2082, %v2307
        %v2420 = vadd.f32 %v2087, %v2312
        %v2421 = vadd.f32 %v2090, %v2315
        %v2422 = vadd.f32 %v2095, %v2320
        %v2423 = vadd.f32 %v2098, %v2323
        %v2424 = vadd.f32 %v2103, %v2328
        %v2425 = vadd.f32 %v2106, %v2331
        %v2426 = vadd.f32 %v2111, %v2336
        %v2427 = vadd.f32 %v2114, %v2339
        %v2428 = vadd.f32 %v2119, %v2344
        %v2429 = vadd.f32 %v2122, %v2347
        %v2430 = vadd.f32 %v2127, %v2352
        %v2431 = vadd.f32 %v2130, %v2355
        %v2432 = vadd.f32 %v2135, %v2360
        %v2433 = vadd.f32 %v2138, %v2363
        %v2434 = vadd.f32 %v2143, %v2368
        %v2435 = vadd.f32 %v2146, %v2371
        %v2436 = vadd.f32 %v2151, %v2376
        %v2437 = vadd.f32 %v2154, %v2379
        %v2438 = vadd.f32 %v2159, %v2384
        %v2439 = vadd.f32 %v2162, %v2387
        %v2440 = vadd.f32 %v2167, %v2392
        %v2441 = vadd.f32 %v2170, %v2395
        %v2442 = vadd.f32 %v2175, %v2400
        %v2443 = vadd.f32 %v2178, %v2403
        %v2444 = vadd.f32 %v2183, %v2408
        %v2445 = vadd.f32 %v2186, %v2411
        %v2446 = vld [vmem:[%s7] sm:$0x1]
        %v2448 = vlaneseq
        %v2449 = vshrl.u32 %v2448, 7
        %v2450 = vsub.s32 0, %v2449
        %v2451 = vrot.slane %v2446, %v2450
        %v2453 = vadd.f32 %v2414, %v2451
        %v2454 = vadd.f32 %v2415, %v2451
        %v2455 = vadd.f32 %v2416, %v2451
        %v2456 = vadd.f32 %v2417, %v2451
        %v2457 = vadd.f32 %v2418, %v2451
        %v2458 = vadd.f32 %v2419, %v2451
        %v2459 = vadd.f32 %v2420, %v2451
        %v2460 = vadd.f32 %v2421, %v2451
        %v2461 = vadd.f32 %v2422, %v2451
        %v2462 = vadd.f32 %v2423, %v2451
        %v2463 = vadd.f32 %v2424, %v2451
        %v2464 = vadd.f32 %v2425, %v2451
        %v2465 = vadd.f32 %v2426, %v2451
        %v2466 = vadd.f32 %v2427, %v2451
        %v2467 = vadd.f32 %v2428, %v2451
        %v2468 = vadd.f32 %v2429, %v2451
        %v2469 = vadd.f32 %v2430, %v2451
        %v2470 = vadd.f32 %v2431, %v2451
        %v2471 = vadd.f32 %v2432, %v2451
        %v2472 = vadd.f32 %v2433, %v2451
        %v2473 = vadd.f32 %v2434, %v2451
        %v2474 = vadd.f32 %v2435, %v2451
        %v2475 = vadd.f32 %v2436, %v2451
        %v2476 = vadd.f32 %v2437, %v2451
        %v2477 = vadd.f32 %v2438, %v2451
        %v2478 = vadd.f32 %v2439, %v2451
        %v2479 = vadd.f32 %v2440, %v2451
        %v2480 = vadd.f32 %v2441, %v2451
        %v2481 = vadd.f32 %v2442, %v2451
        %v2482 = vadd.f32 %v2443, %v2451
        %v2483 = vadd.f32 %v2444, %v2451
        %v2484 = vadd.f32 %v2445, %v2451
        %v2485 = vmax.f32 %v2453, 0.0
        %v2486 = vmax.f32 %v2454, 0.0
        %v2487 = vmax.f32 %v2455, 0.0
        %v2488 = vmax.f32 %v2456, 0.0
        %v2489 = vmax.f32 %v2457, 0.0
        %v2490 = vmax.f32 %v2458, 0.0
        %v2491 = vmax.f32 %v2459, 0.0
        %v2492 = vmax.f32 %v2460, 0.0
        %v2493 = vmax.f32 %v2461, 0.0
        %v2494 = vmax.f32 %v2462, 0.0
        %v2495 = vmax.f32 %v2463, 0.0
        %v2496 = vmax.f32 %v2464, 0.0
        %v2497 = vmax.f32 %v2465, 0.0
        %v2498 = vmax.f32 %v2466, 0.0
        %v2499 = vmax.f32 %v2467, 0.0
        %v2500 = vmax.f32 %v2468, 0.0
        %v2501 = vmax.f32 %v2469, 0.0
        %v2502 = vmax.f32 %v2470, 0.0
        %v2503 = vmax.f32 %v2471, 0.0
        %v2504 = vmax.f32 %v2472, 0.0
        %v2505 = vmax.f32 %v2473, 0.0
        %v2506 = vmax.f32 %v2474, 0.0
        %v2507 = vmax.f32 %v2475, 0.0
        %v2508 = vmax.f32 %v2476, 0.0
        %v2509 = vmax.f32 %v2477, 0.0
        %v2510 = vmax.f32 %v2478, 0.0
        %v2511 = vmax.f32 %v2479, 0.0
        %v2512 = vmax.f32 %v2480, 0.0
        %v2513 = vmax.f32 %v2481, 0.0
        %v2514 = vmax.f32 %v2482, 0.0
        %v2515 = vmax.f32 %v2483, 0.0
        %v2516 = vmax.f32 %v2484, 0.0
        %v2517 = vld [vmem:[%s8] sm:$0x1]
        %v2519 = vlaneseq
        %v2520 = vshrl.u32 %v2519, 7
        %v2521 = vsub.s32 0, %v2520
        %v2522 = vrot.slane %v2517, %v2521
        %v2524 = vmul.f32 %v2485, %v2522
        %v2525 = vmul.f32 %v2486, %v2522
        %v2526 = vmul.f32 %v2487, %v2522
        %v2527 = vmul.f32 %v2488, %v2522
        %v2528 = vmul.f32 %v2489, %v2522
        %v2529 = vmul.f32 %v2490, %v2522
        %v2530 = vmul.f32 %v2491, %v2522
        %v2531 = vmul.f32 %v2492, %v2522
        %v2532 = vmul.f32 %v2493, %v2522
        %v2533 = vmul.f32 %v2494, %v2522
        %v2534 = vmul.f32 %v2495, %v2522
        %v2535 = vmul.f32 %v2496, %v2522
        %v2536 = vmul.f32 %v2497, %v2522
        %v2537 = vmul.f32 %v2498, %v2522
        %v2538 = vmul.f32 %v2499, %v2522
        %v2539 = vmul.f32 %v2500, %v2522
        %v2540 = vmul.f32 %v2501, %v2522
        %v2541 = vmul.f32 %v2502, %v2522
        %v2542 = vmul.f32 %v2503, %v2522
        %v2543 = vmul.f32 %v2504, %v2522
        %v2544 = vmul.f32 %v2505, %v2522
        %v2545 = vmul.f32 %v2506, %v2522
        %v2546 = vmul.f32 %v2507, %v2522
        %v2547 = vmul.f32 %v2508, %v2522
        %v2548 = vmul.f32 %v2509, %v2522
        %v2549 = vmul.f32 %v2510, %v2522
        %v2550 = vmul.f32 %v2511, %v2522
        %v2551 = vmul.f32 %v2512, %v2522
        %v2552 = vmul.f32 %v2513, %v2522
        %v2553 = vmul.f32 %v2514, %v2522
        %v2554 = vmul.f32 %v2515, %v2522
        %v2555 = vmul.f32 %v2516, %v2522
        %2556 = vadd.xlane.f32.xlu0 %v2524
        %v2557 = vpop.xlane.xlu0 %2556
        %2558 = vadd.xlane.f32.xlu0 %v2525
        %v2559 = vpop.xlane.xlu0 %2558
        %2560 = vadd.xlane.f32.xlu0 %v2526
        %v2561 = vpop.xlane.xlu0 %2560
        %2562 = vadd.xlane.f32.xlu0 %v2527
        %v2563 = vpop.xlane.xlu0 %2562
        %2564 = vadd.xlane.f32.xlu0 %v2528
        %v2565 = vpop.xlane.xlu0 %2564
        %2566 = vadd.xlane.f32.xlu0 %v2529
        %v2567 = vpop.xlane.xlu0 %2566
        %2568 = vadd.xlane.f32.xlu0 %v2530
        %v2569 = vpop.xlane.xlu0 %2568
        %2570 = vadd.xlane.f32.xlu0 %v2531
        %v2571 = vpop.xlane.xlu0 %2570
        %2572 = vadd.xlane.f32.xlu0 %v2532
        %v2573 = vpop.xlane.xlu0 %2572
        %2574 = vadd.xlane.f32.xlu0 %v2533
        %v2575 = vpop.xlane.xlu0 %2574
        %2576 = vadd.xlane.f32.xlu0 %v2534
        %v2577 = vpop.xlane.xlu0 %2576
        %2578 = vadd.xlane.f32.xlu0 %v2535
        %v2579 = vpop.xlane.xlu0 %2578
        %2580 = vadd.xlane.f32.xlu0 %v2536
        %v2581 = vpop.xlane.xlu0 %2580
        %2582 = vadd.xlane.f32.xlu0 %v2537
        %v2583 = vpop.xlane.xlu0 %2582
        %2584 = vadd.xlane.f32.xlu0 %v2538
        %v2585 = vpop.xlane.xlu0 %2584
        %2586 = vadd.xlane.f32.xlu0 %v2539
        %v2587 = vpop.xlane.xlu0 %2586
        %2588 = vadd.xlane.f32.xlu0 %v2540
        %v2589 = vpop.xlane.xlu0 %2588
        %2590 = vadd.xlane.f32.xlu0 %v2541
        %v2591 = vpop.xlane.xlu0 %2590
        %2592 = vadd.xlane.f32.xlu0 %v2542
        %v2593 = vpop.xlane.xlu0 %2592
        %2594 = vadd.xlane.f32.xlu0 %v2543
        %v2595 = vpop.xlane.xlu0 %2594
        %2596 = vadd.xlane.f32.xlu0 %v2544
        %v2597 = vpop.xlane.xlu0 %2596
        %2598 = vadd.xlane.f32.xlu0 %v2545
        %v2599 = vpop.xlane.xlu0 %2598
        %2600 = vadd.xlane.f32.xlu0 %v2546
        %v2601 = vpop.xlane.xlu0 %2600
        %2602 = vadd.xlane.f32.xlu0 %v2547
        %v2603 = vpop.xlane.xlu0 %2602
        %2604 = vadd.xlane.f32.xlu0 %v2548
        %v2605 = vpop.xlane.xlu0 %2604
        %2606 = vadd.xlane.f32.xlu0 %v2549
        %v2607 = vpop.xlane.xlu0 %2606
        %2608 = vadd.xlane.f32.xlu0 %v2550
        %v2609 = vpop.xlane.xlu0 %2608
        %2610 = vadd.xlane.f32.xlu0 %v2551
        %v2611 = vpop.xlane.xlu0 %2610
        %2612 = vadd.xlane.f32.xlu0 %v2552
        %v2613 = vpop.xlane.xlu0 %2612
        %2614 = vadd.xlane.f32.xlu0 %v2553
        %v2615 = vpop.xlane.xlu0 %2614
        %2616 = vadd.xlane.f32.xlu0 %v2554
        %v2617 = vpop.xlane.xlu0 %2616
        %2618 = vadd.xlane.f32.xlu0 %v2555
        %v2619 = vpop.xlane.xlu0 %2618
        %v2620 = vld [vmem:[#allocation2] sm:$0x1]
        %v2622 = vlaneseq
        %v2623 = vshrl.u32 %v2622, 7
        %v2624 = vsub.s32 0, %v2623
        %v2625 = vrot.slane %v2620, %v2624
        %v2627 = vadd.f32 %v2557, %v2625
        %v2628 = vadd.f32 %v2559, %v2625
        %v2629 = vadd.f32 %v2561, %v2625
        %v2630 = vadd.f32 %v2563, %v2625
        %v2631 = vadd.f32 %v2565, %v2625
        %v2632 = vadd.f32 %v2567, %v2625
        %v2633 = vadd.f32 %v2569, %v2625
        %v2634 = vadd.f32 %v2571, %v2625
        %v2635 = vadd.f32 %v2573, %v2625
        %v2636 = vadd.f32 %v2575, %v2625
        %v2637 = vadd.f32 %v2577, %v2625
        %v2638 = vadd.f32 %v2579, %v2625
        %v2639 = vadd.f32 %v2581, %v2625
        %v2640 = vadd.f32 %v2583, %v2625
        %v2641 = vadd.f32 %v2585, %v2625
        %v2642 = vadd.f32 %v2587, %v2625
        %v2643 = vadd.f32 %v2589, %v2625
        %v2644 = vadd.f32 %v2591, %v2625
        %v2645 = vadd.f32 %v2593, %v2625
        %v2646 = vadd.f32 %v2595, %v2625
        %v2647 = vadd.f32 %v2597, %v2625
        %v2648 = vadd.f32 %v2599, %v2625
        %v2649 = vadd.f32 %v2601, %v2625
        %v2650 = vadd.f32 %v2603, %v2625
        %v2651 = vadd.f32 %v2605, %v2625
        %v2652 = vadd.f32 %v2607, %v2625
        %v2653 = vadd.f32 %v2609, %v2625
        %v2654 = vadd.f32 %v2611, %v2625
        %v2655 = vadd.f32 %v2613, %v2625
        %v2656 = vadd.f32 %v2615, %v2625
        %v2657 = vadd.f32 %v2617, %v2625
        %v2658 = vadd.f32 %v2619, %v2625
        %v2659 = vxor.u32 %v2627, 2147483648
        %v2660 = vxor.u32 %v2628, 2147483648
        %v2661 = vxor.u32 %v2629, 2147483648
        %v2662 = vxor.u32 %v2630, 2147483648
        %v2663 = vxor.u32 %v2631, 2147483648
        %v2664 = vxor.u32 %v2632, 2147483648
        %v2665 = vxor.u32 %v2633, 2147483648
        %v2666 = vxor.u32 %v2634, 2147483648
        %v2667 = vxor.u32 %v2635, 2147483648
        %v2668 = vxor.u32 %v2636, 2147483648
        %v2669 = vxor.u32 %v2637, 2147483648
        %v2670 = vxor.u32 %v2638, 2147483648
        %v2671 = vxor.u32 %v2639, 2147483648
        %v2672 = vxor.u32 %v2640, 2147483648
        %v2673 = vxor.u32 %v2641, 2147483648
        %v2674 = vxor.u32 %v2642, 2147483648
        %v2675 = vxor.u32 %v2643, 2147483648
        %v2676 = vxor.u32 %v2644, 2147483648
        %v2677 = vxor.u32 %v2645, 2147483648
        %v2678 = vxor.u32 %v2646, 2147483648
        %v2679 = vxor.u32 %v2647, 2147483648
        %v2680 = vxor.u32 %v2648, 2147483648
        %v2681 = vxor.u32 %v2649, 2147483648
        %v2682 = vxor.u32 %v2650, 2147483648
        %v2683 = vxor.u32 %v2651, 2147483648
        %v2684 = vxor.u32 %v2652, 2147483648
        %v2685 = vxor.u32 %v2653, 2147483648
        %v2686 = vxor.u32 %v2654, 2147483648
        %v2687 = vxor.u32 %v2655, 2147483648
        %v2688 = vxor.u32 %v2656, 2147483648
        %v2689 = vxor.u32 %v2657, 2147483648
        %v2690 = vxor.u32 %v2658, 2147483648
        %v2691 = vmul.f32 %v2659, 1.442695
        %v2692 = vpow.pop %v2691
        %v2693 = vmul.f32 %v2660, 1.442695
        %v2694 = vpow.pop %v2693
        %v2695 = vmul.f32 %v2661, 1.442695
        %v2696 = vpow.pop %v2695
        %v2697 = vmul.f32 %v2662, 1.442695
        %v2698 = vpow.pop %v2697
        %v2699 = vmul.f32 %v2663, 1.442695
        %v2700 = vpow.pop %v2699
        %v2701 = vmul.f32 %v2664, 1.442695
        %v2702 = vpow.pop %v2701
        %v2703 = vmul.f32 %v2665, 1.442695
        %v2704 = vpow.pop %v2703
        %v2705 = vmul.f32 %v2666, 1.442695
        %v2706 = vpow.pop %v2705
        %v2707 = vmul.f32 %v2667, 1.442695
        %v2708 = vpow.pop %v2707
        %v2709 = vmul.f32 %v2668, 1.442695
        %v2710 = vpow.pop %v2709
        %v2711 = vmul.f32 %v2669, 1.442695
        %v2712 = vpow.pop %v2711
        %v2713 = vmul.f32 %v2670, 1.442695
        %v2714 = vpow.pop %v2713
        %v2715 = vmul.f32 %v2671, 1.442695
        %v2716 = vpow.pop %v2715
        %v2717 = vmul.f32 %v2672, 1.442695
        %v2718 = vpow.pop %v2717
        %v2719 = vmul.f32 %v2673, 1.442695
        %v2720 = vpow.pop %v2719
        %v2721 = vmul.f32 %v2674, 1.442695
        %v2722 = vpow.pop %v2721
        %v2723 = vmul.f32 %v2675, 1.442695
        %v2724 = vpow.pop %v2723
        %v2725 = vmul.f32 %v2676, 1.442695
        %v2726 = vpow.pop %v2725
        %v2727 = vmul.f32 %v2677, 1.442695
        %v2728 = vpow.pop %v2727
        %v2729 = vmul.f32 %v2678, 1.442695
        %v2730 = vpow.pop %v2729
        %v2731 = vmul.f32 %v2679, 1.442695
        %v2732 = vpow.pop %v2731
        %v2733 = vmul.f32 %v2680, 1.442695
        %v2734 = vpow.pop %v2733
        %v2735 = vmul.f32 %v2681, 1.442695
        %v2736 = vpow.pop %v2735
        %v2737 = vmul.f32 %v2682, 1.442695
        %v2738 = vpow.pop %v2737
        %v2739 = vmul.f32 %v2683, 1.442695
        %v2740 = vpow.pop %v2739
        %v2741 = vmul.f32 %v2684, 1.442695
        %v2742 = vpow.pop %v2741
        %v2743 = vmul.f32 %v2685, 1.442695
        %v2744 = vpow.pop %v2743
        %v2745 = vmul.f32 %v2686, 1.442695
        %v2746 = vpow.pop %v2745
        %v2747 = vmul.f32 %v2687, 1.442695
        %v2748 = vpow.pop %v2747
        %v2749 = vmul.f32 %v2688, 1.442695
        %v2750 = vpow.pop %v2749
        %v2751 = vmul.f32 %v2689, 1.442695
        %v2752 = vpow.pop %v2751
        %v2753 = vmul.f32 %v2690, 1.442695
        %v2754 = vpow.pop %v2753
        %v2755 = vadd.f32 %v2692, 1.0
        %v2756 = vadd.f32 %v2694, 1.0
        %v2757 = vadd.f32 %v2696, 1.0
        %v2758 = vadd.f32 %v2698, 1.0
        %v2759 = vadd.f32 %v2700, 1.0
        %v2760 = vadd.f32 %v2702, 1.0
        %v2761 = vadd.f32 %v2704, 1.0
        %v2762 = vadd.f32 %v2706, 1.0
        %v2763 = vadd.f32 %v2708, 1.0
        %v2764 = vadd.f32 %v2710, 1.0
        %v2765 = vadd.f32 %v2712, 1.0
        %v2766 = vadd.f32 %v2714, 1.0
        %v2767 = vadd.f32 %v2716, 1.0
        %v2768 = vadd.f32 %v2718, 1.0
        %v2769 = vadd.f32 %v2720, 1.0
        %v2770 = vadd.f32 %v2722, 1.0
        %v2771 = vadd.f32 %v2724, 1.0
        %v2772 = vadd.f32 %v2726, 1.0
        %v2773 = vadd.f32 %v2728, 1.0
        %v2774 = vadd.f32 %v2730, 1.0
        %v2775 = vadd.f32 %v2732, 1.0
        %v2776 = vadd.f32 %v2734, 1.0
        %v2777 = vadd.f32 %v2736, 1.0
        %v2778 = vadd.f32 %v2738, 1.0
        %v2779 = vadd.f32 %v2740, 1.0
        %v2780 = vadd.f32 %v2742, 1.0
        %v2781 = vadd.f32 %v2744, 1.0
        %v2782 = vadd.f32 %v2746, 1.0
        %v2783 = vadd.f32 %v2748, 1.0
        %v2784 = vadd.f32 %v2750, 1.0
        %v2785 = vadd.f32 %v2752, 1.0
        %v2786 = vadd.f32 %v2754, 1.0
        %v2787 = vrcp.pop %v2755
        %v2788 = vmul.f32 1.0, %v2787
        %v2789 = vrcp.pop %v2756
        %v2790 = vmul.f32 1.0, %v2789
        %v2791 = vrcp.pop %v2757
        %v2792 = vmul.f32 1.0, %v2791
        %v2793 = vrcp.pop %v2758
        %v2794 = vmul.f32 1.0, %v2793
        %v2795 = vrcp.pop %v2759
        %v2796 = vmul.f32 1.0, %v2795
        %v2797 = vrcp.pop %v2760
        %v2798 = vmul.f32 1.0, %v2797
        %v2799 = vrcp.pop %v2761
        %v2800 = vmul.f32 1.0, %v2799
        %v2801 = vrcp.pop %v2762
        %v2802 = vmul.f32 1.0, %v2801
        %v2803 = vrcp.pop %v2763
        %v2804 = vmul.f32 1.0, %v2803
        %v2805 = vrcp.pop %v2764
        %v2806 = vmul.f32 1.0, %v2805
        %v2807 = vrcp.pop %v2765
        %v2808 = vmul.f32 1.0, %v2807
        %v2809 = vrcp.pop %v2766
        %v2810 = vmul.f32 1.0, %v2809
        %v2811 = vrcp.pop %v2767
        %v2812 = vmul.f32 1.0, %v2811
        %v2813 = vrcp.pop %v2768
        %v2814 = vmul.f32 1.0, %v2813
        %v2815 = vrcp.pop %v2769
        %v2816 = vmul.f32 1.0, %v2815
        %v2817 = vrcp.pop %v2770
        %v2818 = vmul.f32 1.0, %v2817
        %v2819 = vrcp.pop %v2771
        %v2820 = vmul.f32 1.0, %v2819
        %v2821 = vrcp.pop %v2772
        %v2822 = vmul.f32 1.0, %v2821
        %v2823 = vrcp.pop %v2773
        %v2824 = vmul.f32 1.0, %v2823
        %v2825 = vrcp.pop %v2774
        %v2826 = vmul.f32 1.0, %v2825
        %v2827 = vrcp.pop %v2775
        %v2828 = vmul.f32 1.0, %v2827
        %v2829 = vrcp.pop %v2776
        %v2830 = vmul.f32 1.0, %v2829
        %v2831 = vrcp.pop %v2777
        %v2832 = vmul.f32 1.0, %v2831
        %v2833 = vrcp.pop %v2778
        %v2834 = vmul.f32 1.0, %v2833
        %v2835 = vrcp.pop %v2779
        %v2836 = vmul.f32 1.0, %v2835
        %v2837 = vrcp.pop %v2780
        %v2838 = vmul.f32 1.0, %v2837
        %v2839 = vrcp.pop %v2781
        %v2840 = vmul.f32 1.0, %v2839
        %v2841 = vrcp.pop %v2782
        %v2842 = vmul.f32 1.0, %v2841
        %v2843 = vrcp.pop %v2783
        %v2844 = vmul.f32 1.0, %v2843
        %v2845 = vrcp.pop %v2784
        %v2846 = vmul.f32 1.0, %v2845
        %v2847 = vrcp.pop %v2785
        %v2848 = vmul.f32 1.0, %v2847
        %v2849 = vrcp.pop %v2786
        %v2850 = vmul.f32 1.0, %v2849
        %v2851 = vadd.bf16 %v844, %v1286
        %v2852 = vadd.bf16 %v845, %v1287
        %v2853 = vadd.bf16 %v846, %v1288
        %v2854 = vadd.bf16 %v847, %v1289
        %v2855 = vadd.bf16 %v848, %v1290
        %v2856 = vadd.bf16 %v849, %v1291
        %v2857 = vadd.bf16 %v850, %v1292
        %v2858 = vadd.bf16 %v851, %v1293
        %v2859 = vadd.bf16 %v852, %v1294
        %v2860 = vadd.bf16 %v853, %v1295
        %v2861 = vadd.bf16 %v854, %v1296
        %v2862 = vadd.bf16 %v855, %v1297
        %v2863 = vadd.bf16 %v856, %v1298
        %v2864 = vadd.bf16 %v857, %v1299
        %v2865 = vadd.bf16 %v858, %v1300
        %v2866 = vadd.bf16 %v859, %v1301
        %v2867 = vunpack.c.l.bf16 %v2851
        %v2868 = vunpack.c.h.bf16 %v2851
        %v2869 = vunpack.c.l.bf16 %v2852
        %v2870 = vunpack.c.h.bf16 %v2852
        %v2871 = vunpack.c.l.bf16 %v2853
        %v2872 = vunpack.c.h.bf16 %v2853
        %v2873 = vunpack.c.l.bf16 %v2854
        %v2874 = vunpack.c.h.bf16 %v2854
        %v2875 = vunpack.c.l.bf16 %v2855
        %v2876 = vunpack.c.h.bf16 %v2855
        %v2877 = vunpack.c.l.bf16 %v2856
        %v2878 = vunpack.c.h.bf16 %v2856
        %v2879 = vunpack.c.l.bf16 %v2857
        %v2880 = vunpack.c.h.bf16 %v2857
        %v2881 = vunpack.c.l.bf16 %v2858
        %v2882 = vunpack.c.h.bf16 %v2858
        %v2883 = vunpack.c.l.bf16 %v2859
        %v2884 = vunpack.c.h.bf16 %v2859
        %v2885 = vunpack.c.l.bf16 %v2860
        %v2886 = vunpack.c.h.bf16 %v2860
        %v2887 = vunpack.c.l.bf16 %v2861
        %v2888 = vunpack.c.h.bf16 %v2861
        %v2889 = vunpack.c.l.bf16 %v2862
        %v2890 = vunpack.c.h.bf16 %v2862
        %v2891 = vunpack.c.l.bf16 %v2863
        %v2892 = vunpack.c.h.bf16 %v2863
        %v2893 = vunpack.c.l.bf16 %v2864
        %v2894 = vunpack.c.h.bf16 %v2864
        %v2895 = vunpack.c.l.bf16 %v2865
        %v2896 = vunpack.c.h.bf16 %v2865
        %v2897 = vunpack.c.l.bf16 %v2866
        %v2898 = vunpack.c.h.bf16 %v2866
        %2900 = vset.pattern.permute.xlu0 0
        %2901 = vperm.xlu0 %2900, %v2788
        %v2902 = vpop.permute.xlu0 %2901
        %2905 = vset.pattern.permute.xlu0 0
        %2906 = vperm.xlu0 %2905, %v2790
        %v2907 = vpop.permute.xlu0 %2906
        %2910 = vset.pattern.permute.xlu0 0
        %2911 = vperm.xlu0 %2910, %v2792
        %v2912 = vpop.permute.xlu0 %2911
        %2915 = vset.pattern.permute.xlu0 0
        %2916 = vperm.xlu0 %2915, %v2794
        %v2917 = vpop.permute.xlu0 %2916
        %2920 = vset.pattern.permute.xlu0 0
        %2921 = vperm.xlu0 %2920, %v2796
        %v2922 = vpop.permute.xlu0 %2921
        %2925 = vset.pattern.permute.xlu0 0
        %2926 = vperm.xlu0 %2925, %v2798
        %v2927 = vpop.permute.xlu0 %2926
        %2930 = vset.pattern.permute.xlu0 0
        %2931 = vperm.xlu0 %2930, %v2800
        %v2932 = vpop.permute.xlu0 %2931
        %2935 = vset.pattern.permute.xlu0 0
        %2936 = vperm.xlu0 %2935, %v2802
        %v2937 = vpop.permute.xlu0 %2936
        %2940 = vset.pattern.permute.xlu0 0
        %2941 = vperm.xlu0 %2940, %v2804
        %v2942 = vpop.permute.xlu0 %2941
        %2945 = vset.pattern.permute.xlu0 0
        %2946 = vperm.xlu0 %2945, %v2806
        %v2947 = vpop.permute.xlu0 %2946
        %2950 = vset.pattern.permute.xlu0 0
        %2951 = vperm.xlu0 %2950, %v2808
        %v2952 = vpop.permute.xlu0 %2951
        %2955 = vset.pattern.permute.xlu0 0
        %2956 = vperm.xlu0 %2955, %v2810
        %v2957 = vpop.permute.xlu0 %2956
        %2960 = vset.pattern.permute.xlu0 0
        %2961 = vperm.xlu0 %2960, %v2812
        %v2962 = vpop.permute.xlu0 %2961
        %2965 = vset.pattern.permute.xlu0 0
        %2966 = vperm.xlu0 %2965, %v2814
        %v2967 = vpop.permute.xlu0 %2966
        %2970 = vset.pattern.permute.xlu0 0
        %2971 = vperm.xlu0 %2970, %v2816
        %v2972 = vpop.permute.xlu0 %2971
        %2975 = vset.pattern.permute.xlu0 0
        %2976 = vperm.xlu0 %2975, %v2818
        %v2977 = vpop.permute.xlu0 %2976
        %2980 = vset.pattern.permute.xlu0 0
        %2981 = vperm.xlu0 %2980, %v2820
        %v2982 = vpop.permute.xlu0 %2981
        %2985 = vset.pattern.permute.xlu0 0
        %2986 = vperm.xlu0 %2985, %v2822
        %v2987 = vpop.permute.xlu0 %2986
        %2990 = vset.pattern.permute.xlu0 0
        %2991 = vperm.xlu0 %2990, %v2824
        %v2992 = vpop.permute.xlu0 %2991
        %2995 = vset.pattern.permute.xlu0 0
        %2996 = vperm.xlu0 %2995, %v2826
        %v2997 = vpop.permute.xlu0 %2996
        %3000 = vset.pattern.permute.xlu0 0
        %3001 = vperm.xlu0 %3000, %v2828
        %v3002 = vpop.permute.xlu0 %3001
        %3005 = vset.pattern.permute.xlu0 0
        %3006 = vperm.xlu0 %3005, %v2830
        %v3007 = vpop.permute.xlu0 %3006
        %3010 = vset.pattern.permute.xlu0 0
        %3011 = vperm.xlu0 %3010, %v2832
        %v3012 = vpop.permute.xlu0 %3011
        %3015 = vset.pattern.permute.xlu0 0
        %3016 = vperm.xlu0 %3015, %v2834
        %v3017 = vpop.permute.xlu0 %3016
        %3020 = vset.pattern.permute.xlu0 0
        %3021 = vperm.xlu0 %3020, %v2836
        %v3022 = vpop.permute.xlu0 %3021
        %3025 = vset.pattern.permute.xlu0 0
        %3026 = vperm.xlu0 %3025, %v2838
        %v3027 = vpop.permute.xlu0 %3026
        %3030 = vset.pattern.permute.xlu0 0
        %3031 = vperm.xlu0 %3030, %v2840
        %v3032 = vpop.permute.xlu0 %3031
        %3035 = vset.pattern.permute.xlu0 0
        %3036 = vperm.xlu0 %3035, %v2842
        %v3037 = vpop.permute.xlu0 %3036
        %3040 = vset.pattern.permute.xlu0 0
        %3041 = vperm.xlu0 %3040, %v2844
        %v3042 = vpop.permute.xlu0 %3041
        %3045 = vset.pattern.permute.xlu0 0
        %3046 = vperm.xlu0 %3045, %v2846
        %v3047 = vpop.permute.xlu0 %3046
        %3050 = vset.pattern.permute.xlu0 0
        %3051 = vperm.xlu0 %3050, %v2848
        %v3052 = vpop.permute.xlu0 %3051
        %3055 = vset.pattern.permute.xlu0 0
        %3056 = vperm.xlu0 %3055, %v2850
        %v3057 = vpop.permute.xlu0 %3056
        %v3059 = vmul.f32 %v2902, %v2867
        %v3060 = vmul.f32 %v2907, %v2868
        %v3061 = vmul.f32 %v2912, %v2869
        %v3062 = vmul.f32 %v2917, %v2870
        %v3063 = vmul.f32 %v2922, %v2871
        %v3064 = vmul.f32 %v2927, %v2872
        %v3065 = vmul.f32 %v2932, %v2873
        %v3066 = vmul.f32 %v2937, %v2874
        %v3067 = vmul.f32 %v2942, %v2875
        %v3068 = vmul.f32 %v2947, %v2876
        %v3069 = vmul.f32 %v2952, %v2877
        %v3070 = vmul.f32 %v2957, %v2878
        %v3071 = vmul.f32 %v2962, %v2879
        %v3072 = vmul.f32 %v2967, %v2880
        %v3073 = vmul.f32 %v2972, %v2881
        %v3074 = vmul.f32 %v2977, %v2882
        %v3075 = vmul.f32 %v2982, %v2883
        %v3076 = vmul.f32 %v2987, %v2884
        %v3077 = vmul.f32 %v2992, %v2885
        %v3078 = vmul.f32 %v2997, %v2886
        %v3079 = vmul.f32 %v3002, %v2887
        %v3080 = vmul.f32 %v3007, %v2888
        %v3081 = vmul.f32 %v3012, %v2889
        %v3082 = vmul.f32 %v3017, %v2890
        %v3083 = vmul.f32 %v3022, %v2891
        %v3084 = vmul.f32 %v3027, %v2892
        %v3085 = vmul.f32 %v3032, %v2893
        %v3086 = vmul.f32 %v3037, %v2894
        %v3087 = vmul.f32 %v3042, %v2895
        %v3088 = vmul.f32 %v3047, %v2896
        %v3089 = vmul.f32 %v3052, %v2897
        %v3090 = vmul.f32 %v3057, %v2898
        %v3091 = vpack.c.bf16 %v3060, %v3059
        %v3092 = vpack.c.bf16 %v3062, %v3061
        %v3093 = vpack.c.bf16 %v3064, %v3063
        %v3094 = vpack.c.bf16 %v3066, %v3065
        %v3095 = vpack.c.bf16 %v3068, %v3067
        %v3096 = vpack.c.bf16 %v3070, %v3069
        %v3097 = vpack.c.bf16 %v3072, %v3071
        %v3098 = vpack.c.bf16 %v3074, %v3073
        %v3099 = vpack.c.bf16 %v3076, %v3075
        %v3100 = vpack.c.bf16 %v3078, %v3077
        %v3101 = vpack.c.bf16 %v3080, %v3079
        %v3102 = vpack.c.bf16 %v3082, %v3081
        %v3103 = vpack.c.bf16 %v3084, %v3083
        %v3104 = vpack.c.bf16 %v3086, %v3085
        %v3105 = vpack.c.bf16 %v3088, %v3087
        %v3106 = vpack.c.bf16 %v3090, %v3089
        %3107 = vset.pattern.permute.xlu0 3
        %3108 = vperm.xlu0 %3107, %v387
        %v3109 = vpop.permute.xlu0 %3108
        %3110 = vset.pattern.permute.xlu0 3
        %3111 = vperm.xlu0 %3110, %v388
        %v3112 = vpop.permute.xlu0 %3111
        %3113 = vset.pattern.permute.xlu0 3
        %3114 = vperm.xlu0 %3113, %v389
        %v3115 = vpop.permute.xlu0 %3114
        %3116 = vset.pattern.permute.xlu0 3
        %3117 = vperm.xlu0 %3116, %v390
        %v3118 = vpop.permute.xlu0 %3117
        %3119 = vset.pattern.permute.xlu0 3
        %3120 = vperm.xlu0 %3119, %v391
        %v3121 = vpop.permute.xlu0 %3120
        %3122 = vset.pattern.permute.xlu0 3
        %3123 = vperm.xlu0 %3122, %v392
        %v3124 = vpop.permute.xlu0 %3123
        %3125 = vset.pattern.permute.xlu0 3
        %3126 = vperm.xlu0 %3125, %v393
        %v3127 = vpop.permute.xlu0 %3126
        %3128 = vset.pattern.permute.xlu0 3
        %3129 = vperm.xlu0 %3128, %v394
        %v3130 = vpop.permute.xlu0 %3129
        %3131 = vset.pattern.permute.xlu0 3
        %3132 = vperm.xlu0 %3131, %v395
        %v3133 = vpop.permute.xlu0 %3132
        %3134 = vset.pattern.permute.xlu0 3
        %3135 = vperm.xlu0 %3134, %v396
        %v3136 = vpop.permute.xlu0 %3135
        %3137 = vset.pattern.permute.xlu0 3
        %3138 = vperm.xlu0 %3137, %v397
        %v3139 = vpop.permute.xlu0 %3138
        %3140 = vset.pattern.permute.xlu0 3
        %3141 = vperm.xlu0 %3140, %v398
        %v3142 = vpop.permute.xlu0 %3141
        %3143 = vset.pattern.permute.xlu0 3
        %3144 = vperm.xlu0 %3143, %v399
        %v3145 = vpop.permute.xlu0 %3144
        %3146 = vset.pattern.permute.xlu0 3
        %3147 = vperm.xlu0 %3146, %v400
        %v3148 = vpop.permute.xlu0 %3147
        %3149 = vset.pattern.permute.xlu0 3
        %3150 = vperm.xlu0 %3149, %v401
        %v3151 = vpop.permute.xlu0 %3150
        %3152 = vset.pattern.permute.xlu0 3
        %3153 = vperm.xlu0 %3152, %v402
        %v3154 = vpop.permute.xlu0 %3153
        %3155 = vset.pattern.permute.xlu0 3
        %3156 = vperm.xlu0 %3155, %v403
        %v3157 = vpop.permute.xlu0 %3156
        %3158 = vset.pattern.permute.xlu0 3
        %3159 = vperm.xlu0 %3158, %v404
        %v3160 = vpop.permute.xlu0 %3159
        %3161 = vset.pattern.permute.xlu0 3
        %3162 = vperm.xlu0 %3161, %v405
        %v3163 = vpop.permute.xlu0 %3162
        %3164 = vset.pattern.permute.xlu0 3
        %3165 = vperm.xlu0 %3164, %v406
        %v3166 = vpop.permute.xlu0 %3165
        %3167 = vset.pattern.permute.xlu0 3
        %3168 = vperm.xlu0 %3167, %v407
        %v3169 = vpop.permute.xlu0 %3168
        %3170 = vset.pattern.permute.xlu0 3
        %3171 = vperm.xlu0 %3170, %v408
        %v3172 = vpop.permute.xlu0 %3171
        %3173 = vset.pattern.permute.xlu0 3
        %3174 = vperm.xlu0 %3173, %v409
        %v3175 = vpop.permute.xlu0 %3174
        %3176 = vset.pattern.permute.xlu0 3
        %3177 = vperm.xlu0 %3176, %v410
        %v3178 = vpop.permute.xlu0 %3177
        %3179 = vset.pattern.permute.xlu0 3
        %3180 = vperm.xlu0 %3179, %v411
        %v3181 = vpop.permute.xlu0 %3180
        %3182 = vset.pattern.permute.xlu0 3
        %3183 = vperm.xlu0 %3182, %v412
        %v3184 = vpop.permute.xlu0 %3183
        %3185 = vset.pattern.permute.xlu0 3
        %3186 = vperm.xlu0 %3185, %v413
        %v3187 = vpop.permute.xlu0 %3186
        %3188 = vset.pattern.permute.xlu0 3
        %3189 = vperm.xlu0 %3188, %v414
        %v3190 = vpop.permute.xlu0 %3189
        %3191 = vset.pattern.permute.xlu0 3
        %3192 = vperm.xlu0 %3191, %v415
        %v3193 = vpop.permute.xlu0 %3192
        %3194 = vset.pattern.permute.xlu0 3
        %3195 = vperm.xlu0 %3194, %v416
        %v3196 = vpop.permute.xlu0 %3195
        %3197 = vset.pattern.permute.xlu0 3
        %3198 = vperm.xlu0 %3197, %v417
        %v3199 = vpop.permute.xlu0 %3198
        %3200 = vset.pattern.permute.xlu0 3
        %3201 = vperm.xlu0 %3200, %v418
        %v3202 = vpop.permute.xlu0 %3201
        %vm3203 = vcmp.eq.s32.totalorder %v420, %v3109
        %vm3204 = vcmp.eq.s32.totalorder %v420, %v3112
        %vm3205 = vcmp.eq.s32.totalorder %v420, %v3115
        %vm3206 = vcmp.eq.s32.totalorder %v420, %v3118
        %vm3207 = vcmp.eq.s32.totalorder %v420, %v3121
        %vm3208 = vcmp.eq.s32.totalorder %v420, %v3124
        %vm3209 = vcmp.eq.s32.totalorder %v420, %v3127
        %vm3210 = vcmp.eq.s32.totalorder %v420, %v3130
        %vm3211 = vcmp.eq.s32.totalorder %v420, %v3133
        %vm3212 = vcmp.eq.s32.totalorder %v420, %v3136
        %vm3213 = vcmp.eq.s32.totalorder %v420, %v3139
        %vm3214 = vcmp.eq.s32.totalorder %v420, %v3142
        %vm3215 = vcmp.eq.s32.totalorder %v420, %v3145
        %vm3216 = vcmp.eq.s32.totalorder %v420, %v3148
        %vm3217 = vcmp.eq.s32.totalorder %v420, %v3151
        %vm3218 = vcmp.eq.s32.totalorder %v420, %v3154
        %vm3219 = vcmp.eq.s32.totalorder %v420, %v3157
        %vm3220 = vcmp.eq.s32.totalorder %v420, %v3160
        %vm3221 = vcmp.eq.s32.totalorder %v420, %v3163
        %vm3222 = vcmp.eq.s32.totalorder %v420, %v3166
        %vm3223 = vcmp.eq.s32.totalorder %v420, %v3169
        %vm3224 = vcmp.eq.s32.totalorder %v420, %v3172
        %vm3225 = vcmp.eq.s32.totalorder %v420, %v3175
        %vm3226 = vcmp.eq.s32.totalorder %v420, %v3178
        %vm3227 = vcmp.eq.s32.totalorder %v420, %v3181
        %vm3228 = vcmp.eq.s32.totalorder %v420, %v3184
        %vm3229 = vcmp.eq.s32.totalorder %v420, %v3187
        %vm3230 = vcmp.eq.s32.totalorder %v420, %v3190
        %vm3231 = vcmp.eq.s32.totalorder %v420, %v3193
        %vm3232 = vcmp.eq.s32.totalorder %v420, %v3196
        %vm3233 = vcmp.eq.s32.totalorder %v420, %v3199
        %vm3234 = vcmp.eq.s32.totalorder %v420, %v3202
        %v3235 = vsel %vm3203, 1, 0
        %v3236 = vsel %vm3204, 1, 0
        %v3237 = vsel %vm3205, 1, 0
        %v3238 = vsel %vm3206, 1, 0
        %v3239 = vsel %vm3207, 1, 0
        %v3240 = vsel %vm3208, 1, 0
        %v3241 = vsel %vm3209, 1, 0
        %v3242 = vsel %vm3210, 1, 0
        %v3243 = vsel %vm3211, 1, 0
        %v3244 = vsel %vm3212, 1, 0
        %v3245 = vsel %vm3213, 1, 0
        %v3246 = vsel %vm3214, 1, 0
        %v3247 = vsel %vm3215, 1, 0
        %v3248 = vsel %vm3216, 1, 0
        %v3249 = vsel %vm3217, 1, 0
        %v3250 = vsel %vm3218, 1, 0
        %v3251 = vsel %vm3219, 1, 0
        %v3252 = vsel %vm3220, 1, 0
        %v3253 = vsel %vm3221, 1, 0
        %v3254 = vsel %vm3222, 1, 0
        %v3255 = vsel %vm3223, 1, 0
        %v3256 = vsel %vm3224, 1, 0
        %v3257 = vsel %vm3225, 1, 0
        %v3258 = vsel %vm3226, 1, 0
        %v3259 = vsel %vm3227, 1, 0
        %v3260 = vsel %vm3228, 1, 0
        %v3261 = vsel %vm3229, 1, 0
        %v3262 = vsel %vm3230, 1, 0
        %v3263 = vsel %vm3231, 1, 0
        %v3264 = vsel %vm3232, 1, 0
        %v3265 = vsel %vm3233, 1, 0
        %v3266 = vsel %vm3234, 1, 0
        %v3267 = vcvt.s32.f32 %v3235
        %v3268 = vcvt.s32.f32 %v3236
        %v3269 = vcvt.s32.f32 %v3237
        %v3270 = vcvt.s32.f32 %v3238
        %v3271 = vcvt.s32.f32 %v3239
        %v3272 = vcvt.s32.f32 %v3240
        %v3273 = vcvt.s32.f32 %v3241
        %v3274 = vcvt.s32.f32 %v3242
        %v3275 = vcvt.s32.f32 %v3243
        %v3276 = vcvt.s32.f32 %v3244
        %v3277 = vcvt.s32.f32 %v3245
        %v3278 = vcvt.s32.f32 %v3246
        %v3279 = vcvt.s32.f32 %v3247
        %v3280 = vcvt.s32.f32 %v3248
        %v3281 = vcvt.s32.f32 %v3249
        %v3282 = vcvt.s32.f32 %v3250
        %v3283 = vcvt.s32.f32 %v3251
        %v3284 = vcvt.s32.f32 %v3252
        %v3285 = vcvt.s32.f32 %v3253
        %v3286 = vcvt.s32.f32 %v3254
        %v3287 = vcvt.s32.f32 %v3255
        %v3288 = vcvt.s32.f32 %v3256
        %v3289 = vcvt.s32.f32 %v3257
        %v3290 = vcvt.s32.f32 %v3258
        %v3291 = vcvt.s32.f32 %v3259
        %v3292 = vcvt.s32.f32 %v3260
        %v3293 = vcvt.s32.f32 %v3261
        %v3294 = vcvt.s32.f32 %v3262
        %v3295 = vcvt.s32.f32 %v3263
        %v3296 = vcvt.s32.f32 %v3264
        %v3297 = vcvt.s32.f32 %v3265
        %v3298 = vcvt.s32.f32 %v3266
        %v3299 = vpack.c.bf16 %v3268, %v3267
        %v3300 = vpack.c.bf16 %v3270, %v3269
        %v3301 = vpack.c.bf16 %v3272, %v3271
        %v3302 = vpack.c.bf16 %v3274, %v3273
        %v3303 = vpack.c.bf16 %v3276, %v3275
        %v3304 = vpack.c.bf16 %v3278, %v3277
        %v3305 = vpack.c.bf16 %v3280, %v3279
        %v3306 = vpack.c.bf16 %v3282, %v3281
        %v3307 = vpack.c.bf16 %v3284, %v3283
        %v3308 = vpack.c.bf16 %v3286, %v3285
        %v3309 = vpack.c.bf16 %v3288, %v3287
        %v3310 = vpack.c.bf16 %v3290, %v3289
        %v3311 = vpack.c.bf16 %v3292, %v3291
        %v3312 = vpack.c.bf16 %v3294, %v3293
        %v3313 = vpack.c.bf16 %v3296, %v3295
        %v3314 = vpack.c.bf16 %v3298, %v3297
        %v3315 = vld [vmem:[%s372] sm:$0xff]
        %3316 = vxpose.xlu0.c.b16.start [1/8] %v3299, 128
        %3317 = vxpose.xlu0.c.b16.cont [2/8] %v3300, 128
        %3318 = vxpose.xlu0.c.b16.cont [3/8] %v3301, 128
        %3319 = vxpose.xlu0.c.b16.cont [4/8] %v3302, 128
        %3320 = vxpose.xlu0.c.b16.cont [5/8] %v3303, 128
        %3321 = vxpose.xlu0.c.b16.cont [6/8] %v3304, 128
        %3322 = vxpose.xlu0.c.b16.cont [7/8] %v3305, 128
        %3323 = vxpose.xlu0.c.b16.end [8/8] %v3306, 128
        %v3324 = vpop.trf.xlu0
        %v3325 = vpop.trf.xlu0
        %v3326 = vpop.trf.xlu0
        %v3327 = vpop.trf.xlu0
        %v3328 = vpop.trf.xlu0
        %v3329 = vpop.trf.xlu0
        %v3330 = vpop.trf.xlu0
        %v3331 = vpop.trf.xlu0
        %3332 = vxpose.xlu0.c.b16.start [1/8] %v3307, 128
        %3333 = vxpose.xlu0.c.b16.cont [2/8] %v3308, 128
        %3334 = vxpose.xlu0.c.b16.cont [3/8] %v3309, 128
        %3335 = vxpose.xlu0.c.b16.cont [4/8] %v3310, 128
        %3336 = vxpose.xlu0.c.b16.cont [5/8] %v3311, 128
        %3337 = vxpose.xlu0.c.b16.cont [6/8] %v3312, 128
        %3338 = vxpose.xlu0.c.b16.cont [7/8] %v3313, 128
        %3339 = vxpose.xlu0.c.b16.end [8/8] %v3314, 128
        %v3340 = vpop.trf.xlu0
        %v3341 = vpop.trf.xlu0
        %v3342 = vpop.trf.xlu0
        %v3343 = vpop.trf.xlu0
        %v3344 = vpop.trf.xlu0
        %v3345 = vpop.trf.xlu0
        %v3346 = vpop.trf.xlu0
        %v3347 = vpop.trf.xlu0
        %3348 = vmatprep.subr.bf16.mxu0 0
        %3349 = vmatpush1.bf16.msra.mxu0 %v3098
        %3350 = vmatprep.subr.bf16.mxu0 0
        %3351 = vmatpush1.bf16.msra.mxu0 %v3097
        %3352 = vmatprep.subr.bf16.mxu0 0
        %3353 = vmatpush1.bf16.msra.mxu0 %v3096
        %3354 = vmatprep.subr.bf16.mxu0 0
        %3355 = vmatpush1.bf16.msra.mxu0 %v3095
        %3356 = vmatprep.subr.bf16.mxu0 0
        %3357 = vmatpush1.bf16.msra.mxu0 %v3094
        %3358 = vmatprep.subr.bf16.mxu0 0
        %3359 = vmatpush1.bf16.msra.mxu0 %v3093
        %3360 = vmatprep.subr.bf16.mxu0 0
        %3361 = vmatpush1.bf16.msra.mxu0 %v3092
        %3362 = vmatprep.subr.bf16.mxu0 0
        %3363 = vmatpush1.bf16.msra.mxu0 %v3091
        %3364 = vmatprep.subr.bf16.mxu0 0
        %3365 = vmatpush2.bf16.msra.mxu0 %v3106
        %3366 = vmatprep.subr.bf16.mxu0 0
        %3367 = vmatpush2.bf16.msra.mxu0 %v3105
        %3368 = vmatprep.subr.bf16.mxu0 0
        %3369 = vmatpush2.bf16.msra.mxu0 %v3104
        %3370 = vmatprep.subr.bf16.mxu0 0
        %3371 = vmatpush2.bf16.msra.mxu0 %v3103
        %3372 = vmatprep.subr.bf16.mxu0 0
        %3373 = vmatpush2.bf16.msra.mxu0 %v3102
        %3374 = vmatprep.subr.bf16.mxu0 0
        %3375 = vmatpush2.bf16.msra.mxu0 %v3101
        %3376 = vmatprep.subr.bf16.mxu0 0
        %3377 = vmatpush2.bf16.msra.mxu0 %v3100
        %3378 = vmatprep.subr.bf16.mxu0 0
        %3379 = vmatpush2.bf16.msra.mxu0 %v3099
        %3380 = vmatprep.mubr.bf16.mxu0 %v3340
        %3381 = vmatmul.mubr.bf16.gmra.mxu0 %v3324
        %v3382 = vpop.f32.mrf.mxu0
        %v3383 = vadd.f32 0.0, %v3382
        %v3384 = vpop.f32.mrf.mxu0
        %v3385 = vpop.f32.mrf.mxu0
        %v3386 = vpop.f32.mrf.mxu0
        %3387 = vdwg.mxu0
        %v3388 = vadd.f32 %v3315, %v3383
        %3389 = vst [vmem:[%s372] sm:$0xff] %v3388
        %s3390 = sand.u32 %s263, 1
        %s3391 = scalar_lea.sflag [#allocation4], %s3390
        %s3392 = sand.u32 %s263, 1
        %s3393 = smul.addr %s3392, 8
        %s3394 = scalar_lea.vmem [#allocation3], %s3393
        // Predicated region
        $region65: #{tpu_custom_call.1} parent=59 // pred_check
          %p3395 = pneg %p273
        $region66: #{tpu_custom_call.1} parent=59 // pred_check_branch
          %3397 = sbr.rel (%p3395) target = $region68
        $region67: #{tpu_custom_call.1} parent=59 // pred_region
          %s3399 = ssub.s32 128, 128
          %3400 = vsyncadd %s3391, %s3399
          %s3401 = smul.addr %s30, 128
          %s3402 = scalar_lea.hbm %s10, %s3401
          %s3404 = sshll.u32 %s3394, 4
          %s3405 = int_to_ptr.vmem [resolvable:$true] %s3404
          %3407 = dma.vmem_to_hbm [thread:$0]  %s3405, 128, %s3402, %s3391
        $region68: #{tpu_custom_call.1} parent=59 // pred_fallthru
          _
      $region60: #{tpu_custom_call.1} parent=5 // pred_fallthru
        _
      %p3408 = scmp.le.s32.totalorder 2, %s21
      // Predicated region
      $region69: #{tpu_custom_call.1} parent=5 // pred_check
        %p3409 = pneg %p3408
      $region70: #{tpu_custom_call.1} parent=5 // pred_check_branch
        %3411 = sbr.rel (%p3409) target = $region72
      $region71: #{tpu_custom_call.1} parent=5 // pred_region
        %s3412 = ssub.s32 %s21, 2
        // Predicated region
        $region73: #{tpu_custom_call.1} parent=71 // pred_check
          %p3413 = pneg %p279
        $region74: #{tpu_custom_call.1} parent=71 // pred_check_branch
          %3415 = sbr.rel (%p3413) target = $region76
        $region75: #{tpu_custom_call.1} parent=71 // pred_region
          %s3416 = sand.u32 %s264, 1
          %s3417 = scalar_lea.sflag [#allocation4], %s3416
          %s3418 = sand.u32 %s264, 1
          %s3419 = smul.addr %s3418, 8
          %s3420 = scalar_lea.vmem [#allocation3], %s3419
          %3421 = dma.done %s3417, 128
        $region76: #{tpu_custom_call.1} parent=71 // pred_fallthru
          _
      $region72: #{tpu_custom_call.1} parent=5 // pred_fallthru
        _
    $region6: #{tpu_custom_call.1} parent=1 // loop_footer
      %s25 = sadd.s32 1, %s21
    $region7: #{tpu_custom_call.1} parent=1 // loop_footer_branch
      %20 = sbr.rel target = $region3
    $region8: #{tpu_custom_call.1} parent=1 // loop_exit
      _
    %3422 = vsyncpa [#allocation4], 1
    %s3423 = scalar_lea.sflag [#allocation4], 1
    %3424 = vsyncpa %s3423, 1

// kernel: tpu_custom_call.1
$region0: #{tpu_custom_call.1}
  #allocation0 [shape = 'u32[]', space=smem, size = 0x4, offset = 0x4, fixed_abs, tag = 'smem constant byte address 0x4 - core index']
  #allocation1 [shape = 'u32[144,128]{1,0:T(1,128)}', space=vmem, size = 0x12000, scoped, tag = 'internal scratch']
  #allocation2 [shape = 'f32[1,1]{1,0:T(1,128)S(1)}', space=vmem, size = 0x200, scoped, tag = 'scoped memory for tpu_custom_call.1']
  %s0 = inlined_call_operand.vmem [shape: s32[512,4], index: 0, kind: input, shape index: {}]
  %s1 = inlined_call_operand.vmem [shape: bf16[8,128], index: 1, kind: input, shape index: {}]
  %s2 = inlined_call_operand.vmem [shape: bf16[16,128], index: 2, kind: input, shape index: {}]
  %s3 = inlined_call_operand.vmem [shape: bf16[8,128], index: 3, kind: input, shape index: {}]
  %s4 = inlined_call_operand.vmem [shape: bf16[128,128], index: 4, kind: input, shape index: {}]
  %s5 = inlined_call_operand.vmem [shape: bf16[128,128], index: 5, kind: input, shape index: {}]
  %s6 = inlined_call_operand.vmem [shape: bf16[128,128], index: 6, kind: input, shape index: {}]
  %s7 = inlined_call_operand.vmem [shape: f32[1,128], index: 7, kind: input, shape index: {}]
  %s8 = inlined_call_operand.vmem [shape: f32[1,128], index: 8, kind: input, shape index: {}]
  %s9 = inlined_call_operand.<no memory space> [shape: f32[1,1], index: 9, kind: input, shape index: {}]
  %s10 = inlined_call_operand.hbm [shape: f32[2,8,128], index: 10, kind: output, shape index: {}]
  %s11 = sld [smem:[#allocation0]]
  $region77: #{tpu_custom_call.1} parent=0
    _
  %s13 = ssub.s32 1, %s11
  %s14 = scalar_select 0, %s13, %s11
  %v15 = vstv %s9
  %16 = vst [vmem:[#allocation2] sm:$0x1] %v15
  $region1: #{tpu_custom_call.1} parent=0
    #allocation3 [shape = 'u8[8192]{0}', space=vmem, size = 0x2000, scoped, tag = 'output window, operand 0']
    #allocation4 [shape = 's32[2]{0}', space=sflag, size = 0x8, scoped, tag = 'scoped memory for tpu_custom_call.1']
    %17 = vsyncpa [#allocation4], 0
    %s18 = scalar_lea.sflag [#allocation4], 1
    %19 = vsyncpa %s18, 0
    loop: start=0, step=1, limit=4
    $region2: #{tpu_custom_call.1} parent=1 // loop_pre_header
      _
    $region3: #{tpu_custom_call.1} parent=1 // loop_header
      %s21 = sphi 0, %s25
      %p22 = scmp.ge.s32.totalorder %s21, 4
      %s28 = sphi 0, %s40
      %s29 = sphi 0, %s36
      %s30 = sphi 0, %s28
      %s31 = sphi 0, %s29
      %s32 = sphi 0, %s30
      %s33 = sphi 0, %s31
      %s45 = sphi 0, %s47
      %s48 = sphi 0, %s45
      %s49 = sphi 0, %s48
      %s65 = sphi 0, %s49
      %s69 = sphi 0, %s69
      %s71 = sphi 0, %s69
      %s72 = sphi 0, %s71
      %s86 = sphi 0, %s72
      %s90 = sphi 0, %s90
      %s92 = sphi 0, %s90
      %s93 = sphi 0, %s92
      %s107 = sphi 0, %s93
      %s111 = sphi 0, %s111
      %s113 = sphi 0, %s111
      %s114 = sphi 0, %s113
      %s128 = sphi 0, %s114
      %s132 = sphi 0, %s132
      %s134 = sphi 0, %s132
      %s135 = sphi 0, %s134
      %s149 = sphi 0, %s135
      %s153 = sphi 0, %s153
      %s155 = sphi 0, %s153
      %s156 = sphi 0, %s155
      %s170 = sphi 0, %s156
      %s174 = sphi 0, %s174
      %s176 = sphi 0, %s174
      %s177 = sphi 0, %s176
      %s191 = sphi 0, %s177
      %s195 = sphi 0, %s195
      %s197 = sphi 0, %s195
      %s198 = sphi 0, %s197
      %s212 = sphi 0, %s198
      %s216 = sphi 0, %s216
      %s218 = sphi 0, %s216
      %s219 = sphi 0, %s218
      %s233 = sphi 0, %s219
      %s237 = sphi 0, %s237
      %s239 = sphi 0, %s237
      %s240 = sphi 0, %s239
      %s254 = sphi 0, %s240
      %s260 = sphi 0, %s262
      %s263 = sphi 0, %s260
      %s264 = sphi 0, %s263
      %s280 = sphi 0, %s264
    $region4: #{tpu_custom_call.1} parent=1 // loop_header_branch
      %24 = sbr.rel (%p22) target = $region8
    $region5: #{tpu_custom_call.1} parent=1 // loop_body
      %s26 = ssub.s32 %s21, 1
      %s27 = ssub.s32 %s21, 2
      %s34 = sadd.s32 1, %s29
      %p35 = scmp.ge.s32.totalorder %s34, 1
      %s36 = scalar_select %p35, 0, %s34
      %s37 = sadd.s32 1, %s28
      %s38 = scalar_select %p35, %s37, %s28
      %p39 = scmp.ge.s32.totalorder %s38, 2
      %s40 = scalar_select %p39, 0, %s38
      %s41 = sadd.s32 %s28, %s29
      %s42 = sadd.s32 %s40, %s36
      %s43 = ssub.s32 %s41, %s42
      %p44 = scmp.eq.s32.totalorder %s43, 0
      %s46 = sadd.s32 %s45, 1
      %s47 = scalar_select %p44, %s45, %s46
      %p50 = pneg %p44
      %p51 = scmp.eq.s32.totalorder %s21, 1
      %p52 = por %p50, %p51
      %p53 = scmp.ne.s32.totalorder %s45, %s48
      %p54 = scmp.eq.s32.totalorder %s21, 0
      %p55 = por %p53, %p54
      %p56 = scmp.ne.s32.totalorder %s45, %s48
      %p57 = scmp.eq.s32.totalorder %s26, 1
      %p58 = por %p56, %p57
      %p59 = scmp.ne.s32.totalorder %s48, %s49
      %p60 = scmp.eq.s32.totalorder %s26, 0
      %p61 = por %p59, %p60
      %p62 = scmp.ne.s32.totalorder %s48, %s49
      %p63 = scmp.eq.s32.totalorder %s27, 1
      %p64 = por %p62, %p63
      %p66 = scmp.ne.s32.totalorder %s49, %s65
      %p67 = scmp.eq.s32.totalorder %s27, 0
      %p68 = por %p66, %p67
      %s70 = sadd.s32 %s69, 1
      %p73 = scmp.eq.s32.totalorder %s21, 1
      %p74 = scmp.ne.s32.totalorder %s69, %s71
      %p75 = scmp.eq.s32.totalorder %s21, 0
      %p76 = por %p74, %p75
      %p77 = scmp.ne.s32.totalorder %s69, %s71
      %p78 = scmp.eq.s32.totalorder %s26, 1
      %p79 = por %p77, %p78
      %p80 = scmp.ne.s32.totalorder %s71, %s72
      %p81 = scmp.eq.s32.totalorder %s26, 0
      %p82 = por %p80, %p81
      %p83 = scmp.ne.s32.totalorder %s71, %s72
      %p84 = scmp.eq.s32.totalorder %s27, 1
      %p85 = por %p83, %p84
      %p87 = scmp.ne.s32.totalorder %s72, %s86
      %p88 = scmp.eq.s32.totalorder %s27, 0
      %p89 = por %p87, %p88
      %s91 = sadd.s32 %s90, 1
      %p94 = scmp.eq.s32.totalorder %s21, 1
      %p95 = scmp.ne.s32.totalorder %s90, %s92
      %p96 = scmp.eq.s32.totalorder %s21, 0
      %p97 = por %p95, %p96
      %p98 = scmp.ne.s32.totalorder %s90, %s92
      %p99 = scmp.eq.s32.totalorder %s26, 1
      %p100 = por %p98, %p99
      %p101 = scmp.ne.s32.totalorder %s92, %s93
      %p102 = scmp.eq.s32.totalorder %s26, 0
      %p103 = por %p101, %p102
      %p104 = scmp.ne.s32.totalorder %s92, %s93
      %p105 = scmp.eq.s32.totalorder %s27, 1
      %p106 = por %p104, %p105
      %p108 = scmp.ne.s32.totalorder %s93, %s107
      %p109 = scmp.eq.s32.totalorder %s27, 0
      %p110 = por %p108, %p109
      %s112 = sadd.s32 %s111, 1
      %p115 = scmp.eq.s32.totalorder %s21, 1
      %p116 = scmp.ne.s32.totalorder %s111, %s113
      %p117 = scmp.eq.s32.totalorder %s21, 0
      %p118 = por %p116, %p117
      %p119 = scmp.ne.s32.totalorder %s111, %s113
      %p120 = scmp.eq.s32.totalorder %s26, 1
      %p121 = por %p119, %p120
      %p122 = scmp.ne.s32.totalorder %s113, %s114
      %p123 = scmp.eq.s32.totalorder %s26, 0
      %p124 = por %p122, %p123
      %p125 = scmp.ne.s32.totalorder %s113, %s114
      %p126 = scmp.eq.s32.totalorder %s27, 1
      %p127 = por %p125, %p126
      %p129 = scmp.ne.s32.totalorder %s114, %s128
      %p130 = scmp.eq.s32.totalorder %s27, 0
      %p131 = por %p129, %p130
      %s133 = sadd.s32 %s132, 1
      %p136 = scmp.eq.s32.totalorder %s21, 1
      %p137 = scmp.ne.s32.totalorder %s132, %s134
      %p138 = scmp.eq.s32.totalorder %s21, 0
      %p139 = por %p137, %p138
      %p140 = scmp.ne.s32.totalorder %s132, %s134
      %p141 = scmp.eq.s32.totalorder %s26, 1
      %p142 = por %p140, %p141
      %p143 = scmp.ne.s32.totalorder %s134, %s135
      %p144 = scmp.eq.s32.totalorder %s26, 0
      %p145 = por %p143, %p144
      %p146 = scmp.ne.s32.totalorder %s134, %s135
      %p147 = scmp.eq.s32.totalorder %s27, 1
      %p148 = por %p146, %p147
      %p150 = scmp.ne.s32.totalorder %s135, %s149
      %p151 = scmp.eq.s32.totalorder %s27, 0
      %p152 = por %p150, %p151
      %s154 = sadd.s32 %s153, 1
      %p157 = scmp.eq.s32.totalorder %s21, 1
      %p158 = scmp.ne.s32.totalorder %s153, %s155
      %p159 = scmp.eq.s32.totalorder %s21, 0
      %p160 = por %p158, %p159
      %p161 = scmp.ne.s32.totalorder %s153, %s155
      %p162 = scmp.eq.s32.totalorder %s26, 1
      %p163 = por %p161, %p162
      %p164 = scmp.ne.s32.totalorder %s155, %s156
      %p165 = scmp.eq.s32.totalorder %s26, 0
      %p166 = por %p164, %p165
      %p167 = scmp.ne.s32.totalorder %s155, %s156
      %p168 = scmp.eq.s32.totalorder %s27, 1
      %p169 = por %p167, %p168
      %p171 = scmp.ne.s32.totalorder %s156, %s170
      %p172 = scmp.eq.s32.totalorder %s27, 0
      %p173 = por %p171, %p172
      %s175 = sadd.s32 %s174, 1
      %p178 = scmp.eq.s32.totalorder %s21, 1
      %p179 = scmp.ne.s32.totalorder %s174, %s176
      %p180 = scmp.eq.s32.totalorder %s21, 0
      %p181 = por %p179, %p180
      %p182 = scmp.ne.s32.totalorder %s174, %s176
      %p183 = scmp.eq.s32.totalorder %s26, 1
      %p184 = por %p182, %p183
      %p185 = scmp.ne.s32.totalorder %s176, %s177
      %p186 = scmp.eq.s32.totalorder %s26, 0
      %p187 = por %p185, %p186
      %p188 = scmp.ne.s32.totalorder %s176, %s177
      %p189 = scmp.eq.s32.totalorder %s27, 1
      %p190 = por %p188, %p189
      %p192 = scmp.ne.s32.totalorder %s177, %s191
      %p193 = scmp.eq.s32.totalorder %s27, 0
      %p194 = por %p192, %p193
      %s196 = sadd.s32 %s195, 1
      %p199 = scmp.eq.s32.totalorder %s21, 1
      %p200 = scmp.ne.s32.totalorder %s195, %s197
      %p201 = scmp.eq.s32.totalorder %s21, 0
      %p202 = por %p200, %p201
      %p203 = scmp.ne.s32.totalorder %s195, %s197
      %p204 = scmp.eq.s32.totalorder %s26, 1
      %p205 = por %p203, %p204
      %p206 = scmp.ne.s32.totalorder %s197, %s198
      %p207 = scmp.eq.s32.totalorder %s26, 0
      %p208 = por %p206, %p207
      %p209 = scmp.ne.s32.totalorder %s197, %s198
      %p210 = scmp.eq.s32.totalorder %s27, 1
      %p211 = por %p209, %p210
      %p213 = scmp.ne.s32.totalorder %s198, %s212
      %p214 = scmp.eq.s32.totalorder %s27, 0
      %p215 = por %p213, %p214
      %s217 = sadd.s32 %s216, 1
      %p220 = scmp.eq.s32.totalorder %s21, 1
      %p221 = scmp.ne.s32.totalorder %s216, %s218
      %p222 = scmp.eq.s32.totalorder %s21, 0
      %p223 = por %p221, %p222
      %p224 = scmp.ne.s32.totalorder %s216, %s218
      %p225 = scmp.eq.s32.totalorder %s26, 1
      %p226 = por %p224, %p225
      %p227 = scmp.ne.s32.totalorder %s218, %s219
      %p228 = scmp.eq.s32.totalorder %s26, 0
      %p229 = por %p227, %p228
      %p230 = scmp.ne.s32.totalorder %s218, %s219
      %p231 = scmp.eq.s32.totalorder %s27, 1
      %p232 = por %p230, %p231
      %p234 = scmp.ne.s32.totalorder %s219, %s233
      %p235 = scmp.eq.s32.totalorder %s27, 0
      %p236 = por %p234, %p235
      %s238 = sadd.s32 %s237, 1
      %p241 = scmp.eq.s32.totalorder %s21, 1
      %p242 = scmp.ne.s32.totalorder %s237, %s239
      %p243 = scmp.eq.s32.totalorder %s21, 0
      %p244 = por %p242, %p243
      %p245 = scmp.ne.s32.totalorder %s237, %s239
      %p246 = scmp.eq.s32.totalorder %s26, 1
      %p247 = por %p245, %p246
      %p248 = scmp.ne.s32.totalorder %s239, %s240
      %p249 = scmp.eq.s32.totalorder %s26, 0
      %p250 = por %p248, %p249
      %p251 = scmp.ne.s32.totalorder %s239, %s240
      %p252 = scmp.eq.s32.totalorder %s27, 1
      %p253 = por %p251, %p252
      %p255 = scmp.ne.s32.totalorder %s240, %s254
      %p256 = scmp.eq.s32.totalorder %s27, 0
      %p257 = por %p255, %p256
      %s258 = ssub.s32 %s28, %s40
      %p259 = scmp.eq.s32.totalorder %s258, 0
      %s261 = sadd.s32 %s260, 1
      %s262 = scalar_select %p259, %s260, %s261
      %p265 = pneg %p259
      %p266 = scmp.eq.s32.totalorder %s21, 1
      %p267 = por %p265, %p266
      %p268 = scmp.ne.s32.totalorder %s260, %s263
      %p269 = scmp.eq.s32.totalorder %s21, 0
      %p270 = por %p268, %p269
      %p271 = scmp.ne.s32.totalorder %s260, %s263
      %p272 = scmp.eq.s32.totalorder %s26, 1
      %p273 = por %p271, %p272
      %p274 = scmp.ne.s32.totalorder %s263, %s264
      %p275 = scmp.eq.s32.totalorder %s26, 0
      %p276 = por %p274, %p275
      %p277 = scmp.ne.s32.totalorder %s263, %s264
      %p278 = scmp.eq.s32.totalorder %s27, 1
      %p279 = por %p277, %p278
      %p281 = scmp.ne.s32.totalorder %s264, %s280
      %p282 = scmp.eq.s32.totalorder %s27, 0
      %p283 = por %p281, %p282
      %p284 = scmp.le.s32.totalorder 1, %s21
      %p285 = scmp.lt.s32.totalorder %s21, 3
      %p286 = pnand %p284, %p285
      %p287 = pneg %p286
      // Predicated region
      $region9: #{tpu_custom_call.1} parent=5 // pred_check
        _
      $region10: #{tpu_custom_call.1} parent=5 // pred_check_branch
        %289 = sbr.rel (%p286) target = $region12
      $region11: #{tpu_custom_call.1} parent=5 // pred_region
        %s290 = ssub.s32 %s21, 1
        // Predicated region
        $region13: #{tpu_custom_call.1} parent=11 // pred_check
          %p291 = pneg %p82
        $region14: #{tpu_custom_call.1} parent=11 // pred_check_branch
          %293 = sbr.rel (%p291) target = $region16
        $region15: #{tpu_custom_call.1} parent=11 // pred_region
          _
        $region16: #{tpu_custom_call.1} parent=11 // pred_fallthru
          _
        // Predicated region
        $region17: #{tpu_custom_call.1} parent=11 // pred_check
          %p294 = pneg %p103
        $region18: #{tpu_custom_call.1} parent=11 // pred_check_branch
          %296 = sbr.rel (%p294) target = $region20
        $region19: #{tpu_custom_call.1} parent=11 // pred_region
          _
        $region20: #{tpu_custom_call.1} parent=11 // pred_fallthru
          _
        // Predicated region
        $region21: #{tpu_custom_call.1} parent=11 // pred_check
          %p297 = pneg %p124
        $region22: #{tpu_custom_call.1} parent=11 // pred_check_branch
          %299 = sbr.rel (%p297) target = $region24
        $region23: #{tpu_custom_call.1} parent=11 // pred_region
          _
        $region24: #{tpu_custom_call.1} parent=11 // pred_fallthru
          _
        // Predicated region
        $region25: #{tpu_custom_call.1} parent=11 // pred_check
          %p300 = pneg %p145
        $region26: #{tpu_custom_call.1} parent=11 // pred_check_branch
          %302 = sbr.rel (%p300) target = $region28
        $region27: #{tpu_custom_call.1} parent=11 // pred_region
          _
        $region28: #{tpu_custom_call.1} parent=11 // pred_fallthru
          _
        // Predicated region
        $region29: #{tpu_custom_call.1} parent=11 // pred_check
          %p303 = pneg %p166
        $region30: #{tpu_custom_call.1} parent=11 // pred_check_branch
          %305 = sbr.rel (%p303) target = $region32
        $region31: #{tpu_custom_call.1} parent=11 // pred_region
          _
        $region32: #{tpu_custom_call.1} parent=11 // pred_fallthru
          _
        // Predicated region
        $region33: #{tpu_custom_call.1} parent=11 // pred_check
          %p306 = pneg %p187
        $region34: #{tpu_custom_call.1} parent=11 // pred_check_branch
          %308 = sbr.rel (%p306) target = $region36
        $region35: #{tpu_custom_call.1} parent=11 // pred_region
          _
        $region36: #{tpu_custom_call.1} parent=11 // pred_fallthru
          _
        // Predicated region
        $region37: #{tpu_custom_call.1} parent=11 // pred_check
          %p309 = pneg %p208
        $region38: #{tpu_custom_call.1} parent=11 // pred_check_branch
          %311 = sbr.rel (%p309) target = $region40
        $region39: #{tpu_custom_call.1} parent=11 // pred_region
          _
        $region40: #{tpu_custom_call.1} parent=11 // pred_fallthru
          _
        // Predicated region
        $region41: #{tpu_custom_call.1} parent=11 // pred_check
          %p312 = pneg %p229
        $region42: #{tpu_custom_call.1} parent=11 // pred_check_branch
          %314 = sbr.rel (%p312) target = $region44
        $region43: #{tpu_custom_call.1} parent=11 // pred_region
          _
        $region44: #{tpu_custom_call.1} parent=11 // pred_fallthru
          _
        // Predicated region
        $region45: #{tpu_custom_call.1} parent=11 // pred_check
          %p315 = pneg %p250
        $region46: #{tpu_custom_call.1} parent=11 // pred_check_branch
          %317 = sbr.rel (%p315) target = $region48
        $region47: #{tpu_custom_call.1} parent=11 // pred_region
          _
        $region48: #{tpu_custom_call.1} parent=11 // pred_fallthru
          _
      $region12: #{tpu_custom_call.1} parent=5 // pred_fallthru
        _
      %p318 = scmp.lt.s32.totalorder %s21, 2
      // Predicated region
      $region49: #{tpu_custom_call.1} parent=5 // pred_check
        %p319 = pneg %p318
      $region50: #{tpu_custom_call.1} parent=5 // pred_check_branch
        %321 = sbr.rel (%p319) target = $region52
      $region51: #{tpu_custom_call.1} parent=5 // pred_region
        // Predicated region
        $region53: #{tpu_custom_call.1} parent=51 // pred_check
          %p322 = pneg %p55
        $region54: #{tpu_custom_call.1} parent=51 // pred_check_branch
          %324 = sbr.rel (%p322) target = $region56
        $region55: #{tpu_custom_call.1} parent=51 // pred_region
          %s325 = sadd.s32 %s28, %s29
          %s326 = smul.u32 32, %s325
          %p327 = scmp.lt.s32.totalorder %s326, 63
          %s328 = scalar_select %p327, %s326, 63
          %s329 = smul.addr %s328, 8
          %s330 = scalar_lea.vmem %s0, %s329
          %s331 = sadd.s32 %s28, %s29
          %s332 = smul.u32 32, %s331
        $region56: #{tpu_custom_call.1} parent=51 // pred_fallthru
          _
      $region52: #{tpu_custom_call.1} parent=5 // pred_fallthru
        _
      %p333 = scmp.le.s32.totalorder 1, %s21
      %p334 = scmp.lt.s32.totalorder %s21, 3
      %p335 = pnand %p333, %p334
      %p336 = pneg %p335
      // Predicated region
      $region57: #{tpu_custom_call.1} parent=5 // pred_check
        _
      $region58: #{tpu_custom_call.1} parent=5 // pred_check_branch
        %338 = sbr.rel (%p335) target = $region60
      $region59: #{tpu_custom_call.1} parent=5 // pred_region
        %s339 = ssub.s32 %s21, 1
        %s340 = sadd.s32 %s30, %s31
        %s341 = smul.u32 32, %s340
        %p342 = scmp.lt.s32.totalorder %s341, 63
        %s343 = scalar_select %p342, %s341, 63
        %s344 = smul.addr %s343, 8
        %s345 = scalar_lea.vmem %s0, %s344
        %p346 = pneg %p61
        %p347 = pneg %p58
        %p348 = pneg %p82
        %p349 = pneg %p79
        %p350 = pneg %p103
        %p351 = pneg %p100
        %p352 = pneg %p124
        %p353 = pneg %p121
        %p354 = pneg %p145
        %p355 = pneg %p142
        %p356 = pneg %p166
        %p357 = pneg %p163
        %p358 = pneg %p187
        %p359 = pneg %p184
        %p360 = pneg %p208
        %p361 = pneg %p205
        %p362 = pneg %p229
        %p363 = pneg %p226
        %p364 = pneg %p250
        %p365 = pneg %p247
        %p366 = pneg %p276
        %p367 = pneg %p273
        %s368 = sand.u32 %s263, 1
        %s369 = scalar_lea.sflag [#allocation4], %s368
        %s370 = sand.u32 %s263, 1
        %s371 = smul.addr %s370, 8
        %s372 = scalar_lea.vmem [#allocation3], %s371
        %s373 = sadd.s32 %s30, %s31
        %s374 = smul.u32 32, %s373
        %p375 = scmp.lt.s32.totalorder %s374, 63
        %s376 = scalar_select %p375, %s374, 63
        %s377 = smul.addr %s376, 8
        %s378 = scalar_lea.vmem %s0, %s377
        %s379 = sadd.s32 %s30, %s31
        %s380 = smul.u32 32, %s379
        %p382 = scmp.eq.s32.totalorder %s31, 0
        // Predicated region
        $region61: #{tpu_custom_call.1} parent=59 // pred_check
          %p383 = pneg %p382
        $region62: #{tpu_custom_call.1} parent=59 // pred_check_branch
          %385 = sbr.rel (%p383) target = $region64
        $region63: #{tpu_custom_call.1} parent=59 // pred_region
          %386 = vst [vmem:[%s372] sm:$0xff] 0.0
        $region64: #{tpu_custom_call.1} parent=59 // pred_fallthru
          _
        %v387 = vld [vmem:[%s378] sm:$0xff]
        %v388 = vld [vmem:[%s378 + $0x8] sm:$0xff]
        %v389 = vld [vmem:[%s378 + $0x10] sm:$0xff]
        %v390 = vld [vmem:[%s378 + $0x18] sm:$0xff]
        %v391 = vld [vmem:[%s378 + $0x20] sm:$0xff]
        %v392 = vld [vmem:[%s378 + $0x28] sm:$0xff]
        %v393 = vld [vmem:[%s378 + $0x30] sm:$0xff]
        %v394 = vld [vmem:[%s378 + $0x38] sm:$0xff]
        %v395 = vld [vmem:[%s378 + $0x40] sm:$0xff]
        %v396 = vld [vmem:[%s378 + $0x48] sm:$0xff]
        %v397 = vld [vmem:[%s378 + $0x50] sm:$0xff]
        %v398 = vld [vmem:[%s378 + $0x58] sm:$0xff]
        %v399 = vld [vmem:[%s378 + $0x60] sm:$0xff]
        %v400 = vld [vmem:[%s378 + $0x68] sm:$0xff]
        %v401 = vld [vmem:[%s378 + $0x70] sm:$0xff]
        %v402 = vld [vmem:[%s378 + $0x78] sm:$0xff]
        %v403 = vld [vmem:[%s378 + $0x80] sm:$0xff]
        %v404 = vld [vmem:[%s378 + $0x88] sm:$0xff]
        %v405 = vld [vmem:[%s378 + $0x90] sm:$0xff]
        %v406 = vld [vmem:[%s378 + $0x98] sm:$0xff]
        %v407 = vld [vmem:[%s378 + $0xa0] sm:$0xff]
        %v408 = vld [vmem:[%s378 + $0xa8] sm:$0xff]
        %v409 = vld [vmem:[%s378 + $0xb0] sm:$0xff]
        %v410 = vld [vmem:[%s378 + $0xb8] sm:$0xff]
        %v411 = vld [vmem:[%s378 + $0xc0] sm:$0xff]
        %v412 = vld [vmem:[%s378 + $0xc8] sm:$0xff]
        %v413 = vld [vmem:[%s378 + $0xd0] sm:$0xff]
        %v414 = vld [vmem:[%s378 + $0xd8] sm:$0xff]
        %v415 = vld [vmem:[%s378 + $0xe0] sm:$0xff]
        %v416 = vld [vmem:[%s378 + $0xe8] sm:$0xff]
        %v417 = vld [vmem:[%s378 + $0xf0] sm:$0xff]
        %v418 = vld [vmem:[%s378 + $0xf8] sm:$0xff]
        %v419 = vlaneseq
        %v420 = vand.u32 %v419, 127
        %421 = vset.pattern.permute.xlu0 2
        %422 = vperm.xlu0 %421, %v387
        %v423 = vpop.permute.xlu0 %422
        %424 = vset.pattern.permute.xlu0 2
        %425 = vperm.xlu0 %424, %v388
        %v426 = vpop.permute.xlu0 %425
        %427 = vset.pattern.permute.xlu0 2
        %428 = vperm.xlu0 %427, %v389
        %v429 = vpop.permute.xlu0 %428
        %430 = vset.pattern.permute.xlu0 2
        %431 = vperm.xlu0 %430, %v390
        %v432 = vpop.permute.xlu0 %431
        %433 = vset.pattern.permute.xlu0 2
        %434 = vperm.xlu0 %433, %v391
        %v435 = vpop.permute.xlu0 %434
        %436 = vset.pattern.permute.xlu0 2
        %437 = vperm.xlu0 %436, %v392
        %v438 = vpop.permute.xlu0 %437
        %439 = vset.pattern.permute.xlu0 2
        %440 = vperm.xlu0 %439, %v393
        %v441 = vpop.permute.xlu0 %440
        %442 = vset.pattern.permute.xlu0 2
        %443 = vperm.xlu0 %442, %v394
        %v444 = vpop.permute.xlu0 %443
        %445 = vset.pattern.permute.xlu0 2
        %446 = vperm.xlu0 %445, %v395
        %v447 = vpop.permute.xlu0 %446
        %448 = vset.pattern.permute.xlu0 2
        %449 = vperm.xlu0 %448, %v396
        %v450 = vpop.permute.xlu0 %449
        %451 = vset.pattern.permute.xlu0 2
        %452 = vperm.xlu0 %451, %v397
        %v453 = vpop.permute.xlu0 %452
        %454 = vset.pattern.permute.xlu0 2
        %455 = vperm.xlu0 %454, %v398
        %v456 = vpop.permute.xlu0 %455
        %457 = vset.pattern.permute.xlu0 2
        %458 = vperm.xlu0 %457, %v399
        %v459 = vpop.permute.xlu0 %458
        %460 = vset.pattern.permute.xlu0 2
        %461 = vperm.xlu0 %460, %v400
        %v462 = vpop.permute.xlu0 %461
        %463 = vset.pattern.permute.xlu0 2
        %464 = vperm.xlu0 %463, %v401
        %v465 = vpop.permute.xlu0 %464
        %466 = vset.pattern.permute.xlu0 2
        %467 = vperm.xlu0 %466, %v402
        %v468 = vpop.permute.xlu0 %467
        %469 = vset.pattern.permute.xlu0 2
        %470 = vperm.xlu0 %469, %v403
        %v471 = vpop.permute.xlu0 %470
        %472 = vset.pattern.permute.xlu0 2
        %473 = vperm.xlu0 %472, %v404
        %v474 = vpop.permute.xlu0 %473
        %475 = vset.pattern.permute.xlu0 2
        %476 = vperm.xlu0 %475, %v405
        %v477 = vpop.permute.xlu0 %476
        %478 = vset.pattern.permute.xlu0 2
        %479 = vperm.xlu0 %478, %v406
        %v480 = vpop.permute.xlu0 %479
        %481 = vset.pattern.permute.xlu0 2
        %482 = vperm.xlu0 %481, %v407
        %v483 = vpop.permute.xlu0 %482
        %484 = vset.pattern.permute.xlu0 2
        %485 = vperm.xlu0 %484, %v408
        %v486 = vpop.permute.xlu0 %485
        %487 = vset.pattern.permute.xlu0 2
        %488 = vperm.xlu0 %487, %v409
        %v489 = vpop.permute.xlu0 %488
        %490 = vset.pattern.permute.xlu0 2
        %491 = vperm.xlu0 %490, %v410
        %v492 = vpop.permute.xlu0 %491
        %493 = vset.pattern.permute.xlu0 2
        %494 = vperm.xlu0 %493, %v411
        %v495 = vpop.permute.xlu0 %494
        %496 = vset.pattern.permute.xlu0 2
        %497 = vperm.xlu0 %496, %v412
        %v498 = vpop.permute.xlu0 %497
        %499 = vset.pattern.permute.xlu0 2
        %500 = vperm.xlu0 %499, %v413
        %v501 = vpop.permute.xlu0 %500
        %502 = vset.pattern.permute.xlu0 2
        %503 = vperm.xlu0 %502, %v414
        %v504 = vpop.permute.xlu0 %503
        %505 = vset.pattern.permute.xlu0 2
        %506 = vperm.xlu0 %505, %v415
        %v507 = vpop.permute.xlu0 %506
        %508 = vset.pattern.permute.xlu0 2
        %509 = vperm.xlu0 %508, %v416
        %v510 = vpop.permute.xlu0 %509
        %511 = vset.pattern.permute.xlu0 2
        %512 = vperm.xlu0 %511, %v417
        %v513 = vpop.permute.xlu0 %512
        %514 = vset.pattern.permute.xlu0 2
        %515 = vperm.xlu0 %514, %v418
        %v516 = vpop.permute.xlu0 %515
        %vm517 = vcmp.eq.s32.totalorder %v420, %v423
        %vm518 = vcmp.eq.s32.totalorder %v420, %v426
        %vm519 = vcmp.eq.s32.totalorder %v420, %v429
        %vm520 = vcmp.eq.s32.totalorder %v420, %v432
        %vm521 = vcmp.eq.s32.totalorder %v420, %v435
        %vm522 = vcmp.eq.s32.totalorder %v420, %v438
        %vm523 = vcmp.eq.s32.totalorder %v420, %v441
        %vm524 = vcmp.eq.s32.totalorder %v420, %v444
        %vm525 = vcmp.eq.s32.totalorder %v420, %v447
        %vm526 = vcmp.eq.s32.totalorder %v420, %v450
        %vm527 = vcmp.eq.s32.totalorder %v420, %v453
        %vm528 = vcmp.eq.s32.totalorder %v420, %v456
        %vm529 = vcmp.eq.s32.totalorder %v420, %v459
        %vm530 = vcmp.eq.s32.totalorder %v420, %v462
        %vm531 = vcmp.eq.s32.totalorder %v420, %v465
        %vm532 = vcmp.eq.s32.totalorder %v420, %v468
        %vm533 = vcmp.eq.s32.totalorder %v420, %v471
        %vm534 = vcmp.eq.s32.totalorder %v420, %v474
        %vm535 = vcmp.eq.s32.totalorder %v420, %v477
        %vm536 = vcmp.eq.s32.totalorder %v420, %v480
        %vm537 = vcmp.eq.s32.totalorder %v420, %v483
        %vm538 = vcmp.eq.s32.totalorder %v420, %v486
        %vm539 = vcmp.eq.s32.totalorder %v420, %v489
        %vm540 = vcmp.eq.s32.totalorder %v420, %v492
        %vm541 = vcmp.eq.s32.totalorder %v420, %v495
        %vm542 = vcmp.eq.s32.totalorder %v420, %v498
        %vm543 = vcmp.eq.s32.totalorder %v420, %v501
        %vm544 = vcmp.eq.s32.totalorder %v420, %v504
        %vm545 = vcmp.eq.s32.totalorder %v420, %v507
        %vm546 = vcmp.eq.s32.totalorder %v420, %v510
        %vm547 = vcmp.eq.s32.totalorder %v420, %v513
        %vm548 = vcmp.eq.s32.totalorder %v420, %v516
        %v549 = vsel %vm517, 1, 0
        %v550 = vsel %vm518, 1, 0
        %v551 = vsel %vm519, 1, 0
        %v552 = vsel %vm520, 1, 0
        %v553 = vsel %vm521, 1, 0
        %v554 = vsel %vm522, 1, 0
        %v555 = vsel %vm523, 1, 0
        %v556 = vsel %vm524, 1, 0
        %v557 = vsel %vm525, 1, 0
        %v558 = vsel %vm526, 1, 0
        %v559 = vsel %vm527, 1, 0
        %v560 = vsel %vm528, 1, 0
        %v561 = vsel %vm529, 1, 0
        %v562 = vsel %vm530, 1, 0
        %v563 = vsel %vm531, 1, 0
        %v564 = vsel %vm532, 1, 0
        %v565 = vsel %vm533, 1, 0
        %v566 = vsel %vm534, 1, 0
        %v567 = vsel %vm535, 1, 0
        %v568 = vsel %vm536, 1, 0
        %v569 = vsel %vm537, 1, 0
        %v570 = vsel %vm538, 1, 0
        %v571 = vsel %vm539, 1, 0
        %v572 = vsel %vm540, 1, 0
        %v573 = vsel %vm541, 1, 0
        %v574 = vsel %vm542, 1, 0
        %v575 = vsel %vm543, 1, 0
        %v576 = vsel %vm544, 1, 0
        %v577 = vsel %vm545, 1, 0
        %v578 = vsel %vm546, 1, 0
        %v579 = vsel %vm547, 1, 0
        %v580 = vsel %vm548, 1, 0
        %v581 = vcvt.s32.f32 %v549
        %v582 = vcvt.s32.f32 %v550
        %v583 = vcvt.s32.f32 %v551
        %v584 = vcvt.s32.f32 %v552
        %v585 = vcvt.s32.f32 %v553
        %v586 = vcvt.s32.f32 %v554
        %v587 = vcvt.s32.f32 %v555
        %v588 = vcvt.s32.f32 %v556
        %v589 = vcvt.s32.f32 %v557
        %v590 = vcvt.s32.f32 %v558
        %v591 = vcvt.s32.f32 %v559
        %v592 = vcvt.s32.f32 %v560
        %v593 = vcvt.s32.f32 %v561
        %v594 = vcvt.s32.f32 %v562
        %v595 = vcvt.s32.f32 %v563
        %v596 = vcvt.s32.f32 %v564
        %v597 = vcvt.s32.f32 %v565
        %v598 = vcvt.s32.f32 %v566
        %v599 = vcvt.s32.f32 %v567
        %v600 = vcvt.s32.f32 %v568
        %v601 = vcvt.s32.f32 %v569
        %v602 = vcvt.s32.f32 %v570
        %v603 = vcvt.s32.f32 %v571
        %v604 = vcvt.s32.f32 %v572
        %v605 = vcvt.s32.f32 %v573
        %v606 = vcvt.s32.f32 %v574
        %v607 = vcvt.s32.f32 %v575
        %v608 = vcvt.s32.f32 %v576
        %v609 = vcvt.s32.f32 %v577
        %v610 = vcvt.s32.f32 %v578
        %v611 = vcvt.s32.f32 %v579
        %v612 = vcvt.s32.f32 %v580
        %v613 = vpack.c.bf16 %v582, %v581
        %v614 = vpack.c.bf16 %v584, %v583
        %v615 = vpack.c.bf16 %v586, %v585
        %v616 = vpack.c.bf16 %v588, %v587
        %v617 = vpack.c.bf16 %v590, %v589
        %v618 = vpack.c.bf16 %v592, %v591
        %v619 = vpack.c.bf16 %v594, %v593
        %v620 = vpack.c.bf16 %v596, %v595
        %v621 = vpack.c.bf16 %v598, %v597
        %v622 = vpack.c.bf16 %v600, %v599
        %v623 = vpack.c.bf16 %v602, %v601
        %v624 = vpack.c.bf16 %v604, %v603
        %v625 = vpack.c.bf16 %v606, %v605
        %v626 = vpack.c.bf16 %v608, %v607
        %v627 = vpack.c.bf16 %v610, %v609
        %v628 = vpack.c.bf16 %v612, %v611
        %v629 = vld [vmem:[%s1] sm:$0xf]
        %vm630 = vcmask 64512
        %v632 = vsel %vm630, %v613, 0
        %v635 = vsel %vm630, %v614, 0
        %v638 = vsel %vm630, %v615, 0
        %v641 = vsel %vm630, %v616, 0
        %v644 = vsel %vm630, %v617, 0
        %v647 = vsel %vm630, %v618, 0
        %v650 = vsel %vm630, %v619, 0
        %v653 = vsel %vm630, %v620, 0
        %v656 = vsel %vm630, %v621, 0
        %v659 = vsel %vm630, %v622, 0
        %v662 = vsel %vm630, %v623, 0
        %v665 = vsel %vm630, %v624, 0
        %v668 = vsel %vm630, %v625, 0
        %v671 = vsel %vm630, %v626, 0
        %v674 = vsel %vm630, %v627, 0
        %v677 = vsel %vm630, %v628, 0
        %vm679 = vcmask 1043456
        %v681 = vsel %vm679, %v629, 0
        %683 = vmatprep.subr.bf16.mxu0 0
        %684 = vmatpush1.bf16.msra.mxu0 0
        %685 = vmatprep.subr.bf16.mxu0 0
        %686 = vmatpush1.bf16.msra.mxu0 0
        %687 = vmatprep.subr.bf16.mxu0 0
        %688 = vmatpush1.bf16.msra.mxu0 0
        %689 = vmatprep.subr.bf16.mxu0 0
        %690 = vmatpush1.bf16.msra.mxu0 0
        %691 = vmatprep.subr.bf16.mxu0 0
        %692 = vmatpush1.bf16.msra.mxu0 0
        %693 = vmatprep.subr.bf16.mxu0 0
        %694 = vmatpush1.bf16.msra.mxu0 0
        %695 = vmatprep.subr.bf16.mxu0 0
        %696 = vmatpush1.bf16.msra.mxu0 0
        %697 = vmatprep.subr.bf16.mxu0 0
        %698 = vmatpush1.bf16.msra.mxu0 %v681
        %699 = vmatprep.subr.bf16.mxu0 0
        %700 = vmatpush2.bf16.msra.mxu0 0
        %701 = vmatprep.subr.bf16.mxu0 0
        %702 = vmatpush2.bf16.msra.mxu0 0
        %703 = vmatprep.subr.bf16.mxu0 0
        %704 = vmatpush2.bf16.msra.mxu0 0
        %705 = vmatprep.subr.bf16.mxu0 0
        %706 = vmatpush2.bf16.msra.mxu0 0
        %707 = vmatprep.subr.bf16.mxu0 0
        %708 = vmatpush2.bf16.msra.mxu0 0
        %709 = vmatprep.subr.bf16.mxu0 0
        %710 = vmatpush2.bf16.msra.mxu0 0
        %711 = vmatprep.subr.bf16.mxu0 0
        %712 = vmatpush2.bf16.msra.mxu0 0
        %713 = vmatprep.subr.bf16.mxu0 0
        %714 = vmatpush2.bf16.msra.mxu0 0
        %715 = vmatprep.mubr.bf16.mxu0 0
        %716 = vmatmul.mubr.bf16.gmra.mxu0 %v632
        %v717 = vpop.f32.mrf.mxu0
        %v718 = vadd.f32 0.0, %v717
        %v719 = vpop.f32.mrf.mxu0
        %v720 = vpop.f32.mrf.mxu0
        %v721 = vadd.f32 0.0, %v720
        %v722 = vpop.f32.mrf.mxu0
        %723 = vmatprep.mubr.bf16.mxu0 0
        %724 = vmatmul.mubr.bf16.gmra.mxu0 %v635
        %v725 = vpop.f32.mrf.mxu0
        %v726 = vadd.f32 0.0, %v725
        %v727 = vpop.f32.mrf.mxu0
        %v728 = vpop.f32.mrf.mxu0
        %v729 = vadd.f32 0.0, %v728
        %v730 = vpop.f32.mrf.mxu0
        %731 = vmatprep.mubr.bf16.mxu0 0
        %732 = vmatmul.mubr.bf16.gmra.mxu0 %v638
        %v733 = vpop.f32.mrf.mxu0
        %v734 = vadd.f32 0.0, %v733
        %v735 = vpop.f32.mrf.mxu0
        %v736 = vpop.f32.mrf.mxu0
        %v737 = vadd.f32 0.0, %v736
        %v738 = vpop.f32.mrf.mxu0
        %739 = vmatprep.mubr.bf16.mxu0 0
        %740 = vmatmul.mubr.bf16.gmra.mxu0 %v641
        %v741 = vpop.f32.mrf.mxu0
        %v742 = vadd.f32 0.0, %v741
        %v743 = vpop.f32.mrf.mxu0
        %v744 = vpop.f32.mrf.mxu0
        %v745 = vadd.f32 0.0, %v744
        %v746 = vpop.f32.mrf.mxu0
        %747 = vmatprep.mubr.bf16.mxu0 0
        %748 = vmatmul.mubr.bf16.gmra.mxu0 %v644
        %v749 = vpop.f32.mrf.mxu0
        %v750 = vadd.f32 0.0, %v749
        %v751 = vpop.f32.mrf.mxu0
        %v752 = vpop.f32.mrf.mxu0
        %v753 = vadd.f32 0.0, %v752
        %v754 = vpop.f32.mrf.mxu0
        %755 = vmatprep.mubr.bf16.mxu0 0
        %756 = vmatmul.mubr.bf16.gmra.mxu0 %v647
        %v757 = vpop.f32.mrf.mxu0
        %v758 = vadd.f32 0.0, %v757
        %v759 = vpop.f32.mrf.mxu0
        %v760 = vpop.f32.mrf.mxu0
        %v761 = vadd.f32 0.0, %v760
        %v762 = vpop.f32.mrf.mxu0
        %763 = vmatprep.mubr.bf16.mxu0 0
        %764 = vmatmul.mubr.bf16.gmra.mxu0 %v650
        %v765 = vpop.f32.mrf.mxu0
        %v766 = vadd.f32 0.0, %v765
        %v767 = vpop.f32.mrf.mxu0
        %v768 = vpop.f32.mrf.mxu0
        %v769 = vadd.f32 0.0, %v768
        %v770 = vpop.f32.mrf.mxu0
        %771 = vmatprep.mubr.bf16.mxu0 0
        %772 = vmatmul.mubr.bf16.gmra.mxu0 %v653
        %v773 = vpop.f32.mrf.mxu0
        %v774 = vadd.f32 0.0, %v773
        %v775 = vpop.f32.mrf.mxu0
        %v776 = vpop.f32.mrf.mxu0
        %v777 = vadd.f32 0.0, %v776
        %v778 = vpop.f32.mrf.mxu0
        %779 = vmatprep.mubr.bf16.mxu0 0
        %780 = vmatmul.mubr.bf16.gmra.mxu0 %v656
        %v781 = vpop.f32.mrf.mxu0
        %v782 = vadd.f32 0.0, %v781
        %v783 = vpop.f32.mrf.mxu0
        %v784 = vpop.f32.mrf.mxu0
        %v785 = vadd.f32 0.0, %v784
        %v786 = vpop.f32.mrf.mxu0
        %787 = vmatprep.mubr.bf16.mxu0 0
        %788 = vmatmul.mubr.bf16.gmra.mxu0 %v659
        %v789 = vpop.f32.mrf.mxu0
        %v790 = vadd.f32 0.0, %v789
        %v791 = vpop.f32.mrf.mxu0
        %v792 = vpop.f32.mrf.mxu0
        %v793 = vadd.f32 0.0, %v792
        %v794 = vpop.f32.mrf.mxu0
        %795 = vmatprep.mubr.bf16.mxu0 0
        %796 = vmatmul.mubr.bf16.gmra.mxu0 %v662
        %v797 = vpop.f32.mrf.mxu0
        %v798 = vadd.f32 0.0, %v797
        %v799 = vpop.f32.mrf.mxu0
        %v800 = vpop.f32.mrf.mxu0
        %v801 = vadd.f32 0.0, %v800
        %v802 = vpop.f32.mrf.mxu0
        %803 = vmatprep.mubr.bf16.mxu0 0
        %804 = vmatmul.mubr.bf16.gmra.mxu0 %v665
        %v805 = vpop.f32.mrf.mxu0
        %v806 = vadd.f32 0.0, %v805
        %v807 = vpop.f32.mrf.mxu0
        %v808 = vpop.f32.mrf.mxu0
        %v809 = vadd.f32 0.0, %v808
        %v810 = vpop.f32.mrf.mxu0
        %811 = vmatprep.mubr.bf16.mxu0 0
        %812 = vmatmul.mubr.bf16.gmra.mxu0 %v668
        %v813 = vpop.f32.mrf.mxu0
        %v814 = vadd.f32 0.0, %v813
        %v815 = vpop.f32.mrf.mxu0
        %v816 = vpop.f32.mrf.mxu0
        %v817 = vadd.f32 0.0, %v816
        %v818 = vpop.f32.mrf.mxu0
        %819 = vmatprep.mubr.bf16.mxu0 0
        %820 = vmatmul.mubr.bf16.gmra.mxu0 %v671
        %v821 = vpop.f32.mrf.mxu0
        %v822 = vadd.f32 0.0, %v821
        %v823 = vpop.f32.mrf.mxu0
        %v824 = vpop.f32.mrf.mxu0
        %v825 = vadd.f32 0.0, %v824
        %v826 = vpop.f32.mrf.mxu0
        %827 = vmatprep.mubr.bf16.mxu0 0
        %828 = vmatmul.mubr.bf16.gmra.mxu0 %v674
        %v829 = vpop.f32.mrf.mxu0
        %v830 = vadd.f32 0.0, %v829
        %v831 = vpop.f32.mrf.mxu0
        %v832 = vpop.f32.mrf.mxu0
        %v833 = vadd.f32 0.0, %v832
        %v834 = vpop.f32.mrf.mxu0
        %835 = vmatprep.mubr.bf16.mxu0 0
        %836 = vmatmul.mubr.bf16.gmra.mxu0 %v677
        %v837 = vpop.f32.mrf.mxu0
        %v838 = vadd.f32 0.0, %v837
        %v839 = vpop.f32.mrf.mxu0
        %v840 = vpop.f32.mrf.mxu0
        %v841 = vadd.f32 0.0, %v840
        %v842 = vpop.f32.mrf.mxu0
        %843 = vdwg.mxu0
        %v844 = vpack.c.bf16 %v721, %v718
        %v845 = vpack.c.bf16 %v729, %v726
        %v846 = vpack.c.bf16 %v737, %v734
        %v847 = vpack.c.bf16 %v745, %v742
        %v848 = vpack.c.bf16 %v753, %v750
        %v849 = vpack.c.bf16 %v761, %v758
        %v850 = vpack.c.bf16 %v769, %v766
        %v851 = vpack.c.bf16 %v777, %v774
        %v852 = vpack.c.bf16 %v785, %v782
        %v853 = vpack.c.bf16 %v793, %v790
        %v854 = vpack.c.bf16 %v801, %v798
        %v855 = vpack.c.bf16 %v809, %v806
        %v856 = vpack.c.bf16 %v817, %v814
        %v857 = vpack.c.bf16 %v825, %v822
        %v858 = vpack.c.bf16 %v833, %v830
        %v859 = vpack.c.bf16 %v841, %v838
        %860 = vset.pattern.permute.xlu0 1
        %861 = vperm.xlu0 %860, %v387
        %v862 = vpop.permute.xlu0 %861
        %863 = vset.pattern.permute.xlu0 1
        %864 = vperm.xlu0 %863, %v388
        %v865 = vpop.permute.xlu0 %864
        %866 = vset.pattern.permute.xlu0 1
        %867 = vperm.xlu0 %866, %v389
        %v868 = vpop.permute.xlu0 %867
        %869 = vset.pattern.permute.xlu0 1
        %870 = vperm.xlu0 %869, %v390
        %v871 = vpop.permute.xlu0 %870
        %872 = vset.pattern.permute.xlu0 1
        %873 = vperm.xlu0 %872, %v391
        %v874 = vpop.permute.xlu0 %873
        %875 = vset.pattern.permute.xlu0 1
        %876 = vperm.xlu0 %875, %v392
        %v877 = vpop.permute.xlu0 %876
        %878 = vset.pattern.permute.xlu0 1
        %879 = vperm.xlu0 %878, %v393
        %v880 = vpop.permute.xlu0 %879
        %881 = vset.pattern.permute.xlu0 1
        %882 = vperm.xlu0 %881, %v394
        %v883 = vpop.permute.xlu0 %882
        %884 = vset.pattern.permute.xlu0 1
        %885 = vperm.xlu0 %884, %v395
        %v886 = vpop.permute.xlu0 %885
        %887 = vset.pattern.permute.xlu0 1
        %888 = vperm.xlu0 %887, %v396
        %v889 = vpop.permute.xlu0 %888
        %890 = vset.pattern.permute.xlu0 1
        %891 = vperm.xlu0 %890, %v397
        %v892 = vpop.permute.xlu0 %891
        %893 = vset.pattern.permute.xlu0 1
        %894 = vperm.xlu0 %893, %v398
        %v895 = vpop.permute.xlu0 %894
        %896 = vset.pattern.permute.xlu0 1
        %897 = vperm.xlu0 %896, %v399
        %v898 = vpop.permute.xlu0 %897
        %899 = vset.pattern.permute.xlu0 1
        %900 = vperm.xlu0 %899, %v400
        %v901 = vpop.permute.xlu0 %900
        %902 = vset.pattern.permute.xlu0 1
        %903 = vperm.xlu0 %902, %v401
        %v904 = vpop.permute.xlu0 %903
        %905 = vset.pattern.permute.xlu0 1
        %906 = vperm.xlu0 %905, %v402
        %v907 = vpop.permute.xlu0 %906
        %908 = vset.pattern.permute.xlu0 1
        %909 = vperm.xlu0 %908, %v403
        %v910 = vpop.permute.xlu0 %909
        %911 = vset.pattern.permute.xlu0 1
        %912 = vperm.xlu0 %911, %v404
        %v913 = vpop.permute.xlu0 %912
        %914 = vset.pattern.permute.xlu0 1
        %915 = vperm.xlu0 %914, %v405
        %v916 = vpop.permute.xlu0 %915
        %917 = vset.pattern.permute.xlu0 1
        %918 = vperm.xlu0 %917, %v406
        %v919 = vpop.permute.xlu0 %918
        %920 = vset.pattern.permute.xlu0 1
        %921 = vperm.xlu0 %920, %v407
        %v922 = vpop.permute.xlu0 %921
        %923 = vset.pattern.permute.xlu0 1
        %924 = vperm.xlu0 %923, %v408
        %v925 = vpop.permute.xlu0 %924
        %926 = vset.pattern.permute.xlu0 1
        %927 = vperm.xlu0 %926, %v409
        %v928 = vpop.permute.xlu0 %927
        %929 = vset.pattern.permute.xlu0 1
        %930 = vperm.xlu0 %929, %v410
        %v931 = vpop.permute.xlu0 %930
        %932 = vset.pattern.permute.xlu0 1
        %933 = vperm.xlu0 %932, %v411
        %v934 = vpop.permute.xlu0 %933
        %935 = vset.pattern.permute.xlu0 1
        %936 = vperm.xlu0 %935, %v412
        %v937 = vpop.permute.xlu0 %936
        %938 = vset.pattern.permute.xlu0 1
        %939 = vperm.xlu0 %938, %v413
        %v940 = vpop.permute.xlu0 %939
        %941 = vset.pattern.permute.xlu0 1
        %942 = vperm.xlu0 %941, %v414
        %v943 = vpop.permute.xlu0 %942
        %944 = vset.pattern.permute.xlu0 1
        %945 = vperm.xlu0 %944, %v415
        %v946 = vpop.permute.xlu0 %945
        %947 = vset.pattern.permute.xlu0 1
        %948 = vperm.xlu0 %947, %v416
        %v949 = vpop.permute.xlu0 %948
        %950 = vset.pattern.permute.xlu0 1
        %951 = vperm.xlu0 %950, %v417
        %v952 = vpop.permute.xlu0 %951
        %953 = vset.pattern.permute.xlu0 1
        %954 = vperm.xlu0 %953, %v418
        %v955 = vpop.permute.xlu0 %954
        %vm956 = vcmp.eq.s32.totalorder %v420, %v862
        %vm957 = vcmp.eq.s32.totalorder %v420, %v865
        %vm958 = vcmp.eq.s32.totalorder %v420, %v868
        %vm959 = vcmp.eq.s32.totalorder %v420, %v871
        %vm960 = vcmp.eq.s32.totalorder %v420, %v874
        %vm961 = vcmp.eq.s32.totalorder %v420, %v877
        %vm962 = vcmp.eq.s32.totalorder %v420, %v880
        %vm963 = vcmp.eq.s32.totalorder %v420, %v883
        %vm964 = vcmp.eq.s32.totalorder %v420, %v886
        %vm965 = vcmp.eq.s32.totalorder %v420, %v889
        %vm966 = vcmp.eq.s32.totalorder %v420, %v892
        %vm967 = vcmp.eq.s32.totalorder %v420, %v895
        %vm968 = vcmp.eq.s32.totalorder %v420, %v898
        %vm969 = vcmp.eq.s32.totalorder %v420, %v901
        %vm970 = vcmp.eq.s32.totalorder %v420, %v904
        %vm971 = vcmp.eq.s32.totalorder %v420, %v907
        %vm972 = vcmp.eq.s32.totalorder %v420, %v910
        %vm973 = vcmp.eq.s32.totalorder %v420, %v913
        %vm974 = vcmp.eq.s32.totalorder %v420, %v916
        %vm975 = vcmp.eq.s32.totalorder %v420, %v919
        %vm976 = vcmp.eq.s32.totalorder %v420, %v922
        %vm977 = vcmp.eq.s32.totalorder %v420, %v925
        %vm978 = vcmp.eq.s32.totalorder %v420, %v928
        %vm979 = vcmp.eq.s32.totalorder %v420, %v931
        %vm980 = vcmp.eq.s32.totalorder %v420, %v934
        %vm981 = vcmp.eq.s32.totalorder %v420, %v937
        %vm982 = vcmp.eq.s32.totalorder %v420, %v940
        %vm983 = vcmp.eq.s32.totalorder %v420, %v943
        %vm984 = vcmp.eq.s32.totalorder %v420, %v946
        %vm985 = vcmp.eq.s32.totalorder %v420, %v949
        %vm986 = vcmp.eq.s32.totalorder %v420, %v952
        %vm987 = vcmp.eq.s32.totalorder %v420, %v955
        %v988 = vsel %vm956, 1, 0
        %v989 = vsel %vm957, 1, 0
        %v990 = vsel %vm958, 1, 0
        %v991 = vsel %vm959, 1, 0
        %v992 = vsel %vm960, 1, 0
        %v993 = vsel %vm961, 1, 0
        %v994 = vsel %vm962, 1, 0
        %v995 = vsel %vm963, 1, 0
        %v996 = vsel %vm964, 1, 0
        %v997 = vsel %vm965, 1, 0
        %v998 = vsel %vm966, 1, 0
        %v999 = vsel %vm967, 1, 0
        %v1000 = vsel %vm968, 1, 0
        %v1001 = vsel %vm969, 1, 0
        %v1002 = vsel %vm970, 1, 0
        %v1003 = vsel %vm971, 1, 0
        %v1004 = vsel %vm972, 1, 0
        %v1005 = vsel %vm973, 1, 0
        %v1006 = vsel %vm974, 1, 0
        %v1007 = vsel %vm975, 1, 0
        %v1008 = vsel %vm976, 1, 0
        %v1009 = vsel %vm977, 1, 0
        %v1010 = vsel %vm978, 1, 0
        %v1011 = vsel %vm979, 1, 0
        %v1012 = vsel %vm980, 1, 0
        %v1013 = vsel %vm981, 1, 0
        %v1014 = vsel %vm982, 1, 0
        %v1015 = vsel %vm983, 1, 0
        %v1016 = vsel %vm984, 1, 0
        %v1017 = vsel %vm985, 1, 0
        %v1018 = vsel %vm986, 1, 0
        %v1019 = vsel %vm987, 1, 0
        %v1020 = vcvt.s32.f32 %v988
        %v1021 = vcvt.s32.f32 %v989
        %v1022 = vcvt.s32.f32 %v990
        %v1023 = vcvt.s32.f32 %v991
        %v1024 = vcvt.s32.f32 %v992
        %v1025 = vcvt.s32.f32 %v993
        %v1026 = vcvt.s32.f32 %v994
        %v1027 = vcvt.s32.f32 %v995
        %v1028 = vcvt.s32.f32 %v996
        %v1029 = vcvt.s32.f32 %v997
        %v1030 = vcvt.s32.f32 %v998
        %v1031 = vcvt.s32.f32 %v999
        %v1032 = vcvt.s32.f32 %v1000
        %v1033 = vcvt.s32.f32 %v1001
        %v1034 = vcvt.s32.f32 %v1002
        %v1035 = vcvt.s32.f32 %v1003
        %v1036 = vcvt.s32.f32 %v1004
        %v1037 = vcvt.s32.f32 %v1005
        %v1038 = vcvt.s32.f32 %v1006
        %v1039 = vcvt.s32.f32 %v1007
        %v1040 = vcvt.s32.f32 %v1008
        %v1041 = vcvt.s32.f32 %v1009
        %v1042 = vcvt.s32.f32 %v1010
        %v1043 = vcvt.s32.f32 %v1011
        %v1044 = vcvt.s32.f32 %v1012
        %v1045 = vcvt.s32.f32 %v1013
        %v1046 = vcvt.s32.f32 %v1014
        %v1047 = vcvt.s32.f32 %v1015
        %v1048 = vcvt.s32.f32 %v1016
        %v1049 = vcvt.s32.f32 %v1017
        %v1050 = vcvt.s32.f32 %v1018
        %v1051 = vcvt.s32.f32 %v1019
        %v1052 = vpack.c.bf16 %v1021, %v1020
        %v1053 = vpack.c.bf16 %v1023, %v1022
        %v1054 = vpack.c.bf16 %v1025, %v1024
        %v1055 = vpack.c.bf16 %v1027, %v1026
        %v1056 = vpack.c.bf16 %v1029, %v1028
        %v1057 = vpack.c.bf16 %v1031, %v1030
        %v1058 = vpack.c.bf16 %v1033, %v1032
        %v1059 = vpack.c.bf16 %v1035, %v1034
        %v1060 = vpack.c.bf16 %v1037, %v1036
        %v1061 = vpack.c.bf16 %v1039, %v1038
        %v1062 = vpack.c.bf16 %v1041, %v1040
        %v1063 = vpack.c.bf16 %v1043, %v1042
        %v1064 = vpack.c.bf16 %v1045, %v1044
        %v1065 = vpack.c.bf16 %v1047, %v1046
        %v1066 = vpack.c.bf16 %v1049, %v1048
        %v1067 = vpack.c.bf16 %v1051, %v1050
        %v1068 = vld [vmem:[%s2] sm:$0xf]
        %v1069 = vld [vmem:[%s2 + $0x4] sm:$0xf]
        %v1072 = vunpack.c.l.b16 %v1068
        %v1073 = vunpack.c.l.b16 %v1069
        %v1074 = vpack.c.b16 %v1073, %v1072
        %vm1076 = vcmask 130048
        %v1078 = vsel %vm1076, %v1052, 0
        %v1081 = vsel %vm1076, %v1053, 0
        %v1084 = vsel %vm1076, %v1054, 0
        %v1087 = vsel %vm1076, %v1055, 0
        %v1090 = vsel %vm1076, %v1056, 0
        %v1093 = vsel %vm1076, %v1057, 0
        %v1096 = vsel %vm1076, %v1058, 0
        %v1099 = vsel %vm1076, %v1059, 0
        %v1102 = vsel %vm1076, %v1060, 0
        %v1105 = vsel %vm1076, %v1061, 0
        %v1108 = vsel %vm1076, %v1062, 0
        %v1111 = vsel %vm1076, %v1063, 0
        %v1114 = vsel %vm1076, %v1064, 0
        %v1117 = vsel %vm1076, %v1065, 0
        %v1120 = vsel %vm1076, %v1066, 0
        %v1123 = vsel %vm1076, %v1067, 0
        %1125 = vmatprep.subr.bf16.mxu0 0
        %1126 = vmatpush1.bf16.msra.mxu0 0
        %1127 = vmatprep.subr.bf16.mxu0 0
        %1128 = vmatpush1.bf16.msra.mxu0 0
        %1129 = vmatprep.subr.bf16.mxu0 0
        %1130 = vmatpush1.bf16.msra.mxu0 0
        %1131 = vmatprep.subr.bf16.mxu0 0
        %1132 = vmatpush1.bf16.msra.mxu0 0
        %1133 = vmatprep.subr.bf16.mxu0 0
        %1134 = vmatpush1.bf16.msra.mxu0 0
        %1135 = vmatprep.subr.bf16.mxu0 0
        %1136 = vmatpush1.bf16.msra.mxu0 0
        %1137 = vmatprep.subr.bf16.mxu0 0
        %1138 = vmatpush1.bf16.msra.mxu0 0
        %1139 = vmatprep.subr.bf16.mxu0 0
        %1140 = vmatpush1.bf16.msra.mxu0 %v1074
        %1141 = vmatprep.subr.bf16.mxu0 0
        %1142 = vmatpush2.bf16.msra.mxu0 0
        %1143 = vmatprep.subr.bf16.mxu0 0
        %1144 = vmatpush2.bf16.msra.mxu0 0
        %1145 = vmatprep.subr.bf16.mxu0 0
        %1146 = vmatpush2.bf16.msra.mxu0 0
        %1147 = vmatprep.subr.bf16.mxu0 0
        %1148 = vmatpush2.bf16.msra.mxu0 0
        %1149 = vmatprep.subr.bf16.mxu0 0
        %1150 = vmatpush2.bf16.msra.mxu0 0
        %1151 = vmatprep.subr.bf16.mxu0 0
        %1152 = vmatpush2.bf16.msra.mxu0 0
        %1153 = vmatprep.subr.bf16.mxu0 0
        %1154 = vmatpush2.bf16.msra.mxu0 0
        %1155 = vmatprep.subr.bf16.mxu0 0
        %1156 = vmatpush2.bf16.msra.mxu0 0
        %1157 = vmatprep.mubr.bf16.mxu0 0
        %1158 = vmatmul.mubr.bf16.gmra.mxu0 %v1078
        %v1159 = vpop.f32.mrf.mxu0
        %v1160 = vadd.f32 0.0, %v1159
        %v1161 = vpop.f32.mrf.mxu0
        %v1162 = vpop.f32.mrf.mxu0
        %v1163 = vadd.f32 0.0, %v1162
        %v1164 = vpop.f32.mrf.mxu0
        %1165 = vmatprep.mubr.bf16.mxu0 0
        %1166 = vmatmul.mubr.bf16.gmra.mxu0 %v1081
        %v1167 = vpop.f32.mrf.mxu0
        %v1168 = vadd.f32 0.0, %v1167
        %v1169 = vpop.f32.mrf.mxu0
        %v1170 = vpop.f32.mrf.mxu0
        %v1171 = vadd.f32 0.0, %v1170
        %v1172 = vpop.f32.mrf.mxu0
        %1173 = vmatprep.mubr.bf16.mxu0 0
        %1174 = vmatmul.mubr.bf16.gmra.mxu0 %v1084
        %v1175 = vpop.f32.mrf.mxu0
        %v1176 = vadd.f32 0.0, %v1175
        %v1177 = vpop.f32.mrf.mxu0
        %v1178 = vpop.f32.mrf.mxu0
        %v1179 = vadd.f32 0.0, %v1178
        %v1180 = vpop.f32.mrf.mxu0
        %1181 = vmatprep.mubr.bf16.mxu0 0
        %1182 = vmatmul.mubr.bf16.gmra.mxu0 %v1087
        %v1183 = vpop.f32.mrf.mxu0
        %v1184 = vadd.f32 0.0, %v1183
        %v1185 = vpop.f32.mrf.mxu0
        %v1186 = vpop.f32.mrf.mxu0
        %v1187 = vadd.f32 0.0, %v1186
        %v1188 = vpop.f32.mrf.mxu0
        %1189 = vmatprep.mubr.bf16.mxu0 0
        %1190 = vmatmul.mubr.bf16.gmra.mxu0 %v1090
        %v1191 = vpop.f32.mrf.mxu0
        %v1192 = vadd.f32 0.0, %v1191
        %v1193 = vpop.f32.mrf.mxu0
        %v1194 = vpop.f32.mrf.mxu0
        %v1195 = vadd.f32 0.0, %v1194
        %v1196 = vpop.f32.mrf.mxu0
        %1197 = vmatprep.mubr.bf16.mxu0 0
        %1198 = vmatmul.mubr.bf16.gmra.mxu0 %v1093
        %v1199 = vpop.f32.mrf.mxu0
        %v1200 = vadd.f32 0.0, %v1199
        %v1201 = vpop.f32.mrf.mxu0
        %v1202 = vpop.f32.mrf.mxu0
        %v1203 = vadd.f32 0.0, %v1202
        %v1204 = vpop.f32.mrf.mxu0
        %1205 = vmatprep.mubr.bf16.mxu0 0
        %1206 = vmatmul.mubr.bf16.gmra.mxu0 %v1096
        %v1207 = vpop.f32.mrf.mxu0
        %v1208 = vadd.f32 0.0, %v1207
        %v1209 = vpop.f32.mrf.mxu0
        %v1210 = vpop.f32.mrf.mxu0
        %v1211 = vadd.f32 0.0, %v1210
        %v1212 = vpop.f32.mrf.mxu0
        %1213 = vmatprep.mubr.bf16.mxu0 0
        %1214 = vmatmul.mubr.bf16.gmra.mxu0 %v1099
        %v1215 = vpop.f32.mrf.mxu0
        %v1216 = vadd.f32 0.0, %v1215
        %v1217 = vpop.f32.mrf.mxu0
        %v1218 = vpop.f32.mrf.mxu0
        %v1219 = vadd.f32 0.0, %v1218
        %v1220 = vpop.f32.mrf.mxu0
        %1221 = vmatprep.mubr.bf16.mxu0 0
        %1222 = vmatmul.mubr.bf16.gmra.mxu0 %v1102
        %v1223 = vpop.f32.mrf.mxu0
        %v1224 = vadd.f32 0.0, %v1223
        %v1225 = vpop.f32.mrf.mxu0
        %v1226 = vpop.f32.mrf.mxu0
        %v1227 = vadd.f32 0.0, %v1226
        %v1228 = vpop.f32.mrf.mxu0
        %1229 = vmatprep.mubr.bf16.mxu0 0
        %1230 = vmatmul.mubr.bf16.gmra.mxu0 %v1105
        %v1231 = vpop.f32.mrf.mxu0
        %v1232 = vadd.f32 0.0, %v1231
        %v1233 = vpop.f32.mrf.mxu0
        %v1234 = vpop.f32.mrf.mxu0
        %v1235 = vadd.f32 0.0, %v1234
        %v1236 = vpop.f32.mrf.mxu0
        %1237 = vmatprep.mubr.bf16.mxu0 0
        %1238 = vmatmul.mubr.bf16.gmra.mxu0 %v1108
        %v1239 = vpop.f32.mrf.mxu0
        %v1240 = vadd.f32 0.0, %v1239
        %v1241 = vpop.f32.mrf.mxu0
        %v1242 = vpop.f32.mrf.mxu0
        %v1243 = vadd.f32 0.0, %v1242
        %v1244 = vpop.f32.mrf.mxu0
        %1245 = vmatprep.mubr.bf16.mxu0 0
        %1246 = vmatmul.mubr.bf16.gmra.mxu0 %v1111
        %v1247 = vpop.f32.mrf.mxu0
        %v1248 = vadd.f32 0.0, %v1247
        %v1249 = vpop.f32.mrf.mxu0
        %v1250 = vpop.f32.mrf.mxu0
        %v1251 = vadd.f32 0.0, %v1250
        %v1252 = vpop.f32.mrf.mxu0
        %1253 = vmatprep.mubr.bf16.mxu0 0
        %1254 = vmatmul.mubr.bf16.gmra.mxu0 %v1114
        %v1255 = vpop.f32.mrf.mxu0
        %v1256 = vadd.f32 0.0, %v1255
        %v1257 = vpop.f32.mrf.mxu0
        %v1258 = vpop.f32.mrf.mxu0
        %v1259 = vadd.f32 0.0, %v1258
        %v1260 = vpop.f32.mrf.mxu0
        %1261 = vmatprep.mubr.bf16.mxu0 0
        %1262 = vmatmul.mubr.bf16.gmra.mxu0 %v1117
        %v1263 = vpop.f32.mrf.mxu0
        %v1264 = vadd.f32 0.0, %v1263
        %v1265 = vpop.f32.mrf.mxu0
        %v1266 = vpop.f32.mrf.mxu0
        %v1267 = vadd.f32 0.0, %v1266
        %v1268 = vpop.f32.mrf.mxu0
        %1269 = vmatprep.mubr.bf16.mxu0 0
        %1270 = vmatmul.mubr.bf16.gmra.mxu0 %v1120
        %v1271 = vpop.f32.mrf.mxu0
        %v1272 = vadd.f32 0.0, %v1271
        %v1273 = vpop.f32.mrf.mxu0
        %v1274 = vpop.f32.mrf.mxu0
        %v1275 = vadd.f32 0.0, %v1274
        %v1276 = vpop.f32.mrf.mxu0
        %1277 = vmatprep.mubr.bf16.mxu0 0
        %1278 = vmatmul.mubr.bf16.gmra.mxu0 %v1123
        %v1279 = vpop.f32.mrf.mxu0
        %v1280 = vadd.f32 0.0, %v1279
        %v1281 = vpop.f32.mrf.mxu0
        %v1282 = vpop.f32.mrf.mxu0
        %v1283 = vadd.f32 0.0, %v1282
        %v1284 = vpop.f32.mrf.mxu0
        %1285 = vdwg.mxu0
        %v1286 = vpack.c.bf16 %v1163, %v1160
        %v1287 = vpack.c.bf16 %v1171, %v1168
        %v1288 = vpack.c.bf16 %v1179, %v1176
        %v1289 = vpack.c.bf16 %v1187, %v1184
        %v1290 = vpack.c.bf16 %v1195, %v1192
        %v1291 = vpack.c.bf16 %v1203, %v1200
        %v1292 = vpack.c.bf16 %v1211, %v1208
        %v1293 = vpack.c.bf16 %v1219, %v1216
        %v1294 = vpack.c.bf16 %v1227, %v1224
        %v1295 = vpack.c.bf16 %v1235, %v1232
        %v1296 = vpack.c.bf16 %v1243, %v1240
        %v1297 = vpack.c.bf16 %v1251, %v1248
        %v1298 = vpack.c.bf16 %v1259, %v1256
        %v1299 = vpack.c.bf16 %v1267, %v1264
        %v1300 = vpack.c.bf16 %v1275, %v1272
        %v1301 = vpack.c.bf16 %v1283, %v1280
        %1302 = vset.pattern.permute.xlu0 0
        %1303 = vperm.xlu0 %1302, %v387
        %v1304 = vpop.permute.xlu0 %1303
        %1305 = vset.pattern.permute.xlu0 0
        %1306 = vperm.xlu0 %1305, %v388
        %v1307 = vpop.permute.xlu0 %1306
        %1308 = vset.pattern.permute.xlu0 0
        %1309 = vperm.xlu0 %1308, %v389
        %v1310 = vpop.permute.xlu0 %1309
        %1311 = vset.pattern.permute.xlu0 0
        %1312 = vperm.xlu0 %1311, %v390
        %v1313 = vpop.permute.xlu0 %1312
        %1314 = vset.pattern.permute.xlu0 0
        %1315 = vperm.xlu0 %1314, %v391
        %v1316 = vpop.permute.xlu0 %1315
        %1317 = vset.pattern.permute.xlu0 0
        %1318 = vperm.xlu0 %1317, %v392
        %v1319 = vpop.permute.xlu0 %1318
        %1320 = vset.pattern.permute.xlu0 0
        %1321 = vperm.xlu0 %1320, %v393
        %v1322 = vpop.permute.xlu0 %1321
        %1323 = vset.pattern.permute.xlu0 0
        %1324 = vperm.xlu0 %1323, %v394
        %v1325 = vpop.permute.xlu0 %1324
        %1326 = vset.pattern.permute.xlu0 0
        %1327 = vperm.xlu0 %1326, %v395
        %v1328 = vpop.permute.xlu0 %1327
        %1329 = vset.pattern.permute.xlu0 0
        %1330 = vperm.xlu0 %1329, %v396
        %v1331 = vpop.permute.xlu0 %1330
        %1332 = vset.pattern.permute.xlu0 0
        %1333 = vperm.xlu0 %1332, %v397
        %v1334 = vpop.permute.xlu0 %1333
        %1335 = vset.pattern.permute.xlu0 0
        %1336 = vperm.xlu0 %1335, %v398
        %v1337 = vpop.permute.xlu0 %1336
        %1338 = vset.pattern.permute.xlu0 0
        %1339 = vperm.xlu0 %1338, %v399
        %v1340 = vpop.permute.xlu0 %1339
        %1341 = vset.pattern.permute.xlu0 0
        %1342 = vperm.xlu0 %1341, %v400
        %v1343 = vpop.permute.xlu0 %1342
        %1344 = vset.pattern.permute.xlu0 0
        %1345 = vperm.xlu0 %1344, %v401
        %v1346 = vpop.permute.xlu0 %1345
        %1347 = vset.pattern.permute.xlu0 0
        %1348 = vperm.xlu0 %1347, %v402
        %v1349 = vpop.permute.xlu0 %1348
        %1350 = vset.pattern.permute.xlu0 0
        %1351 = vperm.xlu0 %1350, %v403
        %v1352 = vpop.permute.xlu0 %1351
        %1353 = vset.pattern.permute.xlu0 0
        %1354 = vperm.xlu0 %1353, %v404
        %v1355 = vpop.permute.xlu0 %1354
        %1356 = vset.pattern.permute.xlu0 0
        %1357 = vperm.xlu0 %1356, %v405
        %v1358 = vpop.permute.xlu0 %1357
        %1359 = vset.pattern.permute.xlu0 0
        %1360 = vperm.xlu0 %1359, %v406
        %v1361 = vpop.permute.xlu0 %1360
        %1362 = vset.pattern.permute.xlu0 0
        %1363 = vperm.xlu0 %1362, %v407
        %v1364 = vpop.permute.xlu0 %1363
        %1365 = vset.pattern.permute.xlu0 0
        %1366 = vperm.xlu0 %1365, %v408
        %v1367 = vpop.permute.xlu0 %1366
        %1368 = vset.pattern.permute.xlu0 0
        %1369 = vperm.xlu0 %1368, %v409
        %v1370 = vpop.permute.xlu0 %1369
        %1371 = vset.pattern.permute.xlu0 0
        %1372 = vperm.xlu0 %1371, %v410
        %v1373 = vpop.permute.xlu0 %1372
        %1374 = vset.pattern.permute.xlu0 0
        %1375 = vperm.xlu0 %1374, %v411
        %v1376 = vpop.permute.xlu0 %1375
        %1377 = vset.pattern.permute.xlu0 0
        %1378 = vperm.xlu0 %1377, %v412
        %v1379 = vpop.permute.xlu0 %1378
        %1380 = vset.pattern.permute.xlu0 0
        %1381 = vperm.xlu0 %1380, %v413
        %v1382 = vpop.permute.xlu0 %1381
        %1383 = vset.pattern.permute.xlu0 0
        %1384 = vperm.xlu0 %1383, %v414
        %v1385 = vpop.permute.xlu0 %1384
        %1386 = vset.pattern.permute.xlu0 0
        %1387 = vperm.xlu0 %1386, %v415
        %v1388 = vpop.permute.xlu0 %1387
        %1389 = vset.pattern.permute.xlu0 0
        %1390 = vperm.xlu0 %1389, %v416
        %v1391 = vpop.permute.xlu0 %1390
        %1392 = vset.pattern.permute.xlu0 0
        %1393 = vperm.xlu0 %1392, %v417
        %v1394 = vpop.permute.xlu0 %1393
        %1395 = vset.pattern.permute.xlu0 0
        %1396 = vperm.xlu0 %1395, %v418
        %v1397 = vpop.permute.xlu0 %1396
        %vm1398 = vcmp.eq.s32.totalorder %v420, %v1304
        %vm1399 = vcmp.eq.s32.totalorder %v420, %v1307
        %vm1400 = vcmp.eq.s32.totalorder %v420, %v1310
        %vm1401 = vcmp.eq.s32.totalorder %v420, %v1313
        %vm1402 = vcmp.eq.s32.totalorder %v420, %v1316
        %vm1403 = vcmp.eq.s32.totalorder %v420, %v1319
        %vm1404 = vcmp.eq.s32.totalorder %v420, %v1322
        %vm1405 = vcmp.eq.s32.totalorder %v420, %v1325
        %vm1406 = vcmp.eq.s32.totalorder %v420, %v1328
        %vm1407 = vcmp.eq.s32.totalorder %v420, %v1331
        %vm1408 = vcmp.eq.s32.totalorder %v420, %v1334
        %vm1409 = vcmp.eq.s32.totalorder %v420, %v1337
        %vm1410 = vcmp.eq.s32.totalorder %v420, %v1340
        %vm1411 = vcmp.eq.s32.totalorder %v420, %v1343
        %vm1412 = vcmp.eq.s32.totalorder %v420, %v1346
        %vm1413 = vcmp.eq.s32.totalorder %v420, %v1349
        %vm1414 = vcmp.eq.s32.totalorder %v420, %v1352
        %vm1415 = vcmp.eq.s32.totalorder %v420, %v1355
        %vm1416 = vcmp.eq.s32.totalorder %v420, %v1358
        %vm1417 = vcmp.eq.s32.totalorder %v420, %v1361
        %vm1418 = vcmp.eq.s32.totalorder %v420, %v1364
        %vm1419 = vcmp.eq.s32.totalorder %v420, %v1367
        %vm1420 = vcmp.eq.s32.totalorder %v420, %v1370
        %vm1421 = vcmp.eq.s32.totalorder %v420, %v1373
        %vm1422 = vcmp.eq.s32.totalorder %v420, %v1376
        %vm1423 = vcmp.eq.s32.totalorder %v420, %v1379
        %vm1424 = vcmp.eq.s32.totalorder %v420, %v1382
        %vm1425 = vcmp.eq.s32.totalorder %v420, %v1385
        %vm1426 = vcmp.eq.s32.totalorder %v420, %v1388
        %vm1427 = vcmp.eq.s32.totalorder %v420, %v1391
        %vm1428 = vcmp.eq.s32.totalorder %v420, %v1394
        %vm1429 = vcmp.eq.s32.totalorder %v420, %v1397
        %v1430 = vsel %vm1398, 1, 0
        %v1431 = vsel %vm1399, 1, 0
        %v1432 = vsel %vm1400, 1, 0
        %v1433 = vsel %vm1401, 1, 0
        %v1434 = vsel %vm1402, 1, 0
        %v1435 = vsel %vm1403, 1, 0
        %v1436 = vsel %vm1404, 1, 0
        %v1437 = vsel %vm1405, 1, 0
        %v1438 = vsel %vm1406, 1, 0
        %v1439 = vsel %vm1407, 1, 0
        %v1440 = vsel %vm1408, 1, 0
        %v1441 = vsel %vm1409, 1, 0
        %v1442 = vsel %vm1410, 1, 0
        %v1443 = vsel %vm1411, 1, 0
        %v1444 = vsel %vm1412, 1, 0
        %v1445 = vsel %vm1413, 1, 0
        %v1446 = vsel %vm1414, 1, 0
        %v1447 = vsel %vm1415, 1, 0
        %v1448 = vsel %vm1416, 1, 0
        %v1449 = vsel %vm1417, 1, 0
        %v1450 = vsel %vm1418, 1, 0
        %v1451 = vsel %vm1419, 1, 0
        %v1452 = vsel %vm1420, 1, 0
        %v1453 = vsel %vm1421, 1, 0
        %v1454 = vsel %vm1422, 1, 0
        %v1455 = vsel %vm1423, 1, 0
        %v1456 = vsel %vm1424, 1, 0
        %v1457 = vsel %vm1425, 1, 0
        %v1458 = vsel %vm1426, 1, 0
        %v1459 = vsel %vm1427, 1, 0
        %v1460 = vsel %vm1428, 1, 0
        %v1461 = vsel %vm1429, 1, 0
        %v1462 = vcvt.s32.f32 %v1430
        %v1463 = vcvt.s32.f32 %v1431
        %v1464 = vcvt.s32.f32 %v1432
        %v1465 = vcvt.s32.f32 %v1433
        %v1466 = vcvt.s32.f32 %v1434
        %v1467 = vcvt.s32.f32 %v1435
        %v1468 = vcvt.s32.f32 %v1436
        %v1469 = vcvt.s32.f32 %v1437
        %v1470 = vcvt.s32.f32 %v1438
        %v1471 = vcvt.s32.f32 %v1439
        %v1472 = vcvt.s32.f32 %v1440
        %v1473 = vcvt.s32.f32 %v1441
        %v1474 = vcvt.s32.f32 %v1442
        %v1475 = vcvt.s32.f32 %v1443
        %v1476 = vcvt.s32.f32 %v1444
        %v1477 = vcvt.s32.f32 %v1445
        %v1478 = vcvt.s32.f32 %v1446
        %v1479 = vcvt.s32.f32 %v1447
        %v1480 = vcvt.s32.f32 %v1448
        %v1481 = vcvt.s32.f32 %v1449
        %v1482 = vcvt.s32.f32 %v1450
        %v1483 = vcvt.s32.f32 %v1451
        %v1484 = vcvt.s32.f32 %v1452
        %v1485 = vcvt.s32.f32 %v1453
        %v1486 = vcvt.s32.f32 %v1454
        %v1487 = vcvt.s32.f32 %v1455
        %v1488 = vcvt.s32.f32 %v1456
        %v1489 = vcvt.s32.f32 %v1457
        %v1490 = vcvt.s32.f32 %v1458
        %v1491 = vcvt.s32.f32 %v1459
        %v1492 = vcvt.s32.f32 %v1460
        %v1493 = vcvt.s32.f32 %v1461
        %v1494 = vpack.c.bf16 %v1463, %v1462
        %v1495 = vpack.c.bf16 %v1465, %v1464
        %v1496 = vpack.c.bf16 %v1467, %v1466
        %v1497 = vpack.c.bf16 %v1469, %v1468
        %v1498 = vpack.c.bf16 %v1471, %v1470
        %v1499 = vpack.c.bf16 %v1473, %v1472
        %v1500 = vpack.c.bf16 %v1475, %v1474
        %v1501 = vpack.c.bf16 %v1477, %v1476
        %v1502 = vpack.c.bf16 %v1479, %v1478
        %v1503 = vpack.c.bf16 %v1481, %v1480
        %v1504 = vpack.c.bf16 %v1483, %v1482
        %v1505 = vpack.c.bf16 %v1485, %v1484
        %v1506 = vpack.c.bf16 %v1487, %v1486
        %v1507 = vpack.c.bf16 %v1489, %v1488
        %v1508 = vpack.c.bf16 %v1491, %v1490
        %v1509 = vpack.c.bf16 %v1493, %v1492
        %v1510 = vld [vmem:[%s3] sm:$0xf]
        %v1512 = vsel %vm630, %v1494, 0
        %v1515 = vsel %vm630, %v1495, 0
        %v1518 = vsel %vm630, %v1496, 0
        %v1521 = vsel %vm630, %v1497, 0
        %v1524 = vsel %vm630, %v1498, 0
        %v1527 = vsel %vm630, %v1499, 0
        %v1530 = vsel %vm630, %v1500, 0
        %v1533 = vsel %vm630, %v1501, 0
        %v1536 = vsel %vm630, %v1502, 0
        %v1539 = vsel %vm630, %v1503, 0
        %v1542 = vsel %vm630, %v1504, 0
        %v1545 = vsel %vm630, %v1505, 0
        %v1548 = vsel %vm630, %v1506, 0
        %v1551 = vsel %vm630, %v1507, 0
        %v1554 = vsel %vm630, %v1508, 0
        %v1557 = vsel %vm630, %v1509, 0
        %v1560 = vsel %vm679, %v1510, 0
        %1562 = vmatprep.subr.bf16.mxu0 0
        %1563 = vmatpush1.bf16.msra.mxu0 0
        %1564 = vmatprep.subr.bf16.mxu0 0
        %1565 = vmatpush1.bf16.msra.mxu0 0
        %1566 = vmatprep.subr.bf16.mxu0 0
        %1567 = vmatpush1.bf16.msra.mxu0 0
        %1568 = vmatprep.subr.bf16.mxu0 0
        %1569 = vmatpush1.bf16.msra.mxu0 0
        %1570 = vmatprep.subr.bf16.mxu0 0
        %1571 = vmatpush1.bf16.msra.mxu0 0
        %1572 = vmatprep.subr.bf16.mxu0 0
        %1573 = vmatpush1.bf16.msra.mxu0 0
        %1574 = vmatprep.subr.bf16.mxu0 0
        %1575 = vmatpush1.bf16.msra.mxu0 0
        %1576 = vmatprep.subr.bf16.mxu0 0
        %1577 = vmatpush1.bf16.msra.mxu0 %v1560
        %1578 = vmatprep.subr.bf16.mxu0 0
        %1579 = vmatpush2.bf16.msra.mxu0 0
        %1580 = vmatprep.subr.bf16.mxu0 0
        %1581 = vmatpush2.bf16.msra.mxu0 0
        %1582 = vmatprep.subr.bf16.mxu0 0
        %1583 = vmatpush2.bf16.msra.mxu0 0
        %1584 = vmatprep.subr.bf16.mxu0 0
        %1585 = vmatpush2.bf16.msra.mxu0 0
        %1586 = vmatprep.subr.bf16.mxu0 0
        %1587 = vmatpush2.bf16.msra.mxu0 0
        %1588 = vmatprep.subr.bf16.mxu0 0
        %1589 = vmatpush2.bf16.msra.mxu0 0
        %1590 = vmatprep.subr.bf16.mxu0 0
        %1591 = vmatpush2.bf16.msra.mxu0 0
        %1592 = vmatprep.subr.bf16.mxu0 0
        %1593 = vmatpush2.bf16.msra.mxu0 0
        %1594 = vmatprep.mubr.bf16.mxu0 0
        %1595 = vmatmul.mubr.bf16.gmra.mxu0 %v1512
        %v1596 = vpop.f32.mrf.mxu0
        %v1597 = vadd.f32 0.0, %v1596
        %v1598 = vpop.f32.mrf.mxu0
        %v1599 = vpop.f32.mrf.mxu0
        %v1600 = vadd.f32 0.0, %v1599
        %v1601 = vpop.f32.mrf.mxu0
        %1602 = vmatprep.mubr.bf16.mxu0 0
        %1603 = vmatmul.mubr.bf16.gmra.mxu0 %v1515
        %v1604 = vpop.f32.mrf.mxu0
        %v1605 = vadd.f32 0.0, %v1604
        %v1606 = vpop.f32.mrf.mxu0
        %v1607 = vpop.f32.mrf.mxu0
        %v1608 = vadd.f32 0.0, %v1607
        %v1609 = vpop.f32.mrf.mxu0
        %1610 = vmatprep.mubr.bf16.mxu0 0
        %1611 = vmatmul.mubr.bf16.gmra.mxu0 %v1518
        %v1612 = vpop.f32.mrf.mxu0
        %v1613 = vadd.f32 0.0, %v1612
        %v1614 = vpop.f32.mrf.mxu0
        %v1615 = vpop.f32.mrf.mxu0
        %v1616 = vadd.f32 0.0, %v1615
        %v1617 = vpop.f32.mrf.mxu0
        %1618 = vmatprep.mubr.bf16.mxu0 0
        %1619 = vmatmul.mubr.bf16.gmra.mxu0 %v1521
        %v1620 = vpop.f32.mrf.mxu0
        %v1621 = vadd.f32 0.0, %v1620
        %v1622 = vpop.f32.mrf.mxu0
        %v1623 = vpop.f32.mrf.mxu0
        %v1624 = vadd.f32 0.0, %v1623
        %v1625 = vpop.f32.mrf.mxu0
        %1626 = vmatprep.mubr.bf16.mxu0 0
        %1627 = vmatmul.mubr.bf16.gmra.mxu0 %v1524
        %v1628 = vpop.f32.mrf.mxu0
        %v1629 = vadd.f32 0.0, %v1628
        %v1630 = vpop.f32.mrf.mxu0
        %v1631 = vpop.f32.mrf.mxu0
        %v1632 = vadd.f32 0.0, %v1631
        %v1633 = vpop.f32.mrf.mxu0
        %1634 = vmatprep.mubr.bf16.mxu0 0
        %1635 = vmatmul.mubr.bf16.gmra.mxu0 %v1527
        %v1636 = vpop.f32.mrf.mxu0
        %v1637 = vadd.f32 0.0, %v1636
        %v1638 = vpop.f32.mrf.mxu0
        %v1639 = vpop.f32.mrf.mxu0
        %v1640 = vadd.f32 0.0, %v1639
        %v1641 = vpop.f32.mrf.mxu0
        %1642 = vmatprep.mubr.bf16.mxu0 0
        %1643 = vmatmul.mubr.bf16.gmra.mxu0 %v1530
        %v1644 = vpop.f32.mrf.mxu0
        %v1645 = vadd.f32 0.0, %v1644
        %v1646 = vpop.f32.mrf.mxu0
        %v1647 = vpop.f32.mrf.mxu0
        %v1648 = vadd.f32 0.0, %v1647
        %v1649 = vpop.f32.mrf.mxu0
        %1650 = vmatprep.mubr.bf16.mxu0 0
        %1651 = vmatmul.mubr.bf16.gmra.mxu0 %v1533
        %v1652 = vpop.f32.mrf.mxu0
        %v1653 = vadd.f32 0.0, %v1652
        %v1654 = vpop.f32.mrf.mxu0
        %v1655 = vpop.f32.mrf.mxu0
        %v1656 = vadd.f32 0.0, %v1655
        %v1657 = vpop.f32.mrf.mxu0
        %1658 = vmatprep.mubr.bf16.mxu0 0
        %1659 = vmatmul.mubr.bf16.gmra.mxu0 %v1536
        %v1660 = vpop.f32.mrf.mxu0
        %v1661 = vadd.f32 0.0, %v1660
        %v1662 = vpop.f32.mrf.mxu0
        %v1663 = vpop.f32.mrf.mxu0
        %v1664 = vadd.f32 0.0, %v1663
        %v1665 = vpop.f32.mrf.mxu0
        %1666 = vmatprep.mubr.bf16.mxu0 0
        %1667 = vmatmul.mubr.bf16.gmra.mxu0 %v1539
        %v1668 = vpop.f32.mrf.mxu0
        %v1669 = vadd.f32 0.0, %v1668
        %v1670 = vpop.f32.mrf.mxu0
        %v1671 = vpop.f32.mrf.mxu0
        %v1672 = vadd.f32 0.0, %v1671
        %v1673 = vpop.f32.mrf.mxu0
        %1674 = vmatprep.mubr.bf16.mxu0 0
        %1675 = vmatmul.mubr.bf16.gmra.mxu0 %v1542
        %v1676 = vpop.f32.mrf.mxu0
        %v1677 = vadd.f32 0.0, %v1676
        %v1678 = vpop.f32.mrf.mxu0
        %v1679 = vpop.f32.mrf.mxu0
        %v1680 = vadd.f32 0.0, %v1679
        %v1681 = vpop.f32.mrf.mxu0
        %1682 = vmatprep.mubr.bf16.mxu0 0
        %1683 = vmatmul.mubr.bf16.gmra.mxu0 %v1545
        %v1684 = vpop.f32.mrf.mxu0
        %v1685 = vadd.f32 0.0, %v1684
        %v1686 = vpop.f32.mrf.mxu0
        %v1687 = vpop.f32.mrf.mxu0
        %v1688 = vadd.f32 0.0, %v1687
        %v1689 = vpop.f32.mrf.mxu0
        %1690 = vmatprep.mubr.bf16.mxu0 0
        %1691 = vmatmul.mubr.bf16.gmra.mxu0 %v1548
        %v1692 = vpop.f32.mrf.mxu0
        %v1693 = vadd.f32 0.0, %v1692
        %v1694 = vpop.f32.mrf.mxu0
        %v1695 = vpop.f32.mrf.mxu0
        %v1696 = vadd.f32 0.0, %v1695
        %v1697 = vpop.f32.mrf.mxu0
        %1698 = vmatprep.mubr.bf16.mxu0 0
        %1699 = vmatmul.mubr.bf16.gmra.mxu0 %v1551
        %v1700 = vpop.f32.mrf.mxu0
        %v1701 = vadd.f32 0.0, %v1700
        %v1702 = vpop.f32.mrf.mxu0
        %v1703 = vpop.f32.mrf.mxu0
        %v1704 = vadd.f32 0.0, %v1703
        %v1705 = vpop.f32.mrf.mxu0
        %1706 = vmatprep.mubr.bf16.mxu0 0
        %1707 = vmatmul.mubr.bf16.gmra.mxu0 %v1554
        %v1708 = vpop.f32.mrf.mxu0
        %v1709 = vadd.f32 0.0, %v1708
        %v1710 = vpop.f32.mrf.mxu0
        %v1711 = vpop.f32.mrf.mxu0
        %v1712 = vadd.f32 0.0, %v1711
        %v1713 = vpop.f32.mrf.mxu0
        %1714 = vmatprep.mubr.bf16.mxu0 0
        %1715 = vmatmul.mubr.bf16.gmra.mxu0 %v1557
        %v1716 = vpop.f32.mrf.mxu0
        %v1717 = vadd.f32 0.0, %v1716
        %v1718 = vpop.f32.mrf.mxu0
        %v1719 = vpop.f32.mrf.mxu0
        %v1720 = vadd.f32 0.0, %v1719
        %v1721 = vpop.f32.mrf.mxu0
        %1722 = vdwg.mxu0
        %v1723 = vpack.c.bf16 %v1600, %v1597
        %v1724 = vpack.c.bf16 %v1608, %v1605
        %v1725 = vpack.c.bf16 %v1616, %v1613
        %v1726 = vpack.c.bf16 %v1624, %v1621
        %v1727 = vpack.c.bf16 %v1632, %v1629
        %v1728 = vpack.c.bf16 %v1640, %v1637
        %v1729 = vpack.c.bf16 %v1648, %v1645
        %v1730 = vpack.c.bf16 %v1656, %v1653
        %v1731 = vpack.c.bf16 %v1664, %v1661
        %v1732 = vpack.c.bf16 %v1672, %v1669
        %v1733 = vpack.c.bf16 %v1680, %v1677
        %v1734 = vpack.c.bf16 %v1688, %v1685
        %v1735 = vpack.c.bf16 %v1696, %v1693
        %v1736 = vpack.c.bf16 %v1704, %v1701
        %v1737 = vpack.c.bf16 %v1712, %v1709
        %v1738 = vpack.c.bf16 %v1720, %v1717
        %v1739 = vld [vmem:[%s4] sm:$0xf]
        %v1740 = vld [vmem:[%s4 + $0x4] sm:$0xf]
        %v1741 = vld [vmem:[%s4 + $0x8] sm:$0xf]
        %v1742 = vld [vmem:[%s4 + $0xc] sm:$0xf]
        %v1743 = vld [vmem:[%s4 + $0x10] sm:$0xf]
        %v1744 = vld [vmem:[%s4 + $0x14] sm:$0xf]
        %v1745 = vld [vmem:[%s4 + $0x18] sm:$0xf]
        %v1746 = vld [vmem:[%s4 + $0x1c] sm:$0xf]
        %v1747 = vld [vmem:[%s4 + $0x20] sm:$0xf]
        %v1748 = vld [vmem:[%s4 + $0x24] sm:$0xf]
        %v1749 = vld [vmem:[%s4 + $0x28] sm:$0xf]
        %v1750 = vld [vmem:[%s4 + $0x2c] sm:$0xf]
        %v1751 = vld [vmem:[%s4 + $0x30] sm:$0xf]
        %v1752 = vld [vmem:[%s4 + $0x34] sm:$0xf]
        %v1753 = vld [vmem:[%s4 + $0x38] sm:$0xf]
        %v1754 = vld [vmem:[%s4 + $0x3c] sm:$0xf]
        %v1755 = vld [vmem:[%s5] sm:$0xf]
        %v1756 = vld [vmem:[%s5 + $0x4] sm:$0xf]
        %v1757 = vld [vmem:[%s5 + $0x8] sm:$0xf]
        %v1758 = vld [vmem:[%s5 + $0xc] sm:$0xf]
        %v1759 = vld [vmem:[%s5 + $0x10] sm:$0xf]
        %v1760 = vld [vmem:[%s5 + $0x14] sm:$0xf]
        %v1761 = vld [vmem:[%s5 + $0x18] sm:$0xf]
        %v1762 = vld [vmem:[%s5 + $0x1c] sm:$0xf]
        %v1763 = vld [vmem:[%s5 + $0x20] sm:$0xf]
        %v1764 = vld [vmem:[%s5 + $0x24] sm:$0xf]
        %v1765 = vld [vmem:[%s5 + $0x28] sm:$0xf]
        %v1766 = vld [vmem:[%s5 + $0x2c] sm:$0xf]
        %v1767 = vld [vmem:[%s5 + $0x30] sm:$0xf]
        %v1768 = vld [vmem:[%s5 + $0x34] sm:$0xf]
        %v1769 = vld [vmem:[%s5 + $0x38] sm:$0xf]
        %v1770 = vld [vmem:[%s5 + $0x3c] sm:$0xf]
        %v1787 = vunpack.c.l.b16 %v1755
        %v1788 = vunpack.c.l.b16 %v1756
        %v1789 = vunpack.c.l.b16 %v1757
        %v1790 = vunpack.c.l.b16 %v1758
        %v1791 = vunpack.c.l.b16 %v1759
        %v1792 = vunpack.c.l.b16 %v1760
        %v1793 = vunpack.c.l.b16 %v1761
        %v1794 = vunpack.c.l.b16 %v1762
        %v1795 = vunpack.c.l.b16 %v1763
        %v1796 = vunpack.c.l.b16 %v1764
        %v1797 = vunpack.c.l.b16 %v1765
        %v1798 = vunpack.c.l.b16 %v1766
        %v1799 = vunpack.c.l.b16 %v1767
        %v1800 = vunpack.c.l.b16 %v1768
        %v1801 = vunpack.c.l.b16 %v1769
        %v1802 = vunpack.c.l.b16 %v1770
        %v1803 = vpack.c.b16 %v1788, %v1787
        %v1804 = vpack.c.b16 %v1790, %v1789
        %v1805 = vpack.c.b16 %v1792, %v1791
        %v1806 = vpack.c.b16 %v1794, %v1793
        %v1807 = vpack.c.b16 %v1796, %v1795
        %v1808 = vpack.c.b16 %v1798, %v1797
        %v1809 = vpack.c.b16 %v1800, %v1799
        %v1810 = vpack.c.b16 %v1802, %v1801
        %1819 = vmatprep.subr.bf16.mxu0 0
        %1820 = vmatpush1.bf16.msra.mxu0 %v1810
        %1821 = vmatprep.subr.bf16.mxu0 0
        %1822 = vmatpush1.bf16.msra.mxu0 %v1809
        %1823 = vmatprep.subr.bf16.mxu0 0
        %1824 = vmatpush1.bf16.msra.mxu0 %v1808
        %1825 = vmatprep.subr.bf16.mxu0 0
        %1826 = vmatpush1.bf16.msra.mxu0 %v1807
        %1827 = vmatprep.subr.bf16.mxu0 0
        %1828 = vmatpush1.bf16.msra.mxu0 %v1806
        %1829 = vmatprep.subr.bf16.mxu0 0
        %1830 = vmatpush1.bf16.msra.mxu0 %v1805
        %1831 = vmatprep.subr.bf16.mxu0 0
        %1832 = vmatpush1.bf16.msra.mxu0 %v1804
        %1833 = vmatprep.subr.bf16.mxu0 0
        %1834 = vmatpush1.bf16.msra.mxu0 %v1803
        %1835 = vmatprep.subr.bf16.mxu0 0
        %1836 = vmatpush2.bf16.msra.mxu0 0
        %1837 = vmatprep.subr.bf16.mxu0 0
        %1838 = vmatpush2.bf16.msra.mxu0 0
        %1839 = vmatprep.subr.bf16.mxu0 0
        %1840 = vmatpush2.bf16.msra.mxu0 0
        %1841 = vmatprep.subr.bf16.mxu0 0
        %1842 = vmatpush2.bf16.msra.mxu0 0
        %1843 = vmatprep.subr.bf16.mxu0 0
        %1844 = vmatpush2.bf16.msra.mxu0 0
        %1845 = vmatprep.subr.bf16.mxu0 0
        %1846 = vmatpush2.bf16.msra.mxu0 0
        %1847 = vmatprep.subr.bf16.mxu0 0
        %1848 = vmatpush2.bf16.msra.mxu0 0
        %1849 = vmatprep.subr.bf16.mxu0 0
        %1850 = vmatpush2.bf16.msra.mxu0 0
        %1851 = vmatprep.mubr.bf16.mxu0 0
        %1852 = vmatmul.mubr.bf16.gmra.mxu0 %v1286
        %v1853 = vpop.f32.mrf.mxu0
        %v1854 = vadd.f32 0.0, %v1853
        %v1855 = vpop.f32.mrf.mxu0
        %v1856 = vpop.f32.mrf.mxu0
        %v1857 = vadd.f32 0.0, %v1856
        %v1858 = vpop.f32.mrf.mxu0
        %1859 = vmatprep.mubr.bf16.mxu0 0
        %1860 = vmatmul.mubr.bf16.gmra.mxu0 %v1287
        %v1861 = vpop.f32.mrf.mxu0
        %v1862 = vadd.f32 0.0, %v1861
        %v1863 = vpop.f32.mrf.mxu0
        %v1864 = vpop.f32.mrf.mxu0
        %v1865 = vadd.f32 0.0, %v1864
        %v1866 = vpop.f32.mrf.mxu0
        %1867 = vmatprep.mubr.bf16.mxu0 0
        %1868 = vmatmul.mubr.bf16.gmra.mxu0 %v1288
        %v1869 = vpop.f32.mrf.mxu0
        %v1870 = vadd.f32 0.0, %v1869
        %v1871 = vpop.f32.mrf.mxu0
        %v1872 = vpop.f32.mrf.mxu0
        %v1873 = vadd.f32 0.0, %v1872
        %v1874 = vpop.f32.mrf.mxu0
        %1875 = vmatprep.mubr.bf16.mxu0 0
        %1876 = vmatmul.mubr.bf16.gmra.mxu0 %v1289
        %v1877 = vpop.f32.mrf.mxu0
        %v1878 = vadd.f32 0.0, %v1877
        %v1879 = vpop.f32.mrf.mxu0
        %v1880 = vpop.f32.mrf.mxu0
        %v1881 = vadd.f32 0.0, %v1880
        %v1882 = vpop.f32.mrf.mxu0
        %1883 = vmatprep.mubr.bf16.mxu0 0
        %1884 = vmatmul.mubr.bf16.gmra.mxu0 %v1290
        %v1885 = vpop.f32.mrf.mxu0
        %v1886 = vadd.f32 0.0, %v1885
        %v1887 = vpop.f32.mrf.mxu0
        %v1888 = vpop.f32.mrf.mxu0
        %v1889 = vadd.f32 0.0, %v1888
        %v1890 = vpop.f32.mrf.mxu0
        %1891 = vmatprep.mubr.bf16.mxu0 0
        %1892 = vmatmul.mubr.bf16.gmra.mxu0 %v1291
        %v1893 = vpop.f32.mrf.mxu0
        %v1894 = vadd.f32 0.0, %v1893
        %v1895 = vpop.f32.mrf.mxu0
        %v1896 = vpop.f32.mrf.mxu0
        %v1897 = vadd.f32 0.0, %v1896
        %v1898 = vpop.f32.mrf.mxu0
        %1899 = vmatprep.mubr.bf16.mxu0 0
        %1900 = vmatmul.mubr.bf16.gmra.mxu0 %v1292
        %v1901 = vpop.f32.mrf.mxu0
        %v1902 = vadd.f32 0.0, %v1901
        %v1903 = vpop.f32.mrf.mxu0
        %v1904 = vpop.f32.mrf.mxu0
        %v1905 = vadd.f32 0.0, %v1904
        %v1906 = vpop.f32.mrf.mxu0
        %1907 = vmatprep.mubr.bf16.mxu0 0
        %1908 = vmatmul.mubr.bf16.gmra.mxu0 %v1293
        %v1909 = vpop.f32.mrf.mxu0
        %v1910 = vadd.f32 0.0, %v1909
        %v1911 = vpop.f32.mrf.mxu0
        %v1912 = vpop.f32.mrf.mxu0
        %v1913 = vadd.f32 0.0, %v1912
        %v1914 = vpop.f32.mrf.mxu0
        %1915 = vmatprep.mubr.bf16.mxu0 0
        %1916 = vmatmul.mubr.bf16.gmra.mxu0 %v1294
        %v1917 = vpop.f32.mrf.mxu0
        %v1918 = vadd.f32 0.0, %v1917
        %v1919 = vpop.f32.mrf.mxu0
        %v1920 = vpop.f32.mrf.mxu0
        %v1921 = vadd.f32 0.0, %v1920
        %v1922 = vpop.f32.mrf.mxu0
        %1923 = vmatprep.mubr.bf16.mxu0 0
        %1924 = vmatmul.mubr.bf16.gmra.mxu0 %v1295
        %v1925 = vpop.f32.mrf.mxu0
        %v1926 = vadd.f32 0.0, %v1925
        %v1927 = vpop.f32.mrf.mxu0
        %v1928 = vpop.f32.mrf.mxu0
        %v1929 = vadd.f32 0.0, %v1928
        %v1930 = vpop.f32.mrf.mxu0
        %1931 = vmatprep.mubr.bf16.mxu0 0
        %1932 = vmatmul.mubr.bf16.gmra.mxu0 %v1296
        %v1933 = vpop.f32.mrf.mxu0
        %v1934 = vadd.f32 0.0, %v1933
        %v1935 = vpop.f32.mrf.mxu0
        %v1936 = vpop.f32.mrf.mxu0
        %v1937 = vadd.f32 0.0, %v1936
        %v1938 = vpop.f32.mrf.mxu0
        %1939 = vmatprep.mubr.bf16.mxu0 0
        %1940 = vmatmul.mubr.bf16.gmra.mxu0 %v1297
        %v1941 = vpop.f32.mrf.mxu0
        %v1942 = vadd.f32 0.0, %v1941
        %v1943 = vpop.f32.mrf.mxu0
        %v1944 = vpop.f32.mrf.mxu0
        %v1945 = vadd.f32 0.0, %v1944
        %v1946 = vpop.f32.mrf.mxu0
        %1947 = vmatprep.mubr.bf16.mxu0 0
        %1948 = vmatmul.mubr.bf16.gmra.mxu0 %v1298
        %v1949 = vpop.f32.mrf.mxu0
        %v1950 = vadd.f32 0.0, %v1949
        %v1951 = vpop.f32.mrf.mxu0
        %v1952 = vpop.f32.mrf.mxu0
        %v1953 = vadd.f32 0.0, %v1952
        %v1954 = vpop.f32.mrf.mxu0
        %1955 = vmatprep.mubr.bf16.mxu0 0
        %1956 = vmatmul.mubr.bf16.gmra.mxu0 %v1299
        %v1957 = vpop.f32.mrf.mxu0
        %v1958 = vadd.f32 0.0, %v1957
        %v1959 = vpop.f32.mrf.mxu0
        %v1960 = vpop.f32.mrf.mxu0
        %v1961 = vadd.f32 0.0, %v1960
        %v1962 = vpop.f32.mrf.mxu0
        %1963 = vmatprep.mubr.bf16.mxu0 0
        %1964 = vmatmul.mubr.bf16.gmra.mxu0 %v1300
        %v1965 = vpop.f32.mrf.mxu0
        %v1966 = vadd.f32 0.0, %v1965
        %v1967 = vpop.f32.mrf.mxu0
        %v1968 = vpop.f32.mrf.mxu0
        %v1969 = vadd.f32 0.0, %v1968
        %v1970 = vpop.f32.mrf.mxu0
        %1971 = vmatprep.mubr.bf16.mxu0 0
        %1972 = vmatmul.mubr.bf16.gmra.mxu0 %v1301
        %v1973 = vpop.f32.mrf.mxu0
        %v1974 = vadd.f32 0.0, %v1973
        %v1975 = vpop.f32.mrf.mxu0
        %v1976 = vpop.f32.mrf.mxu0
        %v1977 = vadd.f32 0.0, %v1976
        %v1978 = vpop.f32.mrf.mxu0
        %1979 = vdwg.mxu0
        %v1996 = vunpack.c.l.b16 %v1739
        %v1997 = vunpack.c.l.b16 %v1740
        %v1998 = vunpack.c.l.b16 %v1741
        %v1999 = vunpack.c.l.b16 %v1742
        %v2000 = vunpack.c.l.b16 %v1743
        %v2001 = vunpack.c.l.b16 %v1744
        %v2002 = vunpack.c.l.b16 %v1745
        %v2003 = vunpack.c.l.b16 %v1746
        %v2004 = vunpack.c.l.b16 %v1747
        %v2005 = vunpack.c.l.b16 %v1748
        %v2006 = vunpack.c.l.b16 %v1749
        %v2007 = vunpack.c.l.b16 %v1750
        %v2008 = vunpack.c.l.b16 %v1751
        %v2009 = vunpack.c.l.b16 %v1752
        %v2010 = vunpack.c.l.b16 %v1753
        %v2011 = vunpack.c.l.b16 %v1754
        %v2012 = vpack.c.b16 %v1997, %v1996
        %v2013 = vpack.c.b16 %v1999, %v1998
        %v2014 = vpack.c.b16 %v2001, %v2000
        %v2015 = vpack.c.b16 %v2003, %v2002
        %v2016 = vpack.c.b16 %v2005, %v2004
        %v2017 = vpack.c.b16 %v2007, %v2006
        %v2018 = vpack.c.b16 %v2009, %v2008
        %v2019 = vpack.c.b16 %v2011, %v2010
        %2028 = vmatprep.subr.bf16.mxu0 0
        %2029 = vmatpush1.bf16.msra.mxu0 %v2019
        %2030 = vmatprep.subr.bf16.mxu0 0
        %2031 = vmatpush1.bf16.msra.mxu0 %v2018
        %2032 = vmatprep.subr.bf16.mxu0 0
        %2033 = vmatpush1.bf16.msra.mxu0 %v2017
        %2034 = vmatprep.subr.bf16.mxu0 0
        %2035 = vmatpush1.bf16.msra.mxu0 %v2016
        %2036 = vmatprep.subr.bf16.mxu0 0
        %2037 = vmatpush1.bf16.msra.mxu0 %v2015
        %2038 = vmatprep.subr.bf16.mxu0 0
        %2039 = vmatpush1.bf16.msra.mxu0 %v2014
        %2040 = vmatprep.subr.bf16.mxu0 0
        %2041 = vmatpush1.bf16.msra.mxu0 %v2013
        %2042 = vmatprep.subr.bf16.mxu0 0
        %2043 = vmatpush1.bf16.msra.mxu0 %v2012
        %2044 = vmatprep.subr.bf16.mxu0 0
        %2045 = vmatpush2.bf16.msra.mxu0 0
        %2046 = vmatprep.subr.bf16.mxu0 0
        %2047 = vmatpush2.bf16.msra.mxu0 0
        %2048 = vmatprep.subr.bf16.mxu0 0
        %2049 = vmatpush2.bf16.msra.mxu0 0
        %2050 = vmatprep.subr.bf16.mxu0 0
        %2051 = vmatpush2.bf16.msra.mxu0 0
        %2052 = vmatprep.subr.bf16.mxu0 0
        %2053 = vmatpush2.bf16.msra.mxu0 0
        %2054 = vmatprep.subr.bf16.mxu0 0
        %2055 = vmatpush2.bf16.msra.mxu0 0
        %2056 = vmatprep.subr.bf16.mxu0 0
        %2057 = vmatpush2.bf16.msra.mxu0 0
        %2058 = vmatprep.subr.bf16.mxu0 0
        %2059 = vmatpush2.bf16.msra.mxu0 0
        %2060 = vmatprep.mubr.bf16.mxu0 0
        %2061 = vmatmul.mubr.bf16.gmra.mxu0 %v844
        %v2062 = vpop.f32.mrf.mxu0
        %v2063 = vadd.f32 %v1854, %v2062
        %v2064 = vpop.f32.mrf.mxu0
        %v2065 = vpop.f32.mrf.mxu0
        %v2066 = vadd.f32 %v1857, %v2065
        %v2067 = vpop.f32.mrf.mxu0
        %2068 = vmatprep.mubr.bf16.mxu0 0
        %2069 = vmatmul.mubr.bf16.gmra.mxu0 %v845
        %v2070 = vpop.f32.mrf.mxu0
        %v2071 = vadd.f32 %v1862, %v2070
        %v2072 = vpop.f32.mrf.mxu0
        %v2073 = vpop.f32.mrf.mxu0
        %v2074 = vadd.f32 %v1865, %v2073
        %v2075 = vpop.f32.mrf.mxu0
        %2076 = vmatprep.mubr.bf16.mxu0 0
        %2077 = vmatmul.mubr.bf16.gmra.mxu0 %v846
        %v2078 = vpop.f32.mrf.mxu0
        %v2079 = vadd.f32 %v1870, %v2078
        %v2080 = vpop.f32.mrf.mxu0
        %v2081 = vpop.f32.mrf.mxu0
        %v2082 = vadd.f32 %v1873, %v2081
        %v2083 = vpop.f32.mrf.mxu0
        %2084 = vmatprep.mubr.bf16.mxu0 0
        %2085 = vmatmul.mubr.bf16.gmra.mxu0 %v847
        %v2086 = vpop.f32.mrf.mxu0
        %v2087 = vadd.f32 %v1878, %v2086
        %v2088 = vpop.f32.mrf.mxu0
        %v2089 = vpop.f32.mrf.mxu0
        %v2090 = vadd.f32 %v1881, %v2089
        %v2091 = vpop.f32.mrf.mxu0
        %2092 = vmatprep.mubr.bf16.mxu0 0
        %2093 = vmatmul.mubr.bf16.gmra.mxu0 %v848
        %v2094 = vpop.f32.mrf.mxu0
        %v2095 = vadd.f32 %v1886, %v2094
        %v2096 = vpop.f32.mrf.mxu0
        %v2097 = vpop.f32.mrf.mxu0
        %v2098 = vadd.f32 %v1889, %v2097
        %v2099 = vpop.f32.mrf.mxu0
        %2100 = vmatprep.mubr.bf16.mxu0 0
        %2101 = vmatmul.mubr.bf16.gmra.mxu0 %v849
        %v2102 = vpop.f32.mrf.mxu0
        %v2103 = vadd.f32 %v1894, %v2102
        %v2104 = vpop.f32.mrf.mxu0
        %v2105 = vpop.f32.mrf.mxu0
        %v2106 = vadd.f32 %v1897, %v2105
        %v2107 = vpop.f32.mrf.mxu0
        %2108 = vmatprep.mubr.bf16.mxu0 0
        %2109 = vmatmul.mubr.bf16.gmra.mxu0 %v850
        %v2110 = vpop.f32.mrf.mxu0
        %v2111 = vadd.f32 %v1902, %v2110
        %v2112 = vpop.f32.mrf.mxu0
        %v2113 = vpop.f32.mrf.mxu0
        %v2114 = vadd.f32 %v1905, %v2113
        %v2115 = vpop.f32.mrf.mxu0
        %2116 = vmatprep.mubr.bf16.mxu0 0
        %2117 = vmatmul.mubr.bf16.gmra.mxu0 %v851
        %v2118 = vpop.f32.mrf.mxu0
        %v2119 = vadd.f32 %v1910, %v2118
        %v2120 = vpop.f32.mrf.mxu0
        %v2121 = vpop.f32.mrf.mxu0
        %v2122 = vadd.f32 %v1913, %v2121
        %v2123 = vpop.f32.mrf.mxu0
        %2124 = vmatprep.mubr.bf16.mxu0 0
        %2125 = vmatmul.mubr.bf16.gmra.mxu0 %v852
        %v2126 = vpop.f32.mrf.mxu0
        %v2127 = vadd.f32 %v1918, %v2126
        %v2128 = vpop.f32.mrf.mxu0
        %v2129 = vpop.f32.mrf.mxu0
        %v2130 = vadd.f32 %v1921, %v2129
        %v2131 = vpop.f32.mrf.mxu0
        %2132 = vmatprep.mubr.bf16.mxu0 0
        %2133 = vmatmul.mubr.bf16.gmra.mxu0 %v853
        %v2134 = vpop.f32.mrf.mxu0
        %v2135 = vadd.f32 %v1926, %v2134
        %v2136 = vpop.f32.mrf.mxu0
        %v2137 = vpop.f32.mrf.mxu0
        %v2138 = vadd.f32 %v1929, %v2137
        %v2139 = vpop.f32.mrf.mxu0
        %2140 = vmatprep.mubr.bf16.mxu0 0
        %2141 = vmatmul.mubr.bf16.gmra.mxu0 %v854
        %v2142 = vpop.f32.mrf.mxu0
        %v2143 = vadd.f32 %v1934, %v2142
        %v2144 = vpop.f32.mrf.mxu0
        %v2145 = vpop.f32.mrf.mxu0
        %v2146 = vadd.f32 %v1937, %v2145
        %v2147 = vpop.f32.mrf.mxu0
        %2148 = vmatprep.mubr.bf16.mxu0 0
        %2149 = vmatmul.mubr.bf16.gmra.mxu0 %v855
        %v2150 = vpop.f32.mrf.mxu0
        %v2151 = vadd.f32 %v1942, %v2150
        %v2152 = vpop.f32.mrf.mxu0
        %v2153 = vpop.f32.mrf.mxu0
        %v2154 = vadd.f32 %v1945, %v2153
        %v2155 = vpop.f32.mrf.mxu0
        %2156 = vmatprep.mubr.bf16.mxu0 0
        %2157 = vmatmul.mubr.bf16.gmra.mxu0 %v856
        %v2158 = vpop.f32.mrf.mxu0
        %v2159 = vadd.f32 %v1950, %v2158
        %v2160 = vpop.f32.mrf.mxu0
        %v2161 = vpop.f32.mrf.mxu0
        %v2162 = vadd.f32 %v1953, %v2161
        %v2163 = vpop.f32.mrf.mxu0
        %2164 = vmatprep.mubr.bf16.mxu0 0
        %2165 = vmatmul.mubr.bf16.gmra.mxu0 %v857
        %v2166 = vpop.f32.mrf.mxu0
        %v2167 = vadd.f32 %v1958, %v2166
        %v2168 = vpop.f32.mrf.mxu0
        %v2169 = vpop.f32.mrf.mxu0
        %v2170 = vadd.f32 %v1961, %v2169
        %v2171 = vpop.f32.mrf.mxu0
        %2172 = vmatprep.mubr.bf16.mxu0 0
        %2173 = vmatmul.mubr.bf16.gmra.mxu0 %v858
        %v2174 = vpop.f32.mrf.mxu0
        %v2175 = vadd.f32 %v1966, %v2174
        %v2176 = vpop.f32.mrf.mxu0
        %v2177 = vpop.f32.mrf.mxu0
        %v2178 = vadd.f32 %v1969, %v2177
        %v2179 = vpop.f32.mrf.mxu0
        %2180 = vmatprep.mubr.bf16.mxu0 0
        %2181 = vmatmul.mubr.bf16.gmra.mxu0 %v859
        %v2182 = vpop.f32.mrf.mxu0
        %v2183 = vadd.f32 %v1974, %v2182
        %v2184 = vpop.f32.mrf.mxu0
        %v2185 = vpop.f32.mrf.mxu0
        %v2186 = vadd.f32 %v1977, %v2185
        %v2187 = vpop.f32.mrf.mxu0
        %2188 = vdwg.mxu0
        %v2189 = vld [vmem:[%s6] sm:$0xf]
        %v2190 = vld [vmem:[%s6 + $0x4] sm:$0xf]
        %v2191 = vld [vmem:[%s6 + $0x8] sm:$0xf]
        %v2192 = vld [vmem:[%s6 + $0xc] sm:$0xf]
        %v2193 = vld [vmem:[%s6 + $0x10] sm:$0xf]
        %v2194 = vld [vmem:[%s6 + $0x14] sm:$0xf]
        %v2195 = vld [vmem:[%s6 + $0x18] sm:$0xf]
        %v2196 = vld [vmem:[%s6 + $0x1c] sm:$0xf]
        %v2197 = vld [vmem:[%s6 + $0x20] sm:$0xf]
        %v2198 = vld [vmem:[%s6 + $0x24] sm:$0xf]
        %v2199 = vld [vmem:[%s6 + $0x28] sm:$0xf]
        %v2200 = vld [vmem:[%s6 + $0x2c] sm:$0xf]
        %v2201 = vld [vmem:[%s6 + $0x30] sm:$0xf]
        %v2202 = vld [vmem:[%s6 + $0x34] sm:$0xf]
        %v2203 = vld [vmem:[%s6 + $0x38] sm:$0xf]
        %v2204 = vld [vmem:[%s6 + $0x3c] sm:$0xf]
        %v2221 = vunpack.c.l.b16 %v2189
        %v2222 = vunpack.c.l.b16 %v2190
        %v2223 = vunpack.c.l.b16 %v2191
        %v2224 = vunpack.c.l.b16 %v2192
        %v2225 = vunpack.c.l.b16 %v2193
        %v2226 = vunpack.c.l.b16 %v2194
        %v2227 = vunpack.c.l.b16 %v2195
        %v2228 = vunpack.c.l.b16 %v2196
        %v2229 = vunpack.c.l.b16 %v2197
        %v2230 = vunpack.c.l.b16 %v2198
        %v2231 = vunpack.c.l.b16 %v2199
        %v2232 = vunpack.c.l.b16 %v2200
        %v2233 = vunpack.c.l.b16 %v2201
        %v2234 = vunpack.c.l.b16 %v2202
        %v2235 = vunpack.c.l.b16 %v2203
        %v2236 = vunpack.c.l.b16 %v2204
        %v2237 = vpack.c.b16 %v2222, %v2221
        %v2238 = vpack.c.b16 %v2224, %v2223
        %v2239 = vpack.c.b16 %v2226, %v2225
        %v2240 = vpack.c.b16 %v2228, %v2227
        %v2241 = vpack.c.b16 %v2230, %v2229
        %v2242 = vpack.c.b16 %v2232, %v2231
        %v2243 = vpack.c.b16 %v2234, %v2233
        %v2244 = vpack.c.b16 %v2236, %v2235
        %2253 = vmatprep.subr.bf16.mxu0 0
        %2254 = vmatpush1.bf16.msra.mxu0 %v2244
        %2255 = vmatprep.subr.bf16.mxu0 0
        %2256 = vmatpush1.bf16.msra.mxu0 %v2243
        %2257 = vmatprep.subr.bf16.mxu0 0
        %2258 = vmatpush1.bf16.msra.mxu0 %v2242
        %2259 = vmatprep.subr.bf16.mxu0 0
        %2260 = vmatpush1.bf16.msra.mxu0 %v2241
        %2261 = vmatprep.subr.bf16.mxu0 0
        %2262 = vmatpush1.bf16.msra.mxu0 %v2240
        %2263 = vmatprep.subr.bf16.mxu0 0
        %2264 = vmatpush1.bf16.msra.mxu0 %v2239
        %2265 = vmatprep.subr.bf16.mxu0 0
        %2266 = vmatpush1.bf16.msra.mxu0 %v2238
        %2267 = vmatprep.subr.bf16.mxu0 0
        %2268 = vmatpush1.bf16.msra.mxu0 %v2237
        %2269 = vmatprep.subr.bf16.mxu0 0
        %2270 = vmatpush2.bf16.msra.mxu0 0
        %2271 = vmatprep.subr.bf16.mxu0 0
        %2272 = vmatpush2.bf16.msra.mxu0 0
        %2273 = vmatprep.subr.bf16.mxu0 0
        %2274 = vmatpush2.bf16.msra.mxu0 0
        %2275 = vmatprep.subr.bf16.mxu0 0
        %2276 = vmatpush2.bf16.msra.mxu0 0
        %2277 = vmatprep.subr.bf16.mxu0 0
        %2278 = vmatpush2.bf16.msra.mxu0 0
        %2279 = vmatprep.subr.bf16.mxu0 0
        %2280 = vmatpush2.bf16.msra.mxu0 0
        %2281 = vmatprep.subr.bf16.mxu0 0
        %2282 = vmatpush2.bf16.msra.mxu0 0
        %2283 = vmatprep.subr.bf16.mxu0 0
        %2284 = vmatpush2.bf16.msra.mxu0 0
        %2285 = vmatprep.mubr.bf16.mxu0 0
        %2286 = vmatmul.mubr.bf16.gmra.mxu0 %v1723
        %v2287 = vpop.f32.mrf.mxu0
        %v2288 = vadd.f32 0.0, %v2287
        %v2289 = vpop.f32.mrf.mxu0
        %v2290 = vpop.f32.mrf.mxu0
        %v2291 = vadd.f32 0.0, %v2290
        %v2292 = vpop.f32.mrf.mxu0
        %2293 = vmatprep.mubr.bf16.mxu0 0
        %2294 = vmatmul.mubr.bf16.gmra.mxu0 %v1724
        %v2295 = vpop.f32.mrf.mxu0
        %v2296 = vadd.f32 0.0, %v2295
        %v2297 = vpop.f32.mrf.mxu0
        %v2298 = vpop.f32.mrf.mxu0
        %v2299 = vadd.f32 0.0, %v2298
        %v2300 = vpop.f32.mrf.mxu0
        %2301 = vmatprep.mubr.bf16.mxu0 0
        %2302 = vmatmul.mubr.bf16.gmra.mxu0 %v1725
        %v2303 = vpop.f32.mrf.mxu0
        %v2304 = vadd.f32 0.0, %v2303
        %v2305 = vpop.f32.mrf.mxu0
        %v2306 = vpop.f32.mrf.mxu0
        %v2307 = vadd.f32 0.0, %v2306
        %v2308 = vpop.f32.mrf.mxu0
        %2309 = vmatprep.mubr.bf16.mxu0 0
        %2310 = vmatmul.mubr.bf16.gmra.mxu0 %v1726
        %v2311 = vpop.f32.mrf.mxu0
        %v2312 = vadd.f32 0.0, %v2311
        %v2313 = vpop.f32.mrf.mxu0
        %v2314 = vpop.f32.mrf.mxu0
        %v2315 = vadd.f32 0.0, %v2314
        %v2316 = vpop.f32.mrf.mxu0
        %2317 = vmatprep.mubr.bf16.mxu0 0
        %2318 = vmatmul.mubr.bf16.gmra.mxu0 %v1727
        %v2319 = vpop.f32.mrf.mxu0
        %v2320 = vadd.f32 0.0, %v2319
        %v2321 = vpop.f32.mrf.mxu0
        %v2322 = vpop.f32.mrf.mxu0
        %v2323 = vadd.f32 0.0, %v2322
        %v2324 = vpop.f32.mrf.mxu0
        %2325 = vmatprep.mubr.bf16.mxu0 0
        %2326 = vmatmul.mubr.bf16.gmra.mxu0 %v1728
        %v2327 = vpop.f32.mrf.mxu0
        %v2328 = vadd.f32 0.0, %v2327
        %v2329 = vpop.f32.mrf.mxu0
        %v2330 = vpop.f32.mrf.mxu0
        %v2331 = vadd.f32 0.0, %v2330
        %v2332 = vpop.f32.mrf.mxu0
        %2333 = vmatprep.mubr.bf16.mxu0 0
        %2334 = vmatmul.mubr.bf16.gmra.mxu0 %v1729
        %v2335 = vpop.f32.mrf.mxu0
        %v2336 = vadd.f32 0.0, %v2335
        %v2337 = vpop.f32.mrf.mxu0
        %v2338 = vpop.f32.mrf.mxu0
        %v2339 = vadd.f32 0.0, %v2338
        %v2340 = vpop.f32.mrf.mxu0
        %2341 = vmatprep.mubr.bf16.mxu0 0
        %2342 = vmatmul.mubr.bf16.gmra.mxu0 %v1730
        %v2343 = vpop.f32.mrf.mxu0
        %v2344 = vadd.f32 0.0, %v2343
        %v2345 = vpop.f32.mrf.mxu0
        %v2346 = vpop.f32.mrf.mxu0
        %v2347 = vadd.f32 0.0, %v2346
        %v2348 = vpop.f32.mrf.mxu0
        %2349 = vmatprep.mubr.bf16.mxu0 0
        %2350 = vmatmul.mubr.bf16.gmra.mxu0 %v1731
        %v2351 = vpop.f32.mrf.mxu0
        %v2352 = vadd.f32 0.0, %v2351
        %v2353 = vpop.f32.mrf.mxu0
        %v2354 = vpop.f32.mrf.mxu0
        %v2355 = vadd.f32 0.0, %v2354
        %v2356 = vpop.f32.mrf.mxu0
        %2357 = vmatprep.mubr.bf16.mxu0 0
        %2358 = vmatmul.mubr.bf16.gmra.mxu0 %v1732
        %v2359 = vpop.f32.mrf.mxu0
        %v2360 = vadd.f32 0.0, %v2359
        %v2361 = vpop.f32.mrf.mxu0
        %v2362 = vpop.f32.mrf.mxu0
        %v2363 = vadd.f32 0.0, %v2362
        %v2364 = vpop.f32.mrf.mxu0
        %2365 = vmatprep.mubr.bf16.mxu0 0
        %2366 = vmatmul.mubr.bf16.gmra.mxu0 %v1733
        %v2367 = vpop.f32.mrf.mxu0
        %v2368 = vadd.f32 0.0, %v2367
        %v2369 = vpop.f32.mrf.mxu0
        %v2370 = vpop.f32.mrf.mxu0
        %v2371 = vadd.f32 0.0, %v2370
        %v2372 = vpop.f32.mrf.mxu0
        %2373 = vmatprep.mubr.bf16.mxu0 0
        %2374 = vmatmul.mubr.bf16.gmra.mxu0 %v1734
        %v2375 = vpop.f32.mrf.mxu0
        %v2376 = vadd.f32 0.0, %v2375
        %v2377 = vpop.f32.mrf.mxu0
        %v2378 = vpop.f32.mrf.mxu0
        %v2379 = vadd.f32 0.0, %v2378
        %v2380 = vpop.f32.mrf.mxu0
        %2381 = vmatprep.mubr.bf16.mxu0 0
        %2382 = vmatmul.mubr.bf16.gmra.mxu0 %v1735
        %v2383 = vpop.f32.mrf.mxu0
        %v2384 = vadd.f32 0.0, %v2383
        %v2385 = vpop.f32.mrf.mxu0
        %v2386 = vpop.f32.mrf.mxu0
        %v2387 = vadd.f32 0.0, %v2386
        %v2388 = vpop.f32.mrf.mxu0
        %2389 = vmatprep.mubr.bf16.mxu0 0
        %2390 = vmatmul.mubr.bf16.gmra.mxu0 %v1736
        %v2391 = vpop.f32.mrf.mxu0
        %v2392 = vadd.f32 0.0, %v2391
        %v2393 = vpop.f32.mrf.mxu0
        %v2394 = vpop.f32.mrf.mxu0
        %v2395 = vadd.f32 0.0, %v2394
        %v2396 = vpop.f32.mrf.mxu0
        %2397 = vmatprep.mubr.bf16.mxu0 0
        %2398 = vmatmul.mubr.bf16.gmra.mxu0 %v1737
        %v2399 = vpop.f32.mrf.mxu0
        %v2400 = vadd.f32 0.0, %v2399
        %v2401 = vpop.f32.mrf.mxu0
        %v2402 = vpop.f32.mrf.mxu0
        %v2403 = vadd.f32 0.0, %v2402
        %v2404 = vpop.f32.mrf.mxu0
        %2405 = vmatprep.mubr.bf16.mxu0 0
        %2406 = vmatmul.mubr.bf16.gmra.mxu0 %v1738
        %v2407 = vpop.f32.mrf.mxu0
        %v2408 = vadd.f32 0.0, %v2407
        %v2409 = vpop.f32.mrf.mxu0
        %v2410 = vpop.f32.mrf.mxu0
        %v2411 = vadd.f32 0.0, %v2410
        %v2412 = vpop.f32.mrf.mxu0
        %2413 = vdwg.mxu0
        %v2414 = vadd.f32 %v2063, %v2288
        %v2415 = vadd.f32 %v2066, %v2291
        %v2416 = vadd.f32 %v2071, %v2296
        %v2417 = vadd.f32 %v2074, %v2299
        %v2418 = vadd.f32 %v2079, %v2304
        %v2419 = vadd.f32 %v2082, %v2307
        %v2420 = vadd.f32 %v2087, %v2312
        %v2421 = vadd.f32 %v2090, %v2315
        %v2422 = vadd.f32 %v2095, %v2320
        %v2423 = vadd.f32 %v2098, %v2323
        %v2424 = vadd.f32 %v2103, %v2328
        %v2425 = vadd.f32 %v2106, %v2331
        %v2426 = vadd.f32 %v2111, %v2336
        %v2427 = vadd.f32 %v2114, %v2339
        %v2428 = vadd.f32 %v2119, %v2344
        %v2429 = vadd.f32 %v2122, %v2347
        %v2430 = vadd.f32 %v2127, %v2352
        %v2431 = vadd.f32 %v2130, %v2355
        %v2432 = vadd.f32 %v2135, %v2360
        %v2433 = vadd.f32 %v2138, %v2363
        %v2434 = vadd.f32 %v2143, %v2368
        %v2435 = vadd.f32 %v2146, %v2371
        %v2436 = vadd.f32 %v2151, %v2376
        %v2437 = vadd.f32 %v2154, %v2379
        %v2438 = vadd.f32 %v2159, %v2384
        %v2439 = vadd.f32 %v2162, %v2387
        %v2440 = vadd.f32 %v2167, %v2392
        %v2441 = vadd.f32 %v2170, %v2395
        %v2442 = vadd.f32 %v2175, %v2400
        %v2443 = vadd.f32 %v2178, %v2403
        %v2444 = vadd.f32 %v2183, %v2408
        %v2445 = vadd.f32 %v2186, %v2411
        %v2446 = vld [vmem:[%s7] sm:$0x1]
        %v2448 = vlaneseq
        %v2449 = vshrl.u32 %v2448, 7
        %v2450 = vsub.s32 0, %v2449
        %v2451 = vrot.slane %v2446, %v2450
        %v2453 = vadd.f32 %v2414, %v2451
        %v2454 = vadd.f32 %v2415, %v2451
        %v2455 = vadd.f32 %v2416, %v2451
        %v2456 = vadd.f32 %v2417, %v2451
        %v2457 = vadd.f32 %v2418, %v2451
        %v2458 = vadd.f32 %v2419, %v2451
        %v2459 = vadd.f32 %v2420, %v2451
        %v2460 = vadd.f32 %v2421, %v2451
        %v2461 = vadd.f32 %v2422, %v2451
        %v2462 = vadd.f32 %v2423, %v2451
        %v2463 = vadd.f32 %v2424, %v2451
        %v2464 = vadd.f32 %v2425, %v2451
        %v2465 = vadd.f32 %v2426, %v2451
        %v2466 = vadd.f32 %v2427, %v2451
        %v2467 = vadd.f32 %v2428, %v2451
        %v2468 = vadd.f32 %v2429, %v2451
        %v2469 = vadd.f32 %v2430, %v2451
        %v2470 = vadd.f32 %v2431, %v2451
        %v2471 = vadd.f32 %v2432, %v2451
        %v2472 = vadd.f32 %v2433, %v2451
        %v2473 = vadd.f32 %v2434, %v2451
        %v2474 = vadd.f32 %v2435, %v2451
        %v2475 = vadd.f32 %v2436, %v2451
        %v2476 = vadd.f32 %v2437, %v2451
        %v2477 = vadd.f32 %v2438, %v2451
        %v2478 = vadd.f32 %v2439, %v2451
        %v2479 = vadd.f32 %v2440, %v2451
        %v2480 = vadd.f32 %v2441, %v2451
        %v2481 = vadd.f32 %v2442, %v2451
        %v2482 = vadd.f32 %v2443, %v2451
        %v2483 = vadd.f32 %v2444, %v2451
        %v2484 = vadd.f32 %v2445, %v2451
        %v2485 = vmax.f32 %v2453, 0.0
        %v2486 = vmax.f32 %v2454, 0.0
        %v2487 = vmax.f32 %v2455, 0.0
        %v2488 = vmax.f32 %v2456, 0.0
        %v2489 = vmax.f32 %v2457, 0.0
        %v2490 = vmax.f32 %v2458, 0.0
        %v2491 = vmax.f32 %v2459, 0.0
        %v2492 = vmax.f32 %v2460, 0.0
        %v2493 = vmax.f32 %v2461, 0.0
        %v2494 = vmax.f32 %v2462, 0.0
        %v2495 = vmax.f32 %v2463, 0.0
        %v2496 = vmax.f32 %v2464, 0.0
        %v2497 = vmax.f32 %v2465, 0.0
        %v2498 = vmax.f32 %v2466, 0.0
        %v2499 = vmax.f32 %v2467, 0.0
        %v2500 = vmax.f32 %v2468, 0.0
        %v2501 = vmax.f32 %v2469, 0.0
        %v2502 = vmax.f32 %v2470, 0.0
        %v2503 = vmax.f32 %v2471, 0.0
        %v2504 = vmax.f32 %v2472, 0.0
        %v2505 = vmax.f32 %v2473, 0.0
        %v2506 = vmax.f32 %v2474, 0.0
        %v2507 = vmax.f32 %v2475, 0.0
        %v2508 = vmax.f32 %v2476, 0.0
        %v2509 = vmax.f32 %v2477, 0.0
        %v2510 = vmax.f32 %v2478, 0.0
        %v2511 = vmax.f32 %v2479, 0.0
        %v2512 = vmax.f32 %v2480, 0.0
        %v2513 = vmax.f32 %v2481, 0.0
        %v2514 = vmax.f32 %v2482, 0.0
        %v2515 = vmax.f32 %v2483, 0.0
        %v2516 = vmax.f32 %v2484, 0.0
        %v2517 = vld [vmem:[%s8] sm:$0x1]
        %v2519 = vlaneseq
        %v2520 = vshrl.u32 %v2519, 7
        %v2521 = vsub.s32 0, %v2520
        %v2522 = vrot.slane %v2517, %v2521
        %v2524 = vmul.f32 %v2485, %v2522
        %v2525 = vmul.f32 %v2486, %v2522
        %v2526 = vmul.f32 %v2487, %v2522
        %v2527 = vmul.f32 %v2488, %v2522
        %v2528 = vmul.f32 %v2489, %v2522
        %v2529 = vmul.f32 %v2490, %v2522
        %v2530 = vmul.f32 %v2491, %v2522
        %v2531 = vmul.f32 %v2492, %v2522
        %v2532 = vmul.f32 %v2493, %v2522
        %v2533 = vmul.f32 %v2494, %v2522
        %v2534 = vmul.f32 %v2495, %v2522
        %v2535 = vmul.f32 %v2496, %v2522
        %v2536 = vmul.f32 %v2497, %v2522
        %v2537 = vmul.f32 %v2498, %v2522
        %v2538 = vmul.f32 %v2499, %v2522
        %v2539 = vmul.f32 %v2500, %v2522
        %v2540 = vmul.f32 %v2501, %v2522
        %v2541 = vmul.f32 %v2502, %v2522
        %v2542 = vmul.f32 %v2503, %v2522
        %v2543 = vmul.f32 %v2504, %v2522
        %v2544 = vmul.f32 %v2505, %v2522
        %v2545 = vmul.f32 %v2506, %v2522
        %v2546 = vmul.f32 %v2507, %v2522
        %v2547 = vmul.f32 %v2508, %v2522
        %v2548 = vmul.f32 %v2509, %v2522
        %v2549 = vmul.f32 %v2510, %v2522
        %v2550 = vmul.f32 %v2511, %v2522
        %v2551 = vmul.f32 %v2512, %v2522
        %v2552 = vmul.f32 %v2513, %v2522
        %v2553 = vmul.f32 %v2514, %v2522
        %v2554 = vmul.f32 %v2515, %v2522
        %v2555 = vmul.f32 %v2516, %v2522
        %2556 = vadd.xlane.f32.xlu0 %v2524
        %v2557 = vpop.xlane.xlu0 %2556
        %2558 = vadd.xlane.f32.xlu0 %v2525
        %v2559 = vpop.xlane.xlu0 %2558
        %2560 = vadd.xlane.f32.xlu0 %v2526
        %v2561 = vpop.xlane.xlu0 %2560
        %2562 = vadd.xlane.f32.xlu0 %v2527
        %v2563 = vpop.xlane.xlu0 %2562
        %2564 = vadd.xlane.f32.xlu0 %v2528
        %v2565 = vpop.xlane.xlu0 %2564
        %2566 = vadd.xlane.f32.xlu0 %v2529
        %v2567 = vpop.xlane.xlu0 %2566
        %2568 = vadd.xlane.f32.xlu0 %v2530
        %v2569 = vpop.xlane.xlu0 %2568
        %2570 = vadd.xlane.f32.xlu0 %v2531
        %v2571 = vpop.xlane.xlu0 %2570
        %2572 = vadd.xlane.f32.xlu0 %v2532
        %v2573 = vpop.xlane.xlu0 %2572
        %2574 = vadd.xlane.f32.xlu0 %v2533
        %v2575 = vpop.xlane.xlu0 %2574
        %2576 = vadd.xlane.f32.xlu0 %v2534
        %v2577 = vpop.xlane.xlu0 %2576
        %2578 = vadd.xlane.f32.xlu0 %v2535
        %v2579 = vpop.xlane.xlu0 %2578
        %2580 = vadd.xlane.f32.xlu0 %v2536
        %v2581 = vpop.xlane.xlu0 %2580
        %2582 = vadd.xlane.f32.xlu0 %v2537
        %v2583 = vpop.xlane.xlu0 %2582
        %2584 = vadd.xlane.f32.xlu0 %v2538
        %v2585 = vpop.xlane.xlu0 %2584
        %2586 = vadd.xlane.f32.xlu0 %v2539
        %v2587 = vpop.xlane.xlu0 %2586
        %2588 = vadd.xlane.f32.xlu0 %v2540
        %v2589 = vpop.xlane.xlu0 %2588
        %2590 = vadd.xlane.f32.xlu0 %v2541
        %v2591 = vpop.xlane.xlu0 %2590
        %2592 = vadd.xlane.f32.xlu0 %v2542
        %v2593 = vpop.xlane.xlu0 %2592
        %2594 = vadd.xlane.f32.xlu0 %v2543
        %v2595 = vpop.xlane.xlu0 %2594
        %2596 = vadd.xlane.f32.xlu0 %v2544
        %v2597 = vpop.xlane.xlu0 %2596
        %2598 = vadd.xlane.f32.xlu0 %v2545
        %v2599 = vpop.xlane.xlu0 %2598
        %2600 = vadd.xlane.f32.xlu0 %v2546
        %v2601 = vpop.xlane.xlu0 %2600
        %2602 = vadd.xlane.f32.xlu0 %v2547
        %v2603 = vpop.xlane.xlu0 %2602
        %2604 = vadd.xlane.f32.xlu0 %v2548
        %v2605 = vpop.xlane.xlu0 %2604
        %2606 = vadd.xlane.f32.xlu0 %v2549
        %v2607 = vpop.xlane.xlu0 %2606
        %2608 = vadd.xlane.f32.xlu0 %v2550
        %v2609 = vpop.xlane.xlu0 %2608
        %2610 = vadd.xlane.f32.xlu0 %v2551
        %v2611 = vpop.xlane.xlu0 %2610
        %2612 = vadd.xlane.f32.xlu0 %v2552
        %v2613 = vpop.xlane.xlu0 %2612
        %2614 = vadd.xlane.f32.xlu0 %v2553
        %v2615 = vpop.xlane.xlu0 %2614
        %2616 = vadd.xlane.f32.xlu0 %v2554
        %v2617 = vpop.xlane.xlu0 %2616
        %2618 = vadd.xlane.f32.xlu0 %v2555
        %v2619 = vpop.xlane.xlu0 %2618
        %v2620 = vld [vmem:[#allocation2] sm:$0x1]
        %v2622 = vlaneseq
        %v2623 = vshrl.u32 %v2622, 7
        %v2624 = vsub.s32 0, %v2623
        %v2625 = vrot.slane %v2620, %v2624
        %v2627 = vadd.f32 %v2557, %v2625
        %v2628 = vadd.f32 %v2559, %v2625
        %v2629 = vadd.f32 %v2561, %v2625
        %v2630 = vadd.f32 %v2563, %v2625
        %v2631 = vadd.f32 %v2565, %v2625
        %v2632 = vadd.f32 %v2567, %v2625
        %v2633 = vadd.f32 %v2569, %v2625
        %v2634 = vadd.f32 %v2571, %v2625
        %v2635 = vadd.f32 %v2573, %v2625
        %v2636 = vadd.f32 %v2575, %v2625
        %v2637 = vadd.f32 %v2577, %v2625
        %v2638 = vadd.f32 %v2579, %v2625
        %v2639 = vadd.f32 %v2581, %v2625
        %v2640 = vadd.f32 %v2583, %v2625
        %v2641 = vadd.f32 %v2585, %v2625
        %v2642 = vadd.f32 %v2587, %v2625
        %v2643 = vadd.f32 %v2589, %v2625
        %v2644 = vadd.f32 %v2591, %v2625
        %v2645 = vadd.f32 %v2593, %v2625
        %v2646 = vadd.f32 %v2595, %v2625
        %v2647 = vadd.f32 %v2597, %v2625
        %v2648 = vadd.f32 %v2599, %v2625
        %v2649 = vadd.f32 %v2601, %v2625
        %v2650 = vadd.f32 %v2603, %v2625
        %v2651 = vadd.f32 %v2605, %v2625
        %v2652 = vadd.f32 %v2607, %v2625
        %v2653 = vadd.f32 %v2609, %v2625
        %v2654 = vadd.f32 %v2611, %v2625
        %v2655 = vadd.f32 %v2613, %v2625
        %v2656 = vadd.f32 %v2615, %v2625
        %v2657 = vadd.f32 %v2617, %v2625
        %v2658 = vadd.f32 %v2619, %v2625
        %v2659 = vxor.u32 %v2627, 2147483648
        %v2660 = vxor.u32 %v2628, 2147483648
        %v2661 = vxor.u32 %v2629, 2147483648
        %v2662 = vxor.u32 %v2630, 2147483648
        %v2663 = vxor.u32 %v2631, 2147483648
        %v2664 = vxor.u32 %v2632, 2147483648
        %v2665 = vxor.u32 %v2633, 2147483648
        %v2666 = vxor.u32 %v2634, 2147483648
        %v2667 = vxor.u32 %v2635, 2147483648
        %v2668 = vxor.u32 %v2636, 2147483648
        %v2669 = vxor.u32 %v2637, 2147483648
        %v2670 = vxor.u32 %v2638, 2147483648
        %v2671 = vxor.u32 %v2639, 2147483648
        %v2672 = vxor.u32 %v2640, 2147483648
        %v2673 = vxor.u32 %v2641, 2147483648
        %v2674 = vxor.u32 %v2642, 2147483648
        %v2675 = vxor.u32 %v2643, 2147483648
        %v2676 = vxor.u32 %v2644, 2147483648
        %v2677 = vxor.u32 %v2645, 2147483648
        %v2678 = vxor.u32 %v2646, 2147483648
        %v2679 = vxor.u32 %v2647, 2147483648
        %v2680 = vxor.u32 %v2648, 2147483648
        %v2681 = vxor.u32 %v2649, 2147483648
        %v2682 = vxor.u32 %v2650, 2147483648
        %v2683 = vxor.u32 %v2651, 2147483648
        %v2684 = vxor.u32 %v2652, 2147483648
        %v2685 = vxor.u32 %v2653, 2147483648
        %v2686 = vxor.u32 %v2654, 2147483648
        %v2687 = vxor.u32 %v2655, 2147483648
        %v2688 = vxor.u32 %v2656, 2147483648
        %v2689 = vxor.u32 %v2657, 2147483648
        %v2690 = vxor.u32 %v2658, 2147483648
        %v2691 = vmul.f32 %v2659, 1.442695
        %v2692 = vpow.pop %v2691
        %v2693 = vmul.f32 %v2660, 1.442695
        %v2694 = vpow.pop %v2693
        %v2695 = vmul.f32 %v2661, 1.442695
        %v2696 = vpow.pop %v2695
        %v2697 = vmul.f32 %v2662, 1.442695
        %v2698 = vpow.pop %v2697
        %v2699 = vmul.f32 %v2663, 1.442695
        %v2700 = vpow.pop %v2699
        %v2701 = vmul.f32 %v2664, 1.442695
        %v2702 = vpow.pop %v2701
        %v2703 = vmul.f32 %v2665, 1.442695
        %v2704 = vpow.pop %v2703
        %v2705 = vmul.f32 %v2666, 1.442695
        %v2706 = vpow.pop %v2705
        %v2707 = vmul.f32 %v2667, 1.442695
        %v2708 = vpow.pop %v2707
        %v2709 = vmul.f32 %v2668, 1.442695
        %v2710 = vpow.pop %v2709
        %v2711 = vmul.f32 %v2669, 1.442695
        %v2712 = vpow.pop %v2711
        %v2713 = vmul.f32 %v2670, 1.442695
        %v2714 = vpow.pop %v2713
        %v2715 = vmul.f32 %v2671, 1.442695
        %v2716 = vpow.pop %v2715
        %v2717 = vmul.f32 %v2672, 1.442695
        %v2718 = vpow.pop %v2717
        %v2719 = vmul.f32 %v2673, 1.442695
        %v2720 = vpow.pop %v2719
        %v2721 = vmul.f32 %v2674, 1.442695
        %v2722 = vpow.pop %v2721
        %v2723 = vmul.f32 %v2675, 1.442695
        %v2724 = vpow.pop %v2723
        %v2725 = vmul.f32 %v2676, 1.442695
        %v2726 = vpow.pop %v2725
        %v2727 = vmul.f32 %v2677, 1.442695
        %v2728 = vpow.pop %v2727
        %v2729 = vmul.f32 %v2678, 1.442695
        %v2730 = vpow.pop %v2729
        %v2731 = vmul.f32 %v2679, 1.442695
        %v2732 = vpow.pop %v2731
        %v2733 = vmul.f32 %v2680, 1.442695
        %v2734 = vpow.pop %v2733
        %v2735 = vmul.f32 %v2681, 1.442695
        %v2736 = vpow.pop %v2735
        %v2737 = vmul.f32 %v2682, 1.442695
        %v2738 = vpow.pop %v2737
        %v2739 = vmul.f32 %v2683, 1.442695
        %v2740 = vpow.pop %v2739
        %v2741 = vmul.f32 %v2684, 1.442695
        %v2742 = vpow.pop %v2741
        %v2743 = vmul.f32 %v2685, 1.442695
        %v2744 = vpow.pop %v2743
        %v2745 = vmul.f32 %v2686, 1.442695
        %v2746 = vpow.pop %v2745
        %v2747 = vmul.f32 %v2687, 1.442695
        %v2748 = vpow.pop %v2747
        %v2749 = vmul.f32 %v2688, 1.442695
        %v2750 = vpow.pop %v2749
        %v2751 = vmul.f32 %v2689, 1.442695
        %v2752 = vpow.pop %v2751
        %v2753 = vmul.f32 %v2690, 1.442695
        %v2754 = vpow.pop %v2753
        %v2755 = vadd.f32 %v2692, 1.0
        %v2756 = vadd.f32 %v2694, 1.0
        %v2757 = vadd.f32 %v2696, 1.0
        %v2758 = vadd.f32 %v2698, 1.0
        %v2759 = vadd.f32 %v2700, 1.0
        %v2760 = vadd.f32 %v2702, 1.0
        %v2761 = vadd.f32 %v2704, 1.0
        %v2762 = vadd.f32 %v2706, 1.0
        %v2763 = vadd.f32 %v2708, 1.0
        %v2764 = vadd.f32 %v2710, 1.0
        %v2765 = vadd.f32 %v2712, 1.0
        %v2766 = vadd.f32 %v2714, 1.0
        %v2767 = vadd.f32 %v2716, 1.0
        %v2768 = vadd.f32 %v2718, 1.0
        %v2769 = vadd.f32 %v2720, 1.0
        %v2770 = vadd.f32 %v2722, 1.0
        %v2771 = vadd.f32 %v2724, 1.0
        %v2772 = vadd.f32 %v2726, 1.0
        %v2773 = vadd.f32 %v2728, 1.0
        %v2774 = vadd.f32 %v2730, 1.0
        %v2775 = vadd.f32 %v2732, 1.0
        %v2776 = vadd.f32 %v2734, 1.0
        %v2777 = vadd.f32 %v2736, 1.0
        %v2778 = vadd.f32 %v2738, 1.0
        %v2779 = vadd.f32 %v2740, 1.0
        %v2780 = vadd.f32 %v2742, 1.0
        %v2781 = vadd.f32 %v2744, 1.0
        %v2782 = vadd.f32 %v2746, 1.0
        %v2783 = vadd.f32 %v2748, 1.0
        %v2784 = vadd.f32 %v2750, 1.0
        %v2785 = vadd.f32 %v2752, 1.0
        %v2786 = vadd.f32 %v2754, 1.0
        %v2787 = vrcp.pop %v2755
        %v2788 = vmul.f32 1.0, %v2787
        %v2789 = vrcp.pop %v2756
        %v2790 = vmul.f32 1.0, %v2789
        %v2791 = vrcp.pop %v2757
        %v2792 = vmul.f32 1.0, %v2791
        %v2793 = vrcp.pop %v2758
        %v2794 = vmul.f32 1.0, %v2793
        %v2795 = vrcp.pop %v2759
        %v2796 = vmul.f32 1.0, %v2795
        %v2797 = vrcp.pop %v2760
        %v2798 = vmul.f32 1.0, %v2797
        %v2799 = vrcp.pop %v2761
        %v2800 = vmul.f32 1.0, %v2799
        %v2801 = vrcp.pop %v2762
        %v2802 = vmul.f32 1.0, %v2801
        %v2803 = vrcp.pop %v2763
        %v2804 = vmul.f32 1.0, %v2803
        %v2805 = vrcp.pop %v2764
        %v2806 = vmul.f32 1.0, %v2805
        %v2807 = vrcp.pop %v2765
        %v2808 = vmul.f32 1.0, %v2807
        %v2809 = vrcp.pop %v2766
        %v2810 = vmul.f32 1.0, %v2809
        %v2811 = vrcp.pop %v2767
        %v2812 = vmul.f32 1.0, %v2811
        %v2813 = vrcp.pop %v2768
        %v2814 = vmul.f32 1.0, %v2813
        %v2815 = vrcp.pop %v2769
        %v2816 = vmul.f32 1.0, %v2815
        %v2817 = vrcp.pop %v2770
        %v2818 = vmul.f32 1.0, %v2817
        %v2819 = vrcp.pop %v2771
        %v2820 = vmul.f32 1.0, %v2819
        %v2821 = vrcp.pop %v2772
        %v2822 = vmul.f32 1.0, %v2821
        %v2823 = vrcp.pop %v2773
        %v2824 = vmul.f32 1.0, %v2823
        %v2825 = vrcp.pop %v2774
        %v2826 = vmul.f32 1.0, %v2825
        %v2827 = vrcp.pop %v2775
        %v2828 = vmul.f32 1.0, %v2827
        %v2829 = vrcp.pop %v2776
        %v2830 = vmul.f32 1.0, %v2829
        %v2831 = vrcp.pop %v2777
        %v2832 = vmul.f32 1.0, %v2831
        %v2833 = vrcp.pop %v2778
        %v2834 = vmul.f32 1.0, %v2833
        %v2835 = vrcp.pop %v2779
        %v2836 = vmul.f32 1.0, %v2835
        %v2837 = vrcp.pop %v2780
        %v2838 = vmul.f32 1.0, %v2837
        %v2839 = vrcp.pop %v2781
        %v2840 = vmul.f32 1.0, %v2839
        %v2841 = vrcp.pop %v2782
        %v2842 = vmul.f32 1.0, %v2841
        %v2843 = vrcp.pop %v2783
        %v2844 = vmul.f32 1.0, %v2843
        %v2845 = vrcp.pop %v2784
        %v2846 = vmul.f32 1.0, %v2845
        %v2847 = vrcp.pop %v2785
        %v2848 = vmul.f32 1.0, %v2847
        %v2849 = vrcp.pop %v2786
        %v2850 = vmul.f32 1.0, %v2849
        %v2851 = vadd.bf16 %v844, %v1286
        %v2852 = vadd.bf16 %v845, %v1287
        %v2853 = vadd.bf16 %v846, %v1288
        %v2854 = vadd.bf16 %v847, %v1289
        %v2855 = vadd.bf16 %v848, %v1290
        %v2856 = vadd.bf16 %v849, %v1291
        %v2857 = vadd.bf16 %v850, %v1292
        %v2858 = vadd.bf16 %v851, %v1293
        %v2859 = vadd.bf16 %v852, %v1294
        %v2860 = vadd.bf16 %v853, %v1295
        %v2861 = vadd.bf16 %v854, %v1296
        %v2862 = vadd.bf16 %v855, %v1297
        %v2863 = vadd.bf16 %v856, %v1298
        %v2864 = vadd.bf16 %v857, %v1299
        %v2865 = vadd.bf16 %v858, %v1300
        %v2866 = vadd.bf16 %v859, %v1301
        %v2867 = vunpack.c.l.bf16 %v2851
        %v2868 = vunpack.c.h.bf16 %v2851
        %v2869 = vunpack.c.l.bf16 %v2852
        %v2870 = vunpack.c.h.bf16 %v2852
        %v2871 = vunpack.c.l.bf16 %v2853
        %v2872 = vunpack.c.h.bf16 %v2853
        %v2873 = vunpack.c.l.bf16 %v2854
        %v2874 = vunpack.c.h.bf16 %v2854
        %v2875 = vunpack.c.l.bf16 %v2855
        %v2876 = vunpack.c.h.bf16 %v2855
        %v2877 = vunpack.c.l.bf16 %v2856
        %v2878 = vunpack.c.h.bf16 %v2856
        %v2879 = vunpack.c.l.bf16 %v2857
        %v2880 = vunpack.c.h.bf16 %v2857
        %v2881 = vunpack.c.l.bf16 %v2858
        %v2882 = vunpack.c.h.bf16 %v2858
        %v2883 = vunpack.c.l.bf16 %v2859
        %v2884 = vunpack.c.h.bf16 %v2859
        %v2885 = vunpack.c.l.bf16 %v2860
        %v2886 = vunpack.c.h.bf16 %v2860
        %v2887 = vunpack.c.l.bf16 %v2861
        %v2888 = vunpack.c.h.bf16 %v2861
        %v2889 = vunpack.c.l.bf16 %v2862
        %v2890 = vunpack.c.h.bf16 %v2862
        %v2891 = vunpack.c.l.bf16 %v2863
        %v2892 = vunpack.c.h.bf16 %v2863
        %v2893 = vunpack.c.l.bf16 %v2864
        %v2894 = vunpack.c.h.bf16 %v2864
        %v2895 = vunpack.c.l.bf16 %v2865
        %v2896 = vunpack.c.h.bf16 %v2865
        %v2897 = vunpack.c.l.bf16 %v2866
        %v2898 = vunpack.c.h.bf16 %v2866
        %2900 = vset.pattern.permute.xlu0 0
        %2901 = vperm.xlu0 %2900, %v2788
        %v2902 = vpop.permute.xlu0 %2901
        %2905 = vset.pattern.permute.xlu0 0
        %2906 = vperm.xlu0 %2905, %v2790
        %v2907 = vpop.permute.xlu0 %2906
        %2910 = vset.pattern.permute.xlu0 0
        %2911 = vperm.xlu0 %2910, %v2792
        %v2912 = vpop.permute.xlu0 %2911
        %2915 = vset.pattern.permute.xlu0 0
        %2916 = vperm.xlu0 %2915, %v2794
        %v2917 = vpop.permute.xlu0 %2916
        %2920 = vset.pattern.permute.xlu0 0
        %2921 = vperm.xlu0 %2920, %v2796
        %v2922 = vpop.permute.xlu0 %2921
        %2925 = vset.pattern.permute.xlu0 0
        %2926 = vperm.xlu0 %2925, %v2798
        %v2927 = vpop.permute.xlu0 %2926
        %2930 = vset.pattern.permute.xlu0 0
        %2931 = vperm.xlu0 %2930, %v2800
        %v2932 = vpop.permute.xlu0 %2931
        %2935 = vset.pattern.permute.xlu0 0
        %2936 = vperm.xlu0 %2935, %v2802
        %v2937 = vpop.permute.xlu0 %2936
        %2940 = vset.pattern.permute.xlu0 0
        %2941 = vperm.xlu0 %2940, %v2804
        %v2942 = vpop.permute.xlu0 %2941
        %2945 = vset.pattern.permute.xlu0 0
        %2946 = vperm.xlu0 %2945, %v2806
        %v2947 = vpop.permute.xlu0 %2946
        %2950 = vset.pattern.permute.xlu0 0
        %2951 = vperm.xlu0 %2950, %v2808
        %v2952 = vpop.permute.xlu0 %2951
        %2955 = vset.pattern.permute.xlu0 0
        %2956 = vperm.xlu0 %2955, %v2810
        %v2957 = vpop.permute.xlu0 %2956
        %2960 = vset.pattern.permute.xlu0 0
        %2961 = vperm.xlu0 %2960, %v2812
        %v2962 = vpop.permute.xlu0 %2961
        %2965 = vset.pattern.permute.xlu0 0
        %2966 = vperm.xlu0 %2965, %v2814
        %v2967 = vpop.permute.xlu0 %2966
        %2970 = vset.pattern.permute.xlu0 0
        %2971 = vperm.xlu0 %2970, %v2816
        %v2972 = vpop.permute.xlu0 %2971
        %2975 = vset.pattern.permute.xlu0 0
        %2976 = vperm.xlu0 %2975, %v2818
        %v2977 = vpop.permute.xlu0 %2976
        %2980 = vset.pattern.permute.xlu0 0
        %2981 = vperm.xlu0 %2980, %v2820
        %v2982 = vpop.permute.xlu0 %2981
        %2985 = vset.pattern.permute.xlu0 0
        %2986 = vperm.xlu0 %2985, %v2822
        %v2987 = vpop.permute.xlu0 %2986
        %2990 = vset.pattern.permute.xlu0 0
        %2991 = vperm.xlu0 %2990, %v2824
        %v2992 = vpop.permute.xlu0 %2991
        %2995 = vset.pattern.permute.xlu0 0
        %2996 = vperm.xlu0 %2995, %v2826
        %v2997 = vpop.permute.xlu0 %2996
        %3000 = vset.pattern.permute.xlu0 0
        %3001 = vperm.xlu0 %3000, %v2828
        %v3002 = vpop.permute.xlu0 %3001
        %3005 = vset.pattern.permute.xlu0 0
        %3006 = vperm.xlu0 %3005, %v2830
        %v3007 = vpop.permute.xlu0 %3006
        %3010 = vset.pattern.permute.xlu0 0
        %3011 = vperm.xlu0 %3010, %v2832
        %v3012 = vpop.permute.xlu0 %3011
        %3015 = vset.pattern.permute.xlu0 0
        %3016 = vperm.xlu0 %3015, %v2834
        %v3017 = vpop.permute.xlu0 %3016
        %3020 = vset.pattern.permute.xlu0 0
        %3021 = vperm.xlu0 %3020, %v2836
        %v3022 = vpop.permute.xlu0 %3021
        %3025 = vset.pattern.permute.xlu0 0
        %3026 = vperm.xlu0 %3025, %v2838
        %v3027 = vpop.permute.xlu0 %3026
        %3030 = vset.pattern.permute.xlu0 0
        %3031 = vperm.xlu0 %3030, %v2840
        %v3032 = vpop.permute.xlu0 %3031
        %3035 = vset.pattern.permute.xlu0 0
        %3036 = vperm.xlu0 %3035, %v2842
        %v3037 = vpop.permute.xlu0 %3036
        %3040 = vset.pattern.permute.xlu0 0
        %3041 = vperm.xlu0 %3040, %v2844
        %v3042 = vpop.permute.xlu0 %3041
        %3045 = vset.pattern.permute.xlu0 0
        %3046 = vperm.xlu0 %3045, %v2846
        %v3047 = vpop.permute.xlu0 %3046
        %3050 = vset.pattern.permute.xlu0 0
        %3051 = vperm.xlu0 %3050, %v2848
        %v3052 = vpop.permute.xlu0 %3051
        %3055 = vset.pattern.permute.xlu0 0
        %3056 = vperm.xlu0 %3055, %v2850
        %v3057 = vpop.permute.xlu0 %3056
        %v3059 = vmul.f32 %v2902, %v2867
        %v3060 = vmul.f32 %v2907, %v2868
        %v3061 = vmul.f32 %v2912, %v2869
        %v3062 = vmul.f32 %v2917, %v2870
        %v3063 = vmul.f32 %v2922, %v2871
        %v3064 = vmul.f32 %v2927, %v2872
        %v3065 = vmul.f32 %v2932, %v2873
        %v3066 = vmul.f32 %v2937, %v2874
        %v3067 = vmul.f32 %v2942, %v2875
        %v3068 = vmul.f32 %v2947, %v2876
        %v3069 = vmul.f32 %v2952, %v2877
        %v3070 = vmul.f32 %v2957, %v2878
        %v3071 = vmul.f32 %v2962, %v2879
        %v3072 = vmul.f32 %v2967, %v2880
        %v3073 = vmul.f32 %v2972, %v2881
        %v3074 = vmul.f32 %v2977, %v2882
        %v3075 = vmul.f32 %v2982, %v2883
        %v3076 = vmul.f32 %v2987, %v2884
        %v3077 = vmul.f32 %v2992, %v2885
        %v3078 = vmul.f32 %v2997, %v2886
        %v3079 = vmul.f32 %v3002, %v2887
        %v3080 = vmul.f32 %v3007, %v2888
        %v3081 = vmul.f32 %v3012, %v2889
        %v3082 = vmul.f32 %v3017, %v2890
        %v3083 = vmul.f32 %v3022, %v2891
        %v3084 = vmul.f32 %v3027, %v2892
        %v3085 = vmul.f32 %v3032, %v2893
        %v3086 = vmul.f32 %v3037, %v2894
        %v3087 = vmul.f32 %v3042, %v2895
        %v3088 = vmul.f32 %v3047, %v2896
        %v3089 = vmul.f32 %v3052, %v2897
        %v3090 = vmul.f32 %v3057, %v2898
        %v3091 = vpack.c.bf16 %v3060, %v3059
        %v3092 = vpack.c.bf16 %v3062, %v3061
        %v3093 = vpack.c.bf16 %v3064, %v3063
        %v3094 = vpack.c.bf16 %v3066, %v3065
        %v3095 = vpack.c.bf16 %v3068, %v3067
        %v3096 = vpack.c.bf16 %v3070, %v3069
        %v3097 = vpack.c.bf16 %v3072, %v3071
        %v3098 = vpack.c.bf16 %v3074, %v3073
        %v3099 = vpack.c.bf16 %v3076, %v3075
        %v3100 = vpack.c.bf16 %v3078, %v3077
        %v3101 = vpack.c.bf16 %v3080, %v3079
        %v3102 = vpack.c.bf16 %v3082, %v3081
        %v3103 = vpack.c.bf16 %v3084, %v3083
        %v3104 = vpack.c.bf16 %v3086, %v3085
        %v3105 = vpack.c.bf16 %v3088, %v3087
        %v3106 = vpack.c.bf16 %v3090, %v3089
        %3107 = vset.pattern.permute.xlu0 3
        %3108 = vperm.xlu0 %3107, %v387
        %v3109 = vpop.permute.xlu0 %3108
        %3110 = vset.pattern.permute.xlu0 3
        %3111 = vperm.xlu0 %3110, %v388
        %v3112 = vpop.permute.xlu0 %3111
        %3113 = vset.pattern.permute.xlu0 3
        %3114 = vperm.xlu0 %3113, %v389
        %v3115 = vpop.permute.xlu0 %3114
        %3116 = vset.pattern.permute.xlu0 3
        %3117 = vperm.xlu0 %3116, %v390
        %v3118 = vpop.permute.xlu0 %3117
        %3119 = vset.pattern.permute.xlu0 3
        %3120 = vperm.xlu0 %3119, %v391
        %v3121 = vpop.permute.xlu0 %3120
        %3122 = vset.pattern.permute.xlu0 3
        %3123 = vperm.xlu0 %3122, %v392
        %v3124 = vpop.permute.xlu0 %3123
        %3125 = vset.pattern.permute.xlu0 3
        %3126 = vperm.xlu0 %3125, %v393
        %v3127 = vpop.permute.xlu0 %3126
        %3128 = vset.pattern.permute.xlu0 3
        %3129 = vperm.xlu0 %3128, %v394
        %v3130 = vpop.permute.xlu0 %3129
        %3131 = vset.pattern.permute.xlu0 3
        %3132 = vperm.xlu0 %3131, %v395
        %v3133 = vpop.permute.xlu0 %3132
        %3134 = vset.pattern.permute.xlu0 3
        %3135 = vperm.xlu0 %3134, %v396
        %v3136 = vpop.permute.xlu0 %3135
        %3137 = vset.pattern.permute.xlu0 3
        %3138 = vperm.xlu0 %3137, %v397
        %v3139 = vpop.permute.xlu0 %3138
        %3140 = vset.pattern.permute.xlu0 3
        %3141 = vperm.xlu0 %3140, %v398
        %v3142 = vpop.permute.xlu0 %3141
        %3143 = vset.pattern.permute.xlu0 3
        %3144 = vperm.xlu0 %3143, %v399
        %v3145 = vpop.permute.xlu0 %3144
        %3146 = vset.pattern.permute.xlu0 3
        %3147 = vperm.xlu0 %3146, %v400
        %v3148 = vpop.permute.xlu0 %3147
        %3149 = vset.pattern.permute.xlu0 3
        %3150 = vperm.xlu0 %3149, %v401
        %v3151 = vpop.permute.xlu0 %3150
        %3152 = vset.pattern.permute.xlu0 3
        %3153 = vperm.xlu0 %3152, %v402
        %v3154 = vpop.permute.xlu0 %3153
        %3155 = vset.pattern.permute.xlu0 3
        %3156 = vperm.xlu0 %3155, %v403
        %v3157 = vpop.permute.xlu0 %3156
        %3158 = vset.pattern.permute.xlu0 3
        %3159 = vperm.xlu0 %3158, %v404
        %v3160 = vpop.permute.xlu0 %3159
        %3161 = vset.pattern.permute.xlu0 3
        %3162 = vperm.xlu0 %3161, %v405
        %v3163 = vpop.permute.xlu0 %3162
        %3164 = vset.pattern.permute.xlu0 3
        %3165 = vperm.xlu0 %3164, %v406
        %v3166 = vpop.permute.xlu0 %3165
        %3167 = vset.pattern.permute.xlu0 3
        %3168 = vperm.xlu0 %3167, %v407
        %v3169 = vpop.permute.xlu0 %3168
        %3170 = vset.pattern.permute.xlu0 3
        %3171 = vperm.xlu0 %3170, %v408
        %v3172 = vpop.permute.xlu0 %3171
        %3173 = vset.pattern.permute.xlu0 3
        %3174 = vperm.xlu0 %3173, %v409
        %v3175 = vpop.permute.xlu0 %3174
        %3176 = vset.pattern.permute.xlu0 3
        %3177 = vperm.xlu0 %3176, %v410
        %v3178 = vpop.permute.xlu0 %3177
        %3179 = vset.pattern.permute.xlu0 3
        %3180 = vperm.xlu0 %3179, %v411
        %v3181 = vpop.permute.xlu0 %3180
        %3182 = vset.pattern.permute.xlu0 3
        %3183 = vperm.xlu0 %3182, %v412
        %v3184 = vpop.permute.xlu0 %3183
        %3185 = vset.pattern.permute.xlu0 3
        %3186 = vperm.xlu0 %3185, %v413
        %v3187 = vpop.permute.xlu0 %3186
        %3188 = vset.pattern.permute.xlu0 3
        %3189 = vperm.xlu0 %3188, %v414
        %v3190 = vpop.permute.xlu0 %3189
        %3191 = vset.pattern.permute.xlu0 3
        %3192 = vperm.xlu0 %3191, %v415
        %v3193 = vpop.permute.xlu0 %3192
        %3194 = vset.pattern.permute.xlu0 3
        %3195 = vperm.xlu0 %3194, %v416
        %v3196 = vpop.permute.xlu0 %3195
        %3197 = vset.pattern.permute.xlu0 3
        %3198 = vperm.xlu0 %3197, %v417
        %v3199 = vpop.permute.xlu0 %3198
        %3200 = vset.pattern.permute.xlu0 3
        %3201 = vperm.xlu0 %3200, %v418
        %v3202 = vpop.permute.xlu0 %3201
        %vm3203 = vcmp.eq.s32.totalorder %v420, %v3109
        %vm3204 = vcmp.eq.s32.totalorder %v420, %v3112
        %vm3205 = vcmp.eq.s32.totalorder %v420, %v3115
        %vm3206 = vcmp.eq.s32.totalorder %v420, %v3118
        %vm3207 = vcmp.eq.s32.totalorder %v420, %v3121
        %vm3208 = vcmp.eq.s32.totalorder %v420, %v3124
        %vm3209 = vcmp.eq.s32.totalorder %v420, %v3127
        %vm3210 = vcmp.eq.s32.totalorder %v420, %v3130
        %vm3211 = vcmp.eq.s32.totalorder %v420, %v3133
        %vm3212 = vcmp.eq.s32.totalorder %v420, %v3136
        %vm3213 = vcmp.eq.s32.totalorder %v420, %v3139
        %vm3214 = vcmp.eq.s32.totalorder %v420, %v3142
        %vm3215 = vcmp.eq.s32.totalorder %v420, %v3145
        %vm3216 = vcmp.eq.s32.totalorder %v420, %v3148
        %vm3217 = vcmp.eq.s32.totalorder %v420, %v3151
        %vm3218 = vcmp.eq.s32.totalorder %v420, %v3154
        %vm3219 = vcmp.eq.s32.totalorder %v420, %v3157
        %vm3220 = vcmp.eq.s32.totalorder %v420, %v3160
        %vm3221 = vcmp.eq.s32.totalorder %v420, %v3163
        %vm3222 = vcmp.eq.s32.totalorder %v420, %v3166
        %vm3223 = vcmp.eq.s32.totalorder %v420, %v3169
        %vm3224 = vcmp.eq.s32.totalorder %v420, %v3172
        %vm3225 = vcmp.eq.s32.totalorder %v420, %v3175
        %vm3226 = vcmp.eq.s32.totalorder %v420, %v3178
        %vm3227 = vcmp.eq.s32.totalorder %v420, %v3181
        %vm3228 = vcmp.eq.s32.totalorder %v420, %v3184
        %vm3229 = vcmp.eq.s32.totalorder %v420, %v3187
        %vm3230 = vcmp.eq.s32.totalorder %v420, %v3190
        %vm3231 = vcmp.eq.s32.totalorder %v420, %v3193
        %vm3232 = vcmp.eq.s32.totalorder %v420, %v3196
        %vm3233 = vcmp.eq.s32.totalorder %v420, %v3199
        %vm3234 = vcmp.eq.s32.totalorder %v420, %v3202
        %v3235 = vsel %vm3203, 1, 0
        %v3236 = vsel %vm3204, 1, 0
        %v3237 = vsel %vm3205, 1, 0
        %v3238 = vsel %vm3206, 1, 0
        %v3239 = vsel %vm3207, 1, 0
        %v3240 = vsel %vm3208, 1, 0
        %v3241 = vsel %vm3209, 1, 0
        %v3242 = vsel %vm3210, 1, 0
        %v3243 = vsel %vm3211, 1, 0
        %v3244 = vsel %vm3212, 1, 0
        %v3245 = vsel %vm3213, 1, 0
        %v3246 = vsel %vm3214, 1, 0
        %v3247 = vsel %vm3215, 1, 0
        %v3248 = vsel %vm3216, 1, 0
        %v3249 = vsel %vm3217, 1, 0
        %v3250 = vsel %vm3218, 1, 0
        %v3251 = vsel %vm3219, 1, 0
        %v3252 = vsel %vm3220, 1, 0
        %v3253 = vsel %vm3221, 1, 0
        %v3254 = vsel %vm3222, 1, 0
        %v3255 = vsel %vm3223, 1, 0
        %v3256 = vsel %vm3224, 1, 0
        %v3257 = vsel %vm3225, 1, 0
        %v3258 = vsel %vm3226, 1, 0
        %v3259 = vsel %vm3227, 1, 0
        %v3260 = vsel %vm3228, 1, 0
        %v3261 = vsel %vm3229, 1, 0
        %v3262 = vsel %vm3230, 1, 0
        %v3263 = vsel %vm3231, 1, 0
        %v3264 = vsel %vm3232, 1, 0
        %v3265 = vsel %vm3233, 1, 0
        %v3266 = vsel %vm3234, 1, 0
        %v3267 = vcvt.s32.f32 %v3235
        %v3268 = vcvt.s32.f32 %v3236
        %v3269 = vcvt.s32.f32 %v3237
        %v3270 = vcvt.s32.f32 %v3238
        %v3271 = vcvt.s32.f32 %v3239
        %v3272 = vcvt.s32.f32 %v3240
        %v3273 = vcvt.s32.f32 %v3241
        %v3274 = vcvt.s32.f32 %v3242
        %v3275 = vcvt.s32.f32 %v3243
        %v3276 = vcvt.s32.f32 %v3244
        %v3277 = vcvt.s32.f32 %v3245
        %v3278 = vcvt.s32.f32 %v3246
        %v3279 = vcvt.s32.f32 %v3247
        %v3280 = vcvt.s32.f32 %v3248
        %v3281 = vcvt.s32.f32 %v3249
        %v3282 = vcvt.s32.f32 %v3250
        %v3283 = vcvt.s32.f32 %v3251
        %v3284 = vcvt.s32.f32 %v3252
        %v3285 = vcvt.s32.f32 %v3253
        %v3286 = vcvt.s32.f32 %v3254
        %v3287 = vcvt.s32.f32 %v3255
        %v3288 = vcvt.s32.f32 %v3256
        %v3289 = vcvt.s32.f32 %v3257
        %v3290 = vcvt.s32.f32 %v3258
        %v3291 = vcvt.s32.f32 %v3259
        %v3292 = vcvt.s32.f32 %v3260
        %v3293 = vcvt.s32.f32 %v3261
        %v3294 = vcvt.s32.f32 %v3262
        %v3295 = vcvt.s32.f32 %v3263
        %v3296 = vcvt.s32.f32 %v3264
        %v3297 = vcvt.s32.f32 %v3265
        %v3298 = vcvt.s32.f32 %v3266
        %v3299 = vpack.c.bf16 %v3268, %v3267
        %v3300 = vpack.c.bf16 %v3270, %v3269
        %v3301 = vpack.c.bf16 %v3272, %v3271
        %v3302 = vpack.c.bf16 %v3274, %v3273
        %v3303 = vpack.c.bf16 %v3276, %v3275
        %v3304 = vpack.c.bf16 %v3278, %v3277
        %v3305 = vpack.c.bf16 %v3280, %v3279
        %v3306 = vpack.c.bf16 %v3282, %v3281
        %v3307 = vpack.c.bf16 %v3284, %v3283
        %v3308 = vpack.c.bf16 %v3286, %v3285
        %v3309 = vpack.c.bf16 %v3288, %v3287
        %v3310 = vpack.c.bf16 %v3290, %v3289
        %v3311 = vpack.c.bf16 %v3292, %v3291
        %v3312 = vpack.c.bf16 %v3294, %v3293
        %v3313 = vpack.c.bf16 %v3296, %v3295
        %v3314 = vpack.c.bf16 %v3298, %v3297
        %v3315 = vld [vmem:[%s372] sm:$0xff]
        %3316 = vxpose.xlu0.c.b16.start [1/8] %v3299, 128
        %3317 = vxpose.xlu0.c.b16.cont [2/8] %v3300, 128
        %3318 = vxpose.xlu0.c.b16.cont [3/8] %v3301, 128
        %3319 = vxpose.xlu0.c.b16.cont [4/8] %v3302, 128
        %3320 = vxpose.xlu0.c.b16.cont [5/8] %v3303, 128
        %3321 = vxpose.xlu0.c.b16.cont [6/8] %v3304, 128
        %3322 = vxpose.xlu0.c.b16.cont [7/8] %v3305, 128
        %3323 = vxpose.xlu0.c.b16.end [8/8] %v3306, 128
        %v3324 = vpop.trf.xlu0
        %v3325 = vpop.trf.xlu0
        %v3326 = vpop.trf.xlu0
        %v3327 = vpop.trf.xlu0
        %v3328 = vpop.trf.xlu0
        %v3329 = vpop.trf.xlu0
        %v3330 = vpop.trf.xlu0
        %v3331 = vpop.trf.xlu0
        %3332 = vxpose.xlu0.c.b16.start [1/8] %v3307, 128
        %3333 = vxpose.xlu0.c.b16.cont [2/8] %v3308, 128
        %3334 = vxpose.xlu0.c.b16.cont [3/8] %v3309, 128
        %3335 = vxpose.xlu0.c.b16.cont [4/8] %v3310, 128
        %3336 = vxpose.xlu0.c.b16.cont [5/8] %v3311, 128
        %3337 = vxpose.xlu0.c.b16.cont [6/8] %v3312, 128
        %3338 = vxpose.xlu0.c.b16.cont [7/8] %v3313, 128
        %3339 = vxpose.xlu0.c.b16.end [8/8] %v3314, 128
        %v3340 = vpop.trf.xlu0
        %v3341 = vpop.trf.xlu0
        %v3342 = vpop.trf.xlu0
        %v3343 = vpop.trf.xlu0
        %v3344 = vpop.trf.xlu0
        %v3345 = vpop.trf.xlu0
        %v3346 = vpop.trf.xlu0
        %v3347 = vpop.trf.xlu0
        %3348 = vmatprep.subr.bf16.mxu0 0
        %3349 = vmatpush1.bf16.msra.mxu0 %v3098
        %3350 = vmatprep.subr.bf16.mxu0 0
        %3351 = vmatpush1.bf16.msra.mxu0 %v3097
        %3352 = vmatprep.subr.bf16.mxu0 0
        %3353 = vmatpush1.bf16.msra.mxu0 %v3096
        %3354 = vmatprep.subr.bf16.mxu0 0
        %3355 = vmatpush1.bf16.msra.mxu0 %v3095
        %3356 = vmatprep.subr.bf16.mxu0 0
        %3357 = vmatpush1.bf16.msra.mxu0 %v3094
        %3358 = vmatprep.subr.bf16.mxu0 0
        %3359 = vmatpush1.bf16.msra.mxu0 %v3093
        %3360 = vmatprep.subr.bf16.mxu0 0
        %3361 = vmatpush1.bf16.msra.mxu0 %v3092
        %3362 = vmatprep.subr.bf16.mxu0 0
        %3363 = vmatpush1.bf16.msra.mxu0 %v3091
        %3364 = vmatprep.subr.bf16.mxu0 0
        %3365 = vmatpush2.bf16.msra.mxu0 %v3106
        %3366 = vmatprep.subr.bf16.mxu0 0
        %3367 = vmatpush2.bf16.msra.mxu0 %v3105
        %3368 = vmatprep.subr.bf16.mxu0 0
        %3369 = vmatpush2.bf16.msra.mxu0 %v3104
        %3370 = vmatprep.subr.bf16.mxu0 0
        %3371 = vmatpush2.bf16.msra.mxu0 %v3103
        %3372 = vmatprep.subr.bf16.mxu0 0
        %3373 = vmatpush2.bf16.msra.mxu0 %v3102
        %3374 = vmatprep.subr.bf16.mxu0 0
        %3375 = vmatpush2.bf16.msra.mxu0 %v3101
        %3376 = vmatprep.subr.bf16.mxu0 0
        %3377 = vmatpush2.bf16.msra.mxu0 %v3100
        %3378 = vmatprep.subr.bf16.mxu0 0
        %3379 = vmatpush2.bf16.msra.mxu0 %v3099
        %3380 = vmatprep.mubr.bf16.mxu0 %v3340
        %3381 = vmatmul.mubr.bf16.gmra.mxu0 %v3324
        %v3382 = vpop.f32.mrf.mxu0
        %v3383 = vadd.f32 0.0, %v3382
        %v3384 = vpop.f32.mrf.mxu0
        %v3385 = vpop.f32.mrf.mxu0
        %v3386 = vpop.f32.mrf.mxu0
        %3387 = vdwg.mxu0
        %v3388 = vadd.f32 %v3315, %v3383
        %3389 = vst [vmem:[%s372] sm:$0xff] %v3388
        %s3390 = sand.u32 %s263, 1
        %s3391 = scalar_lea.sflag [#allocation4], %s3390
        %s3392 = sand.u32 %s263, 1
        %s3393 = smul.addr %s3392, 8
        %s3394 = scalar_lea.vmem [#allocation3], %s3393
        // Predicated region
        $region65: #{tpu_custom_call.1} parent=59 // pred_check
          %p3395 = pneg %p273
        $region66: #{tpu_custom_call.1} parent=59 // pred_check_branch
          %3397 = sbr.rel (%p3395) target = $region68
        $region67: #{tpu_custom_call.1} parent=59 // pred_region
          %s3399 = ssub.s32 128, 128
          %3400 = vsyncadd %s3391, %s3399
          %s3401 = smul.addr %s30, 128
          %s3402 = scalar_lea.hbm %s10, %s3401
          %s3404 = sshll.u32 %s3394, 4
          %s3405 = int_to_ptr.vmem [resolvable:$true] %s3404
          %3407 = dma.vmem_to_hbm [thread:$0]  %s3405, 128, %s3402, %s3391
        $region68: #{tpu_custom_call.1} parent=59 // pred_fallthru
          _
      $region60: #{tpu_custom_call.1} parent=5 // pred_fallthru
        _
      %p3408 = scmp.le.s32.totalorder 2, %s21
      // Predicated region
      $region69: #{tpu_custom_call.1} parent=5 // pred_check
        %p3409 = pneg %p3408
      $region70: #{tpu_custom_call.1} parent=5 // pred_check_branch
        %3411 = sbr.rel (%p3409) target = $region72
      $region71: #{tpu_custom_call.1} parent=5 // pred_region
        %s3412 = ssub.s32 %s21, 2
        // Predicated region
        $region73: #{tpu_custom_call.1} parent=71 // pred_check
          %p3413 = pneg %p279
        $region74: #{tpu_custom_call.1} parent=71 // pred_check_branch
          %3415 = sbr.rel (%p3413) target = $region76
        $region75: #{tpu_custom_call.1} parent=71 // pred_region
          %s3416 = sand.u32 %s264, 1
          %s3417 = scalar_lea.sflag [#allocation4], %s3416
          %s3418 = sand.u32 %s264, 1
          %s3419 = smul.addr %s3418, 8
          %s3420 = scalar_lea.vmem [#allocation3], %s3419
          %3421 = dma.done %s3417, 128
        $region76: #{tpu_custom_call.1} parent=71 // pred_fallthru
          _
      $region72: #{tpu_custom_call.1} parent=5 // pred_fallthru
        _
    $region6: #{tpu_custom_call.1} parent=1 // loop_footer
      %s25 = sadd.s32 1, %s21
    $region7: #{tpu_custom_call.1} parent=1 // loop_footer_branch
      %20 = sbr.rel target = $region3
    $region8: #{tpu_custom_call.1} parent=1 // loop_exit
      _
    %3422 = vsyncpa [#allocation4], 1
    %s3423 = scalar_lea.sflag [#allocation4], 1
    %3424 = vsyncpa %s3423, 1

</llo_original>
